<compile_context>
chip_gen: v6e
topology: v6e:2x2x1
jax: 0.10.0
libtpu: 0.0.40
codegen_flags: <defaults>
</compile_context>

<pallas_src>
import jax
import jax.numpy as jnp
from jax.experimental import pallas as pl
from jax.experimental.pallas import tpu as pltpu

# ---- tiny synthetic CLIP-ViT hyper-parameters ----
B = 2             # batch
C_IN = 3          # image channels (NCHW, like PyTorch)
IMG = 16          # spatial size
PATCH = 8         # conv1 kernel == stride (patch embedding)
N_PATCH = (IMG // PATCH) ** 2          # 4
SEQ = N_PATCH + 1                      # +cls token = 5
D = 32            # clip_vit.embed_dim
N_HEADS = 2
HEAD_DIM = D // N_HEADS
N_LAYERS = 2      # number of visual transformer resblocks
D_FF = 4 * D      # 128
HIDDEN = 64       # hidden_dim of self.mlp
NUM_OUT = 10      # num_outputs
NUM_T = 5         # config.NUM_TIMESTEPS
EPS = 1e-5
BS = B * SEQ      # flattened token count
CPP = C_IN * PATCH * PATCH             # 192 (im2col patch width)

# row offsets inside the packed slabs (all static)
VEC_CLS = 0
VEC_POS = 1                       # rows 1..1+N_PATCH
VEC_LNPRE = 1 + N_PATCH           # 5 (gamma), 6 (beta)
VEC_LAYER0 = VEC_LNPRE + 2        # 7; 8 rows per layer
VEC_PER_LAYER = 8
VEC_LNPOST = VEC_LAYER0 + VEC_PER_LAYER * N_LAYERS   # 23 (gamma), 24 (beta)
N_VEC_ROWS = VEC_LNPOST + 2       # 25

WO_OFF = CPP                      # 192
WPROJ_OFF = CPP + N_LAYERS * D    # 256
W_OUTD_ROWS = WPROJ_OFF + N_LAYERS * D_FF   # 512

WB_BQKV = 0                       # rows 0..N_LAYERS-1 : bqkv (96, padded to 128)
WB_BFC = N_LAYERS                 # rows 2..3          : bfc  (128)
WB_B1 = 2 * N_LAYERS              # row 4              : b1   (64, padded)
WB_BOUT = 2 * N_LAYERS + 1        # row 5              : [b2|bc] (15, padded)
N_OUT_TOTAL = NUM_OUT + NUM_T


def _layer_norm(x, g, b):
    # var = E[x^2] - mu^2 : the two lane reductions are independent -> overlap.
    mu = jnp.mean(x, axis=-1, keepdims=True)
    ms = jnp.mean(x * x, axis=-1, keepdims=True)
    var = jnp.maximum(ms - mu * mu, 0.0)
    return (x - mu) * jax.lax.rsqrt(var + EPS) * g + b


def _quick_gelu(x):
    # OpenAI-CLIP transformer MLP uses QuickGELU: x * sigmoid(1.702 x)
    return x * jax.nn.sigmoid(1.702 * x)


def clip_forward_kernel(patches_ref, vecs_ref, w_outD_ref, w_inD_ref,
                        wide_b_ref, w_head_ref, out_ref):
    f32 = jnp.float32

    # ---- conv1 (stride == kernel, no bias) as ONE patch matmul ----
    conv_w = w_outD_ref[0:CPP, :]                                  # (192, D)
    patch_emb = jnp.dot(patches_ref[...], conv_w,
                        preferred_element_type=f32)                # (B*N_PATCH, D)

    # ---- assemble [cls | patches] + positional embedding in registers ----
    cls_pos = vecs_ref[VEC_CLS:VEC_CLS + 1, :]                     # (1, D)  (cls+pos[0])
    pos_patch = vecs_ref[VEC_POS:VEC_POS + N_PATCH, :]             # (N_PATCH, D)
    tok = patch_emb.reshape(B, N_PATCH, D) + pos_patch[None, :, :]
    cls_b = jnp.broadcast_to(cls_pos[None, :, :], (B, 1, D))
    x = jnp.concatenate([cls_b, tok], axis=1).reshape(BS, D)       # (BS, D)

    # ln_pre, then keep activations 2-D for every projection.
    x = _layer_norm(x, vecs_ref[VEC_LNPRE:VEC_LNPRE + 1, :],
                    vecs_ref[VEC_LNPRE + 1:VEC_LNPRE + 2, :])

    # NOTE(perf): N_LAYERS=2 -> static Python loop is fine; switch to
    # lax.fori_loop with dynamic leading-axis weight indexing for deep stacks.
    for l in range(N_LAYERS):
        base = VEC_LAYER0 + l * VEC_PER_LAYER
        ln1_g = vecs_ref[base + 0:base + 1, :]
        ln1_b = vecs_ref[base + 1:base + 2, :]
        bo = vecs_ref[base + 2:base + 3, :]
        ln2_g = vecs_ref[base + 3:base + 4, :]
        ln2_b = vecs_ref[base + 4:base + 5, :]
        bproj = vecs_ref[base + 5:base + 6, :]
        film_s = vecs_ref[base + 6:base + 7, :]     # (1 + gamma), folded host-side
        film_b = vecs_ref[base + 7:base + 8, :]

        # ---- residual attention block: x = x + MHSA(ln_1(x)) ----
        h = _layer_norm(x, ln1_g, ln1_b)                            # (BS, D)

        # fused q/k/v: ONE (BS,D)@(D,3D) MXU matmul; scale folded into Wq/bq.
        w_l = w_inD_ref[l]                                          # (D, D_FF+3D)
        wqkv = w_l[:, D_FF:]                                        # (D, 3D) lane-aligned @128
        bqkv = wide_b_ref[WB_BQKV + l:WB_BQKV + l + 1, 0:3 * D]     # (1, 3D)
        qkv = jnp.dot(h, wqkv, preferred_element_type=f32) + bqkv   # (BS, 3D)

        # per-head attention with static lane slices (N_HEADS=2); head
        # recombination is folded into the out-projection row blocks of wo.
        attn = jnp.zeros((BS, D), f32)
        for hh in range(N_HEADS):
            qo = hh * HEAD_DIM
            qh = qkv[:, qo:qo + HEAD_DIM].reshape(B, SEQ, HEAD_DIM)           # scaled q
            kh = qkv[:, D + qo:D + qo + HEAD_DIM].reshape(B, SEQ, HEAD_DIM)
            vh = qkv[:, 2 * D + qo:2 * D + qo + HEAD_DIM].reshape(B, SEQ, HEAD_DIM)

            s = jnp.einsum('bqd,bkd->bqk', qh, kh,
                           preferred_element_type=f32)              # (B, S, S)
            m = jnp.max(s, axis=-1, keepdims=True)
            e = jnp.exp(s - m)
            p = e * pl.reciprocal(jnp.sum(e, axis=-1, keepdims=True), approx=True)
            ctx = jnp.einsum('bqk,bkd->bqd', p, vh,
                             preferred_element_type=f32).reshape(BS, HEAD_DIM)

            wo_h = w_outD_ref[WO_OFF + l * D + qo:WO_OFF + l * D + qo + HEAD_DIM, :]
            attn = attn + jnp.dot(ctx, wo_h, preferred_element_type=f32)
        x = x + attn + bo

        # ---- x = x + MLP(ln_2(x)) ----
        h2 = _layer_norm(x, ln2_g, ln2_b)
        wfc = w_l[:, 0:D_FF]                                        # (D, D_FF)
        bfc = wide_b_ref[WB_BFC + l:WB_BFC + l + 1, :]              # (1, D_FF)
        ff = _quick_gelu(jnp.dot(h2, wfc, preferred_element_type=f32) + bfc)
        wproj = w_outD_ref[WPROJ_OFF + l * D_FF:WPROJ_OFF + (l + 1) * D_FF, :]
        x = x + jnp.dot(ff, wproj, preferred_element_type=f32) + bproj

        # ---- per-layer text conditioning (cond_fn), FiLM form ----
        # TODO(synk): cond_method='xattn' uses an AttentionTextConditioner
        # (cross-attention against frozen text-encoder tokens); realized here
        # as per-layer FiLM scale/shift with deterministic synthetic params.
        x = x * film_s + film_b

    # ---- ln_post on the cls token, fused mlp+classifier heads, one store ----
    cls_out = _layer_norm(x.reshape(B, SEQ, D)[:, 0, :],
                          vecs_ref[VEC_LNPOST:VEC_LNPOST + 1, :],
                          vecs_ref[VEC_LNPOST + 1:VEC_LNPOST + 2, :])   # (B, D)
    w1 = w_head_ref[0:D, :]                                         # (D, HIDDEN)
    b1 = wide_b_ref[WB_B1:WB_B1 + 1, 0:HIDDEN]
    h1 = jnp.maximum(jnp.dot(cls_out, w1, preferred_element_type=f32) + b1, 0.0)

    hc = jnp.concatenate([h1, cls_out], axis=-1)                    # (B, HIDDEN+D)
    w_out = w_head_ref[D:, 0:N_OUT_TOTAL]                           # (HIDDEN+D, 15) block mat
    b_out = wide_b_ref[WB_BOUT:WB_BOUT + 1, 0:N_OUT_TOTAL]
    out_ref[...] = (jnp.dot(hc, w_out, preferred_element_type=f32)
                    + b_out).astype(out_ref.dtype)


def _prep_inputs(image, params):
    """Host-side packing: 28 raw tensors -> 6 dense slabs (one DMA each)."""
    (conv_w, cls_emb, pos_emb, lnpre_g, lnpre_b,
     ln1_g, ln1_b, wqkv, bqkv, wo, bo,
     ln2_g, ln2_b, wfc, bfc, wproj, bproj,
     film_g, film_b, lnpost_g, lnpost_b,
     w1, b1, w2, b2, wc, bc) = params

    b, c, hgt, wdt = image.shape
    gh, gw = hgt // PATCH, wdt // PATCH
    # im2col for stride==kernel conv; (c, kh, kw) order matches a flattened
    # PyTorch conv1 weight (Cout, Cin, kh, kw) -> (Cin*kh*kw, Cout).
    patches = image.reshape(b, c, gh, PATCH, gw, PATCH)
    patches = patches.transpose(0, 2, 4, 1, 3, 5).reshape(
        b * gh * gw, c * PATCH * PATCH)                             # (B*N_PATCH, CPP)

    # ---- (25, D) vector slab -------------------------------------------------
    rows = [cls_emb + pos_emb[0:1], pos_emb[1:], lnpre_g, lnpre_b]
    for l in range(N_LAYERS):
        rows += [ln1_g[l], ln1_b[l], bo[l], ln2_g[l], ln2_b[l], bproj[l],
                 1.0 + film_g[l], film_b[l]]                        # (1+gamma) folded
    rows += [lnpost_g, lnpost_b]
    vecs = jnp.concatenate(rows, axis=0)                            # (N_VEC_ROWS, D)

    # ---- (512, D) "->D" weight slab: conv1, per-layer wo, per-layer wproj ----
    w_outD = jnp.concatenate(
        [conv_w] + [wo[l] for l in range(N_LAYERS)]
        + [wproj[l] for l in range(N_LAYERS)], axis=0)              # (W_OUTD_ROWS, D)

    # ---- (L, D, D_FF+3D) "D->" slab: [wfc | wqkv], attention scale folded ----
    scale = HEAD_DIM ** -0.5
    wqkv_s = jnp.concatenate([wqkv[:, :, :D] * scale, wqkv[:, :, D:]], axis=-1)
    w_inD = jnp.concatenate([wfc, wqkv_s], axis=-1)                 # (L, D, 224)

    # ---- (6, 128) wide-bias slab ---------------------------------------------
    def pad128(a):
        return jnp.pad(a, ((0, 0), (0, 128 - a.shape[-1])))
    bqkv_s = jnp.concatenate([bqkv[:, :, :D] * scale, bqkv[:, :, D:]], axis=-1)
    b_out = jnp.concatenate([b2, bc], axis=-1)                      # (1, 15)
    wide_b = jnp.concatenate(
        [pad128(bqkv_s[l]) for l in range(N_LAYERS)]
        + [bfc[l] for l in range(N_LAYERS)]
        + [pad128(b1), pad128(b_out)], axis=0)                      # (6, 128)

    # ---- (128, 64) head slab: [w1 ; block(W2, Wc)] -----------------------------
    w_block = jnp.zeros((HIDDEN + D, N_OUT_TOTAL), jnp.float32)
    w_block = w_block.at[:HIDDEN, :NUM_OUT].set(w2)
    w_block = w_block.at[HIDDEN:, NUM_OUT:].set(wc)
    w_head = jnp.concatenate(
        [w1, jnp.pad(w_block, ((0, 0), (0, HIDDEN - N_OUT_TOTAL)))], axis=0)  # (128, 64)

    return [patches, vecs, w_outD, w_inD, wide_b, w_head]


def conditioned_clip_forward(image, params):
    """image: float32 NCHW (B, C_IN, IMG, IMG).  Returns (B, NUM_OUT + NUM_T)."""
    inputs = _prep_inputs(image, params)
    b = image.shape[0]
    fn = pl.pallas_call(
        clip_forward_kernel,
        out_shape=jax.ShapeDtypeStruct((b, N_OUT_TOTAL), jnp.float32),
        in_specs=[pl.BlockSpec(memory_space=pltpu.MemorySpace.VMEM)] * len(inputs),
        out_specs=pl.BlockSpec(memory_space=pltpu.MemorySpace.VMEM),
    )
    return fn(*inputs)


def init_params(key):
    ks = list(jax.random.split(key, 16))
    kit = iter(ks)

    def nrm(shape, s=0.02):
        return (s * jax.random.normal(next(kit), shape)).astype(jnp.float32)

    conv_w = nrm((C_IN * PATCH * PATCH, D))            # conv1 weight (flattened)
    cls_emb = nrm((1, D))                              # class_embedding
    pos_emb = nrm((SEQ, D))                            # positional_embedding
    lnpre_g = jnp.ones((1, D), jnp.float32)
    lnpre_b = jnp.zeros((1, D), jnp.float32)

    ln1_g = jnp.ones((N_LAYERS, 1, D), jnp.float32)
    ln1_b = jnp.zeros((N_LAYERS, 1, D), jnp.float32)
    wqkv = nrm((N_LAYERS, D, 3 * D))                   # fused in-proj [q|k|v]
    bqkv = jnp.zeros((N_LAYERS, 1, 3 * D), jnp.float32)
    wo = nrm((N_LAYERS, D, D))
    bo = jnp.zeros((N_LAYERS, 1, D), jnp.float32)
    ln2_g = jnp.ones((N_LAYERS, 1, D), jnp.float32)
    ln2_b = jnp.zeros((N_LAYERS, 1, D), jnp.float32)
    wfc = nrm((N_LAYERS, D, D_FF))
    bfc = jnp.zeros((N_LAYERS, 1, D_FF), jnp.float32)
    wproj = nrm((N_LAYERS, D_FF, D))
    bproj = jnp.zeros((N_LAYERS, 1, D), jnp.float32)
    film_g = nrm((N_LAYERS, 1, D), 0.1)                # synthetic conditioner params
    film_b = nrm((N_LAYERS, 1, D), 0.1)

    lnpost_g = jnp.ones((1, D), jnp.float32)
    lnpost_b = jnp.zeros((1, D), jnp.float32)

    w1 = nrm((D, HIDDEN))                              # self.mlp[0]
    b1 = jnp.zeros((1, HIDDEN), jnp.float32)
    w2 = nrm((HIDDEN, NUM_OUT))                        # self.mlp[2]
    b2 = jnp.zeros((1, NUM_OUT), jnp.float32)
    wc = nrm((D, NUM_T))                               # self.classifier
    bc = jnp.zeros((1, NUM_T), jnp.float32)

    return (conv_w, cls_emb, pos_emb, lnpre_g, lnpre_b,
            ln1_g, ln1_b, wqkv, bqkv, wo, bo,
            ln2_g, ln2_b, wfc, bfc, wproj, bproj,
            film_g, film_b,
            lnpost_g, lnpost_b,
            w1, b1, w2, b2, wc, bc)


if __name__ == "__main__":
    # TODO(synk): the @classifier_free_guidance decorator's null-conditioning /
    # guidance-scale logit mixing is outside the module's hot path and is not
    # reproduced here (cond_drop_prob=0.0 in the reference anyway).
    key = jax.random.PRNGKey(0)
    k_img, k_par = jax.random.split(key)
    image = jax.random.normal(k_img, (B, C_IN, IMG, IMG), dtype=jnp.float32)
    params = init_params(k_par)

    out = conditioned_clip_forward(image, params)
    out = jax.block_until_ready(out)
    assert out.shape == (B, NUM_OUT + NUM_T) and out.dtype == jnp.float32
    assert bool(jnp.all(jnp.isfinite(out)))
    print("KERNEL_OK")
</pallas_src>

<mosaic_0001>
module attributes {stable_mosaic.version = 11 : i64} {
  func.func @clip_forward_kernel(%arg0: memref<8x192xf32, #tpu.memory_space<vmem>>, %arg1: memref<25x32xf32, #tpu.memory_space<vmem>>, %arg2: memref<512x32xf32, #tpu.memory_space<vmem>>, %arg3: memref<2x32x224xf32, #tpu.memory_space<vmem>>, %arg4: memref<6x128xf32, #tpu.memory_space<vmem>>, %arg5: memref<128x64xf32, #tpu.memory_space<vmem>>, %arg6: memref<2x15xf32, #tpu.memory_space<vmem>>) attributes {dimension_semantics = [], scalar_prefetch = 0 : i64, scratch_operands = 0 : i64, tpu.core_type = #tpu.core_type<tc>} {
    %c0 = arith.constant 0 : index
    %c0_0 = arith.constant 0 : index
    %0 = vector.load %arg2[%c0, %c0_0] : memref<512x32xf32, #tpu.memory_space<vmem>>, vector<192x32xf32>
    %c0_1 = arith.constant 0 : index
    %c0_2 = arith.constant 0 : index
    %1 = vector.load %arg0[%c0_1, %c0_2] : memref<8x192xf32, #tpu.memory_space<vmem>>, vector<8x192xf32>
    %cst = arith.constant dense<0.000000e+00> : vector<8x32xf32>
    %2 = tpu.matmul %1, %0, %cst {dimension_numbers = #tpu.dot_dimension_numbers<[1], [0], [0], [1], [0, 0, 1, 1], [], []>} : vector<8x192xf32>, vector<192x32xf32>, vector<8x32xf32> -> vector<8x32xf32>
    %c0_3 = arith.constant 0 : index
    %c0_4 = arith.constant 0 : index
    %3 = vector.load %arg1[%c0_3, %c0_4] : memref<25x32xf32, #tpu.memory_space<vmem>>, vector<1x32xf32>
    %c1 = arith.constant 1 : index
    %c0_5 = arith.constant 0 : index
    %4 = vector.load %arg1[%c1, %c0_5] : memref<25x32xf32, #tpu.memory_space<vmem>>, vector<4x32xf32>
    %5 = vector.shape_cast %2 : vector<8x32xf32> to vector<2x4x32xf32>
    %6 = vector.shape_cast %4 : vector<4x32xf32> to vector<1x4x32xf32>
    %7 = vector.broadcast %6 : vector<1x4x32xf32> to vector<2x4x32xf32>
    %8 = arith.addf %5, %7 : vector<2x4x32xf32>
    %9 = vector.shape_cast %3 : vector<1x32xf32> to vector<1x1x32xf32>
    %10 = vector.shape_cast %9 : vector<1x1x32xf32> to vector<1x1x32xf32>
    %11 = vector.broadcast %10 : vector<1x1x32xf32> to vector<2x1x32xf32>
    %12 = tpu.concatenate %11, %8 in 1 : vector<2x1x32xf32>, vector<2x4x32xf32> -> vector<2x5x32xf32>
    %13 = vector.shape_cast %12 : vector<2x5x32xf32> to vector<10x32xf32>
    %c5 = arith.constant 5 : index
    %c0_6 = arith.constant 0 : index
    %14 = vector.load %arg1[%c5, %c0_6] : memref<25x32xf32, #tpu.memory_space<vmem>>, vector<1x32xf32>
    %c6 = arith.constant 6 : index
    %c0_7 = arith.constant 0 : index
    %15 = vector.load %arg1[%c6, %c0_7] : memref<25x32xf32, #tpu.memory_space<vmem>>, vector<1x32xf32>
    %cst_8 = arith.constant dense<0.000000e+00> : vector<10xf32>
    %16 = vector.multi_reduction <add>, %13, %cst_8 [1] : vector<10x32xf32> to vector<10xf32>
    %17 = vector.shape_cast %16 : vector<10xf32> to vector<10x1xf32>
    %cst_9 = arith.constant 3.200000e+01 : f32
    %18 = vector.broadcast %cst_9 : f32 to vector<10x1xf32>
    %19 = arith.divf %17, %18 : vector<10x1xf32>
    %20 = arith.mulf %13, %13 : vector<10x32xf32>
    %cst_10 = arith.constant dense<0.000000e+00> : vector<10xf32>
    %21 = vector.multi_reduction <add>, %20, %cst_10 [1] : vector<10x32xf32> to vector<10xf32>
    %22 = vector.shape_cast %21 : vector<10xf32> to vector<10x1xf32>
    %cst_11 = arith.constant 3.200000e+01 : f32
    %23 = vector.broadcast %cst_11 : f32 to vector<10x1xf32>
    %24 = arith.divf %22, %23 : vector<10x1xf32>
    %25 = arith.mulf %19, %19 : vector<10x1xf32>
    %26 = arith.subf %24, %25 : vector<10x1xf32>
    %cst_12 = arith.constant 0.000000e+00 : f32
    %27 = vector.broadcast %cst_12 : f32 to vector<10x1xf32>
    %28 = arith.maximumf %26, %27 : vector<10x1xf32>
    %29 = vector.broadcast %19 : vector<10x1xf32> to vector<10x32xf32>
    %30 = arith.subf %13, %29 : vector<10x32xf32>
    %cst_13 = arith.constant 9.99999974E-6 : f32
    %31 = vector.broadcast %cst_13 : f32 to vector<10x1xf32>
    %32 = arith.addf %28, %31 : vector<10x1xf32>
    %33 = math.rsqrt %32 : vector<10x1xf32>
    %34 = vector.broadcast %33 : vector<10x1xf32> to vector<10x32xf32>
    %35 = arith.mulf %30, %34 : vector<10x32xf32>
    %36 = vector.broadcast %14 : vector<1x32xf32> to vector<10x32xf32>
    %37 = arith.mulf %35, %36 : vector<10x32xf32>
    %38 = vector.broadcast %15 : vector<1x32xf32> to vector<10x32xf32>
    %39 = arith.addf %37, %38 : vector<10x32xf32>
    %c7 = arith.constant 7 : index
    %c0_14 = arith.constant 0 : index
    %40 = vector.load %arg1[%c7, %c0_14] : memref<25x32xf32, #tpu.memory_space<vmem>>, vector<1x32xf32>
    %c8 = arith.constant 8 : index
    %c0_15 = arith.constant 0 : index
    %41 = vector.load %arg1[%c8, %c0_15] : memref<25x32xf32, #tpu.memory_space<vmem>>, vector<1x32xf32>
    %c9 = arith.constant 9 : index
    %c0_16 = arith.constant 0 : index
    %42 = vector.load %arg1[%c9, %c0_16] : memref<25x32xf32, #tpu.memory_space<vmem>>, vector<1x32xf32>
    %c10 = arith.constant 10 : index
    %c0_17 = arith.constant 0 : index
    %43 = vector.load %arg1[%c10, %c0_17] : memref<25x32xf32, #tpu.memory_space<vmem>>, vector<1x32xf32>
    %c11 = arith.constant 11 : index
    %c0_18 = arith.constant 0 : index
    %44 = vector.load %arg1[%c11, %c0_18] : memref<25x32xf32, #tpu.memory_space<vmem>>, vector<1x32xf32>
    %c12 = arith.constant 12 : index
    %c0_19 = arith.constant 0 : index
    %45 = vector.load %arg1[%c12, %c0_19] : memref<25x32xf32, #tpu.memory_space<vmem>>, vector<1x32xf32>
    %c13 = arith.constant 13 : index
    %c0_20 = arith.constant 0 : index
    %46 = vector.load %arg1[%c13, %c0_20] : memref<25x32xf32, #tpu.memory_space<vmem>>, vector<1x32xf32>
    %c14 = arith.constant 14 : index
    %c0_21 = arith.constant 0 : index
    %47 = vector.load %arg1[%c14, %c0_21] : memref<25x32xf32, #tpu.memory_space<vmem>>, vector<1x32xf32>
    %cst_22 = arith.constant dense<0.000000e+00> : vector<10xf32>
    %48 = vector.multi_reduction <add>, %39, %cst_22 [1] : vector<10x32xf32> to vector<10xf32>
    %49 = vector.shape_cast %48 : vector<10xf32> to vector<10x1xf32>
    %cst_23 = arith.constant 3.200000e+01 : f32
    %50 = vector.broadcast %cst_23 : f32 to vector<10x1xf32>
    %51 = arith.divf %49, %50 : vector<10x1xf32>
    %52 = arith.mulf %39, %39 : vector<10x32xf32>
    %cst_24 = arith.constant dense<0.000000e+00> : vector<10xf32>
    %53 = vector.multi_reduction <add>, %52, %cst_24 [1] : vector<10x32xf32> to vector<10xf32>
    %54 = vector.shape_cast %53 : vector<10xf32> to vector<10x1xf32>
    %cst_25 = arith.constant 3.200000e+01 : f32
    %55 = vector.broadcast %cst_25 : f32 to vector<10x1xf32>
    %56 = arith.divf %54, %55 : vector<10x1xf32>
    %57 = arith.mulf %51, %51 : vector<10x1xf32>
    %58 = arith.subf %56, %57 : vector<10x1xf32>
    %cst_26 = arith.constant 0.000000e+00 : f32
    %59 = vector.broadcast %cst_26 : f32 to vector<10x1xf32>
    %60 = arith.maximumf %58, %59 : vector<10x1xf32>
    %61 = vector.broadcast %51 : vector<10x1xf32> to vector<10x32xf32>
    %62 = arith.subf %39, %61 : vector<10x32xf32>
    %cst_27 = arith.constant 9.99999974E-6 : f32
    %63 = vector.broadcast %cst_27 : f32 to vector<10x1xf32>
    %64 = arith.addf %60, %63 : vector<10x1xf32>
    %65 = math.rsqrt %64 : vector<10x1xf32>
    %66 = vector.broadcast %65 : vector<10x1xf32> to vector<10x32xf32>
    %67 = arith.mulf %62, %66 : vector<10x32xf32>
    %68 = vector.broadcast %40 : vector<1x32xf32> to vector<10x32xf32>
    %69 = arith.mulf %67, %68 : vector<10x32xf32>
    %70 = vector.broadcast %41 : vector<1x32xf32> to vector<10x32xf32>
    %71 = arith.addf %69, %70 : vector<10x32xf32>
    %c0_28 = arith.constant 0 : index
    %c0_29 = arith.constant 0 : index
    %c0_30 = arith.constant 0 : index
    %72 = vector.load %arg3[%c0_28, %c0_29, %c0_30] : memref<2x32x224xf32, #tpu.memory_space<vmem>>, vector<1x32x224xf32>
    %73 = vector.shape_cast %72 : vector<1x32x224xf32> to vector<32x224xf32>
    %74 = vector.extract_strided_slice %73 {offsets = [0, 128], sizes = [32, 96], strides = [1, 1]} : vector<32x224xf32> to vector<32x96xf32>
    %c0_31 = arith.constant 0 : index
    %c0_32 = arith.constant 0 : index
    %75 = vector.load %arg4[%c0_31, %c0_32] : memref<6x128xf32, #tpu.memory_space<vmem>>, vector<1x96xf32>
    %cst_33 = arith.constant dense<0.000000e+00> : vector<10x96xf32>
    %76 = tpu.matmul %71, %74, %cst_33 {dimension_numbers = #tpu.dot_dimension_numbers<[1], [0], [0], [1], [0, 0, 1, 1], [], []>} : vector<10x32xf32>, vector<32x96xf32>, vector<10x96xf32> -> vector<10x96xf32>
    %77 = vector.broadcast %75 : vector<1x96xf32> to vector<10x96xf32>
    %78 = arith.addf %76, %77 : vector<10x96xf32>
    %cst_34 = arith.constant 0.000000e+00 : f32
    %79 = vector.broadcast %cst_34 : f32 to vector<10x32xf32>
    %80 = vector.extract_strided_slice %78 {offsets = [0, 0], sizes = [10, 16], strides = [1, 1]} : vector<10x96xf32> to vector<10x16xf32>
    %81 = vector.shape_cast %80 : vector<10x16xf32> to vector<2x5x16xf32>
    %82 = vector.extract_strided_slice %78 {offsets = [0, 32], sizes = [10, 16], strides = [1, 1]} : vector<10x96xf32> to vector<10x16xf32>
    %83 = vector.shape_cast %82 : vector<10x16xf32> to vector<2x5x16xf32>
    %84 = vector.extract_strided_slice %78 {offsets = [0, 64], sizes = [10, 16], strides = [1, 1]} : vector<10x96xf32> to vector<10x16xf32>
    %85 = vector.shape_cast %84 : vector<10x16xf32> to vector<2x5x16xf32>
    "tpu.trace_start"() <{level = 10 : i32, message = "bqd,bkd->bqk"}> : () -> ()
    %cst_35 = arith.constant dense<0.000000e+00> : vector<2x5x5xf32>
    %86 = tpu.matmul %81, %83, %cst_35 {dimension_numbers = #tpu.dot_dimension_numbers<[2], [2], [1], [1], [0, 0, 0, 1, 1, 1], [0], [0]>} : vector<2x5x16xf32>, vector<2x5x16xf32>, vector<2x5x5xf32> -> vector<2x5x5xf32>
    "tpu.trace_stop"() : () -> ()
    %cst_36 = arith.constant dense<0xFF800000> : vector<2x5xf32>
    %87 = vector.multi_reduction <maximumf>, %86, %cst_36 [2] : vector<2x5x5xf32> to vector<2x5xf32>
    %88 = vector.shape_cast %87 : vector<2x5xf32> to vector<2x5x1xf32>
    %89 = vector.broadcast %88 : vector<2x5x1xf32> to vector<2x5x5xf32>
    %90 = arith.subf %86, %89 : vector<2x5x5xf32>
    %91 = math.exp %90 : vector<2x5x5xf32>
    %cst_37 = arith.constant dense<0.000000e+00> : vector<2x5xf32>
    %92 = vector.multi_reduction <add>, %91, %cst_37 [2] : vector<2x5x5xf32> to vector<2x5xf32>
    %93 = vector.shape_cast %92 : vector<2x5xf32> to vector<2x5x1xf32>
    %94 = tpu.reciprocal %93 {approx = true} : vector<2x5x1xf32> -> vector<2x5x1xf32>
    %95 = vector.broadcast %94 : vector<2x5x1xf32> to vector<2x5x5xf32>
    %96 = arith.mulf %91, %95 : vector<2x5x5xf32>
    "tpu.trace_start"() <{level = 10 : i32, message = "bqk,bkd->bqd"}> : () -> ()
    %cst_38 = arith.constant dense<0.000000e+00> : vector<2x5x16xf32>
    %97 = tpu.matmul %96, %85, %cst_38 {dimension_numbers = #tpu.dot_dimension_numbers<[2], [1], [1], [2], [0, 0, 0, 1, 1, 2], [0], [0]>} : vector<2x5x5xf32>, vector<2x5x16xf32>, vector<2x5x16xf32> -> vector<2x5x16xf32>
    "tpu.trace_stop"() : () -> ()
    %98 = vector.shape_cast %97 : vector<2x5x16xf32> to vector<10x16xf32>
    %c192 = arith.constant 192 : index
    %c0_39 = arith.constant 0 : index
    %99 = vector.load %arg2[%c192, %c0_39] : memref<512x32xf32, #tpu.memory_space<vmem>>, vector<16x32xf32>
    %cst_40 = arith.constant dense<0.000000e+00> : vector<10x32xf32>
    %100 = tpu.matmul %98, %99, %cst_40 {dimension_numbers = #tpu.dot_dimension_numbers<[1], [0], [0], [1], [0, 0, 1, 1], [], []>} : vector<10x16xf32>, vector<16x32xf32>, vector<10x32xf32> -> vector<10x32xf32>
    %101 = arith.addf %79, %100 : vector<10x32xf32>
    %102 = vector.extract_strided_slice %78 {offsets = [0, 16], sizes = [10, 16], strides = [1, 1]} : vector<10x96xf32> to vector<10x16xf32>
    %103 = vector.shape_cast %102 : vector<10x16xf32> to vector<2x5x16xf32>
    %104 = vector.extract_strided_slice %78 {offsets = [0, 48], sizes = [10, 16], strides = [1, 1]} : vector<10x96xf32> to vector<10x16xf32>
    %105 = vector.shape_cast %104 : vector<10x16xf32> to vector<2x5x16xf32>
    %106 = vector.extract_strided_slice %78 {offsets = [0, 80], sizes = [10, 16], strides = [1, 1]} : vector<10x96xf32> to vector<10x16xf32>
    %107 = vector.shape_cast %106 : vector<10x16xf32> to vector<2x5x16xf32>
    "tpu.trace_start"() <{level = 10 : i32, message = "bqd,bkd->bqk"}> : () -> ()
    %cst_41 = arith.constant dense<0.000000e+00> : vector<2x5x5xf32>
    %108 = tpu.matmul %103, %105, %cst_41 {dimension_numbers = #tpu.dot_dimension_numbers<[2], [2], [1], [1], [0, 0, 0, 1, 1, 1], [0], [0]>} : vector<2x5x16xf32>, vector<2x5x16xf32>, vector<2x5x5xf32> -> vector<2x5x5xf32>
    "tpu.trace_stop"() : () -> ()
    %cst_42 = arith.constant dense<0xFF800000> : vector<2x5xf32>
    %109 = vector.multi_reduction <maximumf>, %108, %cst_42 [2] : vector<2x5x5xf32> to vector<2x5xf32>
    %110 = vector.shape_cast %109 : vector<2x5xf32> to vector<2x5x1xf32>
    %111 = vector.broadcast %110 : vector<2x5x1xf32> to vector<2x5x5xf32>
    %112 = arith.subf %108, %111 : vector<2x5x5xf32>
    %113 = math.exp %112 : vector<2x5x5xf32>
    %cst_43 = arith.constant dense<0.000000e+00> : vector<2x5xf32>
    %114 = vector.multi_reduction <add>, %113, %cst_43 [2] : vector<2x5x5xf32> to vector<2x5xf32>
    %115 = vector.shape_cast %114 : vector<2x5xf32> to vector<2x5x1xf32>
    %116 = tpu.reciprocal %115 {approx = true} : vector<2x5x1xf32> -> vector<2x5x1xf32>
    %117 = vector.broadcast %116 : vector<2x5x1xf32> to vector<2x5x5xf32>
    %118 = arith.mulf %113, %117 : vector<2x5x5xf32>
    "tpu.trace_start"() <{level = 10 : i32, message = "bqk,bkd->bqd"}> : () -> ()
    %cst_44 = arith.constant dense<0.000000e+00> : vector<2x5x16xf32>
    %119 = tpu.matmul %118, %107, %cst_44 {dimension_numbers = #tpu.dot_dimension_numbers<[2], [1], [1], [2], [0, 0, 0, 1, 1, 2], [0], [0]>} : vector<2x5x5xf32>, vector<2x5x16xf32>, vector<2x5x16xf32> -> vector<2x5x16xf32>
    "tpu.trace_stop"() : () -> ()
    %120 = vector.shape_cast %119 : vector<2x5x16xf32> to vector<10x16xf32>
    %c208 = arith.constant 208 : index
    %c0_45 = arith.constant 0 : index
    %121 = vector.load %arg2[%c208, %c0_45] : memref<512x32xf32, #tpu.memory_space<vmem>>, vector<16x32xf32>
    %cst_46 = arith.constant dense<0.000000e+00> : vector<10x32xf32>
    %122 = tpu.matmul %120, %121, %cst_46 {dimension_numbers = #tpu.dot_dimension_numbers<[1], [0], [0], [1], [0, 0, 1, 1], [], []>} : vector<10x16xf32>, vector<16x32xf32>, vector<10x32xf32> -> vector<10x32xf32>
    %123 = arith.addf %101, %122 : vector<10x32xf32>
    %124 = arith.addf %39, %123 : vector<10x32xf32>
    %125 = vector.broadcast %42 : vector<1x32xf32> to vector<10x32xf32>
    %126 = arith.addf %124, %125 : vector<10x32xf32>
    %cst_47 = arith.constant dense<0.000000e+00> : vector<10xf32>
    %127 = vector.multi_reduction <add>, %126, %cst_47 [1] : vector<10x32xf32> to vector<10xf32>
    %128 = vector.shape_cast %127 : vector<10xf32> to vector<10x1xf32>
    %cst_48 = arith.constant 3.200000e+01 : f32
    %129 = vector.broadcast %cst_48 : f32 to vector<10x1xf32>
    %130 = arith.divf %128, %129 : vector<10x1xf32>
    %131 = arith.mulf %126, %126 : vector<10x32xf32>
    %cst_49 = arith.constant dense<0.000000e+00> : vector<10xf32>
    %132 = vector.multi_reduction <add>, %131, %cst_49 [1] : vector<10x32xf32> to vector<10xf32>
    %133 = vector.shape_cast %132 : vector<10xf32> to vector<10x1xf32>
    %cst_50 = arith.constant 3.200000e+01 : f32
    %134 = vector.broadcast %cst_50 : f32 to vector<10x1xf32>
    %135 = arith.divf %133, %134 : vector<10x1xf32>
    %136 = arith.mulf %130, %130 : vector<10x1xf32>
    %137 = arith.subf %135, %136 : vector<10x1xf32>
    %cst_51 = arith.constant 0.000000e+00 : f32
    %138 = vector.broadcast %cst_51 : f32 to vector<10x1xf32>
    %139 = arith.maximumf %137, %138 : vector<10x1xf32>
    %140 = vector.broadcast %130 : vector<10x1xf32> to vector<10x32xf32>
    %141 = arith.subf %126, %140 : vector<10x32xf32>
    %cst_52 = arith.constant 9.99999974E-6 : f32
    %142 = vector.broadcast %cst_52 : f32 to vector<10x1xf32>
    %143 = arith.addf %139, %142 : vector<10x1xf32>
    %144 = math.rsqrt %143 : vector<10x1xf32>
    %145 = vector.broadcast %144 : vector<10x1xf32> to vector<10x32xf32>
    %146 = arith.mulf %141, %145 : vector<10x32xf32>
    %147 = vector.broadcast %43 : vector<1x32xf32> to vector<10x32xf32>
    %148 = arith.mulf %146, %147 : vector<10x32xf32>
    %149 = vector.broadcast %44 : vector<1x32xf32> to vector<10x32xf32>
    %150 = arith.addf %148, %149 : vector<10x32xf32>
    %151 = vector.extract_strided_slice %73 {offsets = [0, 0], sizes = [32, 128], strides = [1, 1]} : vector<32x224xf32> to vector<32x128xf32>
    %c2 = arith.constant 2 : index
    %c0_53 = arith.constant 0 : index
    %152 = vector.load %arg4[%c2, %c0_53] : memref<6x128xf32, #tpu.memory_space<vmem>>, vector<1x128xf32>
    %cst_54 = arith.constant dense<0.000000e+00> : vector<10x128xf32>
    %153 = tpu.matmul %150, %151, %cst_54 {dimension_numbers = #tpu.dot_dimension_numbers<[1], [0], [0], [1], [0, 0, 1, 1], [], []>} : vector<10x32xf32>, vector<32x128xf32>, vector<10x128xf32> -> vector<10x128xf32>
    %154 = vector.broadcast %152 : vector<1x128xf32> to vector<10x128xf32>
    %155 = arith.addf %153, %154 : vector<10x128xf32>
    %cst_55 = arith.constant 1.702000e+00 : f32
    %156 = vector.broadcast %cst_55 : f32 to vector<10x128xf32>
    %157 = arith.mulf %156, %155 : vector<10x128xf32>
    %158 = arith.negf %157 : vector<10x128xf32>
    %159 = math.exp %158 : vector<10x128xf32>
    %cst_56 = arith.constant 1.000000e+00 : f32
    %160 = vector.broadcast %cst_56 : f32 to vector<10x128xf32>
    %161 = arith.addf %160, %159 : vector<10x128xf32>
    %162 = arith.divf %160, %161 : vector<10x128xf32>
    %163 = arith.mulf %155, %162 : vector<10x128xf32>
    %c256 = arith.constant 256 : index
    %c0_57 = arith.constant 0 : index
    %164 = vector.load %arg2[%c256, %c0_57] : memref<512x32xf32, #tpu.memory_space<vmem>>, vector<128x32xf32>
    %cst_58 = arith.constant dense<0.000000e+00> : vector<10x32xf32>
    %165 = tpu.matmul %163, %164, %cst_58 {dimension_numbers = #tpu.dot_dimension_numbers<[1], [0], [0], [1], [0, 0, 1, 1], [], []>} : vector<10x128xf32>, vector<128x32xf32>, vector<10x32xf32> -> vector<10x32xf32>
    %166 = arith.addf %126, %165 : vector<10x32xf32>
    %167 = vector.broadcast %45 : vector<1x32xf32> to vector<10x32xf32>
    %168 = arith.addf %166, %167 : vector<10x32xf32>
    %169 = vector.broadcast %46 : vector<1x32xf32> to vector<10x32xf32>
    %170 = arith.mulf %168, %169 : vector<10x32xf32>
    %171 = vector.broadcast %47 : vector<1x32xf32> to vector<10x32xf32>
    %172 = arith.addf %170, %171 : vector<10x32xf32>
    %c15 = arith.constant 15 : index
    %c0_59 = arith.constant 0 : index
    %173 = vector.load %arg1[%c15, %c0_59] : memref<25x32xf32, #tpu.memory_space<vmem>>, vector<1x32xf32>
    %c16 = arith.constant 16 : index
    %c0_60 = arith.constant 0 : index
    %174 = vector.load %arg1[%c16, %c0_60] : memref<25x32xf32, #tpu.memory_space<vmem>>, vector<1x32xf32>
    %c17 = arith.constant 17 : index
    %c0_61 = arith.constant 0 : index
    %175 = vector.load %arg1[%c17, %c0_61] : memref<25x32xf32, #tpu.memory_space<vmem>>, vector<1x32xf32>
    %c18 = arith.constant 18 : index
    %c0_62 = arith.constant 0 : index
    %176 = vector.load %arg1[%c18, %c0_62] : memref<25x32xf32, #tpu.memory_space<vmem>>, vector<1x32xf32>
    %c19 = arith.constant 19 : index
    %c0_63 = arith.constant 0 : index
    %177 = vector.load %arg1[%c19, %c0_63] : memref<25x32xf32, #tpu.memory_space<vmem>>, vector<1x32xf32>
    %c20 = arith.constant 20 : index
    %c0_64 = arith.constant 0 : index
    %178 = vector.load %arg1[%c20, %c0_64] : memref<25x32xf32, #tpu.memory_space<vmem>>, vector<1x32xf32>
    %c21 = arith.constant 21 : index
    %c0_65 = arith.constant 0 : index
    %179 = vector.load %arg1[%c21, %c0_65] : memref<25x32xf32, #tpu.memory_space<vmem>>, vector<1x32xf32>
    %c22 = arith.constant 22 : index
    %c0_66 = arith.constant 0 : index
    %180 = vector.load %arg1[%c22, %c0_66] : memref<25x32xf32, #tpu.memory_space<vmem>>, vector<1x32xf32>
    %cst_67 = arith.constant dense<0.000000e+00> : vector<10xf32>
    %181 = vector.multi_reduction <add>, %172, %cst_67 [1] : vector<10x32xf32> to vector<10xf32>
    %182 = vector.shape_cast %181 : vector<10xf32> to vector<10x1xf32>
    %cst_68 = arith.constant 3.200000e+01 : f32
    %183 = vector.broadcast %cst_68 : f32 to vector<10x1xf32>
    %184 = arith.divf %182, %183 : vector<10x1xf32>
    %185 = arith.mulf %172, %172 : vector<10x32xf32>
    %cst_69 = arith.constant dense<0.000000e+00> : vector<10xf32>
    %186 = vector.multi_reduction <add>, %185, %cst_69 [1] : vector<10x32xf32> to vector<10xf32>
    %187 = vector.shape_cast %186 : vector<10xf32> to vector<10x1xf32>
    %cst_70 = arith.constant 3.200000e+01 : f32
    %188 = vector.broadcast %cst_70 : f32 to vector<10x1xf32>
    %189 = arith.divf %187, %188 : vector<10x1xf32>
    %190 = arith.mulf %184, %184 : vector<10x1xf32>
    %191 = arith.subf %189, %190 : vector<10x1xf32>
    %cst_71 = arith.constant 0.000000e+00 : f32
    %192 = vector.broadcast %cst_71 : f32 to vector<10x1xf32>
    %193 = arith.maximumf %191, %192 : vector<10x1xf32>
    %194 = vector.broadcast %184 : vector<10x1xf32> to vector<10x32xf32>
    %195 = arith.subf %172, %194 : vector<10x32xf32>
    %cst_72 = arith.constant 9.99999974E-6 : f32
    %196 = vector.broadcast %cst_72 : f32 to vector<10x1xf32>
    %197 = arith.addf %193, %196 : vector<10x1xf32>
    %198 = math.rsqrt %197 : vector<10x1xf32>
    %199 = vector.broadcast %198 : vector<10x1xf32> to vector<10x32xf32>
    %200 = arith.mulf %195, %199 : vector<10x32xf32>
    %201 = vector.broadcast %173 : vector<1x32xf32> to vector<10x32xf32>
    %202 = arith.mulf %200, %201 : vector<10x32xf32>
    %203 = vector.broadcast %174 : vector<1x32xf32> to vector<10x32xf32>
    %204 = arith.addf %202, %203 : vector<10x32xf32>
    %c1_73 = arith.constant 1 : index
    %c0_74 = arith.constant 0 : index
    %c0_75 = arith.constant 0 : index
    %205 = vector.load %arg3[%c1_73, %c0_74, %c0_75] : memref<2x32x224xf32, #tpu.memory_space<vmem>>, vector<1x32x224xf32>
    %206 = vector.shape_cast %205 : vector<1x32x224xf32> to vector<32x224xf32>
    %207 = vector.extract_strided_slice %206 {offsets = [0, 128], sizes = [32, 96], strides = [1, 1]} : vector<32x224xf32> to vector<32x96xf32>
    %c1_76 = arith.constant 1 : index
    %c0_77 = arith.constant 0 : index
    %208 = vector.load %arg4[%c1_76, %c0_77] : memref<6x128xf32, #tpu.memory_space<vmem>>, vector<1x96xf32>
    %cst_78 = arith.constant dense<0.000000e+00> : vector<10x96xf32>
    %209 = tpu.matmul %204, %207, %cst_78 {dimension_numbers = #tpu.dot_dimension_numbers<[1], [0], [0], [1], [0, 0, 1, 1], [], []>} : vector<10x32xf32>, vector<32x96xf32>, vector<10x96xf32> -> vector<10x96xf32>
    %210 = vector.broadcast %208 : vector<1x96xf32> to vector<10x96xf32>
    %211 = arith.addf %209, %210 : vector<10x96xf32>
    %cst_79 = arith.constant 0.000000e+00 : f32
    %212 = vector.broadcast %cst_79 : f32 to vector<10x32xf32>
    %213 = vector.extract_strided_slice %211 {offsets = [0, 0], sizes = [10, 16], strides = [1, 1]} : vector<10x96xf32> to vector<10x16xf32>
    %214 = vector.shape_cast %213 : vector<10x16xf32> to vector<2x5x16xf32>
    %215 = vector.extract_strided_slice %211 {offsets = [0, 32], sizes = [10, 16], strides = [1, 1]} : vector<10x96xf32> to vector<10x16xf32>
    %216 = vector.shape_cast %215 : vector<10x16xf32> to vector<2x5x16xf32>
    %217 = vector.extract_strided_slice %211 {offsets = [0, 64], sizes = [10, 16], strides = [1, 1]} : vector<10x96xf32> to vector<10x16xf32>
    %218 = vector.shape_cast %217 : vector<10x16xf32> to vector<2x5x16xf32>
    "tpu.trace_start"() <{level = 10 : i32, message = "bqd,bkd->bqk"}> : () -> ()
    %cst_80 = arith.constant dense<0.000000e+00> : vector<2x5x5xf32>
    %219 = tpu.matmul %214, %216, %cst_80 {dimension_numbers = #tpu.dot_dimension_numbers<[2], [2], [1], [1], [0, 0, 0, 1, 1, 1], [0], [0]>} : vector<2x5x16xf32>, vector<2x5x16xf32>, vector<2x5x5xf32> -> vector<2x5x5xf32>
    "tpu.trace_stop"() : () -> ()
    %cst_81 = arith.constant dense<0xFF800000> : vector<2x5xf32>
    %220 = vector.multi_reduction <maximumf>, %219, %cst_81 [2] : vector<2x5x5xf32> to vector<2x5xf32>
    %221 = vector.shape_cast %220 : vector<2x5xf32> to vector<2x5x1xf32>
    %222 = vector.broadcast %221 : vector<2x5x1xf32> to vector<2x5x5xf32>
    %223 = arith.subf %219, %222 : vector<2x5x5xf32>
    %224 = math.exp %223 : vector<2x5x5xf32>
    %cst_82 = arith.constant dense<0.000000e+00> : vector<2x5xf32>
    %225 = vector.multi_reduction <add>, %224, %cst_82 [2] : vector<2x5x5xf32> to vector<2x5xf32>
    %226 = vector.shape_cast %225 : vector<2x5xf32> to vector<2x5x1xf32>
    %227 = tpu.reciprocal %226 {approx = true} : vector<2x5x1xf32> -> vector<2x5x1xf32>
    %228 = vector.broadcast %227 : vector<2x5x1xf32> to vector<2x5x5xf32>
    %229 = arith.mulf %224, %228 : vector<2x5x5xf32>
    "tpu.trace_start"() <{level = 10 : i32, message = "bqk,bkd->bqd"}> : () -> ()
    %cst_83 = arith.constant dense<0.000000e+00> : vector<2x5x16xf32>
    %230 = tpu.matmul %229, %218, %cst_83 {dimension_numbers = #tpu.dot_dimension_numbers<[2], [1], [1], [2], [0, 0, 0, 1, 1, 2], [0], [0]>} : vector<2x5x5xf32>, vector<2x5x16xf32>, vector<2x5x16xf32> -> vector<2x5x16xf32>
    "tpu.trace_stop"() : () -> ()
    %231 = vector.shape_cast %230 : vector<2x5x16xf32> to vector<10x16xf32>
    %c224 = arith.constant 224 : index
    %c0_84 = arith.constant 0 : index
    %232 = vector.load %arg2[%c224, %c0_84] : memref<512x32xf32, #tpu.memory_space<vmem>>, vector<16x32xf32>
    %cst_85 = arith.constant dense<0.000000e+00> : vector<10x32xf32>
    %233 = tpu.matmul %231, %232, %cst_85 {dimension_numbers = #tpu.dot_dimension_numbers<[1], [0], [0], [1], [0, 0, 1, 1], [], []>} : vector<10x16xf32>, vector<16x32xf32>, vector<10x32xf32> -> vector<10x32xf32>
    %234 = arith.addf %212, %233 : vector<10x32xf32>
    %235 = vector.extract_strided_slice %211 {offsets = [0, 16], sizes = [10, 16], strides = [1, 1]} : vector<10x96xf32> to vector<10x16xf32>
    %236 = vector.shape_cast %235 : vector<10x16xf32> to vector<2x5x16xf32>
    %237 = vector.extract_strided_slice %211 {offsets = [0, 48], sizes = [10, 16], strides = [1, 1]} : vector<10x96xf32> to vector<10x16xf32>
    %238 = vector.shape_cast %237 : vector<10x16xf32> to vector<2x5x16xf32>
    %239 = vector.extract_strided_slice %211 {offsets = [0, 80], sizes = [10, 16], strides = [1, 1]} : vector<10x96xf32> to vector<10x16xf32>
    %240 = vector.shape_cast %239 : vector<10x16xf32> to vector<2x5x16xf32>
    "tpu.trace_start"() <{level = 10 : i32, message = "bqd,bkd->bqk"}> : () -> ()
    %cst_86 = arith.constant dense<0.000000e+00> : vector<2x5x5xf32>
    %241 = tpu.matmul %236, %238, %cst_86 {dimension_numbers = #tpu.dot_dimension_numbers<[2], [2], [1], [1], [0, 0, 0, 1, 1, 1], [0], [0]>} : vector<2x5x16xf32>, vector<2x5x16xf32>, vector<2x5x5xf32> -> vector<2x5x5xf32>
    "tpu.trace_stop"() : () -> ()
    %cst_87 = arith.constant dense<0xFF800000> : vector<2x5xf32>
    %242 = vector.multi_reduction <maximumf>, %241, %cst_87 [2] : vector<2x5x5xf32> to vector<2x5xf32>
    %243 = vector.shape_cast %242 : vector<2x5xf32> to vector<2x5x1xf32>
    %244 = vector.broadcast %243 : vector<2x5x1xf32> to vector<2x5x5xf32>
    %245 = arith.subf %241, %244 : vector<2x5x5xf32>
    %246 = math.exp %245 : vector<2x5x5xf32>
    %cst_88 = arith.constant dense<0.000000e+00> : vector<2x5xf32>
    %247 = vector.multi_reduction <add>, %246, %cst_88 [2] : vector<2x5x5xf32> to vector<2x5xf32>
    %248 = vector.shape_cast %247 : vector<2x5xf32> to vector<2x5x1xf32>
    %249 = tpu.reciprocal %248 {approx = true} : vector<2x5x1xf32> -> vector<2x5x1xf32>
    %250 = vector.broadcast %249 : vector<2x5x1xf32> to vector<2x5x5xf32>
    %251 = arith.mulf %246, %250 : vector<2x5x5xf32>
    "tpu.trace_start"() <{level = 10 : i32, message = "bqk,bkd->bqd"}> : () -> ()
    %cst_89 = arith.constant dense<0.000000e+00> : vector<2x5x16xf32>
    %252 = tpu.matmul %251, %240, %cst_89 {dimension_numbers = #tpu.dot_dimension_numbers<[2], [1], [1], [2], [0, 0, 0, 1, 1, 2], [0], [0]>} : vector<2x5x5xf32>, vector<2x5x16xf32>, vector<2x5x16xf32> -> vector<2x5x16xf32>
    "tpu.trace_stop"() : () -> ()
    %253 = vector.shape_cast %252 : vector<2x5x16xf32> to vector<10x16xf32>
    %c240 = arith.constant 240 : index
    %c0_90 = arith.constant 0 : index
    %254 = vector.load %arg2[%c240, %c0_90] : memref<512x32xf32, #tpu.memory_space<vmem>>, vector<16x32xf32>
    %cst_91 = arith.constant dense<0.000000e+00> : vector<10x32xf32>
    %255 = tpu.matmul %253, %254, %cst_91 {dimension_numbers = #tpu.dot_dimension_numbers<[1], [0], [0], [1], [0, 0, 1, 1], [], []>} : vector<10x16xf32>, vector<16x32xf32>, vector<10x32xf32> -> vector<10x32xf32>
    %256 = arith.addf %234, %255 : vector<10x32xf32>
    %257 = arith.addf %172, %256 : vector<10x32xf32>
    %258 = vector.broadcast %175 : vector<1x32xf32> to vector<10x32xf32>
    %259 = arith.addf %257, %258 : vector<10x32xf32>
    %cst_92 = arith.constant dense<0.000000e+00> : vector<10xf32>
    %260 = vector.multi_reduction <add>, %259, %cst_92 [1] : vector<10x32xf32> to vector<10xf32>
    %261 = vector.shape_cast %260 : vector<10xf32> to vector<10x1xf32>
    %cst_93 = arith.constant 3.200000e+01 : f32
    %262 = vector.broadcast %cst_93 : f32 to vector<10x1xf32>
    %263 = arith.divf %261, %262 : vector<10x1xf32>
    %264 = arith.mulf %259, %259 : vector<10x32xf32>
    %cst_94 = arith.constant dense<0.000000e+00> : vector<10xf32>
    %265 = vector.multi_reduction <add>, %264, %cst_94 [1] : vector<10x32xf32> to vector<10xf32>
    %266 = vector.shape_cast %265 : vector<10xf32> to vector<10x1xf32>
    %cst_95 = arith.constant 3.200000e+01 : f32
    %267 = vector.broadcast %cst_95 : f32 to vector<10x1xf32>
    %268 = arith.divf %266, %267 : vector<10x1xf32>
    %269 = arith.mulf %263, %263 : vector<10x1xf32>
    %270 = arith.subf %268, %269 : vector<10x1xf32>
    %cst_96 = arith.constant 0.000000e+00 : f32
    %271 = vector.broadcast %cst_96 : f32 to vector<10x1xf32>
    %272 = arith.maximumf %270, %271 : vector<10x1xf32>
    %273 = vector.broadcast %263 : vector<10x1xf32> to vector<10x32xf32>
    %274 = arith.subf %259, %273 : vector<10x32xf32>
    %cst_97 = arith.constant 9.99999974E-6 : f32
    %275 = vector.broadcast %cst_97 : f32 to vector<10x1xf32>
    %276 = arith.addf %272, %275 : vector<10x1xf32>
    %277 = math.rsqrt %276 : vector<10x1xf32>
    %278 = vector.broadcast %277 : vector<10x1xf32> to vector<10x32xf32>
    %279 = arith.mulf %274, %278 : vector<10x32xf32>
    %280 = vector.broadcast %176 : vector<1x32xf32> to vector<10x32xf32>
    %281 = arith.mulf %279, %280 : vector<10x32xf32>
    %282 = vector.broadcast %177 : vector<1x32xf32> to vector<10x32xf32>
    %283 = arith.addf %281, %282 : vector<10x32xf32>
    %284 = vector.extract_strided_slice %206 {offsets = [0, 0], sizes = [32, 128], strides = [1, 1]} : vector<32x224xf32> to vector<32x128xf32>
    %c3 = arith.constant 3 : index
    %c0_98 = arith.constant 0 : index
    %285 = vector.load %arg4[%c3, %c0_98] : memref<6x128xf32, #tpu.memory_space<vmem>>, vector<1x128xf32>
    %cst_99 = arith.constant dense<0.000000e+00> : vector<10x128xf32>
    %286 = tpu.matmul %283, %284, %cst_99 {dimension_numbers = #tpu.dot_dimension_numbers<[1], [0], [0], [1], [0, 0, 1, 1], [], []>} : vector<10x32xf32>, vector<32x128xf32>, vector<10x128xf32> -> vector<10x128xf32>
    %287 = vector.broadcast %285 : vector<1x128xf32> to vector<10x128xf32>
    %288 = arith.addf %286, %287 : vector<10x128xf32>
    %cst_100 = arith.constant 1.702000e+00 : f32
    %289 = vector.broadcast %cst_100 : f32 to vector<10x128xf32>
    %290 = arith.mulf %289, %288 : vector<10x128xf32>
    %291 = arith.negf %290 : vector<10x128xf32>
    %292 = math.exp %291 : vector<10x128xf32>
    %cst_101 = arith.constant 1.000000e+00 : f32
    %293 = vector.broadcast %cst_101 : f32 to vector<10x128xf32>
    %294 = arith.addf %293, %292 : vector<10x128xf32>
    %295 = arith.divf %293, %294 : vector<10x128xf32>
    %296 = arith.mulf %288, %295 : vector<10x128xf32>
    %c384 = arith.constant 384 : index
    %c0_102 = arith.constant 0 : index
    %297 = vector.load %arg2[%c384, %c0_102] : memref<512x32xf32, #tpu.memory_space<vmem>>, vector<128x32xf32>
    %cst_103 = arith.constant dense<0.000000e+00> : vector<10x32xf32>
    %298 = tpu.matmul %296, %297, %cst_103 {dimension_numbers = #tpu.dot_dimension_numbers<[1], [0], [0], [1], [0, 0, 1, 1], [], []>} : vector<10x128xf32>, vector<128x32xf32>, vector<10x32xf32> -> vector<10x32xf32>
    %299 = arith.addf %259, %298 : vector<10x32xf32>
    %300 = vector.broadcast %178 : vector<1x32xf32> to vector<10x32xf32>
    %301 = arith.addf %299, %300 : vector<10x32xf32>
    %302 = vector.broadcast %179 : vector<1x32xf32> to vector<10x32xf32>
    %303 = arith.mulf %301, %302 : vector<10x32xf32>
    %304 = vector.broadcast %180 : vector<1x32xf32> to vector<10x32xf32>
    %305 = arith.addf %303, %304 : vector<10x32xf32>
    %306 = vector.shape_cast %305 : vector<10x32xf32> to vector<2x5x32xf32>
    %307 = vector.extract_strided_slice %306 {offsets = [0, 0, 0], sizes = [2, 1, 32], strides = [1, 1, 1]} : vector<2x5x32xf32> to vector<2x1x32xf32>
    %308 = vector.shape_cast %307 : vector<2x1x32xf32> to vector<2x32xf32>
    %c23 = arith.constant 23 : index
    %c0_104 = arith.constant 0 : index
    %309 = vector.load %arg1[%c23, %c0_104] : memref<25x32xf32, #tpu.memory_space<vmem>>, vector<1x32xf32>
    %c24 = arith.constant 24 : index
    %c0_105 = arith.constant 0 : index
    %310 = vector.load %arg1[%c24, %c0_105] : memref<25x32xf32, #tpu.memory_space<vmem>>, vector<1x32xf32>
    %cst_106 = arith.constant dense<0.000000e+00> : vector<2xf32>
    %311 = vector.multi_reduction <add>, %308, %cst_106 [1] : vector<2x32xf32> to vector<2xf32>
    %312 = vector.shape_cast %311 : vector<2xf32> to vector<2x1xf32>
    %cst_107 = arith.constant 3.200000e+01 : f32
    %313 = vector.broadcast %cst_107 : f32 to vector<2x1xf32>
    %314 = arith.divf %312, %313 : vector<2x1xf32>
    %315 = arith.mulf %308, %308 : vector<2x32xf32>
    %cst_108 = arith.constant dense<0.000000e+00> : vector<2xf32>
    %316 = vector.multi_reduction <add>, %315, %cst_108 [1] : vector<2x32xf32> to vector<2xf32>
    %317 = vector.shape_cast %316 : vector<2xf32> to vector<2x1xf32>
    %cst_109 = arith.constant 3.200000e+01 : f32
    %318 = vector.broadcast %cst_109 : f32 to vector<2x1xf32>
    %319 = arith.divf %317, %318 : vector<2x1xf32>
    %320 = arith.mulf %314, %314 : vector<2x1xf32>
    %321 = arith.subf %319, %320 : vector<2x1xf32>
    %cst_110 = arith.constant 0.000000e+00 : f32
    %322 = vector.broadcast %cst_110 : f32 to vector<2x1xf32>
    %323 = arith.maximumf %321, %322 : vector<2x1xf32>
    %324 = vector.broadcast %314 : vector<2x1xf32> to vector<2x32xf32>
    %325 = arith.subf %308, %324 : vector<2x32xf32>
    %cst_111 = arith.constant 9.99999974E-6 : f32
    %326 = vector.broadcast %cst_111 : f32 to vector<2x1xf32>
    %327 = arith.addf %323, %326 : vector<2x1xf32>
    %328 = math.rsqrt %327 : vector<2x1xf32>
    %329 = vector.broadcast %328 : vector<2x1xf32> to vector<2x32xf32>
    %330 = arith.mulf %325, %329 : vector<2x32xf32>
    %331 = vector.broadcast %309 : vector<1x32xf32> to vector<2x32xf32>
    %332 = arith.mulf %330, %331 : vector<2x32xf32>
    %333 = vector.broadcast %310 : vector<1x32xf32> to vector<2x32xf32>
    %334 = arith.addf %332, %333 : vector<2x32xf32>
    %c0_112 = arith.constant 0 : index
    %c0_113 = arith.constant 0 : index
    %335 = vector.load %arg5[%c0_112, %c0_113] : memref<128x64xf32, #tpu.memory_space<vmem>>, vector<32x64xf32>
    %c4 = arith.constant 4 : index
    %c0_114 = arith.constant 0 : index
    %336 = vector.load %arg4[%c4, %c0_114] : memref<6x128xf32, #tpu.memory_space<vmem>>, vector<1x64xf32>
    %cst_115 = arith.constant dense<0.000000e+00> : vector<2x64xf32>
    %337 = tpu.matmul %334, %335, %cst_115 {dimension_numbers = #tpu.dot_dimension_numbers<[1], [0], [0], [1], [0, 0, 1, 1], [], []>} : vector<2x32xf32>, vector<32x64xf32>, vector<2x64xf32> -> vector<2x64xf32>
    %338 = vector.broadcast %336 : vector<1x64xf32> to vector<2x64xf32>
    %339 = arith.addf %337, %338 : vector<2x64xf32>
    %cst_116 = arith.constant 0.000000e+00 : f32
    %340 = vector.broadcast %cst_116 : f32 to vector<2x64xf32>
    %341 = arith.maximumf %339, %340 : vector<2x64xf32>
    %342 = tpu.concatenate %341, %334 in 1 : vector<2x64xf32>, vector<2x32xf32> -> vector<2x96xf32>
    %c32 = arith.constant 32 : index
    %c0_117 = arith.constant 0 : index
    %343 = vector.load %arg5[%c32, %c0_117] : memref<128x64xf32, #tpu.memory_space<vmem>>, vector<96x15xf32>
    %c5_118 = arith.constant 5 : index
    %c0_119 = arith.constant 0 : index
    %344 = vector.load %arg4[%c5_118, %c0_119] : memref<6x128xf32, #tpu.memory_space<vmem>>, vector<1x15xf32>
    %cst_120 = arith.constant dense<0.000000e+00> : vector<2x15xf32>
    %345 = tpu.matmul %342, %343, %cst_120 {dimension_numbers = #tpu.dot_dimension_numbers<[1], [0], [0], [1], [0, 0, 1, 1], [], []>} : vector<2x96xf32>, vector<96x15xf32>, vector<2x15xf32> -> vector<2x15xf32>
    %346 = vector.broadcast %344 : vector<1x15xf32> to vector<2x15xf32>
    %347 = arith.addf %345, %346 : vector<2x15xf32>
    %c0_121 = arith.constant 0 : index
    %c0_122 = arith.constant 0 : index
    %348 = vector.load %arg6[%c0_121, %c0_122] : memref<2x15xf32, #tpu.memory_space<vmem>>, vector<2x15xf32>
    tpu.vector_store %arg6[%c0_121, %c0_122], %347 {strides = array<i32>} : memref<2x15xf32, #tpu.memory_space<vmem>>, vector<2x15xf32>,
    return
  }
}

</mosaic_0001>

<llo_original>
// kernel: tpu_custom_call.1
$region0: #{tpu_custom_call.1}
  #allocation0 [shape = 'u32[]', space=smem, size = 0x4, offset = 0x4, fixed_abs, tag = 'smem constant byte address 0x4 - core index']
  #allocation1 [shape = 'u32[144,128]{1,0:T(1,128)}', space=vmem, size = 0x12000, scoped, tag = 'internal scratch']
  %s0 = inlined_call_operand.vmem [shape: f32[8,192], index: 0, kind: input, shape index: {}]
  %s1 = inlined_call_operand.vmem [shape: f32[25,32], index: 1, kind: input, shape index: {}]
  %s2 = inlined_call_operand.vmem [shape: f32[512,32], index: 2, kind: input, shape index: {}]
  %s3 = inlined_call_operand.vmem [shape: f32[2,32,224], index: 3, kind: input, shape index: {}]
  %s4 = inlined_call_operand.vmem [shape: f32[6,128], index: 4, kind: input, shape index: {}]
  %s5 = inlined_call_operand.vmem [shape: f32[128,64], index: 5, kind: input, shape index: {}]
  %s6 = inlined_call_operand.hbm [shape: f32[2,15], index: 6, kind: output, shape index: {}]
  %s7 = sld [smem:[#allocation0]]
  $region34: #{tpu_custom_call.1} parent=0
    _
  %s9 = ssub.s32 1, %s7
  %s10 = scalar_select 0, %s9, %s7
  $region1: #{tpu_custom_call.1} parent=0
    #allocation2 [shape = 'u8[1024]{0}', space=vmem, size = 0x400, scoped, tag = 'output window, operand 0, single buffered']
    #allocation3 [shape = 's32[1]{0}', space=sflag, size = 0x4, scoped, tag = 'scoped memory for tpu_custom_call.1']
    %11 = vsyncpa [#allocation3], 0
    // Predicated region
    $region2: #{tpu_custom_call.1} parent=1 // pred_check
      _
    $region3: #{tpu_custom_call.1} parent=1 // pred_check_branch
      %13 = sbr.rel (0) target = $region5
    $region4: #{tpu_custom_call.1} parent=1 // pred_region
      _
    $region5: #{tpu_custom_call.1} parent=1 // pred_fallthru
      _
    // Predicated region
    $region6: #{tpu_custom_call.1} parent=1 // pred_check
      _
    $region7: #{tpu_custom_call.1} parent=1 // pred_check_branch
      %15 = sbr.rel (0) target = $region9
    $region8: #{tpu_custom_call.1} parent=1 // pred_region
      _
    $region9: #{tpu_custom_call.1} parent=1 // pred_fallthru
      _
    // Predicated region
    $region10: #{tpu_custom_call.1} parent=1 // pred_check
      _
    $region11: #{tpu_custom_call.1} parent=1 // pred_check_branch
      %17 = sbr.rel (0) target = $region13
    $region12: #{tpu_custom_call.1} parent=1 // pred_region
      _
    $region13: #{tpu_custom_call.1} parent=1 // pred_fallthru
      _
    // Predicated region
    $region14: #{tpu_custom_call.1} parent=1 // pred_check
      _
    $region15: #{tpu_custom_call.1} parent=1 // pred_check_branch
      %19 = sbr.rel (0) target = $region17
    $region16: #{tpu_custom_call.1} parent=1 // pred_region
      _
    $region17: #{tpu_custom_call.1} parent=1 // pred_fallthru
      _
    // Predicated region
    $region18: #{tpu_custom_call.1} parent=1 // pred_check
      _
    $region19: #{tpu_custom_call.1} parent=1 // pred_check_branch
      %21 = sbr.rel (0) target = $region21
    $region20: #{tpu_custom_call.1} parent=1 // pred_region
      _
    $region21: #{tpu_custom_call.1} parent=1 // pred_fallthru
      _
    // Predicated region
    $region22: #{tpu_custom_call.1} parent=1 // pred_check
      _
    $region23: #{tpu_custom_call.1} parent=1 // pred_check_branch
      %23 = sbr.rel (0) target = $region25
    $region24: #{tpu_custom_call.1} parent=1 // pred_region
      _
    $region25: #{tpu_custom_call.1} parent=1 // pred_fallthru
      _
    %v24 = vld [vmem:[%s2] sm:$0xff]
    %v25 = vld [vmem:[%s2 + $0x8] sm:$0xff]
    %v26 = vld [vmem:[%s2 + $0x10] sm:$0xff]
    %v27 = vld [vmem:[%s2 + $0x18] sm:$0xff]
    %v28 = vld [vmem:[%s2 + $0x20] sm:$0xff]
    %v29 = vld [vmem:[%s2 + $0x28] sm:$0xff]
    %v30 = vld [vmem:[%s2 + $0x30] sm:$0xff]
    %v31 = vld [vmem:[%s2 + $0x38] sm:$0xff]
    %v32 = vld [vmem:[%s2 + $0x40] sm:$0xff]
    %v33 = vld [vmem:[%s2 + $0x48] sm:$0xff]
    %v34 = vld [vmem:[%s2 + $0x50] sm:$0xff]
    %v35 = vld [vmem:[%s2 + $0x58] sm:$0xff]
    %v36 = vld [vmem:[%s2 + $0x60] sm:$0xff]
    %v37 = vld [vmem:[%s2 + $0x68] sm:$0xff]
    %v38 = vld [vmem:[%s2 + $0x70] sm:$0xff]
    %v39 = vld [vmem:[%s2 + $0x78] sm:$0xff]
    %v40 = vld [vmem:[%s2 + $0x80] sm:$0xff]
    %v41 = vld [vmem:[%s2 + $0x88] sm:$0xff]
    %v42 = vld [vmem:[%s2 + $0x90] sm:$0xff]
    %v43 = vld [vmem:[%s2 + $0x98] sm:$0xff]
    %v44 = vld [vmem:[%s2 + $0xa0] sm:$0xff]
    %v45 = vld [vmem:[%s2 + $0xa8] sm:$0xff]
    %v46 = vld [vmem:[%s2 + $0xb0] sm:$0xff]
    %v47 = vld [vmem:[%s2 + $0xb8] sm:$0xff]
    %v48 = vld [vmem:[%s0] sm:$0xff]
    %v49 = vld [vmem:[%s0 + $0x8] sm:$0xff]
    %vm50 = vcmask 523264
    %v52 = vsel %vm50, %v49, 0
    %54 = vmatprep.subr.mxu0 0.0
    %55 = vmatpush1.msra.mxu0 %v39
    %56 = vmatprep.subr.mxu0 0.0
    %57 = vmatpush1.msra.mxu0 %v38
    %58 = vmatprep.subr.mxu0 0.0
    %59 = vmatpush1.msra.mxu0 %v37
    %60 = vmatprep.subr.mxu0 0.0
    %61 = vmatpush1.msra.mxu0 %v36
    %62 = vmatprep.subr.mxu0 0.0
    %63 = vmatpush1.msra.mxu0 %v35
    %64 = vmatprep.subr.mxu0 0.0
    %65 = vmatpush1.msra.mxu0 %v34
    %66 = vmatprep.subr.mxu0 0.0
    %67 = vmatpush1.msra.mxu0 %v33
    %68 = vmatprep.subr.mxu0 0.0
    %69 = vmatpush1.msra.mxu0 %v32
    %70 = vmatprep.subr.mxu0 0.0
    %71 = vmatpush1.msra.mxu0 %v31
    %72 = vmatprep.subr.mxu0 0.0
    %73 = vmatpush1.msra.mxu0 %v30
    %74 = vmatprep.subr.mxu0 0.0
    %75 = vmatpush1.msra.mxu0 %v29
    %76 = vmatprep.subr.mxu0 0.0
    %77 = vmatpush1.msra.mxu0 %v28
    %78 = vmatprep.subr.mxu0 0.0
    %79 = vmatpush1.msra.mxu0 %v27
    %80 = vmatprep.subr.mxu0 0.0
    %81 = vmatpush1.msra.mxu0 %v26
    %82 = vmatprep.subr.mxu0 0.0
    %83 = vmatpush1.msra.mxu0 %v25
    %84 = vmatprep.subr.mxu0 0.0
    %85 = vmatpush1.msra.mxu0 %v24
    %86 = vmatprep.subr.mxu0 0.0
    %87 = vmatpush2.msra.mxu0 0.0
    %88 = vmatprep.subr.mxu0 0.0
    %89 = vmatpush2.msra.mxu0 0.0
    %90 = vmatprep.subr.mxu0 0.0
    %91 = vmatpush2.msra.mxu0 0.0
    %92 = vmatprep.subr.mxu0 0.0
    %93 = vmatpush2.msra.mxu0 0.0
    %94 = vmatprep.subr.mxu0 0.0
    %95 = vmatpush2.msra.mxu0 0.0
    %96 = vmatprep.subr.mxu0 0.0
    %97 = vmatpush2.msra.mxu0 0.0
    %98 = vmatprep.subr.mxu0 0.0
    %99 = vmatpush2.msra.mxu0 0.0
    %100 = vmatprep.subr.mxu0 0.0
    %101 = vmatpush2.msra.mxu0 0.0
    %102 = vmatprep.subr.mxu0 0.0
    %103 = vmatpush2.msra.mxu0 %v47
    %104 = vmatprep.subr.mxu0 0.0
    %105 = vmatpush2.msra.mxu0 %v46
    %106 = vmatprep.subr.mxu0 0.0
    %107 = vmatpush2.msra.mxu0 %v45
    %108 = vmatprep.subr.mxu0 0.0
    %109 = vmatpush2.msra.mxu0 %v44
    %110 = vmatprep.subr.mxu0 0.0
    %111 = vmatpush2.msra.mxu0 %v43
    %112 = vmatprep.subr.mxu0 0.0
    %113 = vmatpush2.msra.mxu0 %v42
    %114 = vmatprep.subr.mxu0 0.0
    %115 = vmatpush2.msra.mxu0 %v41
    %116 = vmatprep.subr.mxu0 0.0
    %117 = vmatpush2.msra.mxu0 %v40
    %118 = vmatprep.mubr.f32.mxu0 %v52
    %119 = vmatmul.mubr.f32.gmra.mxu0 %v48
    %v120 = vpop.f32.mrf.mxu0
    %v121 = vadd.f32 0.0, %v120
    %v122 = vpop.f32.mrf.mxu0
    %123 = vdwg.mxu0
    %v124 = vld [vmem:[%s1] sm:$0x1]
    %v125 = vld [vmem:[%s1 + $0x1] sm:$0xf]
    %v127 = vcombine.high %v121, %v121
    %v129 = vadd.f32 %v121, %v125
    %v130 = vadd.f32 %v127, %v125
    %v133 = vrot.slane %v129, 7
    %v134 = vrot.slane %v130, 7
    %vm137 = vcmask 1040384
    %v138 = vsel %vm137, %v124, %v133
    %v139 = vsel %vm137, %v124, %v134
    %v142 = vcombine.high %v138, %v138
    %v144 = vunpack.c.l.s4 1966171168
    %v145 = vunpack.c.0.s8 %v144
    %v146 = vlaneseq
    %v147 = vshrl.u32 %v146, 7
    %v148 = vsub.s32 %v145, %v147
    %v149 = vrot.slane %v138, %v148
    %v151 = vunpack.c.l.s4 1966171168
    %v152 = vunpack.c.0.s8 %v151
    %v153 = vlaneseq
    %v154 = vshrl.u32 %v153, 7
    %v155 = vsub.s32 %v152, %v154
    %v156 = vrot.slane %v142, %v155
    %v157 = vcombine.high %v149, %v149
    %v159 = vunpack.c.l.s4 1966171168
    %v160 = vunpack.c.0.s8 %v159
    %v161 = vlaneseq
    %v162 = vshrl.u32 %v161, 7
    %v163 = vsub.s32 %v160, %v162
    %v164 = vrot.slane %v149, %v163
    %v166 = vunpack.c.l.s4 1966171168
    %v167 = vunpack.c.0.s8 %v166
    %v168 = vlaneseq
    %v169 = vshrl.u32 %v168, 7
    %v170 = vsub.s32 %v167, %v169
    %v171 = vrot.slane %v156, %v170
    %v173 = vunpack.c.l.s4 1966171168
    %v174 = vunpack.c.0.s8 %v173
    %v175 = vlaneseq
    %v176 = vshrl.u32 %v175, 7
    %v177 = vsub.s32 %v174, %v176
    %v178 = vrot.slane %v157, %v177
    %v179 = vcombine.high %v164, %v164
    %v180 = vcombine.high %v178, %v178
    %v181 = vcombine.high %v139, %v139
    %v183 = vunpack.c.l.s4 1966171168
    %v184 = vunpack.c.0.s8 %v183
    %v185 = vlaneseq
    %v186 = vshrl.u32 %v185, 7
    %v187 = vsub.s32 %v184, %v186
    %v188 = vrot.slane %v139, %v187
    %v190 = vunpack.c.l.s4 1966171168
    %v191 = vunpack.c.0.s8 %v190
    %v192 = vlaneseq
    %v193 = vshrl.u32 %v192, 7
    %v194 = vsub.s32 %v191, %v193
    %v195 = vrot.slane %v181, %v194
    %v196 = vcombine.high %v188, %v188
    %v198 = vunpack.c.l.s4 1966171168
    %v199 = vunpack.c.0.s8 %v198
    %v200 = vlaneseq
    %v201 = vshrl.u32 %v200, 7
    %v202 = vsub.s32 %v199, %v201
    %v203 = vrot.slane %v188, %v202
    %v205 = vunpack.c.l.s4 1966171168
    %v206 = vunpack.c.0.s8 %v205
    %v207 = vlaneseq
    %v208 = vshrl.u32 %v207, 7
    %v209 = vsub.s32 %v206, %v208
    %v210 = vrot.slane %v195, %v209
    %v212 = vunpack.c.l.s4 1966171168
    %v213 = vunpack.c.0.s8 %v212
    %v214 = vlaneseq
    %v215 = vshrl.u32 %v214, 7
    %v216 = vsub.s32 %v213, %v215
    %v217 = vrot.slane %v196, %v216
    %v218 = vcombine.high %v203, %v203
    %v219 = vcombine.high %v217, %v217
    %v230 = vld [vmem:[%s1 + $0x5] sm:$0x1]
    %v231 = vld [vmem:[%s1 + $0x6] sm:$0x1]
    %v232 = vcombine.low %v164, %v178
    %v233 = vcombine.low %v179, %v180
    %v234 = vcombine.low %v171, %v203
    %v235 = vcombine.low %v217, %v218
    %v237 = vunpack.c.l.s4 1966171168
    %v238 = vunpack.c.0.s8 %v237
    %v239 = vlaneseq
    %v240 = vshrl.u32 %v239, 7
    %v241 = vsub.s32 %v238, %v240
    %v242 = vrot.slane %v232, %v241
    %v244 = vunpack.c.l.s4 1966171168
    %v245 = vunpack.c.0.s8 %v244
    %v246 = vlaneseq
    %v247 = vshrl.u32 %v246, 7
    %v248 = vsub.s32 %v245, %v247
    %v249 = vrot.slane %v233, %v248
    %v251 = vunpack.c.l.s4 1966171168
    %v252 = vunpack.c.0.s8 %v251
    %v253 = vlaneseq
    %v254 = vshrl.u32 %v253, 7
    %v255 = vsub.s32 %v252, %v254
    %v256 = vrot.slane %v234, %v255
    %v258 = vunpack.c.l.s4 1966171168
    %v259 = vunpack.c.0.s8 %v258
    %v260 = vlaneseq
    %v261 = vshrl.u32 %v260, 7
    %v262 = vsub.s32 %v259, %v261
    %v263 = vrot.slane %v235, %v262
    %v264 = vcombine.low %v242, %v249
    %v265 = vcombine.low %v256, %v263
    %v267 = vunpack.c.l.s4 1966171168
    %v268 = vunpack.c.0.s8 %v267
    %v269 = vlaneseq
    %v270 = vshrl.u32 %v269, 7
    %v271 = vsub.s32 %v268, %v270
    %v272 = vrot.slane %v264, %v271
    %v274 = vunpack.c.l.s4 1966171168
    %v275 = vunpack.c.0.s8 %v274
    %v276 = vlaneseq
    %v277 = vshrl.u32 %v276, 7
    %v278 = vsub.s32 %v275, %v277
    %v279 = vrot.slane %v265, %v278
    %v280 = vcombine.low %v272, %v279
    %v281 = vcombine.low %v219, %v210
    %v283 = vunpack.c.l.s4 1966171168
    %v284 = vunpack.c.0.s8 %v283
    %v285 = vlaneseq
    %v286 = vshrl.u32 %v285, 7
    %v287 = vsub.s32 %v284, %v286
    %v288 = vrot.slane %v281, %v287
    %v290 = vunpack.c.l.s4 1966171168
    %v291 = vunpack.c.0.s8 %v290
    %v292 = vlaneseq
    %v293 = vshrl.u32 %v292, 7
    %v294 = vsub.s32 %v291, %v293
    %v295 = vrot.slane %v288, %v294
    %vm298 = vcmask 261120
    %v299 = vsel %vm298, %v280, 0.0
    %300 = vadd.xlane.f32.xlu0 %v299
    %v301 = vpop.xlane.xlu0 %300
    %vm302 = vcmask 254976
    %v303 = vsel %vm302, %v295, 0.0
    %304 = vadd.xlane.f32.xlu0 %v303
    %v305 = vpop.xlane.xlu0 %304
    %v306 = vrcp.pop 32.0
    %v307 = vmul.f32 %v301, %v306
    %v308 = vmul.f32 %v305, %v306
    %v309 = vmul.f32 %v164, %v164
    %v310 = vmul.f32 %v178, %v178
    %v311 = vmul.f32 %v179, %v179
    %v312 = vmul.f32 %v180, %v180
    %v313 = vmul.f32 %v171, %v171
    %v314 = vmul.f32 %v203, %v203
    %v315 = vmul.f32 %v217, %v217
    %v316 = vmul.f32 %v218, %v218
    %v317 = vmul.f32 %v219, %v219
    %v318 = vmul.f32 %v210, %v210
    %v329 = vcombine.low %v309, %v310
    %v330 = vcombine.low %v311, %v312
    %v331 = vcombine.low %v313, %v314
    %v332 = vcombine.low %v315, %v316
    %v334 = vunpack.c.l.s4 1966171168
    %v335 = vunpack.c.0.s8 %v334
    %v336 = vlaneseq
    %v337 = vshrl.u32 %v336, 7
    %v338 = vsub.s32 %v335, %v337
    %v339 = vrot.slane %v329, %v338
    %v341 = vunpack.c.l.s4 1966171168
    %v342 = vunpack.c.0.s8 %v341
    %v343 = vlaneseq
    %v344 = vshrl.u32 %v343, 7
    %v345 = vsub.s32 %v342, %v344
    %v346 = vrot.slane %v330, %v345
    %v348 = vunpack.c.l.s4 1966171168
    %v349 = vunpack.c.0.s8 %v348
    %v350 = vlaneseq
    %v351 = vshrl.u32 %v350, 7
    %v352 = vsub.s32 %v349, %v351
    %v353 = vrot.slane %v331, %v352
    %v355 = vunpack.c.l.s4 1966171168
    %v356 = vunpack.c.0.s8 %v355
    %v357 = vlaneseq
    %v358 = vshrl.u32 %v357, 7
    %v359 = vsub.s32 %v356, %v358
    %v360 = vrot.slane %v332, %v359
    %v361 = vcombine.low %v339, %v346
    %v362 = vcombine.low %v353, %v360
    %v364 = vunpack.c.l.s4 1966171168
    %v365 = vunpack.c.0.s8 %v364
    %v366 = vlaneseq
    %v367 = vshrl.u32 %v366, 7
    %v368 = vsub.s32 %v365, %v367
    %v369 = vrot.slane %v361, %v368
    %v371 = vunpack.c.l.s4 1966171168
    %v372 = vunpack.c.0.s8 %v371
    %v373 = vlaneseq
    %v374 = vshrl.u32 %v373, 7
    %v375 = vsub.s32 %v372, %v374
    %v376 = vrot.slane %v362, %v375
    %v377 = vcombine.low %v369, %v376
    %v378 = vcombine.low %v317, %v318
    %v380 = vunpack.c.l.s4 1966171168
    %v381 = vunpack.c.0.s8 %v380
    %v382 = vlaneseq
    %v383 = vshrl.u32 %v382, 7
    %v384 = vsub.s32 %v381, %v383
    %v385 = vrot.slane %v378, %v384
    %v387 = vunpack.c.l.s4 1966171168
    %v388 = vunpack.c.0.s8 %v387
    %v389 = vlaneseq
    %v390 = vshrl.u32 %v389, 7
    %v391 = vsub.s32 %v388, %v390
    %v392 = vrot.slane %v385, %v391
    %v395 = vsel %vm298, %v377, 0.0
    %396 = vadd.xlane.f32.xlu0 %v395
    %v397 = vpop.xlane.xlu0 %396
    %v398 = vsel %vm302, %v392, 0.0
    %399 = vadd.xlane.f32.xlu0 %v398
    %v400 = vpop.xlane.xlu0 %399
    %v401 = vmul.f32 %v397, %v306
    %v402 = vmul.f32 %v400, %v306
    %v403 = vmul.f32 %v307, %v307
    %v404 = vmul.f32 %v308, %v308
    %v405 = vsub.f32 %v401, %v403
    %v406 = vsub.f32 %v402, %v404
    %v407 = vmax.f32 %v405, 0.0
    %v408 = vmax.f32 %v406, 0.0
    %v411 = vlaneseq
    %v412 = vshrl.u32 %v411, 7
    %v413 = vsub.s32 0, %v412
    %v414 = vrot.slane %v307, %v413
    %v415 = vlaneseq
    %v416 = vshrl.u32 %v415, 7
    %v417 = vsub.s32 1, %v416
    %v418 = vrot.slane %v307, %v417
    %v419 = vlaneseq
    %v420 = vshrl.u32 %v419, 7
    %v421 = vsub.s32 2, %v420
    %v422 = vrot.slane %v307, %v421
    %v423 = vlaneseq
    %v424 = vshrl.u32 %v423, 7
    %v425 = vsub.s32 3, %v424
    %v426 = vrot.slane %v307, %v425
    %v427 = vlaneseq
    %v428 = vshrl.u32 %v427, 7
    %v429 = vsub.s32 4, %v428
    %v430 = vrot.slane %v307, %v429
    %v431 = vlaneseq
    %v432 = vshrl.u32 %v431, 7
    %v433 = vsub.s32 5, %v432
    %v434 = vrot.slane %v307, %v433
    %v435 = vlaneseq
    %v436 = vshrl.u32 %v435, 7
    %v437 = vsub.s32 6, %v436
    %v438 = vrot.slane %v307, %v437
    %v439 = vlaneseq
    %v440 = vshrl.u32 %v439, 7
    %v441 = vsub.s32 7, %v440
    %v442 = vrot.slane %v307, %v441
    %v443 = vlaneseq
    %v444 = vshrl.u32 %v443, 7
    %v445 = vsub.s32 0, %v444
    %v446 = vrot.slane %v308, %v445
    %v447 = vlaneseq
    %v448 = vshrl.u32 %v447, 7
    %v449 = vsub.s32 1, %v448
    %v450 = vrot.slane %v308, %v449
    %v461 = vsub.f32 %v164, %v414
    %v462 = vsub.f32 %v178, %v418
    %v463 = vsub.f32 %v179, %v422
    %v464 = vsub.f32 %v180, %v426
    %v465 = vsub.f32 %v171, %v430
    %v466 = vsub.f32 %v203, %v434
    %v467 = vsub.f32 %v217, %v438
    %v468 = vsub.f32 %v218, %v442
    %v469 = vsub.f32 %v219, %v446
    %v470 = vsub.f32 %v210, %v450
    %v471 = vadd.f32 %v407, 1e-05
    %v472 = vadd.f32 %v408, 1e-05
    %v473 = vrsqrt.pop %v471
    %v474 = vrsqrt.pop %v472
    %v477 = vlaneseq
    %v478 = vshrl.u32 %v477, 7
    %v479 = vsub.s32 0, %v478
    %v480 = vrot.slane %v473, %v479
    %v481 = vlaneseq
    %v482 = vshrl.u32 %v481, 7
    %v483 = vsub.s32 1, %v482
    %v484 = vrot.slane %v473, %v483
    %v485 = vlaneseq
    %v486 = vshrl.u32 %v485, 7
    %v487 = vsub.s32 2, %v486
    %v488 = vrot.slane %v473, %v487
    %v489 = vlaneseq
    %v490 = vshrl.u32 %v489, 7
    %v491 = vsub.s32 3, %v490
    %v492 = vrot.slane %v473, %v491
    %v493 = vlaneseq
    %v494 = vshrl.u32 %v493, 7
    %v495 = vsub.s32 4, %v494
    %v496 = vrot.slane %v473, %v495
    %v497 = vlaneseq
    %v498 = vshrl.u32 %v497, 7
    %v499 = vsub.s32 5, %v498
    %v500 = vrot.slane %v473, %v499
    %v501 = vlaneseq
    %v502 = vshrl.u32 %v501, 7
    %v503 = vsub.s32 6, %v502
    %v504 = vrot.slane %v473, %v503
    %v505 = vlaneseq
    %v506 = vshrl.u32 %v505, 7
    %v507 = vsub.s32 7, %v506
    %v508 = vrot.slane %v473, %v507
    %v509 = vlaneseq
    %v510 = vshrl.u32 %v509, 7
    %v511 = vsub.s32 0, %v510
    %v512 = vrot.slane %v474, %v511
    %v513 = vlaneseq
    %v514 = vshrl.u32 %v513, 7
    %v515 = vsub.s32 1, %v514
    %v516 = vrot.slane %v474, %v515
    %v527 = vmul.f32 %v461, %v480
    %v528 = vmul.f32 %v462, %v484
    %v529 = vmul.f32 %v463, %v488
    %v530 = vmul.f32 %v464, %v492
    %v531 = vmul.f32 %v465, %v496
    %v532 = vmul.f32 %v466, %v500
    %v533 = vmul.f32 %v467, %v504
    %v534 = vmul.f32 %v468, %v508
    %v535 = vmul.f32 %v469, %v512
    %v536 = vmul.f32 %v470, %v516
    %v537 = vlaneseq
    %v538 = vshrl.u32 %v537, 7
    %v539 = vsub.s32 0, %v538
    %v540 = vrot.slane %v230, %v539
    %v542 = vcombine.high %v540, %v540
    %v544 = vunpack.c.l.s4 1966171168
    %v545 = vunpack.c.0.s8 %v544
    %v546 = vlaneseq
    %v547 = vshrl.u32 %v546, 7
    %v548 = vsub.s32 %v545, %v547
    %v549 = vrot.slane %v540, %v548
    %v551 = vunpack.c.l.s4 1966171168
    %v552 = vunpack.c.0.s8 %v551
    %v553 = vlaneseq
    %v554 = vshrl.u32 %v553, 7
    %v555 = vsub.s32 %v552, %v554
    %v556 = vrot.slane %v542, %v555
    %v557 = vcombine.high %v549, %v549
    %v558 = vcombine.high %v556, %v556
    %v560 = vunpack.c.l.s4 1966171168
    %v561 = vunpack.c.0.s8 %v560
    %v562 = vlaneseq
    %v563 = vshrl.u32 %v562, 7
    %v564 = vsub.s32 %v561, %v563
    %v565 = vrot.slane %v549, %v564
    %v567 = vunpack.c.l.s4 1966171168
    %v568 = vunpack.c.0.s8 %v567
    %v569 = vlaneseq
    %v570 = vshrl.u32 %v569, 7
    %v571 = vsub.s32 %v568, %v570
    %v572 = vrot.slane %v556, %v571
    %v574 = vunpack.c.l.s4 1966171168
    %v575 = vunpack.c.0.s8 %v574
    %v576 = vlaneseq
    %v577 = vshrl.u32 %v576, 7
    %v578 = vsub.s32 %v575, %v577
    %v579 = vrot.slane %v557, %v578
    %v581 = vunpack.c.l.s4 1966171168
    %v582 = vunpack.c.0.s8 %v581
    %v583 = vlaneseq
    %v584 = vshrl.u32 %v583, 7
    %v585 = vsub.s32 %v582, %v584
    %v586 = vrot.slane %v558, %v585
    %v587 = vcombine.high %v565, %v565
    %v588 = vcombine.high %v572, %v572
    %v589 = vcombine.high %v579, %v579
    %v590 = vcombine.high %v586, %v586
    %v599 = vmul.f32 %v527, %v565
    %v600 = vmul.f32 %v528, %v579
    %v601 = vmul.f32 %v529, %v587
    %v602 = vmul.f32 %v530, %v589
    %v603 = vmul.f32 %v531, %v572
    %v604 = vmul.f32 %v532, %v586
    %v605 = vmul.f32 %v533, %v588
    %v606 = vmul.f32 %v534, %v590
    %v607 = vmul.f32 %v535, %v565
    %v608 = vmul.f32 %v536, %v579
    %v609 = vlaneseq
    %v610 = vshrl.u32 %v609, 7
    %v611 = vsub.s32 0, %v610
    %v612 = vrot.slane %v231, %v611
    %v614 = vcombine.high %v612, %v612
    %v616 = vunpack.c.l.s4 1966171168
    %v617 = vunpack.c.0.s8 %v616
    %v618 = vlaneseq
    %v619 = vshrl.u32 %v618, 7
    %v620 = vsub.s32 %v617, %v619
    %v621 = vrot.slane %v612, %v620
    %v623 = vunpack.c.l.s4 1966171168
    %v624 = vunpack.c.0.s8 %v623
    %v625 = vlaneseq
    %v626 = vshrl.u32 %v625, 7
    %v627 = vsub.s32 %v624, %v626
    %v628 = vrot.slane %v614, %v627
    %v629 = vcombine.high %v621, %v621
    %v630 = vcombine.high %v628, %v628
    %v632 = vunpack.c.l.s4 1966171168
    %v633 = vunpack.c.0.s8 %v632
    %v634 = vlaneseq
    %v635 = vshrl.u32 %v634, 7
    %v636 = vsub.s32 %v633, %v635
    %v637 = vrot.slane %v621, %v636
    %v639 = vunpack.c.l.s4 1966171168
    %v640 = vunpack.c.0.s8 %v639
    %v641 = vlaneseq
    %v642 = vshrl.u32 %v641, 7
    %v643 = vsub.s32 %v640, %v642
    %v644 = vrot.slane %v628, %v643
    %v646 = vunpack.c.l.s4 1966171168
    %v647 = vunpack.c.0.s8 %v646
    %v648 = vlaneseq
    %v649 = vshrl.u32 %v648, 7
    %v650 = vsub.s32 %v647, %v649
    %v651 = vrot.slane %v629, %v650
    %v653 = vunpack.c.l.s4 1966171168
    %v654 = vunpack.c.0.s8 %v653
    %v655 = vlaneseq
    %v656 = vshrl.u32 %v655, 7
    %v657 = vsub.s32 %v654, %v656
    %v658 = vrot.slane %v630, %v657
    %v659 = vcombine.high %v637, %v637
    %v660 = vcombine.high %v644, %v644
    %v661 = vcombine.high %v651, %v651
    %v662 = vcombine.high %v658, %v658
    %v671 = vadd.f32 %v599, %v637
    %v672 = vadd.f32 %v600, %v651
    %v673 = vadd.f32 %v601, %v659
    %v674 = vadd.f32 %v602, %v661
    %v675 = vadd.f32 %v603, %v644
    %v676 = vadd.f32 %v604, %v658
    %v677 = vadd.f32 %v605, %v660
    %v678 = vadd.f32 %v606, %v662
    %v679 = vadd.f32 %v607, %v637
    %v680 = vadd.f32 %v608, %v651
    %v681 = vld [vmem:[%s1 + $0x7] sm:$0x1]
    %v682 = vld [vmem:[%s1 + $0x8] sm:$0x1]
    %v683 = vld [vmem:[%s1 + $0x9] sm:$0x1]
    %v684 = vld [vmem:[%s1 + $0xa] sm:$0x1]
    %v685 = vld [vmem:[%s1 + $0xb] sm:$0x1]
    %v686 = vld [vmem:[%s1 + $0xc] sm:$0x1]
    %v687 = vld [vmem:[%s1 + $0xd] sm:$0x1]
    %v688 = vld [vmem:[%s1 + $0xe] sm:$0x1]
    %v699 = vcombine.low %v671, %v672
    %v700 = vcombine.low %v673, %v674
    %v701 = vcombine.low %v675, %v676
    %v702 = vcombine.low %v677, %v678
    %v704 = vunpack.c.l.s4 1966171168
    %v705 = vunpack.c.0.s8 %v704
    %v706 = vlaneseq
    %v707 = vshrl.u32 %v706, 7
    %v708 = vsub.s32 %v705, %v707
    %v709 = vrot.slane %v699, %v708
    %v711 = vunpack.c.l.s4 1966171168
    %v712 = vunpack.c.0.s8 %v711
    %v713 = vlaneseq
    %v714 = vshrl.u32 %v713, 7
    %v715 = vsub.s32 %v712, %v714
    %v716 = vrot.slane %v700, %v715
    %v718 = vunpack.c.l.s4 1966171168
    %v719 = vunpack.c.0.s8 %v718
    %v720 = vlaneseq
    %v721 = vshrl.u32 %v720, 7
    %v722 = vsub.s32 %v719, %v721
    %v723 = vrot.slane %v701, %v722
    %v725 = vunpack.c.l.s4 1966171168
    %v726 = vunpack.c.0.s8 %v725
    %v727 = vlaneseq
    %v728 = vshrl.u32 %v727, 7
    %v729 = vsub.s32 %v726, %v728
    %v730 = vrot.slane %v702, %v729
    %v731 = vcombine.low %v709, %v716
    %v732 = vcombine.low %v723, %v730
    %v734 = vunpack.c.l.s4 1966171168
    %v735 = vunpack.c.0.s8 %v734
    %v736 = vlaneseq
    %v737 = vshrl.u32 %v736, 7
    %v738 = vsub.s32 %v735, %v737
    %v739 = vrot.slane %v731, %v738
    %v741 = vunpack.c.l.s4 1966171168
    %v742 = vunpack.c.0.s8 %v741
    %v743 = vlaneseq
    %v744 = vshrl.u32 %v743, 7
    %v745 = vsub.s32 %v742, %v744
    %v746 = vrot.slane %v732, %v745
    %v747 = vcombine.low %v739, %v746
    %v748 = vcombine.low %v679, %v680
    %v750 = vunpack.c.l.s4 1966171168
    %v751 = vunpack.c.0.s8 %v750
    %v752 = vlaneseq
    %v753 = vshrl.u32 %v752, 7
    %v754 = vsub.s32 %v751, %v753
    %v755 = vrot.slane %v748, %v754
    %v757 = vunpack.c.l.s4 1966171168
    %v758 = vunpack.c.0.s8 %v757
    %v759 = vlaneseq
    %v760 = vshrl.u32 %v759, 7
    %v761 = vsub.s32 %v758, %v760
    %v762 = vrot.slane %v755, %v761
    %v765 = vsel %vm298, %v747, 0.0
    %766 = vadd.xlane.f32.xlu0 %v765
    %v767 = vpop.xlane.xlu0 %766
    %v768 = vsel %vm302, %v762, 0.0
    %769 = vadd.xlane.f32.xlu0 %v768
    %v770 = vpop.xlane.xlu0 %769
    %v771 = vmul.f32 %v767, %v306
    %v772 = vmul.f32 %v770, %v306
    %v773 = vmul.f32 %v671, %v671
    %v774 = vmul.f32 %v672, %v672
    %v775 = vmul.f32 %v673, %v673
    %v776 = vmul.f32 %v674, %v674
    %v777 = vmul.f32 %v675, %v675
    %v778 = vmul.f32 %v676, %v676
    %v779 = vmul.f32 %v677, %v677
    %v780 = vmul.f32 %v678, %v678
    %v781 = vmul.f32 %v679, %v679
    %v782 = vmul.f32 %v680, %v680
    %v793 = vcombine.low %v773, %v774
    %v794 = vcombine.low %v775, %v776
    %v795 = vcombine.low %v777, %v778
    %v796 = vcombine.low %v779, %v780
    %v798 = vunpack.c.l.s4 1966171168
    %v799 = vunpack.c.0.s8 %v798
    %v800 = vlaneseq
    %v801 = vshrl.u32 %v800, 7
    %v802 = vsub.s32 %v799, %v801
    %v803 = vrot.slane %v793, %v802
    %v805 = vunpack.c.l.s4 1966171168
    %v806 = vunpack.c.0.s8 %v805
    %v807 = vlaneseq
    %v808 = vshrl.u32 %v807, 7
    %v809 = vsub.s32 %v806, %v808
    %v810 = vrot.slane %v794, %v809
    %v812 = vunpack.c.l.s4 1966171168
    %v813 = vunpack.c.0.s8 %v812
    %v814 = vlaneseq
    %v815 = vshrl.u32 %v814, 7
    %v816 = vsub.s32 %v813, %v815
    %v817 = vrot.slane %v795, %v816
    %v819 = vunpack.c.l.s4 1966171168
    %v820 = vunpack.c.0.s8 %v819
    %v821 = vlaneseq
    %v822 = vshrl.u32 %v821, 7
    %v823 = vsub.s32 %v820, %v822
    %v824 = vrot.slane %v796, %v823
    %v825 = vcombine.low %v803, %v810
    %v826 = vcombine.low %v817, %v824
    %v828 = vunpack.c.l.s4 1966171168
    %v829 = vunpack.c.0.s8 %v828
    %v830 = vlaneseq
    %v831 = vshrl.u32 %v830, 7
    %v832 = vsub.s32 %v829, %v831
    %v833 = vrot.slane %v825, %v832
    %v835 = vunpack.c.l.s4 1966171168
    %v836 = vunpack.c.0.s8 %v835
    %v837 = vlaneseq
    %v838 = vshrl.u32 %v837, 7
    %v839 = vsub.s32 %v836, %v838
    %v840 = vrot.slane %v826, %v839
    %v841 = vcombine.low %v833, %v840
    %v842 = vcombine.low %v781, %v782
    %v844 = vunpack.c.l.s4 1966171168
    %v845 = vunpack.c.0.s8 %v844
    %v846 = vlaneseq
    %v847 = vshrl.u32 %v846, 7
    %v848 = vsub.s32 %v845, %v847
    %v849 = vrot.slane %v842, %v848
    %v851 = vunpack.c.l.s4 1966171168
    %v852 = vunpack.c.0.s8 %v851
    %v853 = vlaneseq
    %v854 = vshrl.u32 %v853, 7
    %v855 = vsub.s32 %v852, %v854
    %v856 = vrot.slane %v849, %v855
    %v859 = vsel %vm298, %v841, 0.0
    %860 = vadd.xlane.f32.xlu0 %v859
    %v861 = vpop.xlane.xlu0 %860
    %v862 = vsel %vm302, %v856, 0.0
    %863 = vadd.xlane.f32.xlu0 %v862
    %v864 = vpop.xlane.xlu0 %863
    %v865 = vmul.f32 %v861, %v306
    %v866 = vmul.f32 %v864, %v306
    %v867 = vmul.f32 %v771, %v771
    %v868 = vmul.f32 %v772, %v772
    %v869 = vsub.f32 %v865, %v867
    %v870 = vsub.f32 %v866, %v868
    %v871 = vmax.f32 %v869, 0.0
    %v872 = vmax.f32 %v870, 0.0
    %v875 = vlaneseq
    %v876 = vshrl.u32 %v875, 7
    %v877 = vsub.s32 0, %v876
    %v878 = vrot.slane %v771, %v877
    %v879 = vlaneseq
    %v880 = vshrl.u32 %v879, 7
    %v881 = vsub.s32 1, %v880
    %v882 = vrot.slane %v771, %v881
    %v883 = vlaneseq
    %v884 = vshrl.u32 %v883, 7
    %v885 = vsub.s32 2, %v884
    %v886 = vrot.slane %v771, %v885
    %v887 = vlaneseq
    %v888 = vshrl.u32 %v887, 7
    %v889 = vsub.s32 3, %v888
    %v890 = vrot.slane %v771, %v889
    %v891 = vlaneseq
    %v892 = vshrl.u32 %v891, 7
    %v893 = vsub.s32 4, %v892
    %v894 = vrot.slane %v771, %v893
    %v895 = vlaneseq
    %v896 = vshrl.u32 %v895, 7
    %v897 = vsub.s32 5, %v896
    %v898 = vrot.slane %v771, %v897
    %v899 = vlaneseq
    %v900 = vshrl.u32 %v899, 7
    %v901 = vsub.s32 6, %v900
    %v902 = vrot.slane %v771, %v901
    %v903 = vlaneseq
    %v904 = vshrl.u32 %v903, 7
    %v905 = vsub.s32 7, %v904
    %v906 = vrot.slane %v771, %v905
    %v907 = vlaneseq
    %v908 = vshrl.u32 %v907, 7
    %v909 = vsub.s32 0, %v908
    %v910 = vrot.slane %v772, %v909
    %v911 = vlaneseq
    %v912 = vshrl.u32 %v911, 7
    %v913 = vsub.s32 1, %v912
    %v914 = vrot.slane %v772, %v913
    %v925 = vsub.f32 %v671, %v878
    %v926 = vsub.f32 %v672, %v882
    %v927 = vsub.f32 %v673, %v886
    %v928 = vsub.f32 %v674, %v890
    %v929 = vsub.f32 %v675, %v894
    %v930 = vsub.f32 %v676, %v898
    %v931 = vsub.f32 %v677, %v902
    %v932 = vsub.f32 %v678, %v906
    %v933 = vsub.f32 %v679, %v910
    %v934 = vsub.f32 %v680, %v914
    %v935 = vadd.f32 %v871, 1e-05
    %v936 = vadd.f32 %v872, 1e-05
    %v937 = vrsqrt.pop %v935
    %v938 = vrsqrt.pop %v936
    %v941 = vlaneseq
    %v942 = vshrl.u32 %v941, 7
    %v943 = vsub.s32 0, %v942
    %v944 = vrot.slane %v937, %v943
    %v945 = vlaneseq
    %v946 = vshrl.u32 %v945, 7
    %v947 = vsub.s32 1, %v946
    %v948 = vrot.slane %v937, %v947
    %v949 = vlaneseq
    %v950 = vshrl.u32 %v949, 7
    %v951 = vsub.s32 2, %v950
    %v952 = vrot.slane %v937, %v951
    %v953 = vlaneseq
    %v954 = vshrl.u32 %v953, 7
    %v955 = vsub.s32 3, %v954
    %v956 = vrot.slane %v937, %v955
    %v957 = vlaneseq
    %v958 = vshrl.u32 %v957, 7
    %v959 = vsub.s32 4, %v958
    %v960 = vrot.slane %v937, %v959
    %v961 = vlaneseq
    %v962 = vshrl.u32 %v961, 7
    %v963 = vsub.s32 5, %v962
    %v964 = vrot.slane %v937, %v963
    %v965 = vlaneseq
    %v966 = vshrl.u32 %v965, 7
    %v967 = vsub.s32 6, %v966
    %v968 = vrot.slane %v937, %v967
    %v969 = vlaneseq
    %v970 = vshrl.u32 %v969, 7
    %v971 = vsub.s32 7, %v970
    %v972 = vrot.slane %v937, %v971
    %v973 = vlaneseq
    %v974 = vshrl.u32 %v973, 7
    %v975 = vsub.s32 0, %v974
    %v976 = vrot.slane %v938, %v975
    %v977 = vlaneseq
    %v978 = vshrl.u32 %v977, 7
    %v979 = vsub.s32 1, %v978
    %v980 = vrot.slane %v938, %v979
    %v991 = vmul.f32 %v925, %v944
    %v992 = vmul.f32 %v926, %v948
    %v993 = vmul.f32 %v927, %v952
    %v994 = vmul.f32 %v928, %v956
    %v995 = vmul.f32 %v929, %v960
    %v996 = vmul.f32 %v930, %v964
    %v997 = vmul.f32 %v931, %v968
    %v998 = vmul.f32 %v932, %v972
    %v999 = vmul.f32 %v933, %v976
    %v1000 = vmul.f32 %v934, %v980
    %v1001 = vlaneseq
    %v1002 = vshrl.u32 %v1001, 7
    %v1003 = vsub.s32 0, %v1002
    %v1004 = vrot.slane %v681, %v1003
    %v1006 = vcombine.high %v1004, %v1004
    %v1008 = vunpack.c.l.s4 1966171168
    %v1009 = vunpack.c.0.s8 %v1008
    %v1010 = vlaneseq
    %v1011 = vshrl.u32 %v1010, 7
    %v1012 = vsub.s32 %v1009, %v1011
    %v1013 = vrot.slane %v1004, %v1012
    %v1015 = vunpack.c.l.s4 1966171168
    %v1016 = vunpack.c.0.s8 %v1015
    %v1017 = vlaneseq
    %v1018 = vshrl.u32 %v1017, 7
    %v1019 = vsub.s32 %v1016, %v1018
    %v1020 = vrot.slane %v1006, %v1019
    %v1021 = vcombine.high %v1013, %v1013
    %v1022 = vcombine.high %v1020, %v1020
    %v1024 = vunpack.c.l.s4 1966171168
    %v1025 = vunpack.c.0.s8 %v1024
    %v1026 = vlaneseq
    %v1027 = vshrl.u32 %v1026, 7
    %v1028 = vsub.s32 %v1025, %v1027
    %v1029 = vrot.slane %v1013, %v1028
    %v1031 = vunpack.c.l.s4 1966171168
    %v1032 = vunpack.c.0.s8 %v1031
    %v1033 = vlaneseq
    %v1034 = vshrl.u32 %v1033, 7
    %v1035 = vsub.s32 %v1032, %v1034
    %v1036 = vrot.slane %v1020, %v1035
    %v1038 = vunpack.c.l.s4 1966171168
    %v1039 = vunpack.c.0.s8 %v1038
    %v1040 = vlaneseq
    %v1041 = vshrl.u32 %v1040, 7
    %v1042 = vsub.s32 %v1039, %v1041
    %v1043 = vrot.slane %v1021, %v1042
    %v1045 = vunpack.c.l.s4 1966171168
    %v1046 = vunpack.c.0.s8 %v1045
    %v1047 = vlaneseq
    %v1048 = vshrl.u32 %v1047, 7
    %v1049 = vsub.s32 %v1046, %v1048
    %v1050 = vrot.slane %v1022, %v1049
    %v1051 = vcombine.high %v1029, %v1029
    %v1052 = vcombine.high %v1036, %v1036
    %v1053 = vcombine.high %v1043, %v1043
    %v1054 = vcombine.high %v1050, %v1050
    %v1063 = vmul.f32 %v991, %v1029
    %v1064 = vmul.f32 %v992, %v1043
    %v1065 = vmul.f32 %v993, %v1051
    %v1066 = vmul.f32 %v994, %v1053
    %v1067 = vmul.f32 %v995, %v1036
    %v1068 = vmul.f32 %v996, %v1050
    %v1069 = vmul.f32 %v997, %v1052
    %v1070 = vmul.f32 %v998, %v1054
    %v1071 = vmul.f32 %v999, %v1029
    %v1072 = vmul.f32 %v1000, %v1043
    %v1073 = vlaneseq
    %v1074 = vshrl.u32 %v1073, 7
    %v1075 = vsub.s32 0, %v1074
    %v1076 = vrot.slane %v682, %v1075
    %v1078 = vcombine.high %v1076, %v1076
    %v1080 = vunpack.c.l.s4 1966171168
    %v1081 = vunpack.c.0.s8 %v1080
    %v1082 = vlaneseq
    %v1083 = vshrl.u32 %v1082, 7
    %v1084 = vsub.s32 %v1081, %v1083
    %v1085 = vrot.slane %v1076, %v1084
    %v1087 = vunpack.c.l.s4 1966171168
    %v1088 = vunpack.c.0.s8 %v1087
    %v1089 = vlaneseq
    %v1090 = vshrl.u32 %v1089, 7
    %v1091 = vsub.s32 %v1088, %v1090
    %v1092 = vrot.slane %v1078, %v1091
    %v1093 = vcombine.high %v1085, %v1085
    %v1094 = vcombine.high %v1092, %v1092
    %v1096 = vunpack.c.l.s4 1966171168
    %v1097 = vunpack.c.0.s8 %v1096
    %v1098 = vlaneseq
    %v1099 = vshrl.u32 %v1098, 7
    %v1100 = vsub.s32 %v1097, %v1099
    %v1101 = vrot.slane %v1085, %v1100
    %v1103 = vunpack.c.l.s4 1966171168
    %v1104 = vunpack.c.0.s8 %v1103
    %v1105 = vlaneseq
    %v1106 = vshrl.u32 %v1105, 7
    %v1107 = vsub.s32 %v1104, %v1106
    %v1108 = vrot.slane %v1092, %v1107
    %v1110 = vunpack.c.l.s4 1966171168
    %v1111 = vunpack.c.0.s8 %v1110
    %v1112 = vlaneseq
    %v1113 = vshrl.u32 %v1112, 7
    %v1114 = vsub.s32 %v1111, %v1113
    %v1115 = vrot.slane %v1093, %v1114
    %v1117 = vunpack.c.l.s4 1966171168
    %v1118 = vunpack.c.0.s8 %v1117
    %v1119 = vlaneseq
    %v1120 = vshrl.u32 %v1119, 7
    %v1121 = vsub.s32 %v1118, %v1120
    %v1122 = vrot.slane %v1094, %v1121
    %v1123 = vcombine.high %v1101, %v1101
    %v1124 = vcombine.high %v1108, %v1108
    %v1125 = vcombine.high %v1115, %v1115
    %v1126 = vcombine.high %v1122, %v1122
    %v1135 = vadd.f32 %v1063, %v1101
    %v1136 = vadd.f32 %v1064, %v1115
    %v1137 = vadd.f32 %v1065, %v1123
    %v1138 = vadd.f32 %v1066, %v1125
    %v1139 = vadd.f32 %v1067, %v1108
    %v1140 = vadd.f32 %v1068, %v1122
    %v1141 = vadd.f32 %v1069, %v1124
    %v1142 = vadd.f32 %v1070, %v1126
    %v1143 = vadd.f32 %v1071, %v1101
    %v1144 = vadd.f32 %v1072, %v1115
    %v1145 = vld [vmem:[%s3] sm:$0xff]
    %v1146 = vld [vmem:[%s3 + $0x8] sm:$0xff]
    %v1147 = vld [vmem:[%s3 + $0x10] sm:$0xff]
    %v1148 = vld [vmem:[%s3 + $0x18] sm:$0xff]
    %v1149 = vld [vmem:[%s3 + $0x20] sm:$0xff]
    %v1150 = vld [vmem:[%s3 + $0x28] sm:$0xff]
    %v1151 = vld [vmem:[%s3 + $0x30] sm:$0xff]
    %v1152 = vld [vmem:[%s3 + $0x38] sm:$0xff]
    %v1153 = vld [vmem:[%s4] sm:$0x1]
    %v1154 = vlaneseq
    %v1155 = vshrl.u32 %v1154, 7
    %v1156 = vsub.s32 0, %v1155
    %v1157 = vrot.slane %v1153, %v1156
    %v1168 = vcombine.low %v1135, %v1136
    %v1169 = vcombine.low %v1137, %v1138
    %v1170 = vcombine.low %v1139, %v1140
    %v1171 = vcombine.low %v1141, %v1142
    %v1173 = vunpack.c.l.s4 1966171168
    %v1174 = vunpack.c.0.s8 %v1173
    %v1175 = vlaneseq
    %v1176 = vshrl.u32 %v1175, 7
    %v1177 = vsub.s32 %v1174, %v1176
    %v1178 = vrot.slane %v1168, %v1177
    %v1180 = vunpack.c.l.s4 1966171168
    %v1181 = vunpack.c.0.s8 %v1180
    %v1182 = vlaneseq
    %v1183 = vshrl.u32 %v1182, 7
    %v1184 = vsub.s32 %v1181, %v1183
    %v1185 = vrot.slane %v1169, %v1184
    %v1187 = vunpack.c.l.s4 1966171168
    %v1188 = vunpack.c.0.s8 %v1187
    %v1189 = vlaneseq
    %v1190 = vshrl.u32 %v1189, 7
    %v1191 = vsub.s32 %v1188, %v1190
    %v1192 = vrot.slane %v1170, %v1191
    %v1194 = vunpack.c.l.s4 1966171168
    %v1195 = vunpack.c.0.s8 %v1194
    %v1196 = vlaneseq
    %v1197 = vshrl.u32 %v1196, 7
    %v1198 = vsub.s32 %v1195, %v1197
    %v1199 = vrot.slane %v1171, %v1198
    %v1200 = vcombine.low %v1178, %v1185
    %v1201 = vcombine.low %v1192, %v1199
    %v1203 = vunpack.c.l.s4 1966171168
    %v1204 = vunpack.c.0.s8 %v1203
    %v1205 = vlaneseq
    %v1206 = vshrl.u32 %v1205, 7
    %v1207 = vsub.s32 %v1204, %v1206
    %v1208 = vrot.slane %v1200, %v1207
    %v1210 = vunpack.c.l.s4 1966171168
    %v1211 = vunpack.c.0.s8 %v1210
    %v1212 = vlaneseq
    %v1213 = vshrl.u32 %v1212, 7
    %v1214 = vsub.s32 %v1211, %v1213
    %v1215 = vrot.slane %v1201, %v1214
    %v1216 = vcombine.low %v1208, %v1215
    %v1217 = vcombine.low %v1143, %v1144
    %v1219 = vunpack.c.l.s4 1966171168
    %v1220 = vunpack.c.0.s8 %v1219
    %v1221 = vlaneseq
    %v1222 = vshrl.u32 %v1221, 7
    %v1223 = vsub.s32 %v1220, %v1222
    %v1224 = vrot.slane %v1217, %v1223
    %v1226 = vunpack.c.l.s4 1966171168
    %v1227 = vunpack.c.0.s8 %v1226
    %v1228 = vlaneseq
    %v1229 = vshrl.u32 %v1228, 7
    %v1230 = vsub.s32 %v1227, %v1229
    %v1231 = vrot.slane %v1224, %v1230
    %v1232 = vsel %vm298, %v1216, 0
    %v1234 = vsel %vm298, %v1231, 0
    %1236 = vmatprep.subr.mxu0 0.0
    %1237 = vmatpush1.msra.mxu0 0.0
    %1238 = vmatprep.subr.mxu0 0.0
    %1239 = vmatpush1.msra.mxu0 0.0
    %1240 = vmatprep.subr.mxu0 0.0
    %1241 = vmatpush1.msra.mxu0 0.0
    %1242 = vmatprep.subr.mxu0 0.0
    %1243 = vmatpush1.msra.mxu0 0.0
    %1244 = vmatprep.subr.mxu0 0.0
    %1245 = vmatpush1.msra.mxu0 0.0
    %1246 = vmatprep.subr.mxu0 0.0
    %1247 = vmatpush1.msra.mxu0 0.0
    %1248 = vmatprep.subr.mxu0 0.0
    %1249 = vmatpush1.msra.mxu0 0.0
    %1250 = vmatprep.subr.mxu0 0.0
    %1251 = vmatpush1.msra.mxu0 0.0
    %1252 = vmatprep.subr.mxu0 0.0
    %1253 = vmatpush1.msra.mxu0 0.0
    %1254 = vmatprep.subr.mxu0 0.0
    %1255 = vmatpush1.msra.mxu0 0.0
    %1256 = vmatprep.subr.mxu0 0.0
    %1257 = vmatpush1.msra.mxu0 0.0
    %1258 = vmatprep.subr.mxu0 0.0
    %1259 = vmatpush1.msra.mxu0 0.0
    %1260 = vmatprep.subr.mxu0 0.0
    %1261 = vmatpush1.msra.mxu0 %v1152
    %1262 = vmatprep.subr.mxu0 0.0
    %1263 = vmatpush1.msra.mxu0 %v1150
    %1264 = vmatprep.subr.mxu0 0.0
    %1265 = vmatpush1.msra.mxu0 %v1148
    %1266 = vmatprep.subr.mxu0 0.0
    %1267 = vmatpush1.msra.mxu0 %v1146
    %1268 = vmatprep.subr.mxu0 0.0
    %1269 = vmatpush2.msra.mxu0 0.0
    %1270 = vmatprep.subr.mxu0 0.0
    %1271 = vmatpush2.msra.mxu0 0.0
    %1272 = vmatprep.subr.mxu0 0.0
    %1273 = vmatpush2.msra.mxu0 0.0
    %1274 = vmatprep.subr.mxu0 0.0
    %1275 = vmatpush2.msra.mxu0 0.0
    %1276 = vmatprep.subr.mxu0 0.0
    %1277 = vmatpush2.msra.mxu0 0.0
    %1278 = vmatprep.subr.mxu0 0.0
    %1279 = vmatpush2.msra.mxu0 0.0
    %1280 = vmatprep.subr.mxu0 0.0
    %1281 = vmatpush2.msra.mxu0 0.0
    %1282 = vmatprep.subr.mxu0 0.0
    %1283 = vmatpush2.msra.mxu0 0.0
    %1284 = vmatprep.subr.mxu0 0.0
    %1285 = vmatpush2.msra.mxu0 0.0
    %1286 = vmatprep.subr.mxu0 0.0
    %1287 = vmatpush2.msra.mxu0 0.0
    %1288 = vmatprep.subr.mxu0 0.0
    %1289 = vmatpush2.msra.mxu0 0.0
    %1290 = vmatprep.subr.mxu0 0.0
    %1291 = vmatpush2.msra.mxu0 0.0
    %1292 = vmatprep.subr.mxu0 0.0
    %1293 = vmatpush2.msra.mxu0 0.0
    %1294 = vmatprep.subr.mxu0 0.0
    %1295 = vmatpush2.msra.mxu0 0.0
    %1296 = vmatprep.subr.mxu0 0.0
    %1297 = vmatpush2.msra.mxu0 0.0
    %1298 = vmatprep.subr.mxu0 0.0
    %1299 = vmatpush2.msra.mxu0 0.0
    %1300 = vmatprep.mubr.f32.mxu0 0.0
    %1301 = vmatmul.mubr.f32.gmra.mxu0 %v1232
    %v1302 = vpop.f32.mrf.mxu0
    %v1303 = vadd.f32 %v1157, %v1302
    %v1304 = vpop.f32.mrf.mxu0
    %1305 = vmatprep.mubr.f32.mxu0 0.0
    %1306 = vmatmul.mubr.f32.gmra.mxu0 %v1234
    %v1307 = vpop.f32.mrf.mxu0
    %v1308 = vadd.f32 %v1157, %v1307
    %v1309 = vpop.f32.mrf.mxu0
    %1310 = vdwg.mxu0
    %v1313 = vcombine.high %v1303, %v1303
    %v1315 = vunpack.c.l.s4 1966171168
    %v1316 = vunpack.c.0.s8 %v1315
    %v1317 = vlaneseq
    %v1318 = vshrl.u32 %v1317, 7
    %v1319 = vsub.s32 %v1316, %v1318
    %v1320 = vrot.slane %v1303, %v1319
    %v1322 = vunpack.c.l.s4 1966171168
    %v1323 = vunpack.c.0.s8 %v1322
    %v1324 = vlaneseq
    %v1325 = vshrl.u32 %v1324, 7
    %v1326 = vsub.s32 %v1323, %v1325
    %v1327 = vrot.slane %v1313, %v1326
    %v1328 = vcombine.high %v1320, %v1320
    %v1329 = vcombine.high %v1327, %v1327
    %v1331 = vunpack.c.l.s4 1966171168
    %v1332 = vunpack.c.0.s8 %v1331
    %v1333 = vlaneseq
    %v1334 = vshrl.u32 %v1333, 7
    %v1335 = vsub.s32 %v1332, %v1334
    %v1336 = vrot.slane %v1320, %v1335
    %v1338 = vunpack.c.l.s4 1966171168
    %v1339 = vunpack.c.0.s8 %v1338
    %v1340 = vlaneseq
    %v1341 = vshrl.u32 %v1340, 7
    %v1342 = vsub.s32 %v1339, %v1341
    %v1343 = vrot.slane %v1327, %v1342
    %v1345 = vunpack.c.l.s4 1966171168
    %v1346 = vunpack.c.0.s8 %v1345
    %v1347 = vlaneseq
    %v1348 = vshrl.u32 %v1347, 7
    %v1349 = vsub.s32 %v1346, %v1348
    %v1350 = vrot.slane %v1328, %v1349
    %v1352 = vunpack.c.l.s4 1966171168
    %v1353 = vunpack.c.0.s8 %v1352
    %v1354 = vlaneseq
    %v1355 = vshrl.u32 %v1354, 7
    %v1356 = vsub.s32 %v1353, %v1355
    %v1357 = vrot.slane %v1329, %v1356
    %v1358 = vcombine.high %v1336, %v1336
    %v1359 = vcombine.high %v1343, %v1343
    %v1360 = vcombine.high %v1350, %v1350
    %v1361 = vcombine.high %v1357, %v1357
    %v1363 = vunpack.c.l.s4 1966171168
    %v1364 = vunpack.c.0.s8 %v1363
    %v1365 = vlaneseq
    %v1366 = vshrl.u32 %v1365, 7
    %v1367 = vsub.s32 %v1364, %v1366
    %v1368 = vrot.slane %v1308, %v1367
    %v1369 = vcombine.high %v1368, %v1368
    %v1371 = vunpack.c.l.s4 1966171168
    %v1372 = vunpack.c.0.s8 %v1371
    %v1373 = vlaneseq
    %v1374 = vshrl.u32 %v1373, 7
    %v1375 = vsub.s32 %v1372, %v1374
    %v1376 = vrot.slane %v1368, %v1375
    %v1378 = vunpack.c.l.s4 1966171168
    %v1379 = vunpack.c.0.s8 %v1378
    %v1380 = vlaneseq
    %v1381 = vshrl.u32 %v1380, 7
    %v1382 = vsub.s32 %v1379, %v1381
    %v1383 = vrot.slane %v1369, %v1382
    %v1384 = vcombine.low %v1336, %v1350
    %v1385 = vcombine.low %v1358, %v1360
    %v1387 = vunpack.c.l.s4 1966171168
    %v1388 = vunpack.c.0.s8 %v1387
    %v1389 = vlaneseq
    %v1390 = vshrl.u32 %v1389, 7
    %v1391 = vsub.s32 %v1388, %v1390
    %v1392 = vrot.slane %v1384, %v1391
    %v1394 = vunpack.c.l.s4 1966171168
    %v1395 = vunpack.c.0.s8 %v1394
    %v1396 = vlaneseq
    %v1397 = vshrl.u32 %v1396, 7
    %v1398 = vsub.s32 %v1395, %v1397
    %v1399 = vrot.slane %v1385, %v1398
    %v1401 = vunpack.c.l.s4 1966171168
    %v1402 = vunpack.c.0.s8 %v1401
    %v1403 = vlaneseq
    %v1404 = vshrl.u32 %v1403, 7
    %v1405 = vsub.s32 %v1402, %v1404
    %v1406 = vrot.slane %v1343, %v1405
    %v1407 = vcombine.low %v1392, %v1399
    %v1409 = vunpack.c.l.s4 1966171168
    %v1410 = vunpack.c.0.s8 %v1409
    %v1411 = vlaneseq
    %v1412 = vshrl.u32 %v1411, 7
    %v1413 = vsub.s32 %v1410, %v1412
    %v1414 = vrot.slane %v1407, %v1413
    %v1416 = vunpack.c.l.s4 1966171168
    %v1417 = vunpack.c.0.s8 %v1416
    %v1418 = vlaneseq
    %v1419 = vshrl.u32 %v1418, 7
    %v1420 = vsub.s32 %v1417, %v1419
    %v1421 = vrot.slane %v1406, %v1420
    %v1422 = vcombine.low %v1414, %v1421
    %1423 = vrot.lane.b32.xlu0 %v1422, 96
    %v1424 = vpop.permute.xlu0 %1423
    %vm1425 = vcmask 130048
    %v1426 = vsel %vm1425, %v1422, 0
    %v1428 = vsel %vm1425, %v1424, 0
    %1430 = vmatprep.subr.mxu0 0.0
    %1431 = vmatpush1.xpose.msra.mxu0 0.0
    %1432 = vmatprep.subr.mxu0 0.0
    %1433 = vmatpush1.xpose.msra.mxu0 0.0
    %1434 = vmatprep.subr.mxu0 0.0
    %1435 = vmatpush1.xpose.msra.mxu0 0.0
    %1436 = vmatprep.subr.mxu0 0.0
    %1437 = vmatpush1.xpose.msra.mxu0 0.0
    %1438 = vmatprep.subr.mxu0 0.0
    %1439 = vmatpush1.xpose.msra.mxu0 0.0
    %1440 = vmatprep.subr.mxu0 0.0
    %1441 = vmatpush1.xpose.msra.mxu0 0.0
    %1442 = vmatprep.subr.mxu0 0.0
    %1443 = vmatpush1.xpose.msra.mxu0 0.0
    %1444 = vmatprep.subr.mxu0 0.0
    %1445 = vmatpush1.xpose.msra.mxu0 0.0
    %1446 = vmatprep.subr.mxu0 0.0
    %1447 = vmatpush1.xpose.msra.mxu0 0.0
    %1448 = vmatprep.subr.mxu0 0.0
    %1449 = vmatpush1.xpose.msra.mxu0 0.0
    %1450 = vmatprep.subr.mxu0 0.0
    %1451 = vmatpush1.xpose.msra.mxu0 0.0
    %1452 = vmatprep.subr.mxu0 0.0
    %1453 = vmatpush1.xpose.msra.mxu0 0.0
    %1454 = vmatprep.subr.mxu0 0.0
    %1455 = vmatpush1.xpose.msra.mxu0 0.0
    %1456 = vmatprep.subr.mxu0 0.0
    %1457 = vmatpush1.xpose.msra.mxu0 0.0
    %1458 = vmatprep.subr.mxu0 0.0
    %1459 = vmatpush1.xpose.msra.mxu0 0.0
    %1460 = vmatprep.subr.mxu0 0.0
    %1461 = vmatpush1.xpose.msra.mxu0 %v1428
    %1462 = vmatprep.subr.mxu0 0.0
    %1463 = vmatpush2.xpose.msra.mxu0 0.0
    %1464 = vmatprep.subr.mxu0 0.0
    %1465 = vmatpush2.xpose.msra.mxu0 0.0
    %1466 = vmatprep.subr.mxu0 0.0
    %1467 = vmatpush2.xpose.msra.mxu0 0.0
    %1468 = vmatprep.subr.mxu0 0.0
    %1469 = vmatpush2.xpose.msra.mxu0 0.0
    %1470 = vmatprep.subr.mxu0 0.0
    %1471 = vmatpush2.xpose.msra.mxu0 0.0
    %1472 = vmatprep.subr.mxu0 0.0
    %1473 = vmatpush2.xpose.msra.mxu0 0.0
    %1474 = vmatprep.subr.mxu0 0.0
    %1475 = vmatpush2.xpose.msra.mxu0 0.0
    %1476 = vmatprep.subr.mxu0 0.0
    %1477 = vmatpush2.xpose.msra.mxu0 0.0
    %1478 = vmatprep.subr.mxu0 0.0
    %1479 = vmatpush2.xpose.msra.mxu0 0.0
    %1480 = vmatprep.subr.mxu0 0.0
    %1481 = vmatpush2.xpose.msra.mxu0 0.0
    %1482 = vmatprep.subr.mxu0 0.0
    %1483 = vmatpush2.xpose.msra.mxu0 0.0
    %1484 = vmatprep.subr.mxu0 0.0
    %1485 = vmatpush2.xpose.msra.mxu0 0.0
    %1486 = vmatprep.subr.mxu0 0.0
    %1487 = vmatpush2.xpose.msra.mxu0 0.0
    %1488 = vmatprep.subr.mxu0 0.0
    %1489 = vmatpush2.xpose.msra.mxu0 0.0
    %1490 = vmatprep.subr.mxu0 0.0
    %1491 = vmatpush2.xpose.msra.mxu0 0.0
    %1492 = vmatprep.subr.mxu0 0.0
    %1493 = vmatpush2.xpose.msra.mxu0 0.0
    %1494 = vmatprep.mubr.f32.mxu0 0.0
    %1495 = vmatmul.mubr.f32.gmra.mxu0 %v1426
    %v1496 = vpop.f32.mrf.mxu0
    %v1497 = vadd.f32 0.0, %v1496
    %v1498 = vpop.f32.mrf.mxu0
    %1499 = vdwg.mxu0
    %v1500 = vcombine.low %v1357, %v1359
    %v1501 = vcombine.low %v1361, %v1376
    %v1503 = vunpack.c.l.s4 1966171168
    %v1504 = vunpack.c.0.s8 %v1503
    %v1505 = vlaneseq
    %v1506 = vshrl.u32 %v1505, 7
    %v1507 = vsub.s32 %v1504, %v1506
    %v1508 = vrot.slane %v1500, %v1507
    %v1510 = vunpack.c.l.s4 1966171168
    %v1511 = vunpack.c.0.s8 %v1510
    %v1512 = vlaneseq
    %v1513 = vshrl.u32 %v1512, 7
    %v1514 = vsub.s32 %v1511, %v1513
    %v1515 = vrot.slane %v1501, %v1514
    %v1517 = vunpack.c.l.s4 1966171168
    %v1518 = vunpack.c.0.s8 %v1517
    %v1519 = vlaneseq
    %v1520 = vshrl.u32 %v1519, 7
    %v1521 = vsub.s32 %v1518, %v1520
    %v1522 = vrot.slane %v1383, %v1521
    %v1523 = vcombine.low %v1508, %v1515
    %v1525 = vunpack.c.l.s4 1966171168
    %v1526 = vunpack.c.0.s8 %v1525
    %v1527 = vlaneseq
    %v1528 = vshrl.u32 %v1527, 7
    %v1529 = vsub.s32 %v1526, %v1528
    %v1530 = vrot.slane %v1523, %v1529
    %v1532 = vunpack.c.l.s4 1966171168
    %v1533 = vunpack.c.0.s8 %v1532
    %v1534 = vlaneseq
    %v1535 = vshrl.u32 %v1534, 7
    %v1536 = vsub.s32 %v1533, %v1535
    %v1537 = vrot.slane %v1522, %v1536
    %v1538 = vcombine.low %v1530, %v1537
    %1539 = vrot.lane.b32.xlu0 %v1538, 96
    %v1540 = vpop.permute.xlu0 %1539
    %v1541 = vsel %vm1425, %v1538, 0
    %v1543 = vsel %vm1425, %v1540, 0
    %1545 = vmatprep.subr.mxu0 0.0
    %1546 = vmatpush1.xpose.msra.mxu0 0.0
    %1547 = vmatprep.subr.mxu0 0.0
    %1548 = vmatpush1.xpose.msra.mxu0 0.0
    %1549 = vmatprep.subr.mxu0 0.0
    %1550 = vmatpush1.xpose.msra.mxu0 0.0
    %1551 = vmatprep.subr.mxu0 0.0
    %1552 = vmatpush1.xpose.msra.mxu0 0.0
    %1553 = vmatprep.subr.mxu0 0.0
    %1554 = vmatpush1.xpose.msra.mxu0 0.0
    %1555 = vmatprep.subr.mxu0 0.0
    %1556 = vmatpush1.xpose.msra.mxu0 0.0
    %1557 = vmatprep.subr.mxu0 0.0
    %1558 = vmatpush1.xpose.msra.mxu0 0.0
    %1559 = vmatprep.subr.mxu0 0.0
    %1560 = vmatpush1.xpose.msra.mxu0 0.0
    %1561 = vmatprep.subr.mxu0 0.0
    %1562 = vmatpush1.xpose.msra.mxu0 0.0
    %1563 = vmatprep.subr.mxu0 0.0
    %1564 = vmatpush1.xpose.msra.mxu0 0.0
    %1565 = vmatprep.subr.mxu0 0.0
    %1566 = vmatpush1.xpose.msra.mxu0 0.0
    %1567 = vmatprep.subr.mxu0 0.0
    %1568 = vmatpush1.xpose.msra.mxu0 0.0
    %1569 = vmatprep.subr.mxu0 0.0
    %1570 = vmatpush1.xpose.msra.mxu0 0.0
    %1571 = vmatprep.subr.mxu0 0.0
    %1572 = vmatpush1.xpose.msra.mxu0 0.0
    %1573 = vmatprep.subr.mxu0 0.0
    %1574 = vmatpush1.xpose.msra.mxu0 0.0
    %1575 = vmatprep.subr.mxu0 0.0
    %1576 = vmatpush1.xpose.msra.mxu0 %v1543
    %1577 = vmatprep.subr.mxu0 0.0
    %1578 = vmatpush2.xpose.msra.mxu0 0.0
    %1579 = vmatprep.subr.mxu0 0.0
    %1580 = vmatpush2.xpose.msra.mxu0 0.0
    %1581 = vmatprep.subr.mxu0 0.0
    %1582 = vmatpush2.xpose.msra.mxu0 0.0
    %1583 = vmatprep.subr.mxu0 0.0
    %1584 = vmatpush2.xpose.msra.mxu0 0.0
    %1585 = vmatprep.subr.mxu0 0.0
    %1586 = vmatpush2.xpose.msra.mxu0 0.0
    %1587 = vmatprep.subr.mxu0 0.0
    %1588 = vmatpush2.xpose.msra.mxu0 0.0
    %1589 = vmatprep.subr.mxu0 0.0
    %1590 = vmatpush2.xpose.msra.mxu0 0.0
    %1591 = vmatprep.subr.mxu0 0.0
    %1592 = vmatpush2.xpose.msra.mxu0 0.0
    %1593 = vmatprep.subr.mxu0 0.0
    %1594 = vmatpush2.xpose.msra.mxu0 0.0
    %1595 = vmatprep.subr.mxu0 0.0
    %1596 = vmatpush2.xpose.msra.mxu0 0.0
    %1597 = vmatprep.subr.mxu0 0.0
    %1598 = vmatpush2.xpose.msra.mxu0 0.0
    %1599 = vmatprep.subr.mxu0 0.0
    %1600 = vmatpush2.xpose.msra.mxu0 0.0
    %1601 = vmatprep.subr.mxu0 0.0
    %1602 = vmatpush2.xpose.msra.mxu0 0.0
    %1603 = vmatprep.subr.mxu0 0.0
    %1604 = vmatpush2.xpose.msra.mxu0 0.0
    %1605 = vmatprep.subr.mxu0 0.0
    %1606 = vmatpush2.xpose.msra.mxu0 0.0
    %1607 = vmatprep.subr.mxu0 0.0
    %1608 = vmatpush2.xpose.msra.mxu0 0.0
    %1609 = vmatprep.mubr.f32.mxu0 0.0
    %1610 = vmatmul.mubr.f32.gmra.mxu0 %v1541
    %v1611 = vpop.f32.mrf.mxu0
    %v1612 = vadd.f32 0.0, %v1611
    %v1613 = vpop.f32.mrf.mxu0
    %1614 = vdwg.mxu0
    %vm1615 = vcmask 36864
    %v1616 = vsel %vm1615, %v1497, -inf
    %1617 = vmax.xlane.f32.xlu0 %v1616
    %v1618 = vpop.xlane.xlu0 %1617
    %v1619 = vsel %vm1615, %v1612, -inf
    %1620 = vmax.xlane.f32.xlu0 %v1619
    %v1621 = vpop.xlane.xlu0 %1620
    %v1622 = vsub.f32 %v1497, %v1618
    %v1623 = vsub.f32 %v1612, %v1621
    %v1624 = vmul.f32 %v1622, 1.442695
    %v1625 = vpow.pop %v1624
    %v1626 = vmul.f32 %v1623, 1.442695
    %v1627 = vpow.pop %v1626
    %v1628 = vsel %vm1615, %v1625, 0.0
    %1629 = vadd.xlane.f32.xlu0 %v1628
    %v1630 = vpop.xlane.xlu0 %1629
    %v1631 = vsel %vm1615, %v1627, 0.0
    %1632 = vadd.xlane.f32.xlu0 %v1631
    %v1633 = vpop.xlane.xlu0 %1632
    %v1634 = vrcp.pop %v1630
    %v1635 = vrcp.pop %v1633
    %v1636 = vmul.f32 %v1625, %v1634
    %v1637 = vmul.f32 %v1627, %v1635
    %1638 = vrot.lane.b32.xlu0 %v1422, 64
    %v1639 = vpop.permute.xlu0 %1638
    %vm1640 = vcmask 39936
    %v1642 = vsel %vm1640, %v1636, 0
    %vm1644 = vcmask 1044480
    %v1645 = vsel %vm1644, %v1639, 0
    %1647 = vmatprep.subr.mxu0 0.0
    %1648 = vmatpush1.msra.mxu0 0.0
    %1649 = vmatprep.subr.mxu0 0.0
    %1650 = vmatpush1.msra.mxu0 0.0
    %1651 = vmatprep.subr.mxu0 0.0
    %1652 = vmatpush1.msra.mxu0 0.0
    %1653 = vmatprep.subr.mxu0 0.0
    %1654 = vmatpush1.msra.mxu0 0.0
    %1655 = vmatprep.subr.mxu0 0.0
    %1656 = vmatpush1.msra.mxu0 0.0
    %1657 = vmatprep.subr.mxu0 0.0
    %1658 = vmatpush1.msra.mxu0 0.0
    %1659 = vmatprep.subr.mxu0 0.0
    %1660 = vmatpush1.msra.mxu0 0.0
    %1661 = vmatprep.subr.mxu0 0.0
    %1662 = vmatpush1.msra.mxu0 0.0
    %1663 = vmatprep.subr.mxu0 0.0
    %1664 = vmatpush1.msra.mxu0 0.0
    %1665 = vmatprep.subr.mxu0 0.0
    %1666 = vmatpush1.msra.mxu0 0.0
    %1667 = vmatprep.subr.mxu0 0.0
    %1668 = vmatpush1.msra.mxu0 0.0
    %1669 = vmatprep.subr.mxu0 0.0
    %1670 = vmatpush1.msra.mxu0 0.0
    %1671 = vmatprep.subr.mxu0 0.0
    %1672 = vmatpush1.msra.mxu0 0.0
    %1673 = vmatprep.subr.mxu0 0.0
    %1674 = vmatpush1.msra.mxu0 0.0
    %1675 = vmatprep.subr.mxu0 0.0
    %1676 = vmatpush1.msra.mxu0 0.0
    %1677 = vmatprep.subr.mxu0 0.0
    %1678 = vmatpush1.msra.mxu0 %v1645
    %1679 = vmatprep.subr.mxu0 0.0
    %1680 = vmatpush2.msra.mxu0 0.0
    %1681 = vmatprep.subr.mxu0 0.0
    %1682 = vmatpush2.msra.mxu0 0.0
    %1683 = vmatprep.subr.mxu0 0.0
    %1684 = vmatpush2.msra.mxu0 0.0
    %1685 = vmatprep.subr.mxu0 0.0
    %1686 = vmatpush2.msra.mxu0 0.0
    %1687 = vmatprep.subr.mxu0 0.0
    %1688 = vmatpush2.msra.mxu0 0.0
    %1689 = vmatprep.subr.mxu0 0.0
    %1690 = vmatpush2.msra.mxu0 0.0
    %1691 = vmatprep.subr.mxu0 0.0
    %1692 = vmatpush2.msra.mxu0 0.0
    %1693 = vmatprep.subr.mxu0 0.0
    %1694 = vmatpush2.msra.mxu0 0.0
    %1695 = vmatprep.subr.mxu0 0.0
    %1696 = vmatpush2.msra.mxu0 0.0
    %1697 = vmatprep.subr.mxu0 0.0
    %1698 = vmatpush2.msra.mxu0 0.0
    %1699 = vmatprep.subr.mxu0 0.0
    %1700 = vmatpush2.msra.mxu0 0.0
    %1701 = vmatprep.subr.mxu0 0.0
    %1702 = vmatpush2.msra.mxu0 0.0
    %1703 = vmatprep.subr.mxu0 0.0
    %1704 = vmatpush2.msra.mxu0 0.0
    %1705 = vmatprep.subr.mxu0 0.0
    %1706 = vmatpush2.msra.mxu0 0.0
    %1707 = vmatprep.subr.mxu0 0.0
    %1708 = vmatpush2.msra.mxu0 0.0
    %1709 = vmatprep.subr.mxu0 0.0
    %1710 = vmatpush2.msra.mxu0 0.0
    %1711 = vmatprep.mubr.f32.mxu0 0.0
    %1712 = vmatmul.mubr.f32.gmra.mxu0 %v1642
    %v1713 = vpop.f32.mrf.mxu0
    %v1714 = vadd.f32 0.0, %v1713
    %v1715 = vpop.f32.mrf.mxu0
    %1716 = vdwg.mxu0
    %1717 = vrot.lane.b32.xlu0 %v1538, 64
    %v1718 = vpop.permute.xlu0 %1717
    %v1720 = vsel %vm1640, %v1637, 0
    %v1722 = vsel %vm1644, %v1718, 0
    %1724 = vmatprep.subr.mxu0 0.0
    %1725 = vmatpush1.msra.mxu0 0.0
    %1726 = vmatprep.subr.mxu0 0.0
    %1727 = vmatpush1.msra.mxu0 0.0
    %1728 = vmatprep.subr.mxu0 0.0
    %1729 = vmatpush1.msra.mxu0 0.0
    %1730 = vmatprep.subr.mxu0 0.0
    %1731 = vmatpush1.msra.mxu0 0.0
    %1732 = vmatprep.subr.mxu0 0.0
    %1733 = vmatpush1.msra.mxu0 0.0
    %1734 = vmatprep.subr.mxu0 0.0
    %1735 = vmatpush1.msra.mxu0 0.0
    %1736 = vmatprep.subr.mxu0 0.0
    %1737 = vmatpush1.msra.mxu0 0.0
    %1738 = vmatprep.subr.mxu0 0.0
    %1739 = vmatpush1.msra.mxu0 0.0
    %1740 = vmatprep.subr.mxu0 0.0
    %1741 = vmatpush1.msra.mxu0 0.0
    %1742 = vmatprep.subr.mxu0 0.0
    %1743 = vmatpush1.msra.mxu0 0.0
    %1744 = vmatprep.subr.mxu0 0.0
    %1745 = vmatpush1.msra.mxu0 0.0
    %1746 = vmatprep.subr.mxu0 0.0
    %1747 = vmatpush1.msra.mxu0 0.0
    %1748 = vmatprep.subr.mxu0 0.0
    %1749 = vmatpush1.msra.mxu0 0.0
    %1750 = vmatprep.subr.mxu0 0.0
    %1751 = vmatpush1.msra.mxu0 0.0
    %1752 = vmatprep.subr.mxu0 0.0
    %1753 = vmatpush1.msra.mxu0 0.0
    %1754 = vmatprep.subr.mxu0 0.0
    %1755 = vmatpush1.msra.mxu0 %v1722
    %1756 = vmatprep.subr.mxu0 0.0
    %1757 = vmatpush2.msra.mxu0 0.0
    %1758 = vmatprep.subr.mxu0 0.0
    %1759 = vmatpush2.msra.mxu0 0.0
    %1760 = vmatprep.subr.mxu0 0.0
    %1761 = vmatpush2.msra.mxu0 0.0
    %1762 = vmatprep.subr.mxu0 0.0
    %1763 = vmatpush2.msra.mxu0 0.0
    %1764 = vmatprep.subr.mxu0 0.0
    %1765 = vmatpush2.msra.mxu0 0.0
    %1766 = vmatprep.subr.mxu0 0.0
    %1767 = vmatpush2.msra.mxu0 0.0
    %1768 = vmatprep.subr.mxu0 0.0
    %1769 = vmatpush2.msra.mxu0 0.0
    %1770 = vmatprep.subr.mxu0 0.0
    %1771 = vmatpush2.msra.mxu0 0.0
    %1772 = vmatprep.subr.mxu0 0.0
    %1773 = vmatpush2.msra.mxu0 0.0
    %1774 = vmatprep.subr.mxu0 0.0
    %1775 = vmatpush2.msra.mxu0 0.0
    %1776 = vmatprep.subr.mxu0 0.0
    %1777 = vmatpush2.msra.mxu0 0.0
    %1778 = vmatprep.subr.mxu0 0.0
    %1779 = vmatpush2.msra.mxu0 0.0
    %1780 = vmatprep.subr.mxu0 0.0
    %1781 = vmatpush2.msra.mxu0 0.0
    %1782 = vmatprep.subr.mxu0 0.0
    %1783 = vmatpush2.msra.mxu0 0.0
    %1784 = vmatprep.subr.mxu0 0.0
    %1785 = vmatpush2.msra.mxu0 0.0
    %1786 = vmatprep.subr.mxu0 0.0
    %1787 = vmatpush2.msra.mxu0 0.0
    %1788 = vmatprep.mubr.f32.mxu0 0.0
    %1789 = vmatmul.mubr.f32.gmra.mxu0 %v1720
    %v1790 = vpop.f32.mrf.mxu0
    %v1791 = vadd.f32 0.0, %v1790
    %v1792 = vpop.f32.mrf.mxu0
    %1793 = vdwg.mxu0
    %v1796 = vcombine.high %v1714, %v1714
    %v1798 = vunpack.c.l.s4 1966171168
    %v1799 = vunpack.c.0.s8 %v1798
    %v1800 = vlaneseq
    %v1801 = vshrl.u32 %v1800, 7
    %v1802 = vsub.s32 %v1799, %v1801
    %v1803 = vrot.slane %v1714, %v1802
    %v1805 = vunpack.c.l.s4 1966171168
    %v1806 = vunpack.c.0.s8 %v1805
    %v1807 = vlaneseq
    %v1808 = vshrl.u32 %v1807, 7
    %v1809 = vsub.s32 %v1806, %v1808
    %v1810 = vrot.slane %v1796, %v1809
    %v1811 = vcombine.high %v1803, %v1803
    %v1813 = vunpack.c.l.s4 1966171168
    %v1814 = vunpack.c.0.s8 %v1813
    %v1815 = vlaneseq
    %v1816 = vshrl.u32 %v1815, 7
    %v1817 = vsub.s32 %v1814, %v1816
    %v1818 = vrot.slane %v1803, %v1817
    %v1820 = vunpack.c.l.s4 1966171168
    %v1821 = vunpack.c.0.s8 %v1820
    %v1822 = vlaneseq
    %v1823 = vshrl.u32 %v1822, 7
    %v1824 = vsub.s32 %v1821, %v1823
    %v1825 = vrot.slane %v1810, %v1824
    %v1827 = vunpack.c.l.s4 1966171168
    %v1828 = vunpack.c.0.s8 %v1827
    %v1829 = vlaneseq
    %v1830 = vshrl.u32 %v1829, 7
    %v1831 = vsub.s32 %v1828, %v1830
    %v1832 = vrot.slane %v1811, %v1831
    %v1833 = vcombine.high %v1818, %v1818
    %v1834 = vcombine.high %v1832, %v1832
    %v1835 = vcombine.high %v1791, %v1791
    %v1837 = vunpack.c.l.s4 1966171168
    %v1838 = vunpack.c.0.s8 %v1837
    %v1839 = vlaneseq
    %v1840 = vshrl.u32 %v1839, 7
    %v1841 = vsub.s32 %v1838, %v1840
    %v1842 = vrot.slane %v1791, %v1841
    %v1844 = vunpack.c.l.s4 1966171168
    %v1845 = vunpack.c.0.s8 %v1844
    %v1846 = vlaneseq
    %v1847 = vshrl.u32 %v1846, 7
    %v1848 = vsub.s32 %v1845, %v1847
    %v1849 = vrot.slane %v1835, %v1848
    %v1850 = vcombine.high %v1842, %v1842
    %v1852 = vunpack.c.l.s4 1966171168
    %v1853 = vunpack.c.0.s8 %v1852
    %v1854 = vlaneseq
    %v1855 = vshrl.u32 %v1854, 7
    %v1856 = vsub.s32 %v1853, %v1855
    %v1857 = vrot.slane %v1842, %v1856
    %v1859 = vunpack.c.l.s4 1966171168
    %v1860 = vunpack.c.0.s8 %v1859
    %v1861 = vlaneseq
    %v1862 = vshrl.u32 %v1861, 7
    %v1863 = vsub.s32 %v1860, %v1862
    %v1864 = vrot.slane %v1849, %v1863
    %v1866 = vunpack.c.l.s4 1966171168
    %v1867 = vunpack.c.0.s8 %v1866
    %v1868 = vlaneseq
    %v1869 = vshrl.u32 %v1868, 7
    %v1870 = vsub.s32 %v1867, %v1869
    %v1871 = vrot.slane %v1850, %v1870
    %v1872 = vcombine.high %v1857, %v1857
    %v1873 = vcombine.high %v1871, %v1871
    %v1874 = vld [vmem:[%s2 + $0xc0] sm:$0xff]
    %v1875 = vld [vmem:[%s2 + $0xc8] sm:$0xff]
    %1876 = vrot.lane.b32.xlu0 %v1422, 112
    %v1877 = vpop.permute.xlu0 %1876
    %1878 = vrot.lane.b32.xlu0 %v1422, 80
    %v1879 = vpop.permute.xlu0 %1878
    %v1880 = vsel %vm1425, %v1877, 0
    %v1882 = vsel %vm1425, %v1879, 0
    %1884 = vmatprep.subr.mxu0 0.0
    %1885 = vmatpush1.xpose.msra.mxu0 0.0
    %1886 = vmatprep.subr.mxu0 0.0
    %1887 = vmatpush1.xpose.msra.mxu0 0.0
    %1888 = vmatprep.subr.mxu0 0.0
    %1889 = vmatpush1.xpose.msra.mxu0 0.0
    %1890 = vmatprep.subr.mxu0 0.0
    %1891 = vmatpush1.xpose.msra.mxu0 0.0
    %1892 = vmatprep.subr.mxu0 0.0
    %1893 = vmatpush1.xpose.msra.mxu0 0.0
    %1894 = vmatprep.subr.mxu0 0.0
    %1895 = vmatpush1.xpose.msra.mxu0 0.0
    %1896 = vmatprep.subr.mxu0 0.0
    %1897 = vmatpush1.xpose.msra.mxu0 0.0
    %1898 = vmatprep.subr.mxu0 0.0
    %1899 = vmatpush1.xpose.msra.mxu0 0.0
    %1900 = vmatprep.subr.mxu0 0.0
    %1901 = vmatpush1.xpose.msra.mxu0 0.0
    %1902 = vmatprep.subr.mxu0 0.0
    %1903 = vmatpush1.xpose.msra.mxu0 0.0
    %1904 = vmatprep.subr.mxu0 0.0
    %1905 = vmatpush1.xpose.msra.mxu0 0.0
    %1906 = vmatprep.subr.mxu0 0.0
    %1907 = vmatpush1.xpose.msra.mxu0 0.0
    %1908 = vmatprep.subr.mxu0 0.0
    %1909 = vmatpush1.xpose.msra.mxu0 0.0
    %1910 = vmatprep.subr.mxu0 0.0
    %1911 = vmatpush1.xpose.msra.mxu0 0.0
    %1912 = vmatprep.subr.mxu0 0.0
    %1913 = vmatpush1.xpose.msra.mxu0 0.0
    %1914 = vmatprep.subr.mxu0 0.0
    %1915 = vmatpush1.xpose.msra.mxu0 %v1882
    %1916 = vmatprep.subr.mxu0 0.0
    %1917 = vmatpush2.xpose.msra.mxu0 0.0
    %1918 = vmatprep.subr.mxu0 0.0
    %1919 = vmatpush2.xpose.msra.mxu0 0.0
    %1920 = vmatprep.subr.mxu0 0.0
    %1921 = vmatpush2.xpose.msra.mxu0 0.0
    %1922 = vmatprep.subr.mxu0 0.0
    %1923 = vmatpush2.xpose.msra.mxu0 0.0
    %1924 = vmatprep.subr.mxu0 0.0
    %1925 = vmatpush2.xpose.msra.mxu0 0.0
    %1926 = vmatprep.subr.mxu0 0.0
    %1927 = vmatpush2.xpose.msra.mxu0 0.0
    %1928 = vmatprep.subr.mxu0 0.0
    %1929 = vmatpush2.xpose.msra.mxu0 0.0
    %1930 = vmatprep.subr.mxu0 0.0
    %1931 = vmatpush2.xpose.msra.mxu0 0.0
    %1932 = vmatprep.subr.mxu0 0.0
    %1933 = vmatpush2.xpose.msra.mxu0 0.0
    %1934 = vmatprep.subr.mxu0 0.0
    %1935 = vmatpush2.xpose.msra.mxu0 0.0
    %1936 = vmatprep.subr.mxu0 0.0
    %1937 = vmatpush2.xpose.msra.mxu0 0.0
    %1938 = vmatprep.subr.mxu0 0.0
    %1939 = vmatpush2.xpose.msra.mxu0 0.0
    %1940 = vmatprep.subr.mxu0 0.0
    %1941 = vmatpush2.xpose.msra.mxu0 0.0
    %1942 = vmatprep.subr.mxu0 0.0
    %1943 = vmatpush2.xpose.msra.mxu0 0.0
    %1944 = vmatprep.subr.mxu0 0.0
    %1945 = vmatpush2.xpose.msra.mxu0 0.0
    %1946 = vmatprep.subr.mxu0 0.0
    %1947 = vmatpush2.xpose.msra.mxu0 0.0
    %1948 = vmatprep.mubr.f32.mxu0 0.0
    %1949 = vmatmul.mubr.f32.gmra.mxu0 %v1880
    %v1950 = vpop.f32.mrf.mxu0
    %v1951 = vadd.f32 0.0, %v1950
    %v1952 = vpop.f32.mrf.mxu0
    %1953 = vdwg.mxu0
    %1954 = vrot.lane.b32.xlu0 %v1538, 112
    %v1955 = vpop.permute.xlu0 %1954
    %1956 = vrot.lane.b32.xlu0 %v1538, 80
    %v1957 = vpop.permute.xlu0 %1956
    %v1958 = vsel %vm1425, %v1955, 0
    %v1960 = vsel %vm1425, %v1957, 0
    %1962 = vmatprep.subr.mxu0 0.0
    %1963 = vmatpush1.xpose.msra.mxu0 0.0
    %1964 = vmatprep.subr.mxu0 0.0
    %1965 = vmatpush1.xpose.msra.mxu0 0.0
    %1966 = vmatprep.subr.mxu0 0.0
    %1967 = vmatpush1.xpose.msra.mxu0 0.0
    %1968 = vmatprep.subr.mxu0 0.0
    %1969 = vmatpush1.xpose.msra.mxu0 0.0
    %1970 = vmatprep.subr.mxu0 0.0
    %1971 = vmatpush1.xpose.msra.mxu0 0.0
    %1972 = vmatprep.subr.mxu0 0.0
    %1973 = vmatpush1.xpose.msra.mxu0 0.0
    %1974 = vmatprep.subr.mxu0 0.0
    %1975 = vmatpush1.xpose.msra.mxu0 0.0
    %1976 = vmatprep.subr.mxu0 0.0
    %1977 = vmatpush1.xpose.msra.mxu0 0.0
    %1978 = vmatprep.subr.mxu0 0.0
    %1979 = vmatpush1.xpose.msra.mxu0 0.0
    %1980 = vmatprep.subr.mxu0 0.0
    %1981 = vmatpush1.xpose.msra.mxu0 0.0
    %1982 = vmatprep.subr.mxu0 0.0
    %1983 = vmatpush1.xpose.msra.mxu0 0.0
    %1984 = vmatprep.subr.mxu0 0.0
    %1985 = vmatpush1.xpose.msra.mxu0 0.0
    %1986 = vmatprep.subr.mxu0 0.0
    %1987 = vmatpush1.xpose.msra.mxu0 0.0
    %1988 = vmatprep.subr.mxu0 0.0
    %1989 = vmatpush1.xpose.msra.mxu0 0.0
    %1990 = vmatprep.subr.mxu0 0.0
    %1991 = vmatpush1.xpose.msra.mxu0 0.0
    %1992 = vmatprep.subr.mxu0 0.0
    %1993 = vmatpush1.xpose.msra.mxu0 %v1960
    %1994 = vmatprep.subr.mxu0 0.0
    %1995 = vmatpush2.xpose.msra.mxu0 0.0
    %1996 = vmatprep.subr.mxu0 0.0
    %1997 = vmatpush2.xpose.msra.mxu0 0.0
    %1998 = vmatprep.subr.mxu0 0.0
    %1999 = vmatpush2.xpose.msra.mxu0 0.0
    %2000 = vmatprep.subr.mxu0 0.0
    %2001 = vmatpush2.xpose.msra.mxu0 0.0
    %2002 = vmatprep.subr.mxu0 0.0
    %2003 = vmatpush2.xpose.msra.mxu0 0.0
    %2004 = vmatprep.subr.mxu0 0.0
    %2005 = vmatpush2.xpose.msra.mxu0 0.0
    %2006 = vmatprep.subr.mxu0 0.0
    %2007 = vmatpush2.xpose.msra.mxu0 0.0
    %2008 = vmatprep.subr.mxu0 0.0
    %2009 = vmatpush2.xpose.msra.mxu0 0.0
    %2010 = vmatprep.subr.mxu0 0.0
    %2011 = vmatpush2.xpose.msra.mxu0 0.0
    %2012 = vmatprep.subr.mxu0 0.0
    %2013 = vmatpush2.xpose.msra.mxu0 0.0
    %2014 = vmatprep.subr.mxu0 0.0
    %2015 = vmatpush2.xpose.msra.mxu0 0.0
    %2016 = vmatprep.subr.mxu0 0.0
    %2017 = vmatpush2.xpose.msra.mxu0 0.0
    %2018 = vmatprep.subr.mxu0 0.0
    %2019 = vmatpush2.xpose.msra.mxu0 0.0
    %2020 = vmatprep.subr.mxu0 0.0
    %2021 = vmatpush2.xpose.msra.mxu0 0.0
    %2022 = vmatprep.subr.mxu0 0.0
    %2023 = vmatpush2.xpose.msra.mxu0 0.0
    %2024 = vmatprep.subr.mxu0 0.0
    %2025 = vmatpush2.xpose.msra.mxu0 0.0
    %2026 = vmatprep.mubr.f32.mxu0 0.0
    %2027 = vmatmul.mubr.f32.gmra.mxu0 %v1958
    %v2028 = vpop.f32.mrf.mxu0
    %v2029 = vadd.f32 0.0, %v2028
    %v2030 = vpop.f32.mrf.mxu0
    %2031 = vdwg.mxu0
    %v2032 = vsel %vm1615, %v1951, -inf
    %2033 = vmax.xlane.f32.xlu0 %v2032
    %v2034 = vpop.xlane.xlu0 %2033
    %v2035 = vsel %vm1615, %v2029, -inf
    %2036 = vmax.xlane.f32.xlu0 %v2035
    %v2037 = vpop.xlane.xlu0 %2036
    %v2038 = vsub.f32 %v1951, %v2034
    %v2039 = vsub.f32 %v2029, %v2037
    %v2040 = vmul.f32 %v2038, 1.442695
    %v2041 = vpow.pop %v2040
    %v2042 = vmul.f32 %v2039, 1.442695
    %v2043 = vpow.pop %v2042
    %v2044 = vsel %vm1615, %v2041, 0.0
    %2045 = vadd.xlane.f32.xlu0 %v2044
    %v2046 = vpop.xlane.xlu0 %2045
    %v2047 = vsel %vm1615, %v2043, 0.0
    %2048 = vadd.xlane.f32.xlu0 %v2047
    %v2049 = vpop.xlane.xlu0 %2048
    %v2050 = vrcp.pop %v2046
    %v2051 = vrcp.pop %v2049
    %v2052 = vmul.f32 %v2041, %v2050
    %v2053 = vmul.f32 %v2043, %v2051
    %2054 = vrot.lane.b32.xlu0 %v1422, 48
    %v2055 = vpop.permute.xlu0 %2054
    %v2057 = vsel %vm1640, %v2052, 0
    %v2059 = vsel %vm1644, %v2055, 0
    %2061 = vmatprep.subr.mxu0 0.0
    %2062 = vmatpush1.msra.mxu0 0.0
    %2063 = vmatprep.subr.mxu0 0.0
    %2064 = vmatpush1.msra.mxu0 0.0
    %2065 = vmatprep.subr.mxu0 0.0
    %2066 = vmatpush1.msra.mxu0 0.0
    %2067 = vmatprep.subr.mxu0 0.0
    %2068 = vmatpush1.msra.mxu0 0.0
    %2069 = vmatprep.subr.mxu0 0.0
    %2070 = vmatpush1.msra.mxu0 0.0
    %2071 = vmatprep.subr.mxu0 0.0
    %2072 = vmatpush1.msra.mxu0 0.0
    %2073 = vmatprep.subr.mxu0 0.0
    %2074 = vmatpush1.msra.mxu0 0.0
    %2075 = vmatprep.subr.mxu0 0.0
    %2076 = vmatpush1.msra.mxu0 0.0
    %2077 = vmatprep.subr.mxu0 0.0
    %2078 = vmatpush1.msra.mxu0 0.0
    %2079 = vmatprep.subr.mxu0 0.0
    %2080 = vmatpush1.msra.mxu0 0.0
    %2081 = vmatprep.subr.mxu0 0.0
    %2082 = vmatpush1.msra.mxu0 0.0
    %2083 = vmatprep.subr.mxu0 0.0
    %2084 = vmatpush1.msra.mxu0 0.0
    %2085 = vmatprep.subr.mxu0 0.0
    %2086 = vmatpush1.msra.mxu0 0.0
    %2087 = vmatprep.subr.mxu0 0.0
    %2088 = vmatpush1.msra.mxu0 0.0
    %2089 = vmatprep.subr.mxu0 0.0
    %2090 = vmatpush1.msra.mxu0 0.0
    %2091 = vmatprep.subr.mxu0 0.0
    %2092 = vmatpush1.msra.mxu0 %v2059
    %2093 = vmatprep.subr.mxu0 0.0
    %2094 = vmatpush2.msra.mxu0 0.0
    %2095 = vmatprep.subr.mxu0 0.0
    %2096 = vmatpush2.msra.mxu0 0.0
    %2097 = vmatprep.subr.mxu0 0.0
    %2098 = vmatpush2.msra.mxu0 0.0
    %2099 = vmatprep.subr.mxu0 0.0
    %2100 = vmatpush2.msra.mxu0 0.0
    %2101 = vmatprep.subr.mxu0 0.0
    %2102 = vmatpush2.msra.mxu0 0.0
    %2103 = vmatprep.subr.mxu0 0.0
    %2104 = vmatpush2.msra.mxu0 0.0
    %2105 = vmatprep.subr.mxu0 0.0
    %2106 = vmatpush2.msra.mxu0 0.0
    %2107 = vmatprep.subr.mxu0 0.0
    %2108 = vmatpush2.msra.mxu0 0.0
    %2109 = vmatprep.subr.mxu0 0.0
    %2110 = vmatpush2.msra.mxu0 0.0
    %2111 = vmatprep.subr.mxu0 0.0
    %2112 = vmatpush2.msra.mxu0 0.0
    %2113 = vmatprep.subr.mxu0 0.0
    %2114 = vmatpush2.msra.mxu0 0.0
    %2115 = vmatprep.subr.mxu0 0.0
    %2116 = vmatpush2.msra.mxu0 0.0
    %2117 = vmatprep.subr.mxu0 0.0
    %2118 = vmatpush2.msra.mxu0 0.0
    %2119 = vmatprep.subr.mxu0 0.0
    %2120 = vmatpush2.msra.mxu0 0.0
    %2121 = vmatprep.subr.mxu0 0.0
    %2122 = vmatpush2.msra.mxu0 0.0
    %2123 = vmatprep.subr.mxu0 0.0
    %2124 = vmatpush2.msra.mxu0 0.0
    %2125 = vmatprep.mubr.f32.mxu0 0.0
    %2126 = vmatmul.mubr.f32.gmra.mxu0 %v2057
    %v2127 = vpop.f32.mrf.mxu0
    %v2128 = vadd.f32 0.0, %v2127
    %v2129 = vpop.f32.mrf.mxu0
    %2130 = vdwg.mxu0
    %2131 = vrot.lane.b32.xlu0 %v1538, 48
    %v2132 = vpop.permute.xlu0 %2131
    %v2134 = vsel %vm1640, %v2053, 0
    %v2136 = vsel %vm1644, %v2132, 0
    %2138 = vmatprep.subr.mxu0 0.0
    %2139 = vmatpush1.msra.mxu0 0.0
    %2140 = vmatprep.subr.mxu0 0.0
    %2141 = vmatpush1.msra.mxu0 0.0
    %2142 = vmatprep.subr.mxu0 0.0
    %2143 = vmatpush1.msra.mxu0 0.0
    %2144 = vmatprep.subr.mxu0 0.0
    %2145 = vmatpush1.msra.mxu0 0.0
    %2146 = vmatprep.subr.mxu0 0.0
    %2147 = vmatpush1.msra.mxu0 0.0
    %2148 = vmatprep.subr.mxu0 0.0
    %2149 = vmatpush1.msra.mxu0 0.0
    %2150 = vmatprep.subr.mxu0 0.0
    %2151 = vmatpush1.msra.mxu0 0.0
    %2152 = vmatprep.subr.mxu0 0.0
    %2153 = vmatpush1.msra.mxu0 0.0
    %2154 = vmatprep.subr.mxu0 0.0
    %2155 = vmatpush1.msra.mxu0 0.0
    %2156 = vmatprep.subr.mxu0 0.0
    %2157 = vmatpush1.msra.mxu0 0.0
    %2158 = vmatprep.subr.mxu0 0.0
    %2159 = vmatpush1.msra.mxu0 0.0
    %2160 = vmatprep.subr.mxu0 0.0
    %2161 = vmatpush1.msra.mxu0 0.0
    %2162 = vmatprep.subr.mxu0 0.0
    %2163 = vmatpush1.msra.mxu0 0.0
    %2164 = vmatprep.subr.mxu0 0.0
    %2165 = vmatpush1.msra.mxu0 0.0
    %2166 = vmatprep.subr.mxu0 0.0
    %2167 = vmatpush1.msra.mxu0 0.0
    %2168 = vmatprep.subr.mxu0 0.0
    %2169 = vmatpush1.msra.mxu0 %v2136
    %2170 = vmatprep.subr.mxu0 0.0
    %2171 = vmatpush2.msra.mxu0 0.0
    %2172 = vmatprep.subr.mxu0 0.0
    %2173 = vmatpush2.msra.mxu0 0.0
    %2174 = vmatprep.subr.mxu0 0.0
    %2175 = vmatpush2.msra.mxu0 0.0
    %2176 = vmatprep.subr.mxu0 0.0
    %2177 = vmatpush2.msra.mxu0 0.0
    %2178 = vmatprep.subr.mxu0 0.0
    %2179 = vmatpush2.msra.mxu0 0.0
    %2180 = vmatprep.subr.mxu0 0.0
    %2181 = vmatpush2.msra.mxu0 0.0
    %2182 = vmatprep.subr.mxu0 0.0
    %2183 = vmatpush2.msra.mxu0 0.0
    %2184 = vmatprep.subr.mxu0 0.0
    %2185 = vmatpush2.msra.mxu0 0.0
    %2186 = vmatprep.subr.mxu0 0.0
    %2187 = vmatpush2.msra.mxu0 0.0
    %2188 = vmatprep.subr.mxu0 0.0
    %2189 = vmatpush2.msra.mxu0 0.0
    %2190 = vmatprep.subr.mxu0 0.0
    %2191 = vmatpush2.msra.mxu0 0.0
    %2192 = vmatprep.subr.mxu0 0.0
    %2193 = vmatpush2.msra.mxu0 0.0
    %2194 = vmatprep.subr.mxu0 0.0
    %2195 = vmatpush2.msra.mxu0 0.0
    %2196 = vmatprep.subr.mxu0 0.0
    %2197 = vmatpush2.msra.mxu0 0.0
    %2198 = vmatprep.subr.mxu0 0.0
    %2199 = vmatpush2.msra.mxu0 0.0
    %2200 = vmatprep.subr.mxu0 0.0
    %2201 = vmatpush2.msra.mxu0 0.0
    %2202 = vmatprep.mubr.f32.mxu0 0.0
    %2203 = vmatmul.mubr.f32.gmra.mxu0 %v2134
    %v2204 = vpop.f32.mrf.mxu0
    %v2205 = vadd.f32 0.0, %v2204
    %v2206 = vpop.f32.mrf.mxu0
    %2207 = vdwg.mxu0
    %v2210 = vcombine.high %v2128, %v2128
    %v2212 = vunpack.c.l.s4 1966171168
    %v2213 = vunpack.c.0.s8 %v2212
    %v2214 = vlaneseq
    %v2215 = vshrl.u32 %v2214, 7
    %v2216 = vsub.s32 %v2213, %v2215
    %v2217 = vrot.slane %v2128, %v2216
    %v2219 = vunpack.c.l.s4 1966171168
    %v2220 = vunpack.c.0.s8 %v2219
    %v2221 = vlaneseq
    %v2222 = vshrl.u32 %v2221, 7
    %v2223 = vsub.s32 %v2220, %v2222
    %v2224 = vrot.slane %v2210, %v2223
    %v2225 = vcombine.high %v2217, %v2217
    %v2227 = vunpack.c.l.s4 1966171168
    %v2228 = vunpack.c.0.s8 %v2227
    %v2229 = vlaneseq
    %v2230 = vshrl.u32 %v2229, 7
    %v2231 = vsub.s32 %v2228, %v2230
    %v2232 = vrot.slane %v2217, %v2231
    %v2234 = vunpack.c.l.s4 1966171168
    %v2235 = vunpack.c.0.s8 %v2234
    %v2236 = vlaneseq
    %v2237 = vshrl.u32 %v2236, 7
    %v2238 = vsub.s32 %v2235, %v2237
    %v2239 = vrot.slane %v2224, %v2238
    %v2241 = vunpack.c.l.s4 1966171168
    %v2242 = vunpack.c.0.s8 %v2241
    %v2243 = vlaneseq
    %v2244 = vshrl.u32 %v2243, 7
    %v2245 = vsub.s32 %v2242, %v2244
    %v2246 = vrot.slane %v2225, %v2245
    %v2247 = vcombine.high %v2232, %v2232
    %v2248 = vcombine.high %v2246, %v2246
    %v2249 = vcombine.high %v2205, %v2205
    %v2251 = vunpack.c.l.s4 1966171168
    %v2252 = vunpack.c.0.s8 %v2251
    %v2253 = vlaneseq
    %v2254 = vshrl.u32 %v2253, 7
    %v2255 = vsub.s32 %v2252, %v2254
    %v2256 = vrot.slane %v2205, %v2255
    %v2258 = vunpack.c.l.s4 1966171168
    %v2259 = vunpack.c.0.s8 %v2258
    %v2260 = vlaneseq
    %v2261 = vshrl.u32 %v2260, 7
    %v2262 = vsub.s32 %v2259, %v2261
    %v2263 = vrot.slane %v2249, %v2262
    %v2264 = vcombine.high %v2256, %v2256
    %v2266 = vunpack.c.l.s4 1966171168
    %v2267 = vunpack.c.0.s8 %v2266
    %v2268 = vlaneseq
    %v2269 = vshrl.u32 %v2268, 7
    %v2270 = vsub.s32 %v2267, %v2269
    %v2271 = vrot.slane %v2256, %v2270
    %v2273 = vunpack.c.l.s4 1966171168
    %v2274 = vunpack.c.0.s8 %v2273
    %v2275 = vlaneseq
    %v2276 = vshrl.u32 %v2275, 7
    %v2277 = vsub.s32 %v2274, %v2276
    %v2278 = vrot.slane %v2263, %v2277
    %v2280 = vunpack.c.l.s4 1966171168
    %v2281 = vunpack.c.0.s8 %v2280
    %v2282 = vlaneseq
    %v2283 = vshrl.u32 %v2282, 7
    %v2284 = vsub.s32 %v2281, %v2283
    %v2285 = vrot.slane %v2264, %v2284
    %v2286 = vcombine.high %v2271, %v2271
    %v2287 = vcombine.high %v2285, %v2285
    %v2288 = vld [vmem:[%s2 + $0xd0] sm:$0xff]
    %v2289 = vld [vmem:[%s2 + $0xd8] sm:$0xff]
    %v2290 = vcombine.low %v2232, %v2246
    %v2291 = vcombine.low %v2247, %v2248
    %v2292 = vcombine.low %v2239, %v2271
    %v2293 = vcombine.low %v2285, %v2286
    %v2295 = vunpack.c.l.s4 1966171168
    %v2296 = vunpack.c.0.s8 %v2295
    %v2297 = vlaneseq
    %v2298 = vshrl.u32 %v2297, 7
    %v2299 = vsub.s32 %v2296, %v2298
    %v2300 = vrot.slane %v2290, %v2299
    %v2302 = vunpack.c.l.s4 1966171168
    %v2303 = vunpack.c.0.s8 %v2302
    %v2304 = vlaneseq
    %v2305 = vshrl.u32 %v2304, 7
    %v2306 = vsub.s32 %v2303, %v2305
    %v2307 = vrot.slane %v2291, %v2306
    %v2309 = vunpack.c.l.s4 1966171168
    %v2310 = vunpack.c.0.s8 %v2309
    %v2311 = vlaneseq
    %v2312 = vshrl.u32 %v2311, 7
    %v2313 = vsub.s32 %v2310, %v2312
    %v2314 = vrot.slane %v2292, %v2313
    %v2316 = vunpack.c.l.s4 1966171168
    %v2317 = vunpack.c.0.s8 %v2316
    %v2318 = vlaneseq
    %v2319 = vshrl.u32 %v2318, 7
    %v2320 = vsub.s32 %v2317, %v2319
    %v2321 = vrot.slane %v2293, %v2320
    %v2322 = vcombine.low %v2300, %v2307
    %v2323 = vcombine.low %v2314, %v2321
    %v2325 = vunpack.c.l.s4 1966171168
    %v2326 = vunpack.c.0.s8 %v2325
    %v2327 = vlaneseq
    %v2328 = vshrl.u32 %v2327, 7
    %v2329 = vsub.s32 %v2326, %v2328
    %v2330 = vrot.slane %v2322, %v2329
    %v2332 = vunpack.c.l.s4 1966171168
    %v2333 = vunpack.c.0.s8 %v2332
    %v2334 = vlaneseq
    %v2335 = vshrl.u32 %v2334, 7
    %v2336 = vsub.s32 %v2333, %v2335
    %v2337 = vrot.slane %v2323, %v2336
    %v2338 = vcombine.low %v2330, %v2337
    %v2339 = vcombine.low %v2287, %v2278
    %v2341 = vunpack.c.l.s4 1966171168
    %v2342 = vunpack.c.0.s8 %v2341
    %v2343 = vlaneseq
    %v2344 = vshrl.u32 %v2343, 7
    %v2345 = vsub.s32 %v2342, %v2344
    %v2346 = vrot.slane %v2339, %v2345
    %v2348 = vunpack.c.l.s4 1966171168
    %v2349 = vunpack.c.0.s8 %v2348
    %v2350 = vlaneseq
    %v2351 = vshrl.u32 %v2350, 7
    %v2352 = vsub.s32 %v2349, %v2351
    %v2353 = vrot.slane %v2346, %v2352
    %v2354 = vsel %vm1425, %v2338, 0
    %v2356 = vsel %vm1425, %v2353, 0
    %2358 = vmatprep.subr.mxu0 0.0
    %2359 = vmatpush1.msra.mxu0 0.0
    %2360 = vmatprep.subr.mxu0 0.0
    %2361 = vmatpush1.msra.mxu0 0.0
    %2362 = vmatprep.subr.mxu0 0.0
    %2363 = vmatpush1.msra.mxu0 0.0
    %2364 = vmatprep.subr.mxu0 0.0
    %2365 = vmatpush1.msra.mxu0 0.0
    %2366 = vmatprep.subr.mxu0 0.0
    %2367 = vmatpush1.msra.mxu0 0.0
    %2368 = vmatprep.subr.mxu0 0.0
    %2369 = vmatpush1.msra.mxu0 0.0
    %2370 = vmatprep.subr.mxu0 0.0
    %2371 = vmatpush1.msra.mxu0 0.0
    %2372 = vmatprep.subr.mxu0 0.0
    %2373 = vmatpush1.msra.mxu0 0.0
    %2374 = vmatprep.subr.mxu0 0.0
    %2375 = vmatpush1.msra.mxu0 0.0
    %2376 = vmatprep.subr.mxu0 0.0
    %2377 = vmatpush1.msra.mxu0 0.0
    %2378 = vmatprep.subr.mxu0 0.0
    %2379 = vmatpush1.msra.mxu0 0.0
    %2380 = vmatprep.subr.mxu0 0.0
    %2381 = vmatpush1.msra.mxu0 0.0
    %2382 = vmatprep.subr.mxu0 0.0
    %2383 = vmatpush1.msra.mxu0 0.0
    %2384 = vmatprep.subr.mxu0 0.0
    %2385 = vmatpush1.msra.mxu0 0.0
    %2386 = vmatprep.subr.mxu0 0.0
    %2387 = vmatpush1.msra.mxu0 %v2289
    %2388 = vmatprep.subr.mxu0 0.0
    %2389 = vmatpush1.msra.mxu0 %v2288
    %2390 = vmatprep.subr.mxu0 0.0
    %2391 = vmatpush2.msra.mxu0 0.0
    %2392 = vmatprep.subr.mxu0 0.0
    %2393 = vmatpush2.msra.mxu0 0.0
    %2394 = vmatprep.subr.mxu0 0.0
    %2395 = vmatpush2.msra.mxu0 0.0
    %2396 = vmatprep.subr.mxu0 0.0
    %2397 = vmatpush2.msra.mxu0 0.0
    %2398 = vmatprep.subr.mxu0 0.0
    %2399 = vmatpush2.msra.mxu0 0.0
    %2400 = vmatprep.subr.mxu0 0.0
    %2401 = vmatpush2.msra.mxu0 0.0
    %2402 = vmatprep.subr.mxu0 0.0
    %2403 = vmatpush2.msra.mxu0 0.0
    %2404 = vmatprep.subr.mxu0 0.0
    %2405 = vmatpush2.msra.mxu0 0.0
    %2406 = vmatprep.subr.mxu0 0.0
    %2407 = vmatpush2.msra.mxu0 0.0
    %2408 = vmatprep.subr.mxu0 0.0
    %2409 = vmatpush2.msra.mxu0 0.0
    %2410 = vmatprep.subr.mxu0 0.0
    %2411 = vmatpush2.msra.mxu0 0.0
    %2412 = vmatprep.subr.mxu0 0.0
    %2413 = vmatpush2.msra.mxu0 0.0
    %2414 = vmatprep.subr.mxu0 0.0
    %2415 = vmatpush2.msra.mxu0 0.0
    %2416 = vmatprep.subr.mxu0 0.0
    %2417 = vmatpush2.msra.mxu0 0.0
    %2418 = vmatprep.subr.mxu0 0.0
    %2419 = vmatpush2.msra.mxu0 0.0
    %2420 = vmatprep.subr.mxu0 0.0
    %2421 = vmatpush2.msra.mxu0 0.0
    %2422 = vmatprep.mubr.f32.mxu0 0.0
    %2423 = vmatmul.mubr.f32.gmra.mxu0 %v2354
    %v2424 = vpop.f32.mrf.mxu0
    %v2425 = vadd.f32 0.0, %v2424
    %v2426 = vpop.f32.mrf.mxu0
    %2427 = vmatprep.mubr.f32.mxu0 0.0
    %2428 = vmatmul.mubr.f32.gmra.mxu0 %v2356
    %v2429 = vpop.f32.mrf.mxu0
    %v2430 = vadd.f32 0.0, %v2429
    %v2431 = vpop.f32.mrf.mxu0
    %2432 = vdwg.mxu0
    %v2433 = vcombine.low %v1818, %v1832
    %v2434 = vcombine.low %v1833, %v1834
    %v2435 = vcombine.low %v1825, %v1857
    %v2436 = vcombine.low %v1871, %v1872
    %v2438 = vunpack.c.l.s4 1966171168
    %v2439 = vunpack.c.0.s8 %v2438
    %v2440 = vlaneseq
    %v2441 = vshrl.u32 %v2440, 7
    %v2442 = vsub.s32 %v2439, %v2441
    %v2443 = vrot.slane %v2433, %v2442
    %v2445 = vunpack.c.l.s4 1966171168
    %v2446 = vunpack.c.0.s8 %v2445
    %v2447 = vlaneseq
    %v2448 = vshrl.u32 %v2447, 7
    %v2449 = vsub.s32 %v2446, %v2448
    %v2450 = vrot.slane %v2434, %v2449
    %v2452 = vunpack.c.l.s4 1966171168
    %v2453 = vunpack.c.0.s8 %v2452
    %v2454 = vlaneseq
    %v2455 = vshrl.u32 %v2454, 7
    %v2456 = vsub.s32 %v2453, %v2455
    %v2457 = vrot.slane %v2435, %v2456
    %v2459 = vunpack.c.l.s4 1966171168
    %v2460 = vunpack.c.0.s8 %v2459
    %v2461 = vlaneseq
    %v2462 = vshrl.u32 %v2461, 7
    %v2463 = vsub.s32 %v2460, %v2462
    %v2464 = vrot.slane %v2436, %v2463
    %v2465 = vcombine.low %v2443, %v2450
    %v2466 = vcombine.low %v2457, %v2464
    %v2468 = vunpack.c.l.s4 1966171168
    %v2469 = vunpack.c.0.s8 %v2468
    %v2470 = vlaneseq
    %v2471 = vshrl.u32 %v2470, 7
    %v2472 = vsub.s32 %v2469, %v2471
    %v2473 = vrot.slane %v2465, %v2472
    %v2475 = vunpack.c.l.s4 1966171168
    %v2476 = vunpack.c.0.s8 %v2475
    %v2477 = vlaneseq
    %v2478 = vshrl.u32 %v2477, 7
    %v2479 = vsub.s32 %v2476, %v2478
    %v2480 = vrot.slane %v2466, %v2479
    %v2481 = vcombine.low %v2473, %v2480
    %v2482 = vcombine.low %v1873, %v1864
    %v2484 = vunpack.c.l.s4 1966171168
    %v2485 = vunpack.c.0.s8 %v2484
    %v2486 = vlaneseq
    %v2487 = vshrl.u32 %v2486, 7
    %v2488 = vsub.s32 %v2485, %v2487
    %v2489 = vrot.slane %v2482, %v2488
    %v2491 = vunpack.c.l.s4 1966171168
    %v2492 = vunpack.c.0.s8 %v2491
    %v2493 = vlaneseq
    %v2494 = vshrl.u32 %v2493, 7
    %v2495 = vsub.s32 %v2492, %v2494
    %v2496 = vrot.slane %v2489, %v2495
    %v2497 = vsel %vm1425, %v2481, 0
    %v2499 = vsel %vm1425, %v2496, 0
    %2501 = vmatprep.subr.mxu0 0.0
    %2502 = vmatpush1.msra.mxu0 0.0
    %2503 = vmatprep.subr.mxu0 0.0
    %2504 = vmatpush1.msra.mxu0 0.0
    %2505 = vmatprep.subr.mxu0 0.0
    %2506 = vmatpush1.msra.mxu0 0.0
    %2507 = vmatprep.subr.mxu0 0.0
    %2508 = vmatpush1.msra.mxu0 0.0
    %2509 = vmatprep.subr.mxu0 0.0
    %2510 = vmatpush1.msra.mxu0 0.0
    %2511 = vmatprep.subr.mxu0 0.0
    %2512 = vmatpush1.msra.mxu0 0.0
    %2513 = vmatprep.subr.mxu0 0.0
    %2514 = vmatpush1.msra.mxu0 0.0
    %2515 = vmatprep.subr.mxu0 0.0
    %2516 = vmatpush1.msra.mxu0 0.0
    %2517 = vmatprep.subr.mxu0 0.0
    %2518 = vmatpush1.msra.mxu0 0.0
    %2519 = vmatprep.subr.mxu0 0.0
    %2520 = vmatpush1.msra.mxu0 0.0
    %2521 = vmatprep.subr.mxu0 0.0
    %2522 = vmatpush1.msra.mxu0 0.0
    %2523 = vmatprep.subr.mxu0 0.0
    %2524 = vmatpush1.msra.mxu0 0.0
    %2525 = vmatprep.subr.mxu0 0.0
    %2526 = vmatpush1.msra.mxu0 0.0
    %2527 = vmatprep.subr.mxu0 0.0
    %2528 = vmatpush1.msra.mxu0 0.0
    %2529 = vmatprep.subr.mxu0 0.0
    %2530 = vmatpush1.msra.mxu0 %v1875
    %2531 = vmatprep.subr.mxu0 0.0
    %2532 = vmatpush1.msra.mxu0 %v1874
    %2533 = vmatprep.subr.mxu0 0.0
    %2534 = vmatpush2.msra.mxu0 0.0
    %2535 = vmatprep.subr.mxu0 0.0
    %2536 = vmatpush2.msra.mxu0 0.0
    %2537 = vmatprep.subr.mxu0 0.0
    %2538 = vmatpush2.msra.mxu0 0.0
    %2539 = vmatprep.subr.mxu0 0.0
    %2540 = vmatpush2.msra.mxu0 0.0
    %2541 = vmatprep.subr.mxu0 0.0
    %2542 = vmatpush2.msra.mxu0 0.0
    %2543 = vmatprep.subr.mxu0 0.0
    %2544 = vmatpush2.msra.mxu0 0.0
    %2545 = vmatprep.subr.mxu0 0.0
    %2546 = vmatpush2.msra.mxu0 0.0
    %2547 = vmatprep.subr.mxu0 0.0
    %2548 = vmatpush2.msra.mxu0 0.0
    %2549 = vmatprep.subr.mxu0 0.0
    %2550 = vmatpush2.msra.mxu0 0.0
    %2551 = vmatprep.subr.mxu0 0.0
    %2552 = vmatpush2.msra.mxu0 0.0
    %2553 = vmatprep.subr.mxu0 0.0
    %2554 = vmatpush2.msra.mxu0 0.0
    %2555 = vmatprep.subr.mxu0 0.0
    %2556 = vmatpush2.msra.mxu0 0.0
    %2557 = vmatprep.subr.mxu0 0.0
    %2558 = vmatpush2.msra.mxu0 0.0
    %2559 = vmatprep.subr.mxu0 0.0
    %2560 = vmatpush2.msra.mxu0 0.0
    %2561 = vmatprep.subr.mxu0 0.0
    %2562 = vmatpush2.msra.mxu0 0.0
    %2563 = vmatprep.subr.mxu0 0.0
    %2564 = vmatpush2.msra.mxu0 0.0
    %2565 = vmatprep.mubr.f32.mxu0 0.0
    %2566 = vmatmul.mubr.f32.gmra.mxu0 %v2497
    %v2567 = vpop.f32.mrf.mxu0
    %v2568 = vadd.f32 %v2425, %v2567
    %v2569 = vpop.f32.mrf.mxu0
    %2570 = vmatprep.mubr.f32.mxu0 0.0
    %2571 = vmatmul.mubr.f32.gmra.mxu0 %v2499
    %v2572 = vpop.f32.mrf.mxu0
    %v2573 = vadd.f32 %v2430, %v2572
    %v2574 = vpop.f32.mrf.mxu0
    %2575 = vdwg.mxu0
    %v2578 = vcombine.high %v2568, %v2568
    %v2580 = vunpack.c.l.s4 1966171168
    %v2581 = vunpack.c.0.s8 %v2580
    %v2582 = vlaneseq
    %v2583 = vshrl.u32 %v2582, 7
    %v2584 = vsub.s32 %v2581, %v2583
    %v2585 = vrot.slane %v2568, %v2584
    %v2587 = vunpack.c.l.s4 1966171168
    %v2588 = vunpack.c.0.s8 %v2587
    %v2589 = vlaneseq
    %v2590 = vshrl.u32 %v2589, 7
    %v2591 = vsub.s32 %v2588, %v2590
    %v2592 = vrot.slane %v2578, %v2591
    %v2593 = vcombine.high %v2585, %v2585
    %v2594 = vcombine.high %v2592, %v2592
    %v2596 = vunpack.c.l.s4 1966171168
    %v2597 = vunpack.c.0.s8 %v2596
    %v2598 = vlaneseq
    %v2599 = vshrl.u32 %v2598, 7
    %v2600 = vsub.s32 %v2597, %v2599
    %v2601 = vrot.slane %v2585, %v2600
    %v2603 = vunpack.c.l.s4 1966171168
    %v2604 = vunpack.c.0.s8 %v2603
    %v2605 = vlaneseq
    %v2606 = vshrl.u32 %v2605, 7
    %v2607 = vsub.s32 %v2604, %v2606
    %v2608 = vrot.slane %v2592, %v2607
    %v2610 = vunpack.c.l.s4 1966171168
    %v2611 = vunpack.c.0.s8 %v2610
    %v2612 = vlaneseq
    %v2613 = vshrl.u32 %v2612, 7
    %v2614 = vsub.s32 %v2611, %v2613
    %v2615 = vrot.slane %v2593, %v2614
    %v2617 = vunpack.c.l.s4 1966171168
    %v2618 = vunpack.c.0.s8 %v2617
    %v2619 = vlaneseq
    %v2620 = vshrl.u32 %v2619, 7
    %v2621 = vsub.s32 %v2618, %v2620
    %v2622 = vrot.slane %v2594, %v2621
    %v2623 = vcombine.high %v2601, %v2601
    %v2624 = vcombine.high %v2608, %v2608
    %v2625 = vcombine.high %v2615, %v2615
    %v2626 = vcombine.high %v2622, %v2622
    %v2628 = vunpack.c.l.s4 1966171168
    %v2629 = vunpack.c.0.s8 %v2628
    %v2630 = vlaneseq
    %v2631 = vshrl.u32 %v2630, 7
    %v2632 = vsub.s32 %v2629, %v2631
    %v2633 = vrot.slane %v2573, %v2632
    %v2634 = vcombine.high %v2633, %v2633
    %v2636 = vunpack.c.l.s4 1966171168
    %v2637 = vunpack.c.0.s8 %v2636
    %v2638 = vlaneseq
    %v2639 = vshrl.u32 %v2638, 7
    %v2640 = vsub.s32 %v2637, %v2639
    %v2641 = vrot.slane %v2633, %v2640
    %v2643 = vunpack.c.l.s4 1966171168
    %v2644 = vunpack.c.0.s8 %v2643
    %v2645 = vlaneseq
    %v2646 = vshrl.u32 %v2645, 7
    %v2647 = vsub.s32 %v2644, %v2646
    %v2648 = vrot.slane %v2634, %v2647
    %v2659 = vadd.f32 %v671, %v2601
    %v2660 = vadd.f32 %v672, %v2615
    %v2661 = vadd.f32 %v673, %v2623
    %v2662 = vadd.f32 %v674, %v2625
    %v2663 = vadd.f32 %v675, %v2608
    %v2664 = vadd.f32 %v676, %v2622
    %v2665 = vadd.f32 %v677, %v2624
    %v2666 = vadd.f32 %v678, %v2626
    %v2667 = vadd.f32 %v679, %v2641
    %v2668 = vadd.f32 %v680, %v2648
    %v2669 = vlaneseq
    %v2670 = vshrl.u32 %v2669, 7
    %v2671 = vsub.s32 0, %v2670
    %v2672 = vrot.slane %v683, %v2671
    %v2674 = vcombine.high %v2672, %v2672
    %v2676 = vunpack.c.l.s4 1966171168
    %v2677 = vunpack.c.0.s8 %v2676
    %v2678 = vlaneseq
    %v2679 = vshrl.u32 %v2678, 7
    %v2680 = vsub.s32 %v2677, %v2679
    %v2681 = vrot.slane %v2672, %v2680
    %v2683 = vunpack.c.l.s4 1966171168
    %v2684 = vunpack.c.0.s8 %v2683
    %v2685 = vlaneseq
    %v2686 = vshrl.u32 %v2685, 7
    %v2687 = vsub.s32 %v2684, %v2686
    %v2688 = vrot.slane %v2674, %v2687
    %v2689 = vcombine.high %v2681, %v2681
    %v2690 = vcombine.high %v2688, %v2688
    %v2692 = vunpack.c.l.s4 1966171168
    %v2693 = vunpack.c.0.s8 %v2692
    %v2694 = vlaneseq
    %v2695 = vshrl.u32 %v2694, 7
    %v2696 = vsub.s32 %v2693, %v2695
    %v2697 = vrot.slane %v2681, %v2696
    %v2699 = vunpack.c.l.s4 1966171168
    %v2700 = vunpack.c.0.s8 %v2699
    %v2701 = vlaneseq
    %v2702 = vshrl.u32 %v2701, 7
    %v2703 = vsub.s32 %v2700, %v2702
    %v2704 = vrot.slane %v2688, %v2703
    %v2706 = vunpack.c.l.s4 1966171168
    %v2707 = vunpack.c.0.s8 %v2706
    %v2708 = vlaneseq
    %v2709 = vshrl.u32 %v2708, 7
    %v2710 = vsub.s32 %v2707, %v2709
    %v2711 = vrot.slane %v2689, %v2710
    %v2713 = vunpack.c.l.s4 1966171168
    %v2714 = vunpack.c.0.s8 %v2713
    %v2715 = vlaneseq
    %v2716 = vshrl.u32 %v2715, 7
    %v2717 = vsub.s32 %v2714, %v2716
    %v2718 = vrot.slane %v2690, %v2717
    %v2719 = vcombine.high %v2697, %v2697
    %v2720 = vcombine.high %v2704, %v2704
    %v2721 = vcombine.high %v2711, %v2711
    %v2722 = vcombine.high %v2718, %v2718
    %v2731 = vadd.f32 %v2659, %v2697
    %v2732 = vadd.f32 %v2660, %v2711
    %v2733 = vadd.f32 %v2661, %v2719
    %v2734 = vadd.f32 %v2662, %v2721
    %v2735 = vadd.f32 %v2663, %v2704
    %v2736 = vadd.f32 %v2664, %v2718
    %v2737 = vadd.f32 %v2665, %v2720
    %v2738 = vadd.f32 %v2666, %v2722
    %v2739 = vadd.f32 %v2667, %v2697
    %v2740 = vadd.f32 %v2668, %v2711
    %v2751 = vcombine.low %v2731, %v2732
    %v2752 = vcombine.low %v2733, %v2734
    %v2753 = vcombine.low %v2735, %v2736
    %v2754 = vcombine.low %v2737, %v2738
    %v2756 = vunpack.c.l.s4 1966171168
    %v2757 = vunpack.c.0.s8 %v2756
    %v2758 = vlaneseq
    %v2759 = vshrl.u32 %v2758, 7
    %v2760 = vsub.s32 %v2757, %v2759
    %v2761 = vrot.slane %v2751, %v2760
    %v2763 = vunpack.c.l.s4 1966171168
    %v2764 = vunpack.c.0.s8 %v2763
    %v2765 = vlaneseq
    %v2766 = vshrl.u32 %v2765, 7
    %v2767 = vsub.s32 %v2764, %v2766
    %v2768 = vrot.slane %v2752, %v2767
    %v2770 = vunpack.c.l.s4 1966171168
    %v2771 = vunpack.c.0.s8 %v2770
    %v2772 = vlaneseq
    %v2773 = vshrl.u32 %v2772, 7
    %v2774 = vsub.s32 %v2771, %v2773
    %v2775 = vrot.slane %v2753, %v2774
    %v2777 = vunpack.c.l.s4 1966171168
    %v2778 = vunpack.c.0.s8 %v2777
    %v2779 = vlaneseq
    %v2780 = vshrl.u32 %v2779, 7
    %v2781 = vsub.s32 %v2778, %v2780
    %v2782 = vrot.slane %v2754, %v2781
    %v2783 = vcombine.low %v2761, %v2768
    %v2784 = vcombine.low %v2775, %v2782
    %v2786 = vunpack.c.l.s4 1966171168
    %v2787 = vunpack.c.0.s8 %v2786
    %v2788 = vlaneseq
    %v2789 = vshrl.u32 %v2788, 7
    %v2790 = vsub.s32 %v2787, %v2789
    %v2791 = vrot.slane %v2783, %v2790
    %v2793 = vunpack.c.l.s4 1966171168
    %v2794 = vunpack.c.0.s8 %v2793
    %v2795 = vlaneseq
    %v2796 = vshrl.u32 %v2795, 7
    %v2797 = vsub.s32 %v2794, %v2796
    %v2798 = vrot.slane %v2784, %v2797
    %v2799 = vcombine.low %v2791, %v2798
    %v2800 = vcombine.low %v2739, %v2740
    %v2802 = vunpack.c.l.s4 1966171168
    %v2803 = vunpack.c.0.s8 %v2802
    %v2804 = vlaneseq
    %v2805 = vshrl.u32 %v2804, 7
    %v2806 = vsub.s32 %v2803, %v2805
    %v2807 = vrot.slane %v2800, %v2806
    %v2809 = vunpack.c.l.s4 1966171168
    %v2810 = vunpack.c.0.s8 %v2809
    %v2811 = vlaneseq
    %v2812 = vshrl.u32 %v2811, 7
    %v2813 = vsub.s32 %v2810, %v2812
    %v2814 = vrot.slane %v2807, %v2813
    %v2817 = vsel %vm298, %v2799, 0.0
    %2818 = vadd.xlane.f32.xlu0 %v2817
    %v2819 = vpop.xlane.xlu0 %2818
    %v2820 = vsel %vm302, %v2814, 0.0
    %2821 = vadd.xlane.f32.xlu0 %v2820
    %v2822 = vpop.xlane.xlu0 %2821
    %v2823 = vmul.f32 %v2819, %v306
    %v2824 = vmul.f32 %v2822, %v306
    %v2825 = vmul.f32 %v2731, %v2731
    %v2826 = vmul.f32 %v2732, %v2732
    %v2827 = vmul.f32 %v2733, %v2733
    %v2828 = vmul.f32 %v2734, %v2734
    %v2829 = vmul.f32 %v2735, %v2735
    %v2830 = vmul.f32 %v2736, %v2736
    %v2831 = vmul.f32 %v2737, %v2737
    %v2832 = vmul.f32 %v2738, %v2738
    %v2833 = vmul.f32 %v2739, %v2739
    %v2834 = vmul.f32 %v2740, %v2740
    %v2845 = vcombine.low %v2825, %v2826
    %v2846 = vcombine.low %v2827, %v2828
    %v2847 = vcombine.low %v2829, %v2830
    %v2848 = vcombine.low %v2831, %v2832
    %v2850 = vunpack.c.l.s4 1966171168
    %v2851 = vunpack.c.0.s8 %v2850
    %v2852 = vlaneseq
    %v2853 = vshrl.u32 %v2852, 7
    %v2854 = vsub.s32 %v2851, %v2853
    %v2855 = vrot.slane %v2845, %v2854
    %v2857 = vunpack.c.l.s4 1966171168
    %v2858 = vunpack.c.0.s8 %v2857
    %v2859 = vlaneseq
    %v2860 = vshrl.u32 %v2859, 7
    %v2861 = vsub.s32 %v2858, %v2860
    %v2862 = vrot.slane %v2846, %v2861
    %v2864 = vunpack.c.l.s4 1966171168
    %v2865 = vunpack.c.0.s8 %v2864
    %v2866 = vlaneseq
    %v2867 = vshrl.u32 %v2866, 7
    %v2868 = vsub.s32 %v2865, %v2867
    %v2869 = vrot.slane %v2847, %v2868
    %v2871 = vunpack.c.l.s4 1966171168
    %v2872 = vunpack.c.0.s8 %v2871
    %v2873 = vlaneseq
    %v2874 = vshrl.u32 %v2873, 7
    %v2875 = vsub.s32 %v2872, %v2874
    %v2876 = vrot.slane %v2848, %v2875
    %v2877 = vcombine.low %v2855, %v2862
    %v2878 = vcombine.low %v2869, %v2876
    %v2880 = vunpack.c.l.s4 1966171168
    %v2881 = vunpack.c.0.s8 %v2880
    %v2882 = vlaneseq
    %v2883 = vshrl.u32 %v2882, 7
    %v2884 = vsub.s32 %v2881, %v2883
    %v2885 = vrot.slane %v2877, %v2884
    %v2887 = vunpack.c.l.s4 1966171168
    %v2888 = vunpack.c.0.s8 %v2887
    %v2889 = vlaneseq
    %v2890 = vshrl.u32 %v2889, 7
    %v2891 = vsub.s32 %v2888, %v2890
    %v2892 = vrot.slane %v2878, %v2891
    %v2893 = vcombine.low %v2885, %v2892
    %v2894 = vcombine.low %v2833, %v2834
    %v2896 = vunpack.c.l.s4 1966171168
    %v2897 = vunpack.c.0.s8 %v2896
    %v2898 = vlaneseq
    %v2899 = vshrl.u32 %v2898, 7
    %v2900 = vsub.s32 %v2897, %v2899
    %v2901 = vrot.slane %v2894, %v2900
    %v2903 = vunpack.c.l.s4 1966171168
    %v2904 = vunpack.c.0.s8 %v2903
    %v2905 = vlaneseq
    %v2906 = vshrl.u32 %v2905, 7
    %v2907 = vsub.s32 %v2904, %v2906
    %v2908 = vrot.slane %v2901, %v2907
    %v2911 = vsel %vm298, %v2893, 0.0
    %2912 = vadd.xlane.f32.xlu0 %v2911
    %v2913 = vpop.xlane.xlu0 %2912
    %v2914 = vsel %vm302, %v2908, 0.0
    %2915 = vadd.xlane.f32.xlu0 %v2914
    %v2916 = vpop.xlane.xlu0 %2915
    %v2917 = vmul.f32 %v2913, %v306
    %v2918 = vmul.f32 %v2916, %v306
    %v2919 = vmul.f32 %v2823, %v2823
    %v2920 = vmul.f32 %v2824, %v2824
    %v2921 = vsub.f32 %v2917, %v2919
    %v2922 = vsub.f32 %v2918, %v2920
    %v2923 = vmax.f32 %v2921, 0.0
    %v2924 = vmax.f32 %v2922, 0.0
    %v2927 = vlaneseq
    %v2928 = vshrl.u32 %v2927, 7
    %v2929 = vsub.s32 0, %v2928
    %v2930 = vrot.slane %v2823, %v2929
    %v2931 = vlaneseq
    %v2932 = vshrl.u32 %v2931, 7
    %v2933 = vsub.s32 1, %v2932
    %v2934 = vrot.slane %v2823, %v2933
    %v2935 = vlaneseq
    %v2936 = vshrl.u32 %v2935, 7
    %v2937 = vsub.s32 2, %v2936
    %v2938 = vrot.slane %v2823, %v2937
    %v2939 = vlaneseq
    %v2940 = vshrl.u32 %v2939, 7
    %v2941 = vsub.s32 3, %v2940
    %v2942 = vrot.slane %v2823, %v2941
    %v2943 = vlaneseq
    %v2944 = vshrl.u32 %v2943, 7
    %v2945 = vsub.s32 4, %v2944
    %v2946 = vrot.slane %v2823, %v2945
    %v2947 = vlaneseq
    %v2948 = vshrl.u32 %v2947, 7
    %v2949 = vsub.s32 5, %v2948
    %v2950 = vrot.slane %v2823, %v2949
    %v2951 = vlaneseq
    %v2952 = vshrl.u32 %v2951, 7
    %v2953 = vsub.s32 6, %v2952
    %v2954 = vrot.slane %v2823, %v2953
    %v2955 = vlaneseq
    %v2956 = vshrl.u32 %v2955, 7
    %v2957 = vsub.s32 7, %v2956
    %v2958 = vrot.slane %v2823, %v2957
    %v2959 = vlaneseq
    %v2960 = vshrl.u32 %v2959, 7
    %v2961 = vsub.s32 0, %v2960
    %v2962 = vrot.slane %v2824, %v2961
    %v2963 = vlaneseq
    %v2964 = vshrl.u32 %v2963, 7
    %v2965 = vsub.s32 1, %v2964
    %v2966 = vrot.slane %v2824, %v2965
    %v2977 = vsub.f32 %v2731, %v2930
    %v2978 = vsub.f32 %v2732, %v2934
    %v2979 = vsub.f32 %v2733, %v2938
    %v2980 = vsub.f32 %v2734, %v2942
    %v2981 = vsub.f32 %v2735, %v2946
    %v2982 = vsub.f32 %v2736, %v2950
    %v2983 = vsub.f32 %v2737, %v2954
    %v2984 = vsub.f32 %v2738, %v2958
    %v2985 = vsub.f32 %v2739, %v2962
    %v2986 = vsub.f32 %v2740, %v2966
    %v2987 = vadd.f32 %v2923, 1e-05
    %v2988 = vadd.f32 %v2924, 1e-05
    %v2989 = vrsqrt.pop %v2987
    %v2990 = vrsqrt.pop %v2988
    %v2993 = vlaneseq
    %v2994 = vshrl.u32 %v2993, 7
    %v2995 = vsub.s32 0, %v2994
    %v2996 = vrot.slane %v2989, %v2995
    %v2997 = vlaneseq
    %v2998 = vshrl.u32 %v2997, 7
    %v2999 = vsub.s32 1, %v2998
    %v3000 = vrot.slane %v2989, %v2999
    %v3001 = vlaneseq
    %v3002 = vshrl.u32 %v3001, 7
    %v3003 = vsub.s32 2, %v3002
    %v3004 = vrot.slane %v2989, %v3003
    %v3005 = vlaneseq
    %v3006 = vshrl.u32 %v3005, 7
    %v3007 = vsub.s32 3, %v3006
    %v3008 = vrot.slane %v2989, %v3007
    %v3009 = vlaneseq
    %v3010 = vshrl.u32 %v3009, 7
    %v3011 = vsub.s32 4, %v3010
    %v3012 = vrot.slane %v2989, %v3011
    %v3013 = vlaneseq
    %v3014 = vshrl.u32 %v3013, 7
    %v3015 = vsub.s32 5, %v3014
    %v3016 = vrot.slane %v2989, %v3015
    %v3017 = vlaneseq
    %v3018 = vshrl.u32 %v3017, 7
    %v3019 = vsub.s32 6, %v3018
    %v3020 = vrot.slane %v2989, %v3019
    %v3021 = vlaneseq
    %v3022 = vshrl.u32 %v3021, 7
    %v3023 = vsub.s32 7, %v3022
    %v3024 = vrot.slane %v2989, %v3023
    %v3025 = vlaneseq
    %v3026 = vshrl.u32 %v3025, 7
    %v3027 = vsub.s32 0, %v3026
    %v3028 = vrot.slane %v2990, %v3027
    %v3029 = vlaneseq
    %v3030 = vshrl.u32 %v3029, 7
    %v3031 = vsub.s32 1, %v3030
    %v3032 = vrot.slane %v2990, %v3031
    %v3043 = vmul.f32 %v2977, %v2996
    %v3044 = vmul.f32 %v2978, %v3000
    %v3045 = vmul.f32 %v2979, %v3004
    %v3046 = vmul.f32 %v2980, %v3008
    %v3047 = vmul.f32 %v2981, %v3012
    %v3048 = vmul.f32 %v2982, %v3016
    %v3049 = vmul.f32 %v2983, %v3020
    %v3050 = vmul.f32 %v2984, %v3024
    %v3051 = vmul.f32 %v2985, %v3028
    %v3052 = vmul.f32 %v2986, %v3032
    %v3053 = vlaneseq
    %v3054 = vshrl.u32 %v3053, 7
    %v3055 = vsub.s32 0, %v3054
    %v3056 = vrot.slane %v684, %v3055
    %v3058 = vcombine.high %v3056, %v3056
    %v3060 = vunpack.c.l.s4 1966171168
    %v3061 = vunpack.c.0.s8 %v3060
    %v3062 = vlaneseq
    %v3063 = vshrl.u32 %v3062, 7
    %v3064 = vsub.s32 %v3061, %v3063
    %v3065 = vrot.slane %v3056, %v3064
    %v3067 = vunpack.c.l.s4 1966171168
    %v3068 = vunpack.c.0.s8 %v3067
    %v3069 = vlaneseq
    %v3070 = vshrl.u32 %v3069, 7
    %v3071 = vsub.s32 %v3068, %v3070
    %v3072 = vrot.slane %v3058, %v3071
    %v3073 = vcombine.high %v3065, %v3065
    %v3074 = vcombine.high %v3072, %v3072
    %v3076 = vunpack.c.l.s4 1966171168
    %v3077 = vunpack.c.0.s8 %v3076
    %v3078 = vlaneseq
    %v3079 = vshrl.u32 %v3078, 7
    %v3080 = vsub.s32 %v3077, %v3079
    %v3081 = vrot.slane %v3065, %v3080
    %v3083 = vunpack.c.l.s4 1966171168
    %v3084 = vunpack.c.0.s8 %v3083
    %v3085 = vlaneseq
    %v3086 = vshrl.u32 %v3085, 7
    %v3087 = vsub.s32 %v3084, %v3086
    %v3088 = vrot.slane %v3072, %v3087
    %v3090 = vunpack.c.l.s4 1966171168
    %v3091 = vunpack.c.0.s8 %v3090
    %v3092 = vlaneseq
    %v3093 = vshrl.u32 %v3092, 7
    %v3094 = vsub.s32 %v3091, %v3093
    %v3095 = vrot.slane %v3073, %v3094
    %v3097 = vunpack.c.l.s4 1966171168
    %v3098 = vunpack.c.0.s8 %v3097
    %v3099 = vlaneseq
    %v3100 = vshrl.u32 %v3099, 7
    %v3101 = vsub.s32 %v3098, %v3100
    %v3102 = vrot.slane %v3074, %v3101
    %v3103 = vcombine.high %v3081, %v3081
    %v3104 = vcombine.high %v3088, %v3088
    %v3105 = vcombine.high %v3095, %v3095
    %v3106 = vcombine.high %v3102, %v3102
    %v3115 = vmul.f32 %v3043, %v3081
    %v3116 = vmul.f32 %v3044, %v3095
    %v3117 = vmul.f32 %v3045, %v3103
    %v3118 = vmul.f32 %v3046, %v3105
    %v3119 = vmul.f32 %v3047, %v3088
    %v3120 = vmul.f32 %v3048, %v3102
    %v3121 = vmul.f32 %v3049, %v3104
    %v3122 = vmul.f32 %v3050, %v3106
    %v3123 = vmul.f32 %v3051, %v3081
    %v3124 = vmul.f32 %v3052, %v3095
    %v3125 = vlaneseq
    %v3126 = vshrl.u32 %v3125, 7
    %v3127 = vsub.s32 0, %v3126
    %v3128 = vrot.slane %v685, %v3127
    %v3130 = vcombine.high %v3128, %v3128
    %v3132 = vunpack.c.l.s4 1966171168
    %v3133 = vunpack.c.0.s8 %v3132
    %v3134 = vlaneseq
    %v3135 = vshrl.u32 %v3134, 7
    %v3136 = vsub.s32 %v3133, %v3135
    %v3137 = vrot.slane %v3128, %v3136
    %v3139 = vunpack.c.l.s4 1966171168
    %v3140 = vunpack.c.0.s8 %v3139
    %v3141 = vlaneseq
    %v3142 = vshrl.u32 %v3141, 7
    %v3143 = vsub.s32 %v3140, %v3142
    %v3144 = vrot.slane %v3130, %v3143
    %v3145 = vcombine.high %v3137, %v3137
    %v3146 = vcombine.high %v3144, %v3144
    %v3148 = vunpack.c.l.s4 1966171168
    %v3149 = vunpack.c.0.s8 %v3148
    %v3150 = vlaneseq
    %v3151 = vshrl.u32 %v3150, 7
    %v3152 = vsub.s32 %v3149, %v3151
    %v3153 = vrot.slane %v3137, %v3152
    %v3155 = vunpack.c.l.s4 1966171168
    %v3156 = vunpack.c.0.s8 %v3155
    %v3157 = vlaneseq
    %v3158 = vshrl.u32 %v3157, 7
    %v3159 = vsub.s32 %v3156, %v3158
    %v3160 = vrot.slane %v3144, %v3159
    %v3162 = vunpack.c.l.s4 1966171168
    %v3163 = vunpack.c.0.s8 %v3162
    %v3164 = vlaneseq
    %v3165 = vshrl.u32 %v3164, 7
    %v3166 = vsub.s32 %v3163, %v3165
    %v3167 = vrot.slane %v3145, %v3166
    %v3169 = vunpack.c.l.s4 1966171168
    %v3170 = vunpack.c.0.s8 %v3169
    %v3171 = vlaneseq
    %v3172 = vshrl.u32 %v3171, 7
    %v3173 = vsub.s32 %v3170, %v3172
    %v3174 = vrot.slane %v3146, %v3173
    %v3175 = vcombine.high %v3153, %v3153
    %v3176 = vcombine.high %v3160, %v3160
    %v3177 = vcombine.high %v3167, %v3167
    %v3178 = vcombine.high %v3174, %v3174
    %v3187 = vadd.f32 %v3115, %v3153
    %v3188 = vadd.f32 %v3116, %v3167
    %v3189 = vadd.f32 %v3117, %v3175
    %v3190 = vadd.f32 %v3118, %v3177
    %v3191 = vadd.f32 %v3119, %v3160
    %v3192 = vadd.f32 %v3120, %v3174
    %v3193 = vadd.f32 %v3121, %v3176
    %v3194 = vadd.f32 %v3122, %v3178
    %v3195 = vadd.f32 %v3123, %v3153
    %v3196 = vadd.f32 %v3124, %v3167
    %v3197 = vld [vmem:[%s4 + $0x2] sm:$0x1]
    %v3198 = vlaneseq
    %v3199 = vshrl.u32 %v3198, 7
    %v3200 = vsub.s32 0, %v3199
    %v3201 = vrot.slane %v3197, %v3200
    %v3212 = vcombine.low %v3187, %v3188
    %v3213 = vcombine.low %v3189, %v3190
    %v3214 = vcombine.low %v3191, %v3192
    %v3215 = vcombine.low %v3193, %v3194
    %v3217 = vunpack.c.l.s4 1966171168
    %v3218 = vunpack.c.0.s8 %v3217
    %v3219 = vlaneseq
    %v3220 = vshrl.u32 %v3219, 7
    %v3221 = vsub.s32 %v3218, %v3220
    %v3222 = vrot.slane %v3212, %v3221
    %v3224 = vunpack.c.l.s4 1966171168
    %v3225 = vunpack.c.0.s8 %v3224
    %v3226 = vlaneseq
    %v3227 = vshrl.u32 %v3226, 7
    %v3228 = vsub.s32 %v3225, %v3227
    %v3229 = vrot.slane %v3213, %v3228
    %v3231 = vunpack.c.l.s4 1966171168
    %v3232 = vunpack.c.0.s8 %v3231
    %v3233 = vlaneseq
    %v3234 = vshrl.u32 %v3233, 7
    %v3235 = vsub.s32 %v3232, %v3234
    %v3236 = vrot.slane %v3214, %v3235
    %v3238 = vunpack.c.l.s4 1966171168
    %v3239 = vunpack.c.0.s8 %v3238
    %v3240 = vlaneseq
    %v3241 = vshrl.u32 %v3240, 7
    %v3242 = vsub.s32 %v3239, %v3241
    %v3243 = vrot.slane %v3215, %v3242
    %v3244 = vcombine.low %v3222, %v3229
    %v3245 = vcombine.low %v3236, %v3243
    %v3247 = vunpack.c.l.s4 1966171168
    %v3248 = vunpack.c.0.s8 %v3247
    %v3249 = vlaneseq
    %v3250 = vshrl.u32 %v3249, 7
    %v3251 = vsub.s32 %v3248, %v3250
    %v3252 = vrot.slane %v3244, %v3251
    %v3254 = vunpack.c.l.s4 1966171168
    %v3255 = vunpack.c.0.s8 %v3254
    %v3256 = vlaneseq
    %v3257 = vshrl.u32 %v3256, 7
    %v3258 = vsub.s32 %v3255, %v3257
    %v3259 = vrot.slane %v3245, %v3258
    %v3260 = vcombine.low %v3252, %v3259
    %v3261 = vcombine.low %v3195, %v3196
    %v3263 = vunpack.c.l.s4 1966171168
    %v3264 = vunpack.c.0.s8 %v3263
    %v3265 = vlaneseq
    %v3266 = vshrl.u32 %v3265, 7
    %v3267 = vsub.s32 %v3264, %v3266
    %v3268 = vrot.slane %v3261, %v3267
    %v3270 = vunpack.c.l.s4 1966171168
    %v3271 = vunpack.c.0.s8 %v3270
    %v3272 = vlaneseq
    %v3273 = vshrl.u32 %v3272, 7
    %v3274 = vsub.s32 %v3271, %v3273
    %v3275 = vrot.slane %v3268, %v3274
    %v3276 = vsel %vm298, %v3260, 0
    %v3278 = vsel %vm298, %v3275, 0
    %3280 = vmatprep.subr.mxu0 0.0
    %3281 = vmatpush1.msra.mxu0 0.0
    %3282 = vmatprep.subr.mxu0 0.0
    %3283 = vmatpush1.msra.mxu0 0.0
    %3284 = vmatprep.subr.mxu0 0.0
    %3285 = vmatpush1.msra.mxu0 0.0
    %3286 = vmatprep.subr.mxu0 0.0
    %3287 = vmatpush1.msra.mxu0 0.0
    %3288 = vmatprep.subr.mxu0 0.0
    %3289 = vmatpush1.msra.mxu0 0.0
    %3290 = vmatprep.subr.mxu0 0.0
    %3291 = vmatpush1.msra.mxu0 0.0
    %3292 = vmatprep.subr.mxu0 0.0
    %3293 = vmatpush1.msra.mxu0 0.0
    %3294 = vmatprep.subr.mxu0 0.0
    %3295 = vmatpush1.msra.mxu0 0.0
    %3296 = vmatprep.subr.mxu0 0.0
    %3297 = vmatpush1.msra.mxu0 0.0
    %3298 = vmatprep.subr.mxu0 0.0
    %3299 = vmatpush1.msra.mxu0 0.0
    %3300 = vmatprep.subr.mxu0 0.0
    %3301 = vmatpush1.msra.mxu0 0.0
    %3302 = vmatprep.subr.mxu0 0.0
    %3303 = vmatpush1.msra.mxu0 0.0
    %3304 = vmatprep.subr.mxu0 0.0
    %3305 = vmatpush1.msra.mxu0 %v1151
    %3306 = vmatprep.subr.mxu0 0.0
    %3307 = vmatpush1.msra.mxu0 %v1149
    %3308 = vmatprep.subr.mxu0 0.0
    %3309 = vmatpush1.msra.mxu0 %v1147
    %3310 = vmatprep.subr.mxu0 0.0
    %3311 = vmatpush1.msra.mxu0 %v1145
    %3312 = vmatprep.subr.mxu0 0.0
    %3313 = vmatpush2.msra.mxu0 0.0
    %3314 = vmatprep.subr.mxu0 0.0
    %3315 = vmatpush2.msra.mxu0 0.0
    %3316 = vmatprep.subr.mxu0 0.0
    %3317 = vmatpush2.msra.mxu0 0.0
    %3318 = vmatprep.subr.mxu0 0.0
    %3319 = vmatpush2.msra.mxu0 0.0
    %3320 = vmatprep.subr.mxu0 0.0
    %3321 = vmatpush2.msra.mxu0 0.0
    %3322 = vmatprep.subr.mxu0 0.0
    %3323 = vmatpush2.msra.mxu0 0.0
    %3324 = vmatprep.subr.mxu0 0.0
    %3325 = vmatpush2.msra.mxu0 0.0
    %3326 = vmatprep.subr.mxu0 0.0
    %3327 = vmatpush2.msra.mxu0 0.0
    %3328 = vmatprep.subr.mxu0 0.0
    %3329 = vmatpush2.msra.mxu0 0.0
    %3330 = vmatprep.subr.mxu0 0.0
    %3331 = vmatpush2.msra.mxu0 0.0
    %3332 = vmatprep.subr.mxu0 0.0
    %3333 = vmatpush2.msra.mxu0 0.0
    %3334 = vmatprep.subr.mxu0 0.0
    %3335 = vmatpush2.msra.mxu0 0.0
    %3336 = vmatprep.subr.mxu0 0.0
    %3337 = vmatpush2.msra.mxu0 0.0
    %3338 = vmatprep.subr.mxu0 0.0
    %3339 = vmatpush2.msra.mxu0 0.0
    %3340 = vmatprep.subr.mxu0 0.0
    %3341 = vmatpush2.msra.mxu0 0.0
    %3342 = vmatprep.subr.mxu0 0.0
    %3343 = vmatpush2.msra.mxu0 0.0
    %3344 = vmatprep.mubr.f32.mxu0 0.0
    %3345 = vmatmul.mubr.f32.gmra.mxu0 %v3276
    %v3346 = vpop.f32.mrf.mxu0
    %v3347 = vadd.f32 %v3201, %v3346
    %v3348 = vpop.f32.mrf.mxu0
    %3349 = vmatprep.mubr.f32.mxu0 0.0
    %3350 = vmatmul.mubr.f32.gmra.mxu0 %v3278
    %v3351 = vpop.f32.mrf.mxu0
    %v3352 = vadd.f32 %v3201, %v3351
    %v3353 = vpop.f32.mrf.mxu0
    %3354 = vdwg.mxu0
    %v3355 = vmul.f32 %v3347, 1.702
    %v3356 = vmul.f32 %v3352, 1.702
    %v3357 = vxor.u32 %v3355, 2147483648
    %v3358 = vxor.u32 %v3356, 2147483648
    %v3359 = vmul.f32 %v3357, 1.442695
    %v3360 = vpow.pop %v3359
    %v3361 = vmul.f32 %v3358, 1.442695
    %v3362 = vpow.pop %v3361
    %v3363 = vadd.f32 %v3360, 1.0
    %v3364 = vadd.f32 %v3362, 1.0
    %v3365 = vrcp.pop %v3363
    %v3366 = vmul.f32 1.0, %v3365
    %v3367 = vrcp.pop %v3364
    %v3368 = vmul.f32 1.0, %v3367
    %v3369 = vmul.f32 %v3347, %v3366
    %v3370 = vmul.f32 %v3352, %v3368
    %v3371 = vld [vmem:[%s2 + $0x100] sm:$0xff]
    %v3372 = vld [vmem:[%s2 + $0x108] sm:$0xff]
    %v3373 = vld [vmem:[%s2 + $0x110] sm:$0xff]
    %v3374 = vld [vmem:[%s2 + $0x118] sm:$0xff]
    %v3375 = vld [vmem:[%s2 + $0x120] sm:$0xff]
    %v3376 = vld [vmem:[%s2 + $0x128] sm:$0xff]
    %v3377 = vld [vmem:[%s2 + $0x130] sm:$0xff]
    %v3378 = vld [vmem:[%s2 + $0x138] sm:$0xff]
    %v3379 = vld [vmem:[%s2 + $0x140] sm:$0xff]
    %v3380 = vld [vmem:[%s2 + $0x148] sm:$0xff]
    %v3381 = vld [vmem:[%s2 + $0x150] sm:$0xff]
    %v3382 = vld [vmem:[%s2 + $0x158] sm:$0xff]
    %v3383 = vld [vmem:[%s2 + $0x160] sm:$0xff]
    %v3384 = vld [vmem:[%s2 + $0x168] sm:$0xff]
    %v3385 = vld [vmem:[%s2 + $0x170] sm:$0xff]
    %v3386 = vld [vmem:[%s2 + $0x178] sm:$0xff]
    %3387 = vmatprep.subr.mxu0 0.0
    %3388 = vmatpush1.msra.mxu0 %v3386
    %3389 = vmatprep.subr.mxu0 0.0
    %3390 = vmatpush1.msra.mxu0 %v3385
    %3391 = vmatprep.subr.mxu0 0.0
    %3392 = vmatpush1.msra.mxu0 %v3384
    %3393 = vmatprep.subr.mxu0 0.0
    %3394 = vmatpush1.msra.mxu0 %v3383
    %3395 = vmatprep.subr.mxu0 0.0
    %3396 = vmatpush1.msra.mxu0 %v3382
    %3397 = vmatprep.subr.mxu0 0.0
    %3398 = vmatpush1.msra.mxu0 %v3381
    %3399 = vmatprep.subr.mxu0 0.0
    %3400 = vmatpush1.msra.mxu0 %v3380
    %3401 = vmatprep.subr.mxu0 0.0
    %3402 = vmatpush1.msra.mxu0 %v3379
    %3403 = vmatprep.subr.mxu0 0.0
    %3404 = vmatpush1.msra.mxu0 %v3378
    %3405 = vmatprep.subr.mxu0 0.0
    %3406 = vmatpush1.msra.mxu0 %v3377
    %3407 = vmatprep.subr.mxu0 0.0
    %3408 = vmatpush1.msra.mxu0 %v3376
    %3409 = vmatprep.subr.mxu0 0.0
    %3410 = vmatpush1.msra.mxu0 %v3375
    %3411 = vmatprep.subr.mxu0 0.0
    %3412 = vmatpush1.msra.mxu0 %v3374
    %3413 = vmatprep.subr.mxu0 0.0
    %3414 = vmatpush1.msra.mxu0 %v3373
    %3415 = vmatprep.subr.mxu0 0.0
    %3416 = vmatpush1.msra.mxu0 %v3372
    %3417 = vmatprep.subr.mxu0 0.0
    %3418 = vmatpush1.msra.mxu0 %v3371
    %3419 = vmatprep.subr.mxu0 0.0
    %3420 = vmatpush2.msra.mxu0 0.0
    %3421 = vmatprep.subr.mxu0 0.0
    %3422 = vmatpush2.msra.mxu0 0.0
    %3423 = vmatprep.subr.mxu0 0.0
    %3424 = vmatpush2.msra.mxu0 0.0
    %3425 = vmatprep.subr.mxu0 0.0
    %3426 = vmatpush2.msra.mxu0 0.0
    %3427 = vmatprep.subr.mxu0 0.0
    %3428 = vmatpush2.msra.mxu0 0.0
    %3429 = vmatprep.subr.mxu0 0.0
    %3430 = vmatpush2.msra.mxu0 0.0
    %3431 = vmatprep.subr.mxu0 0.0
    %3432 = vmatpush2.msra.mxu0 0.0
    %3433 = vmatprep.subr.mxu0 0.0
    %3434 = vmatpush2.msra.mxu0 0.0
    %3435 = vmatprep.subr.mxu0 0.0
    %3436 = vmatpush2.msra.mxu0 0.0
    %3437 = vmatprep.subr.mxu0 0.0
    %3438 = vmatpush2.msra.mxu0 0.0
    %3439 = vmatprep.subr.mxu0 0.0
    %3440 = vmatpush2.msra.mxu0 0.0
    %3441 = vmatprep.subr.mxu0 0.0
    %3442 = vmatpush2.msra.mxu0 0.0
    %3443 = vmatprep.subr.mxu0 0.0
    %3444 = vmatpush2.msra.mxu0 0.0
    %3445 = vmatprep.subr.mxu0 0.0
    %3446 = vmatpush2.msra.mxu0 0.0
    %3447 = vmatprep.subr.mxu0 0.0
    %3448 = vmatpush2.msra.mxu0 0.0
    %3449 = vmatprep.subr.mxu0 0.0
    %3450 = vmatpush2.msra.mxu0 0.0
    %3451 = vmatprep.mubr.f32.mxu0 0.0
    %3452 = vmatmul.mubr.f32.gmra.mxu0 %v3369
    %v3453 = vpop.f32.mrf.mxu0
    %v3454 = vadd.f32 0.0, %v3453
    %v3455 = vpop.f32.mrf.mxu0
    %3456 = vmatprep.mubr.f32.mxu0 0.0
    %3457 = vmatmul.mubr.f32.gmra.mxu0 %v3370
    %v3458 = vpop.f32.mrf.mxu0
    %v3459 = vadd.f32 0.0, %v3458
    %v3460 = vpop.f32.mrf.mxu0
    %3461 = vdwg.mxu0
    %v3464 = vcombine.high %v3454, %v3454
    %v3466 = vunpack.c.l.s4 1966171168
    %v3467 = vunpack.c.0.s8 %v3466
    %v3468 = vlaneseq
    %v3469 = vshrl.u32 %v3468, 7
    %v3470 = vsub.s32 %v3467, %v3469
    %v3471 = vrot.slane %v3454, %v3470
    %v3473 = vunpack.c.l.s4 1966171168
    %v3474 = vunpack.c.0.s8 %v3473
    %v3475 = vlaneseq
    %v3476 = vshrl.u32 %v3475, 7
    %v3477 = vsub.s32 %v3474, %v3476
    %v3478 = vrot.slane %v3464, %v3477
    %v3479 = vcombine.high %v3471, %v3471
    %v3480 = vcombine.high %v3478, %v3478
    %v3482 = vunpack.c.l.s4 1966171168
    %v3483 = vunpack.c.0.s8 %v3482
    %v3484 = vlaneseq
    %v3485 = vshrl.u32 %v3484, 7
    %v3486 = vsub.s32 %v3483, %v3485
    %v3487 = vrot.slane %v3471, %v3486
    %v3489 = vunpack.c.l.s4 1966171168
    %v3490 = vunpack.c.0.s8 %v3489
    %v3491 = vlaneseq
    %v3492 = vshrl.u32 %v3491, 7
    %v3493 = vsub.s32 %v3490, %v3492
    %v3494 = vrot.slane %v3478, %v3493
    %v3496 = vunpack.c.l.s4 1966171168
    %v3497 = vunpack.c.0.s8 %v3496
    %v3498 = vlaneseq
    %v3499 = vshrl.u32 %v3498, 7
    %v3500 = vsub.s32 %v3497, %v3499
    %v3501 = vrot.slane %v3479, %v3500
    %v3503 = vunpack.c.l.s4 1966171168
    %v3504 = vunpack.c.0.s8 %v3503
    %v3505 = vlaneseq
    %v3506 = vshrl.u32 %v3505, 7
    %v3507 = vsub.s32 %v3504, %v3506
    %v3508 = vrot.slane %v3480, %v3507
    %v3509 = vcombine.high %v3487, %v3487
    %v3510 = vcombine.high %v3494, %v3494
    %v3511 = vcombine.high %v3501, %v3501
    %v3512 = vcombine.high %v3508, %v3508
    %v3514 = vunpack.c.l.s4 1966171168
    %v3515 = vunpack.c.0.s8 %v3514
    %v3516 = vlaneseq
    %v3517 = vshrl.u32 %v3516, 7
    %v3518 = vsub.s32 %v3515, %v3517
    %v3519 = vrot.slane %v3459, %v3518
    %v3520 = vcombine.high %v3519, %v3519
    %v3522 = vunpack.c.l.s4 1966171168
    %v3523 = vunpack.c.0.s8 %v3522
    %v3524 = vlaneseq
    %v3525 = vshrl.u32 %v3524, 7
    %v3526 = vsub.s32 %v3523, %v3525
    %v3527 = vrot.slane %v3519, %v3526
    %v3529 = vunpack.c.l.s4 1966171168
    %v3530 = vunpack.c.0.s8 %v3529
    %v3531 = vlaneseq
    %v3532 = vshrl.u32 %v3531, 7
    %v3533 = vsub.s32 %v3530, %v3532
    %v3534 = vrot.slane %v3520, %v3533
    %v3545 = vadd.f32 %v2731, %v3487
    %v3546 = vadd.f32 %v2732, %v3501
    %v3547 = vadd.f32 %v2733, %v3509
    %v3548 = vadd.f32 %v2734, %v3511
    %v3549 = vadd.f32 %v2735, %v3494
    %v3550 = vadd.f32 %v2736, %v3508
    %v3551 = vadd.f32 %v2737, %v3510
    %v3552 = vadd.f32 %v2738, %v3512
    %v3553 = vadd.f32 %v2739, %v3527
    %v3554 = vadd.f32 %v2740, %v3534
    %v3555 = vlaneseq
    %v3556 = vshrl.u32 %v3555, 7
    %v3557 = vsub.s32 0, %v3556
    %v3558 = vrot.slane %v686, %v3557
    %v3560 = vcombine.high %v3558, %v3558
    %v3562 = vunpack.c.l.s4 1966171168
    %v3563 = vunpack.c.0.s8 %v3562
    %v3564 = vlaneseq
    %v3565 = vshrl.u32 %v3564, 7
    %v3566 = vsub.s32 %v3563, %v3565
    %v3567 = vrot.slane %v3558, %v3566
    %v3569 = vunpack.c.l.s4 1966171168
    %v3570 = vunpack.c.0.s8 %v3569
    %v3571 = vlaneseq
    %v3572 = vshrl.u32 %v3571, 7
    %v3573 = vsub.s32 %v3570, %v3572
    %v3574 = vrot.slane %v3560, %v3573
    %v3575 = vcombine.high %v3567, %v3567
    %v3576 = vcombine.high %v3574, %v3574
    %v3578 = vunpack.c.l.s4 1966171168
    %v3579 = vunpack.c.0.s8 %v3578
    %v3580 = vlaneseq
    %v3581 = vshrl.u32 %v3580, 7
    %v3582 = vsub.s32 %v3579, %v3581
    %v3583 = vrot.slane %v3567, %v3582
    %v3585 = vunpack.c.l.s4 1966171168
    %v3586 = vunpack.c.0.s8 %v3585
    %v3587 = vlaneseq
    %v3588 = vshrl.u32 %v3587, 7
    %v3589 = vsub.s32 %v3586, %v3588
    %v3590 = vrot.slane %v3574, %v3589
    %v3592 = vunpack.c.l.s4 1966171168
    %v3593 = vunpack.c.0.s8 %v3592
    %v3594 = vlaneseq
    %v3595 = vshrl.u32 %v3594, 7
    %v3596 = vsub.s32 %v3593, %v3595
    %v3597 = vrot.slane %v3575, %v3596
    %v3599 = vunpack.c.l.s4 1966171168
    %v3600 = vunpack.c.0.s8 %v3599
    %v3601 = vlaneseq
    %v3602 = vshrl.u32 %v3601, 7
    %v3603 = vsub.s32 %v3600, %v3602
    %v3604 = vrot.slane %v3576, %v3603
    %v3605 = vcombine.high %v3583, %v3583
    %v3606 = vcombine.high %v3590, %v3590
    %v3607 = vcombine.high %v3597, %v3597
    %v3608 = vcombine.high %v3604, %v3604
    %v3617 = vadd.f32 %v3545, %v3583
    %v3618 = vadd.f32 %v3546, %v3597
    %v3619 = vadd.f32 %v3547, %v3605
    %v3620 = vadd.f32 %v3548, %v3607
    %v3621 = vadd.f32 %v3549, %v3590
    %v3622 = vadd.f32 %v3550, %v3604
    %v3623 = vadd.f32 %v3551, %v3606
    %v3624 = vadd.f32 %v3552, %v3608
    %v3625 = vadd.f32 %v3553, %v3583
    %v3626 = vadd.f32 %v3554, %v3597
    %v3627 = vlaneseq
    %v3628 = vshrl.u32 %v3627, 7
    %v3629 = vsub.s32 0, %v3628
    %v3630 = vrot.slane %v687, %v3629
    %v3632 = vcombine.high %v3630, %v3630
    %v3634 = vunpack.c.l.s4 1966171168
    %v3635 = vunpack.c.0.s8 %v3634
    %v3636 = vlaneseq
    %v3637 = vshrl.u32 %v3636, 7
    %v3638 = vsub.s32 %v3635, %v3637
    %v3639 = vrot.slane %v3630, %v3638
    %v3641 = vunpack.c.l.s4 1966171168
    %v3642 = vunpack.c.0.s8 %v3641
    %v3643 = vlaneseq
    %v3644 = vshrl.u32 %v3643, 7
    %v3645 = vsub.s32 %v3642, %v3644
    %v3646 = vrot.slane %v3632, %v3645
    %v3647 = vcombine.high %v3639, %v3639
    %v3648 = vcombine.high %v3646, %v3646
    %v3650 = vunpack.c.l.s4 1966171168
    %v3651 = vunpack.c.0.s8 %v3650
    %v3652 = vlaneseq
    %v3653 = vshrl.u32 %v3652, 7
    %v3654 = vsub.s32 %v3651, %v3653
    %v3655 = vrot.slane %v3639, %v3654
    %v3657 = vunpack.c.l.s4 1966171168
    %v3658 = vunpack.c.0.s8 %v3657
    %v3659 = vlaneseq
    %v3660 = vshrl.u32 %v3659, 7
    %v3661 = vsub.s32 %v3658, %v3660
    %v3662 = vrot.slane %v3646, %v3661
    %v3664 = vunpack.c.l.s4 1966171168
    %v3665 = vunpack.c.0.s8 %v3664
    %v3666 = vlaneseq
    %v3667 = vshrl.u32 %v3666, 7
    %v3668 = vsub.s32 %v3665, %v3667
    %v3669 = vrot.slane %v3647, %v3668
    %v3671 = vunpack.c.l.s4 1966171168
    %v3672 = vunpack.c.0.s8 %v3671
    %v3673 = vlaneseq
    %v3674 = vshrl.u32 %v3673, 7
    %v3675 = vsub.s32 %v3672, %v3674
    %v3676 = vrot.slane %v3648, %v3675
    %v3677 = vcombine.high %v3655, %v3655
    %v3678 = vcombine.high %v3662, %v3662
    %v3679 = vcombine.high %v3669, %v3669
    %v3680 = vcombine.high %v3676, %v3676
    %v3689 = vmul.f32 %v3617, %v3655
    %v3690 = vmul.f32 %v3618, %v3669
    %v3691 = vmul.f32 %v3619, %v3677
    %v3692 = vmul.f32 %v3620, %v3679
    %v3693 = vmul.f32 %v3621, %v3662
    %v3694 = vmul.f32 %v3622, %v3676
    %v3695 = vmul.f32 %v3623, %v3678
    %v3696 = vmul.f32 %v3624, %v3680
    %v3697 = vmul.f32 %v3625, %v3655
    %v3698 = vmul.f32 %v3626, %v3669
    %v3699 = vlaneseq
    %v3700 = vshrl.u32 %v3699, 7
    %v3701 = vsub.s32 0, %v3700
    %v3702 = vrot.slane %v688, %v3701
    %v3704 = vcombine.high %v3702, %v3702
    %v3706 = vunpack.c.l.s4 1966171168
    %v3707 = vunpack.c.0.s8 %v3706
    %v3708 = vlaneseq
    %v3709 = vshrl.u32 %v3708, 7
    %v3710 = vsub.s32 %v3707, %v3709
    %v3711 = vrot.slane %v3702, %v3710
    %v3713 = vunpack.c.l.s4 1966171168
    %v3714 = vunpack.c.0.s8 %v3713
    %v3715 = vlaneseq
    %v3716 = vshrl.u32 %v3715, 7
    %v3717 = vsub.s32 %v3714, %v3716
    %v3718 = vrot.slane %v3704, %v3717
    %v3719 = vcombine.high %v3711, %v3711
    %v3720 = vcombine.high %v3718, %v3718
    %v3722 = vunpack.c.l.s4 1966171168
    %v3723 = vunpack.c.0.s8 %v3722
    %v3724 = vlaneseq
    %v3725 = vshrl.u32 %v3724, 7
    %v3726 = vsub.s32 %v3723, %v3725
    %v3727 = vrot.slane %v3711, %v3726
    %v3729 = vunpack.c.l.s4 1966171168
    %v3730 = vunpack.c.0.s8 %v3729
    %v3731 = vlaneseq
    %v3732 = vshrl.u32 %v3731, 7
    %v3733 = vsub.s32 %v3730, %v3732
    %v3734 = vrot.slane %v3718, %v3733
    %v3736 = vunpack.c.l.s4 1966171168
    %v3737 = vunpack.c.0.s8 %v3736
    %v3738 = vlaneseq
    %v3739 = vshrl.u32 %v3738, 7
    %v3740 = vsub.s32 %v3737, %v3739
    %v3741 = vrot.slane %v3719, %v3740
    %v3743 = vunpack.c.l.s4 1966171168
    %v3744 = vunpack.c.0.s8 %v3743
    %v3745 = vlaneseq
    %v3746 = vshrl.u32 %v3745, 7
    %v3747 = vsub.s32 %v3744, %v3746
    %v3748 = vrot.slane %v3720, %v3747
    %v3749 = vcombine.high %v3727, %v3727
    %v3750 = vcombine.high %v3734, %v3734
    %v3751 = vcombine.high %v3741, %v3741
    %v3752 = vcombine.high %v3748, %v3748
    %v3761 = vadd.f32 %v3689, %v3727
    %v3762 = vadd.f32 %v3690, %v3741
    %v3763 = vadd.f32 %v3691, %v3749
    %v3764 = vadd.f32 %v3692, %v3751
    %v3765 = vadd.f32 %v3693, %v3734
    %v3766 = vadd.f32 %v3694, %v3748
    %v3767 = vadd.f32 %v3695, %v3750
    %v3768 = vadd.f32 %v3696, %v3752
    %v3769 = vadd.f32 %v3697, %v3727
    %v3770 = vadd.f32 %v3698, %v3741
    %v3771 = vld [vmem:[%s1 + $0xf] sm:$0x1]
    %v3772 = vld [vmem:[%s1 + $0x10] sm:$0x1]
    %v3773 = vld [vmem:[%s1 + $0x11] sm:$0x1]
    %v3774 = vld [vmem:[%s1 + $0x12] sm:$0x1]
    %v3775 = vld [vmem:[%s1 + $0x13] sm:$0x1]
    %v3776 = vld [vmem:[%s1 + $0x14] sm:$0x1]
    %v3777 = vld [vmem:[%s1 + $0x15] sm:$0x1]
    %v3778 = vld [vmem:[%s1 + $0x16] sm:$0x1]
    %v3789 = vcombine.low %v3761, %v3762
    %v3790 = vcombine.low %v3763, %v3764
    %v3791 = vcombine.low %v3765, %v3766
    %v3792 = vcombine.low %v3767, %v3768
    %v3794 = vunpack.c.l.s4 1966171168
    %v3795 = vunpack.c.0.s8 %v3794
    %v3796 = vlaneseq
    %v3797 = vshrl.u32 %v3796, 7
    %v3798 = vsub.s32 %v3795, %v3797
    %v3799 = vrot.slane %v3789, %v3798
    %v3801 = vunpack.c.l.s4 1966171168
    %v3802 = vunpack.c.0.s8 %v3801
    %v3803 = vlaneseq
    %v3804 = vshrl.u32 %v3803, 7
    %v3805 = vsub.s32 %v3802, %v3804
    %v3806 = vrot.slane %v3790, %v3805
    %v3808 = vunpack.c.l.s4 1966171168
    %v3809 = vunpack.c.0.s8 %v3808
    %v3810 = vlaneseq
    %v3811 = vshrl.u32 %v3810, 7
    %v3812 = vsub.s32 %v3809, %v3811
    %v3813 = vrot.slane %v3791, %v3812
    %v3815 = vunpack.c.l.s4 1966171168
    %v3816 = vunpack.c.0.s8 %v3815
    %v3817 = vlaneseq
    %v3818 = vshrl.u32 %v3817, 7
    %v3819 = vsub.s32 %v3816, %v3818
    %v3820 = vrot.slane %v3792, %v3819
    %v3821 = vcombine.low %v3799, %v3806
    %v3822 = vcombine.low %v3813, %v3820
    %v3824 = vunpack.c.l.s4 1966171168
    %v3825 = vunpack.c.0.s8 %v3824
    %v3826 = vlaneseq
    %v3827 = vshrl.u32 %v3826, 7
    %v3828 = vsub.s32 %v3825, %v3827
    %v3829 = vrot.slane %v3821, %v3828
    %v3831 = vunpack.c.l.s4 1966171168
    %v3832 = vunpack.c.0.s8 %v3831
    %v3833 = vlaneseq
    %v3834 = vshrl.u32 %v3833, 7
    %v3835 = vsub.s32 %v3832, %v3834
    %v3836 = vrot.slane %v3822, %v3835
    %v3837 = vcombine.low %v3829, %v3836
    %v3838 = vcombine.low %v3769, %v3770
    %v3840 = vunpack.c.l.s4 1966171168
    %v3841 = vunpack.c.0.s8 %v3840
    %v3842 = vlaneseq
    %v3843 = vshrl.u32 %v3842, 7
    %v3844 = vsub.s32 %v3841, %v3843
    %v3845 = vrot.slane %v3838, %v3844
    %v3847 = vunpack.c.l.s4 1966171168
    %v3848 = vunpack.c.0.s8 %v3847
    %v3849 = vlaneseq
    %v3850 = vshrl.u32 %v3849, 7
    %v3851 = vsub.s32 %v3848, %v3850
    %v3852 = vrot.slane %v3845, %v3851
    %v3855 = vsel %vm298, %v3837, 0.0
    %3856 = vadd.xlane.f32.xlu0 %v3855
    %v3857 = vpop.xlane.xlu0 %3856
    %v3858 = vsel %vm302, %v3852, 0.0
    %3859 = vadd.xlane.f32.xlu0 %v3858
    %v3860 = vpop.xlane.xlu0 %3859
    %v3861 = vmul.f32 %v3857, %v306
    %v3862 = vmul.f32 %v3860, %v306
    %v3863 = vmul.f32 %v3761, %v3761
    %v3864 = vmul.f32 %v3762, %v3762
    %v3865 = vmul.f32 %v3763, %v3763
    %v3866 = vmul.f32 %v3764, %v3764
    %v3867 = vmul.f32 %v3765, %v3765
    %v3868 = vmul.f32 %v3766, %v3766
    %v3869 = vmul.f32 %v3767, %v3767
    %v3870 = vmul.f32 %v3768, %v3768
    %v3871 = vmul.f32 %v3769, %v3769
    %v3872 = vmul.f32 %v3770, %v3770
    %v3883 = vcombine.low %v3863, %v3864
    %v3884 = vcombine.low %v3865, %v3866
    %v3885 = vcombine.low %v3867, %v3868
    %v3886 = vcombine.low %v3869, %v3870
    %v3888 = vunpack.c.l.s4 1966171168
    %v3889 = vunpack.c.0.s8 %v3888
    %v3890 = vlaneseq
    %v3891 = vshrl.u32 %v3890, 7
    %v3892 = vsub.s32 %v3889, %v3891
    %v3893 = vrot.slane %v3883, %v3892
    %v3895 = vunpack.c.l.s4 1966171168
    %v3896 = vunpack.c.0.s8 %v3895
    %v3897 = vlaneseq
    %v3898 = vshrl.u32 %v3897, 7
    %v3899 = vsub.s32 %v3896, %v3898
    %v3900 = vrot.slane %v3884, %v3899
    %v3902 = vunpack.c.l.s4 1966171168
    %v3903 = vunpack.c.0.s8 %v3902
    %v3904 = vlaneseq
    %v3905 = vshrl.u32 %v3904, 7
    %v3906 = vsub.s32 %v3903, %v3905
    %v3907 = vrot.slane %v3885, %v3906
    %v3909 = vunpack.c.l.s4 1966171168
    %v3910 = vunpack.c.0.s8 %v3909
    %v3911 = vlaneseq
    %v3912 = vshrl.u32 %v3911, 7
    %v3913 = vsub.s32 %v3910, %v3912
    %v3914 = vrot.slane %v3886, %v3913
    %v3915 = vcombine.low %v3893, %v3900
    %v3916 = vcombine.low %v3907, %v3914
    %v3918 = vunpack.c.l.s4 1966171168
    %v3919 = vunpack.c.0.s8 %v3918
    %v3920 = vlaneseq
    %v3921 = vshrl.u32 %v3920, 7
    %v3922 = vsub.s32 %v3919, %v3921
    %v3923 = vrot.slane %v3915, %v3922
    %v3925 = vunpack.c.l.s4 1966171168
    %v3926 = vunpack.c.0.s8 %v3925
    %v3927 = vlaneseq
    %v3928 = vshrl.u32 %v3927, 7
    %v3929 = vsub.s32 %v3926, %v3928
    %v3930 = vrot.slane %v3916, %v3929
    %v3931 = vcombine.low %v3923, %v3930
    %v3932 = vcombine.low %v3871, %v3872
    %v3934 = vunpack.c.l.s4 1966171168
    %v3935 = vunpack.c.0.s8 %v3934
    %v3936 = vlaneseq
    %v3937 = vshrl.u32 %v3936, 7
    %v3938 = vsub.s32 %v3935, %v3937
    %v3939 = vrot.slane %v3932, %v3938
    %v3941 = vunpack.c.l.s4 1966171168
    %v3942 = vunpack.c.0.s8 %v3941
    %v3943 = vlaneseq
    %v3944 = vshrl.u32 %v3943, 7
    %v3945 = vsub.s32 %v3942, %v3944
    %v3946 = vrot.slane %v3939, %v3945
    %v3949 = vsel %vm298, %v3931, 0.0
    %3950 = vadd.xlane.f32.xlu0 %v3949
    %v3951 = vpop.xlane.xlu0 %3950
    %v3952 = vsel %vm302, %v3946, 0.0
    %3953 = vadd.xlane.f32.xlu0 %v3952
    %v3954 = vpop.xlane.xlu0 %3953
    %v3955 = vmul.f32 %v3951, %v306
    %v3956 = vmul.f32 %v3954, %v306
    %v3957 = vmul.f32 %v3861, %v3861
    %v3958 = vmul.f32 %v3862, %v3862
    %v3959 = vsub.f32 %v3955, %v3957
    %v3960 = vsub.f32 %v3956, %v3958
    %v3961 = vmax.f32 %v3959, 0.0
    %v3962 = vmax.f32 %v3960, 0.0
    %v3965 = vlaneseq
    %v3966 = vshrl.u32 %v3965, 7
    %v3967 = vsub.s32 0, %v3966
    %v3968 = vrot.slane %v3861, %v3967
    %v3969 = vlaneseq
    %v3970 = vshrl.u32 %v3969, 7
    %v3971 = vsub.s32 1, %v3970
    %v3972 = vrot.slane %v3861, %v3971
    %v3973 = vlaneseq
    %v3974 = vshrl.u32 %v3973, 7
    %v3975 = vsub.s32 2, %v3974
    %v3976 = vrot.slane %v3861, %v3975
    %v3977 = vlaneseq
    %v3978 = vshrl.u32 %v3977, 7
    %v3979 = vsub.s32 3, %v3978
    %v3980 = vrot.slane %v3861, %v3979
    %v3981 = vlaneseq
    %v3982 = vshrl.u32 %v3981, 7
    %v3983 = vsub.s32 4, %v3982
    %v3984 = vrot.slane %v3861, %v3983
    %v3985 = vlaneseq
    %v3986 = vshrl.u32 %v3985, 7
    %v3987 = vsub.s32 5, %v3986
    %v3988 = vrot.slane %v3861, %v3987
    %v3989 = vlaneseq
    %v3990 = vshrl.u32 %v3989, 7
    %v3991 = vsub.s32 6, %v3990
    %v3992 = vrot.slane %v3861, %v3991
    %v3993 = vlaneseq
    %v3994 = vshrl.u32 %v3993, 7
    %v3995 = vsub.s32 7, %v3994
    %v3996 = vrot.slane %v3861, %v3995
    %v3997 = vlaneseq
    %v3998 = vshrl.u32 %v3997, 7
    %v3999 = vsub.s32 0, %v3998
    %v4000 = vrot.slane %v3862, %v3999
    %v4001 = vlaneseq
    %v4002 = vshrl.u32 %v4001, 7
    %v4003 = vsub.s32 1, %v4002
    %v4004 = vrot.slane %v3862, %v4003
    %v4015 = vsub.f32 %v3761, %v3968
    %v4016 = vsub.f32 %v3762, %v3972
    %v4017 = vsub.f32 %v3763, %v3976
    %v4018 = vsub.f32 %v3764, %v3980
    %v4019 = vsub.f32 %v3765, %v3984
    %v4020 = vsub.f32 %v3766, %v3988
    %v4021 = vsub.f32 %v3767, %v3992
    %v4022 = vsub.f32 %v3768, %v3996
    %v4023 = vsub.f32 %v3769, %v4000
    %v4024 = vsub.f32 %v3770, %v4004
    %v4025 = vadd.f32 %v3961, 1e-05
    %v4026 = vadd.f32 %v3962, 1e-05
    %v4027 = vrsqrt.pop %v4025
    %v4028 = vrsqrt.pop %v4026
    %v4031 = vlaneseq
    %v4032 = vshrl.u32 %v4031, 7
    %v4033 = vsub.s32 0, %v4032
    %v4034 = vrot.slane %v4027, %v4033
    %v4035 = vlaneseq
    %v4036 = vshrl.u32 %v4035, 7
    %v4037 = vsub.s32 1, %v4036
    %v4038 = vrot.slane %v4027, %v4037
    %v4039 = vlaneseq
    %v4040 = vshrl.u32 %v4039, 7
    %v4041 = vsub.s32 2, %v4040
    %v4042 = vrot.slane %v4027, %v4041
    %v4043 = vlaneseq
    %v4044 = vshrl.u32 %v4043, 7
    %v4045 = vsub.s32 3, %v4044
    %v4046 = vrot.slane %v4027, %v4045
    %v4047 = vlaneseq
    %v4048 = vshrl.u32 %v4047, 7
    %v4049 = vsub.s32 4, %v4048
    %v4050 = vrot.slane %v4027, %v4049
    %v4051 = vlaneseq
    %v4052 = vshrl.u32 %v4051, 7
    %v4053 = vsub.s32 5, %v4052
    %v4054 = vrot.slane %v4027, %v4053
    %v4055 = vlaneseq
    %v4056 = vshrl.u32 %v4055, 7
    %v4057 = vsub.s32 6, %v4056
    %v4058 = vrot.slane %v4027, %v4057
    %v4059 = vlaneseq
    %v4060 = vshrl.u32 %v4059, 7
    %v4061 = vsub.s32 7, %v4060
    %v4062 = vrot.slane %v4027, %v4061
    %v4063 = vlaneseq
    %v4064 = vshrl.u32 %v4063, 7
    %v4065 = vsub.s32 0, %v4064
    %v4066 = vrot.slane %v4028, %v4065
    %v4067 = vlaneseq
    %v4068 = vshrl.u32 %v4067, 7
    %v4069 = vsub.s32 1, %v4068
    %v4070 = vrot.slane %v4028, %v4069
    %v4081 = vmul.f32 %v4015, %v4034
    %v4082 = vmul.f32 %v4016, %v4038
    %v4083 = vmul.f32 %v4017, %v4042
    %v4084 = vmul.f32 %v4018, %v4046
    %v4085 = vmul.f32 %v4019, %v4050
    %v4086 = vmul.f32 %v4020, %v4054
    %v4087 = vmul.f32 %v4021, %v4058
    %v4088 = vmul.f32 %v4022, %v4062
    %v4089 = vmul.f32 %v4023, %v4066
    %v4090 = vmul.f32 %v4024, %v4070
    %v4091 = vlaneseq
    %v4092 = vshrl.u32 %v4091, 7
    %v4093 = vsub.s32 0, %v4092
    %v4094 = vrot.slane %v3771, %v4093
    %v4096 = vcombine.high %v4094, %v4094
    %v4098 = vunpack.c.l.s4 1966171168
    %v4099 = vunpack.c.0.s8 %v4098
    %v4100 = vlaneseq
    %v4101 = vshrl.u32 %v4100, 7
    %v4102 = vsub.s32 %v4099, %v4101
    %v4103 = vrot.slane %v4094, %v4102
    %v4105 = vunpack.c.l.s4 1966171168
    %v4106 = vunpack.c.0.s8 %v4105
    %v4107 = vlaneseq
    %v4108 = vshrl.u32 %v4107, 7
    %v4109 = vsub.s32 %v4106, %v4108
    %v4110 = vrot.slane %v4096, %v4109
    %v4111 = vcombine.high %v4103, %v4103
    %v4112 = vcombine.high %v4110, %v4110
    %v4114 = vunpack.c.l.s4 1966171168
    %v4115 = vunpack.c.0.s8 %v4114
    %v4116 = vlaneseq
    %v4117 = vshrl.u32 %v4116, 7
    %v4118 = vsub.s32 %v4115, %v4117
    %v4119 = vrot.slane %v4103, %v4118
    %v4121 = vunpack.c.l.s4 1966171168
    %v4122 = vunpack.c.0.s8 %v4121
    %v4123 = vlaneseq
    %v4124 = vshrl.u32 %v4123, 7
    %v4125 = vsub.s32 %v4122, %v4124
    %v4126 = vrot.slane %v4110, %v4125
    %v4128 = vunpack.c.l.s4 1966171168
    %v4129 = vunpack.c.0.s8 %v4128
    %v4130 = vlaneseq
    %v4131 = vshrl.u32 %v4130, 7
    %v4132 = vsub.s32 %v4129, %v4131
    %v4133 = vrot.slane %v4111, %v4132
    %v4135 = vunpack.c.l.s4 1966171168
    %v4136 = vunpack.c.0.s8 %v4135
    %v4137 = vlaneseq
    %v4138 = vshrl.u32 %v4137, 7
    %v4139 = vsub.s32 %v4136, %v4138
    %v4140 = vrot.slane %v4112, %v4139
    %v4141 = vcombine.high %v4119, %v4119
    %v4142 = vcombine.high %v4126, %v4126
    %v4143 = vcombine.high %v4133, %v4133
    %v4144 = vcombine.high %v4140, %v4140
    %v4153 = vmul.f32 %v4081, %v4119
    %v4154 = vmul.f32 %v4082, %v4133
    %v4155 = vmul.f32 %v4083, %v4141
    %v4156 = vmul.f32 %v4084, %v4143
    %v4157 = vmul.f32 %v4085, %v4126
    %v4158 = vmul.f32 %v4086, %v4140
    %v4159 = vmul.f32 %v4087, %v4142
    %v4160 = vmul.f32 %v4088, %v4144
    %v4161 = vmul.f32 %v4089, %v4119
    %v4162 = vmul.f32 %v4090, %v4133
    %v4163 = vlaneseq
    %v4164 = vshrl.u32 %v4163, 7
    %v4165 = vsub.s32 0, %v4164
    %v4166 = vrot.slane %v3772, %v4165
    %v4168 = vcombine.high %v4166, %v4166
    %v4170 = vunpack.c.l.s4 1966171168
    %v4171 = vunpack.c.0.s8 %v4170
    %v4172 = vlaneseq
    %v4173 = vshrl.u32 %v4172, 7
    %v4174 = vsub.s32 %v4171, %v4173
    %v4175 = vrot.slane %v4166, %v4174
    %v4177 = vunpack.c.l.s4 1966171168
    %v4178 = vunpack.c.0.s8 %v4177
    %v4179 = vlaneseq
    %v4180 = vshrl.u32 %v4179, 7
    %v4181 = vsub.s32 %v4178, %v4180
    %v4182 = vrot.slane %v4168, %v4181
    %v4183 = vcombine.high %v4175, %v4175
    %v4184 = vcombine.high %v4182, %v4182
    %v4186 = vunpack.c.l.s4 1966171168
    %v4187 = vunpack.c.0.s8 %v4186
    %v4188 = vlaneseq
    %v4189 = vshrl.u32 %v4188, 7
    %v4190 = vsub.s32 %v4187, %v4189
    %v4191 = vrot.slane %v4175, %v4190
    %v4193 = vunpack.c.l.s4 1966171168
    %v4194 = vunpack.c.0.s8 %v4193
    %v4195 = vlaneseq
    %v4196 = vshrl.u32 %v4195, 7
    %v4197 = vsub.s32 %v4194, %v4196
    %v4198 = vrot.slane %v4182, %v4197
    %v4200 = vunpack.c.l.s4 1966171168
    %v4201 = vunpack.c.0.s8 %v4200
    %v4202 = vlaneseq
    %v4203 = vshrl.u32 %v4202, 7
    %v4204 = vsub.s32 %v4201, %v4203
    %v4205 = vrot.slane %v4183, %v4204
    %v4207 = vunpack.c.l.s4 1966171168
    %v4208 = vunpack.c.0.s8 %v4207
    %v4209 = vlaneseq
    %v4210 = vshrl.u32 %v4209, 7
    %v4211 = vsub.s32 %v4208, %v4210
    %v4212 = vrot.slane %v4184, %v4211
    %v4213 = vcombine.high %v4191, %v4191
    %v4214 = vcombine.high %v4198, %v4198
    %v4215 = vcombine.high %v4205, %v4205
    %v4216 = vcombine.high %v4212, %v4212
    %v4225 = vadd.f32 %v4153, %v4191
    %v4226 = vadd.f32 %v4154, %v4205
    %v4227 = vadd.f32 %v4155, %v4213
    %v4228 = vadd.f32 %v4156, %v4215
    %v4229 = vadd.f32 %v4157, %v4198
    %v4230 = vadd.f32 %v4158, %v4212
    %v4231 = vadd.f32 %v4159, %v4214
    %v4232 = vadd.f32 %v4160, %v4216
    %v4233 = vadd.f32 %v4161, %v4191
    %v4234 = vadd.f32 %v4162, %v4205
    %s4235 = scalar_lea.vmem %s3, 64
    %v4236 = vld [vmem:[%s4235] sm:$0xff]
    %v4237 = vld [vmem:[%s4235 + $0x8] sm:$0xff]
    %v4238 = vld [vmem:[%s4235 + $0x10] sm:$0xff]
    %v4239 = vld [vmem:[%s4235 + $0x18] sm:$0xff]
    %v4240 = vld [vmem:[%s4235 + $0x20] sm:$0xff]
    %v4241 = vld [vmem:[%s4235 + $0x28] sm:$0xff]
    %v4242 = vld [vmem:[%s4235 + $0x30] sm:$0xff]
    %v4243 = vld [vmem:[%s4235 + $0x38] sm:$0xff]
    %v4244 = vld [vmem:[%s4 + $0x1] sm:$0x1]
    %v4245 = vlaneseq
    %v4246 = vshrl.u32 %v4245, 7
    %v4247 = vsub.s32 0, %v4246
    %v4248 = vrot.slane %v4244, %v4247
    %v4259 = vcombine.low %v4225, %v4226
    %v4260 = vcombine.low %v4227, %v4228
    %v4261 = vcombine.low %v4229, %v4230
    %v4262 = vcombine.low %v4231, %v4232
    %v4264 = vunpack.c.l.s4 1966171168
    %v4265 = vunpack.c.0.s8 %v4264
    %v4266 = vlaneseq
    %v4267 = vshrl.u32 %v4266, 7
    %v4268 = vsub.s32 %v4265, %v4267
    %v4269 = vrot.slane %v4259, %v4268
    %v4271 = vunpack.c.l.s4 1966171168
    %v4272 = vunpack.c.0.s8 %v4271
    %v4273 = vlaneseq
    %v4274 = vshrl.u32 %v4273, 7
    %v4275 = vsub.s32 %v4272, %v4274
    %v4276 = vrot.slane %v4260, %v4275
    %v4278 = vunpack.c.l.s4 1966171168
    %v4279 = vunpack.c.0.s8 %v4278
    %v4280 = vlaneseq
    %v4281 = vshrl.u32 %v4280, 7
    %v4282 = vsub.s32 %v4279, %v4281
    %v4283 = vrot.slane %v4261, %v4282
    %v4285 = vunpack.c.l.s4 1966171168
    %v4286 = vunpack.c.0.s8 %v4285
    %v4287 = vlaneseq
    %v4288 = vshrl.u32 %v4287, 7
    %v4289 = vsub.s32 %v4286, %v4288
    %v4290 = vrot.slane %v4262, %v4289
    %v4291 = vcombine.low %v4269, %v4276
    %v4292 = vcombine.low %v4283, %v4290
    %v4294 = vunpack.c.l.s4 1966171168
    %v4295 = vunpack.c.0.s8 %v4294
    %v4296 = vlaneseq
    %v4297 = vshrl.u32 %v4296, 7
    %v4298 = vsub.s32 %v4295, %v4297
    %v4299 = vrot.slane %v4291, %v4298
    %v4301 = vunpack.c.l.s4 1966171168
    %v4302 = vunpack.c.0.s8 %v4301
    %v4303 = vlaneseq
    %v4304 = vshrl.u32 %v4303, 7
    %v4305 = vsub.s32 %v4302, %v4304
    %v4306 = vrot.slane %v4292, %v4305
    %v4307 = vcombine.low %v4299, %v4306
    %v4308 = vcombine.low %v4233, %v4234
    %v4310 = vunpack.c.l.s4 1966171168
    %v4311 = vunpack.c.0.s8 %v4310
    %v4312 = vlaneseq
    %v4313 = vshrl.u32 %v4312, 7
    %v4314 = vsub.s32 %v4311, %v4313
    %v4315 = vrot.slane %v4308, %v4314
    %v4317 = vunpack.c.l.s4 1966171168
    %v4318 = vunpack.c.0.s8 %v4317
    %v4319 = vlaneseq
    %v4320 = vshrl.u32 %v4319, 7
    %v4321 = vsub.s32 %v4318, %v4320
    %v4322 = vrot.slane %v4315, %v4321
    %v4323 = vsel %vm298, %v4307, 0
    %v4325 = vsel %vm298, %v4322, 0
    %4327 = vmatprep.subr.mxu0 0.0
    %4328 = vmatpush1.msra.mxu0 0.0
    %4329 = vmatprep.subr.mxu0 0.0
    %4330 = vmatpush1.msra.mxu0 0.0
    %4331 = vmatprep.subr.mxu0 0.0
    %4332 = vmatpush1.msra.mxu0 0.0
    %4333 = vmatprep.subr.mxu0 0.0
    %4334 = vmatpush1.msra.mxu0 0.0
    %4335 = vmatprep.subr.mxu0 0.0
    %4336 = vmatpush1.msra.mxu0 0.0
    %4337 = vmatprep.subr.mxu0 0.0
    %4338 = vmatpush1.msra.mxu0 0.0
    %4339 = vmatprep.subr.mxu0 0.0
    %4340 = vmatpush1.msra.mxu0 0.0
    %4341 = vmatprep.subr.mxu0 0.0
    %4342 = vmatpush1.msra.mxu0 0.0
    %4343 = vmatprep.subr.mxu0 0.0
    %4344 = vmatpush1.msra.mxu0 0.0
    %4345 = vmatprep.subr.mxu0 0.0
    %4346 = vmatpush1.msra.mxu0 0.0
    %4347 = vmatprep.subr.mxu0 0.0
    %4348 = vmatpush1.msra.mxu0 0.0
    %4349 = vmatprep.subr.mxu0 0.0
    %4350 = vmatpush1.msra.mxu0 0.0
    %4351 = vmatprep.subr.mxu0 0.0
    %4352 = vmatpush1.msra.mxu0 %v4243
    %4353 = vmatprep.subr.mxu0 0.0
    %4354 = vmatpush1.msra.mxu0 %v4241
    %4355 = vmatprep.subr.mxu0 0.0
    %4356 = vmatpush1.msra.mxu0 %v4239
    %4357 = vmatprep.subr.mxu0 0.0
    %4358 = vmatpush1.msra.mxu0 %v4237
    %4359 = vmatprep.subr.mxu0 0.0
    %4360 = vmatpush2.msra.mxu0 0.0
    %4361 = vmatprep.subr.mxu0 0.0
    %4362 = vmatpush2.msra.mxu0 0.0
    %4363 = vmatprep.subr.mxu0 0.0
    %4364 = vmatpush2.msra.mxu0 0.0
    %4365 = vmatprep.subr.mxu0 0.0
    %4366 = vmatpush2.msra.mxu0 0.0
    %4367 = vmatprep.subr.mxu0 0.0
    %4368 = vmatpush2.msra.mxu0 0.0
    %4369 = vmatprep.subr.mxu0 0.0
    %4370 = vmatpush2.msra.mxu0 0.0
    %4371 = vmatprep.subr.mxu0 0.0
    %4372 = vmatpush2.msra.mxu0 0.0
    %4373 = vmatprep.subr.mxu0 0.0
    %4374 = vmatpush2.msra.mxu0 0.0
    %4375 = vmatprep.subr.mxu0 0.0
    %4376 = vmatpush2.msra.mxu0 0.0
    %4377 = vmatprep.subr.mxu0 0.0
    %4378 = vmatpush2.msra.mxu0 0.0
    %4379 = vmatprep.subr.mxu0 0.0
    %4380 = vmatpush2.msra.mxu0 0.0
    %4381 = vmatprep.subr.mxu0 0.0
    %4382 = vmatpush2.msra.mxu0 0.0
    %4383 = vmatprep.subr.mxu0 0.0
    %4384 = vmatpush2.msra.mxu0 0.0
    %4385 = vmatprep.subr.mxu0 0.0
    %4386 = vmatpush2.msra.mxu0 0.0
    %4387 = vmatprep.subr.mxu0 0.0
    %4388 = vmatpush2.msra.mxu0 0.0
    %4389 = vmatprep.subr.mxu0 0.0
    %4390 = vmatpush2.msra.mxu0 0.0
    %4391 = vmatprep.mubr.f32.mxu0 0.0
    %4392 = vmatmul.mubr.f32.gmra.mxu0 %v4323
    %v4393 = vpop.f32.mrf.mxu0
    %v4394 = vadd.f32 %v4248, %v4393
    %v4395 = vpop.f32.mrf.mxu0
    %4396 = vmatprep.mubr.f32.mxu0 0.0
    %4397 = vmatmul.mubr.f32.gmra.mxu0 %v4325
    %v4398 = vpop.f32.mrf.mxu0
    %v4399 = vadd.f32 %v4248, %v4398
    %v4400 = vpop.f32.mrf.mxu0
    %4401 = vdwg.mxu0
    %v4404 = vcombine.high %v4394, %v4394
    %v4406 = vunpack.c.l.s4 1966171168
    %v4407 = vunpack.c.0.s8 %v4406
    %v4408 = vlaneseq
    %v4409 = vshrl.u32 %v4408, 7
    %v4410 = vsub.s32 %v4407, %v4409
    %v4411 = vrot.slane %v4394, %v4410
    %v4413 = vunpack.c.l.s4 1966171168
    %v4414 = vunpack.c.0.s8 %v4413
    %v4415 = vlaneseq
    %v4416 = vshrl.u32 %v4415, 7
    %v4417 = vsub.s32 %v4414, %v4416
    %v4418 = vrot.slane %v4404, %v4417
    %v4419 = vcombine.high %v4411, %v4411
    %v4420 = vcombine.high %v4418, %v4418
    %v4422 = vunpack.c.l.s4 1966171168
    %v4423 = vunpack.c.0.s8 %v4422
    %v4424 = vlaneseq
    %v4425 = vshrl.u32 %v4424, 7
    %v4426 = vsub.s32 %v4423, %v4425
    %v4427 = vrot.slane %v4411, %v4426
    %v4429 = vunpack.c.l.s4 1966171168
    %v4430 = vunpack.c.0.s8 %v4429
    %v4431 = vlaneseq
    %v4432 = vshrl.u32 %v4431, 7
    %v4433 = vsub.s32 %v4430, %v4432
    %v4434 = vrot.slane %v4418, %v4433
    %v4436 = vunpack.c.l.s4 1966171168
    %v4437 = vunpack.c.0.s8 %v4436
    %v4438 = vlaneseq
    %v4439 = vshrl.u32 %v4438, 7
    %v4440 = vsub.s32 %v4437, %v4439
    %v4441 = vrot.slane %v4419, %v4440
    %v4443 = vunpack.c.l.s4 1966171168
    %v4444 = vunpack.c.0.s8 %v4443
    %v4445 = vlaneseq
    %v4446 = vshrl.u32 %v4445, 7
    %v4447 = vsub.s32 %v4444, %v4446
    %v4448 = vrot.slane %v4420, %v4447
    %v4449 = vcombine.high %v4427, %v4427
    %v4450 = vcombine.high %v4434, %v4434
    %v4451 = vcombine.high %v4441, %v4441
    %v4452 = vcombine.high %v4448, %v4448
    %v4454 = vunpack.c.l.s4 1966171168
    %v4455 = vunpack.c.0.s8 %v4454
    %v4456 = vlaneseq
    %v4457 = vshrl.u32 %v4456, 7
    %v4458 = vsub.s32 %v4455, %v4457
    %v4459 = vrot.slane %v4399, %v4458
    %v4460 = vcombine.high %v4459, %v4459
    %v4462 = vunpack.c.l.s4 1966171168
    %v4463 = vunpack.c.0.s8 %v4462
    %v4464 = vlaneseq
    %v4465 = vshrl.u32 %v4464, 7
    %v4466 = vsub.s32 %v4463, %v4465
    %v4467 = vrot.slane %v4459, %v4466
    %v4469 = vunpack.c.l.s4 1966171168
    %v4470 = vunpack.c.0.s8 %v4469
    %v4471 = vlaneseq
    %v4472 = vshrl.u32 %v4471, 7
    %v4473 = vsub.s32 %v4470, %v4472
    %v4474 = vrot.slane %v4460, %v4473
    %v4475 = vcombine.low %v4427, %v4441
    %v4476 = vcombine.low %v4449, %v4451
    %v4478 = vunpack.c.l.s4 1966171168
    %v4479 = vunpack.c.0.s8 %v4478
    %v4480 = vlaneseq
    %v4481 = vshrl.u32 %v4480, 7
    %v4482 = vsub.s32 %v4479, %v4481
    %v4483 = vrot.slane %v4475, %v4482
    %v4485 = vunpack.c.l.s4 1966171168
    %v4486 = vunpack.c.0.s8 %v4485
    %v4487 = vlaneseq
    %v4488 = vshrl.u32 %v4487, 7
    %v4489 = vsub.s32 %v4486, %v4488
    %v4490 = vrot.slane %v4476, %v4489
    %v4492 = vunpack.c.l.s4 1966171168
    %v4493 = vunpack.c.0.s8 %v4492
    %v4494 = vlaneseq
    %v4495 = vshrl.u32 %v4494, 7
    %v4496 = vsub.s32 %v4493, %v4495
    %v4497 = vrot.slane %v4434, %v4496
    %v4498 = vcombine.low %v4483, %v4490
    %v4500 = vunpack.c.l.s4 1966171168
    %v4501 = vunpack.c.0.s8 %v4500
    %v4502 = vlaneseq
    %v4503 = vshrl.u32 %v4502, 7
    %v4504 = vsub.s32 %v4501, %v4503
    %v4505 = vrot.slane %v4498, %v4504
    %v4507 = vunpack.c.l.s4 1966171168
    %v4508 = vunpack.c.0.s8 %v4507
    %v4509 = vlaneseq
    %v4510 = vshrl.u32 %v4509, 7
    %v4511 = vsub.s32 %v4508, %v4510
    %v4512 = vrot.slane %v4497, %v4511
    %v4513 = vcombine.low %v4505, %v4512
    %4514 = vrot.lane.b32.xlu0 %v4513, 96
    %v4515 = vpop.permute.xlu0 %4514
    %v4516 = vsel %vm1425, %v4513, 0
    %v4518 = vsel %vm1425, %v4515, 0
    %4520 = vmatprep.subr.mxu0 0.0
    %4521 = vmatpush1.xpose.msra.mxu0 0.0
    %4522 = vmatprep.subr.mxu0 0.0
    %4523 = vmatpush1.xpose.msra.mxu0 0.0
    %4524 = vmatprep.subr.mxu0 0.0
    %4525 = vmatpush1.xpose.msra.mxu0 0.0
    %4526 = vmatprep.subr.mxu0 0.0
    %4527 = vmatpush1.xpose.msra.mxu0 0.0
    %4528 = vmatprep.subr.mxu0 0.0
    %4529 = vmatpush1.xpose.msra.mxu0 0.0
    %4530 = vmatprep.subr.mxu0 0.0
    %4531 = vmatpush1.xpose.msra.mxu0 0.0
    %4532 = vmatprep.subr.mxu0 0.0
    %4533 = vmatpush1.xpose.msra.mxu0 0.0
    %4534 = vmatprep.subr.mxu0 0.0
    %4535 = vmatpush1.xpose.msra.mxu0 0.0
    %4536 = vmatprep.subr.mxu0 0.0
    %4537 = vmatpush1.xpose.msra.mxu0 0.0
    %4538 = vmatprep.subr.mxu0 0.0
    %4539 = vmatpush1.xpose.msra.mxu0 0.0
    %4540 = vmatprep.subr.mxu0 0.0
    %4541 = vmatpush1.xpose.msra.mxu0 0.0
    %4542 = vmatprep.subr.mxu0 0.0
    %4543 = vmatpush1.xpose.msra.mxu0 0.0
    %4544 = vmatprep.subr.mxu0 0.0
    %4545 = vmatpush1.xpose.msra.mxu0 0.0
    %4546 = vmatprep.subr.mxu0 0.0
    %4547 = vmatpush1.xpose.msra.mxu0 0.0
    %4548 = vmatprep.subr.mxu0 0.0
    %4549 = vmatpush1.xpose.msra.mxu0 0.0
    %4550 = vmatprep.subr.mxu0 0.0
    %4551 = vmatpush1.xpose.msra.mxu0 %v4518
    %4552 = vmatprep.subr.mxu0 0.0
    %4553 = vmatpush2.xpose.msra.mxu0 0.0
    %4554 = vmatprep.subr.mxu0 0.0
    %4555 = vmatpush2.xpose.msra.mxu0 0.0
    %4556 = vmatprep.subr.mxu0 0.0
    %4557 = vmatpush2.xpose.msra.mxu0 0.0
    %4558 = vmatprep.subr.mxu0 0.0
    %4559 = vmatpush2.xpose.msra.mxu0 0.0
    %4560 = vmatprep.subr.mxu0 0.0
    %4561 = vmatpush2.xpose.msra.mxu0 0.0
    %4562 = vmatprep.subr.mxu0 0.0
    %4563 = vmatpush2.xpose.msra.mxu0 0.0
    %4564 = vmatprep.subr.mxu0 0.0
    %4565 = vmatpush2.xpose.msra.mxu0 0.0
    %4566 = vmatprep.subr.mxu0 0.0
    %4567 = vmatpush2.xpose.msra.mxu0 0.0
    %4568 = vmatprep.subr.mxu0 0.0
    %4569 = vmatpush2.xpose.msra.mxu0 0.0
    %4570 = vmatprep.subr.mxu0 0.0
    %4571 = vmatpush2.xpose.msra.mxu0 0.0
    %4572 = vmatprep.subr.mxu0 0.0
    %4573 = vmatpush2.xpose.msra.mxu0 0.0
    %4574 = vmatprep.subr.mxu0 0.0
    %4575 = vmatpush2.xpose.msra.mxu0 0.0
    %4576 = vmatprep.subr.mxu0 0.0
    %4577 = vmatpush2.xpose.msra.mxu0 0.0
    %4578 = vmatprep.subr.mxu0 0.0
    %4579 = vmatpush2.xpose.msra.mxu0 0.0
    %4580 = vmatprep.subr.mxu0 0.0
    %4581 = vmatpush2.xpose.msra.mxu0 0.0
    %4582 = vmatprep.subr.mxu0 0.0
    %4583 = vmatpush2.xpose.msra.mxu0 0.0
    %4584 = vmatprep.mubr.f32.mxu0 0.0
    %4585 = vmatmul.mubr.f32.gmra.mxu0 %v4516
    %v4586 = vpop.f32.mrf.mxu0
    %v4587 = vadd.f32 0.0, %v4586
    %v4588 = vpop.f32.mrf.mxu0
    %4589 = vdwg.mxu0
    %v4590 = vcombine.low %v4448, %v4450
    %v4591 = vcombine.low %v4452, %v4467
    %v4593 = vunpack.c.l.s4 1966171168
    %v4594 = vunpack.c.0.s8 %v4593
    %v4595 = vlaneseq
    %v4596 = vshrl.u32 %v4595, 7
    %v4597 = vsub.s32 %v4594, %v4596
    %v4598 = vrot.slane %v4590, %v4597
    %v4600 = vunpack.c.l.s4 1966171168
    %v4601 = vunpack.c.0.s8 %v4600
    %v4602 = vlaneseq
    %v4603 = vshrl.u32 %v4602, 7
    %v4604 = vsub.s32 %v4601, %v4603
    %v4605 = vrot.slane %v4591, %v4604
    %v4607 = vunpack.c.l.s4 1966171168
    %v4608 = vunpack.c.0.s8 %v4607
    %v4609 = vlaneseq
    %v4610 = vshrl.u32 %v4609, 7
    %v4611 = vsub.s32 %v4608, %v4610
    %v4612 = vrot.slane %v4474, %v4611
    %v4613 = vcombine.low %v4598, %v4605
    %v4615 = vunpack.c.l.s4 1966171168
    %v4616 = vunpack.c.0.s8 %v4615
    %v4617 = vlaneseq
    %v4618 = vshrl.u32 %v4617, 7
    %v4619 = vsub.s32 %v4616, %v4618
    %v4620 = vrot.slane %v4613, %v4619
    %v4622 = vunpack.c.l.s4 1966171168
    %v4623 = vunpack.c.0.s8 %v4622
    %v4624 = vlaneseq
    %v4625 = vshrl.u32 %v4624, 7
    %v4626 = vsub.s32 %v4623, %v4625
    %v4627 = vrot.slane %v4612, %v4626
    %v4628 = vcombine.low %v4620, %v4627
    %4629 = vrot.lane.b32.xlu0 %v4628, 96
    %v4630 = vpop.permute.xlu0 %4629
    %v4631 = vsel %vm1425, %v4628, 0
    %v4633 = vsel %vm1425, %v4630, 0
    %4635 = vmatprep.subr.mxu0 0.0
    %4636 = vmatpush1.xpose.msra.mxu0 0.0
    %4637 = vmatprep.subr.mxu0 0.0
    %4638 = vmatpush1.xpose.msra.mxu0 0.0
    %4639 = vmatprep.subr.mxu0 0.0
    %4640 = vmatpush1.xpose.msra.mxu0 0.0
    %4641 = vmatprep.subr.mxu0 0.0
    %4642 = vmatpush1.xpose.msra.mxu0 0.0
    %4643 = vmatprep.subr.mxu0 0.0
    %4644 = vmatpush1.xpose.msra.mxu0 0.0
    %4645 = vmatprep.subr.mxu0 0.0
    %4646 = vmatpush1.xpose.msra.mxu0 0.0
    %4647 = vmatprep.subr.mxu0 0.0
    %4648 = vmatpush1.xpose.msra.mxu0 0.0
    %4649 = vmatprep.subr.mxu0 0.0
    %4650 = vmatpush1.xpose.msra.mxu0 0.0
    %4651 = vmatprep.subr.mxu0 0.0
    %4652 = vmatpush1.xpose.msra.mxu0 0.0
    %4653 = vmatprep.subr.mxu0 0.0
    %4654 = vmatpush1.xpose.msra.mxu0 0.0
    %4655 = vmatprep.subr.mxu0 0.0
    %4656 = vmatpush1.xpose.msra.mxu0 0.0
    %4657 = vmatprep.subr.mxu0 0.0
    %4658 = vmatpush1.xpose.msra.mxu0 0.0
    %4659 = vmatprep.subr.mxu0 0.0
    %4660 = vmatpush1.xpose.msra.mxu0 0.0
    %4661 = vmatprep.subr.mxu0 0.0
    %4662 = vmatpush1.xpose.msra.mxu0 0.0
    %4663 = vmatprep.subr.mxu0 0.0
    %4664 = vmatpush1.xpose.msra.mxu0 0.0
    %4665 = vmatprep.subr.mxu0 0.0
    %4666 = vmatpush1.xpose.msra.mxu0 %v4633
    %4667 = vmatprep.subr.mxu0 0.0
    %4668 = vmatpush2.xpose.msra.mxu0 0.0
    %4669 = vmatprep.subr.mxu0 0.0
    %4670 = vmatpush2.xpose.msra.mxu0 0.0
    %4671 = vmatprep.subr.mxu0 0.0
    %4672 = vmatpush2.xpose.msra.mxu0 0.0
    %4673 = vmatprep.subr.mxu0 0.0
    %4674 = vmatpush2.xpose.msra.mxu0 0.0
    %4675 = vmatprep.subr.mxu0 0.0
    %4676 = vmatpush2.xpose.msra.mxu0 0.0
    %4677 = vmatprep.subr.mxu0 0.0
    %4678 = vmatpush2.xpose.msra.mxu0 0.0
    %4679 = vmatprep.subr.mxu0 0.0
    %4680 = vmatpush2.xpose.msra.mxu0 0.0
    %4681 = vmatprep.subr.mxu0 0.0
    %4682 = vmatpush2.xpose.msra.mxu0 0.0
    %4683 = vmatprep.subr.mxu0 0.0
    %4684 = vmatpush2.xpose.msra.mxu0 0.0
    %4685 = vmatprep.subr.mxu0 0.0
    %4686 = vmatpush2.xpose.msra.mxu0 0.0
    %4687 = vmatprep.subr.mxu0 0.0
    %4688 = vmatpush2.xpose.msra.mxu0 0.0
    %4689 = vmatprep.subr.mxu0 0.0
    %4690 = vmatpush2.xpose.msra.mxu0 0.0
    %4691 = vmatprep.subr.mxu0 0.0
    %4692 = vmatpush2.xpose.msra.mxu0 0.0
    %4693 = vmatprep.subr.mxu0 0.0
    %4694 = vmatpush2.xpose.msra.mxu0 0.0
    %4695 = vmatprep.subr.mxu0 0.0
    %4696 = vmatpush2.xpose.msra.mxu0 0.0
    %4697 = vmatprep.subr.mxu0 0.0
    %4698 = vmatpush2.xpose.msra.mxu0 0.0
    %4699 = vmatprep.mubr.f32.mxu0 0.0
    %4700 = vmatmul.mubr.f32.gmra.mxu0 %v4631
    %v4701 = vpop.f32.mrf.mxu0
    %v4702 = vadd.f32 0.0, %v4701
    %v4703 = vpop.f32.mrf.mxu0
    %4704 = vdwg.mxu0
    %v4705 = vsel %vm1615, %v4587, -inf
    %4706 = vmax.xlane.f32.xlu0 %v4705
    %v4707 = vpop.xlane.xlu0 %4706
    %v4708 = vsel %vm1615, %v4702, -inf
    %4709 = vmax.xlane.f32.xlu0 %v4708
    %v4710 = vpop.xlane.xlu0 %4709
    %v4711 = vsub.f32 %v4587, %v4707
    %v4712 = vsub.f32 %v4702, %v4710
    %v4713 = vmul.f32 %v4711, 1.442695
    %v4714 = vpow.pop %v4713
    %v4715 = vmul.f32 %v4712, 1.442695
    %v4716 = vpow.pop %v4715
    %v4717 = vsel %vm1615, %v4714, 0.0
    %4718 = vadd.xlane.f32.xlu0 %v4717
    %v4719 = vpop.xlane.xlu0 %4718
    %v4720 = vsel %vm1615, %v4716, 0.0
    %4721 = vadd.xlane.f32.xlu0 %v4720
    %v4722 = vpop.xlane.xlu0 %4721
    %v4723 = vrcp.pop %v4719
    %v4724 = vrcp.pop %v4722
    %v4725 = vmul.f32 %v4714, %v4723
    %v4726 = vmul.f32 %v4716, %v4724
    %4727 = vrot.lane.b32.xlu0 %v4513, 64
    %v4728 = vpop.permute.xlu0 %4727
    %v4730 = vsel %vm1640, %v4725, 0
    %v4732 = vsel %vm1644, %v4728, 0
    %4734 = vmatprep.subr.mxu0 0.0
    %4735 = vmatpush1.msra.mxu0 0.0
    %4736 = vmatprep.subr.mxu0 0.0
    %4737 = vmatpush1.msra.mxu0 0.0
    %4738 = vmatprep.subr.mxu0 0.0
    %4739 = vmatpush1.msra.mxu0 0.0
    %4740 = vmatprep.subr.mxu0 0.0
    %4741 = vmatpush1.msra.mxu0 0.0
    %4742 = vmatprep.subr.mxu0 0.0
    %4743 = vmatpush1.msra.mxu0 0.0
    %4744 = vmatprep.subr.mxu0 0.0
    %4745 = vmatpush1.msra.mxu0 0.0
    %4746 = vmatprep.subr.mxu0 0.0
    %4747 = vmatpush1.msra.mxu0 0.0
    %4748 = vmatprep.subr.mxu0 0.0
    %4749 = vmatpush1.msra.mxu0 0.0
    %4750 = vmatprep.subr.mxu0 0.0
    %4751 = vmatpush1.msra.mxu0 0.0
    %4752 = vmatprep.subr.mxu0 0.0
    %4753 = vmatpush1.msra.mxu0 0.0
    %4754 = vmatprep.subr.mxu0 0.0
    %4755 = vmatpush1.msra.mxu0 0.0
    %4756 = vmatprep.subr.mxu0 0.0
    %4757 = vmatpush1.msra.mxu0 0.0
    %4758 = vmatprep.subr.mxu0 0.0
    %4759 = vmatpush1.msra.mxu0 0.0
    %4760 = vmatprep.subr.mxu0 0.0
    %4761 = vmatpush1.msra.mxu0 0.0
    %4762 = vmatprep.subr.mxu0 0.0
    %4763 = vmatpush1.msra.mxu0 0.0
    %4764 = vmatprep.subr.mxu0 0.0
    %4765 = vmatpush1.msra.mxu0 %v4732
    %4766 = vmatprep.subr.mxu0 0.0
    %4767 = vmatpush2.msra.mxu0 0.0
    %4768 = vmatprep.subr.mxu0 0.0
    %4769 = vmatpush2.msra.mxu0 0.0
    %4770 = vmatprep.subr.mxu0 0.0
    %4771 = vmatpush2.msra.mxu0 0.0
    %4772 = vmatprep.subr.mxu0 0.0
    %4773 = vmatpush2.msra.mxu0 0.0
    %4774 = vmatprep.subr.mxu0 0.0
    %4775 = vmatpush2.msra.mxu0 0.0
    %4776 = vmatprep.subr.mxu0 0.0
    %4777 = vmatpush2.msra.mxu0 0.0
    %4778 = vmatprep.subr.mxu0 0.0
    %4779 = vmatpush2.msra.mxu0 0.0
    %4780 = vmatprep.subr.mxu0 0.0
    %4781 = vmatpush2.msra.mxu0 0.0
    %4782 = vmatprep.subr.mxu0 0.0
    %4783 = vmatpush2.msra.mxu0 0.0
    %4784 = vmatprep.subr.mxu0 0.0
    %4785 = vmatpush2.msra.mxu0 0.0
    %4786 = vmatprep.subr.mxu0 0.0
    %4787 = vmatpush2.msra.mxu0 0.0
    %4788 = vmatprep.subr.mxu0 0.0
    %4789 = vmatpush2.msra.mxu0 0.0
    %4790 = vmatprep.subr.mxu0 0.0
    %4791 = vmatpush2.msra.mxu0 0.0
    %4792 = vmatprep.subr.mxu0 0.0
    %4793 = vmatpush2.msra.mxu0 0.0
    %4794 = vmatprep.subr.mxu0 0.0
    %4795 = vmatpush2.msra.mxu0 0.0
    %4796 = vmatprep.subr.mxu0 0.0
    %4797 = vmatpush2.msra.mxu0 0.0
    %4798 = vmatprep.mubr.f32.mxu0 0.0
    %4799 = vmatmul.mubr.f32.gmra.mxu0 %v4730
    %v4800 = vpop.f32.mrf.mxu0
    %v4801 = vadd.f32 0.0, %v4800
    %v4802 = vpop.f32.mrf.mxu0
    %4803 = vdwg.mxu0
    %4804 = vrot.lane.b32.xlu0 %v4628, 64
    %v4805 = vpop.permute.xlu0 %4804
    %v4807 = vsel %vm1640, %v4726, 0
    %v4809 = vsel %vm1644, %v4805, 0
    %4811 = vmatprep.subr.mxu0 0.0
    %4812 = vmatpush1.msra.mxu0 0.0
    %4813 = vmatprep.subr.mxu0 0.0
    %4814 = vmatpush1.msra.mxu0 0.0
    %4815 = vmatprep.subr.mxu0 0.0
    %4816 = vmatpush1.msra.mxu0 0.0
    %4817 = vmatprep.subr.mxu0 0.0
    %4818 = vmatpush1.msra.mxu0 0.0
    %4819 = vmatprep.subr.mxu0 0.0
    %4820 = vmatpush1.msra.mxu0 0.0
    %4821 = vmatprep.subr.mxu0 0.0
    %4822 = vmatpush1.msra.mxu0 0.0
    %4823 = vmatprep.subr.mxu0 0.0
    %4824 = vmatpush1.msra.mxu0 0.0
    %4825 = vmatprep.subr.mxu0 0.0
    %4826 = vmatpush1.msra.mxu0 0.0
    %4827 = vmatprep.subr.mxu0 0.0
    %4828 = vmatpush1.msra.mxu0 0.0
    %4829 = vmatprep.subr.mxu0 0.0
    %4830 = vmatpush1.msra.mxu0 0.0
    %4831 = vmatprep.subr.mxu0 0.0
    %4832 = vmatpush1.msra.mxu0 0.0
    %4833 = vmatprep.subr.mxu0 0.0
    %4834 = vmatpush1.msra.mxu0 0.0
    %4835 = vmatprep.subr.mxu0 0.0
    %4836 = vmatpush1.msra.mxu0 0.0
    %4837 = vmatprep.subr.mxu0 0.0
    %4838 = vmatpush1.msra.mxu0 0.0
    %4839 = vmatprep.subr.mxu0 0.0
    %4840 = vmatpush1.msra.mxu0 0.0
    %4841 = vmatprep.subr.mxu0 0.0
    %4842 = vmatpush1.msra.mxu0 %v4809
    %4843 = vmatprep.subr.mxu0 0.0
    %4844 = vmatpush2.msra.mxu0 0.0
    %4845 = vmatprep.subr.mxu0 0.0
    %4846 = vmatpush2.msra.mxu0 0.0
    %4847 = vmatprep.subr.mxu0 0.0
    %4848 = vmatpush2.msra.mxu0 0.0
    %4849 = vmatprep.subr.mxu0 0.0
    %4850 = vmatpush2.msra.mxu0 0.0
    %4851 = vmatprep.subr.mxu0 0.0
    %4852 = vmatpush2.msra.mxu0 0.0
    %4853 = vmatprep.subr.mxu0 0.0
    %4854 = vmatpush2.msra.mxu0 0.0
    %4855 = vmatprep.subr.mxu0 0.0
    %4856 = vmatpush2.msra.mxu0 0.0
    %4857 = vmatprep.subr.mxu0 0.0
    %4858 = vmatpush2.msra.mxu0 0.0
    %4859 = vmatprep.subr.mxu0 0.0
    %4860 = vmatpush2.msra.mxu0 0.0
    %4861 = vmatprep.subr.mxu0 0.0
    %4862 = vmatpush2.msra.mxu0 0.0
    %4863 = vmatprep.subr.mxu0 0.0
    %4864 = vmatpush2.msra.mxu0 0.0
    %4865 = vmatprep.subr.mxu0 0.0
    %4866 = vmatpush2.msra.mxu0 0.0
    %4867 = vmatprep.subr.mxu0 0.0
    %4868 = vmatpush2.msra.mxu0 0.0
    %4869 = vmatprep.subr.mxu0 0.0
    %4870 = vmatpush2.msra.mxu0 0.0
    %4871 = vmatprep.subr.mxu0 0.0
    %4872 = vmatpush2.msra.mxu0 0.0
    %4873 = vmatprep.subr.mxu0 0.0
    %4874 = vmatpush2.msra.mxu0 0.0
    %4875 = vmatprep.mubr.f32.mxu0 0.0
    %4876 = vmatmul.mubr.f32.gmra.mxu0 %v4807
    %v4877 = vpop.f32.mrf.mxu0
    %v4878 = vadd.f32 0.0, %v4877
    %v4879 = vpop.f32.mrf.mxu0
    %4880 = vdwg.mxu0
    %v4883 = vcombine.high %v4801, %v4801
    %v4885 = vunpack.c.l.s4 1966171168
    %v4886 = vunpack.c.0.s8 %v4885
    %v4887 = vlaneseq
    %v4888 = vshrl.u32 %v4887, 7
    %v4889 = vsub.s32 %v4886, %v4888
    %v4890 = vrot.slane %v4801, %v4889
    %v4892 = vunpack.c.l.s4 1966171168
    %v4893 = vunpack.c.0.s8 %v4892
    %v4894 = vlaneseq
    %v4895 = vshrl.u32 %v4894, 7
    %v4896 = vsub.s32 %v4893, %v4895
    %v4897 = vrot.slane %v4883, %v4896
    %v4898 = vcombine.high %v4890, %v4890
    %v4900 = vunpack.c.l.s4 1966171168
    %v4901 = vunpack.c.0.s8 %v4900
    %v4902 = vlaneseq
    %v4903 = vshrl.u32 %v4902, 7
    %v4904 = vsub.s32 %v4901, %v4903
    %v4905 = vrot.slane %v4890, %v4904
    %v4907 = vunpack.c.l.s4 1966171168
    %v4908 = vunpack.c.0.s8 %v4907
    %v4909 = vlaneseq
    %v4910 = vshrl.u32 %v4909, 7
    %v4911 = vsub.s32 %v4908, %v4910
    %v4912 = vrot.slane %v4897, %v4911
    %v4914 = vunpack.c.l.s4 1966171168
    %v4915 = vunpack.c.0.s8 %v4914
    %v4916 = vlaneseq
    %v4917 = vshrl.u32 %v4916, 7
    %v4918 = vsub.s32 %v4915, %v4917
    %v4919 = vrot.slane %v4898, %v4918
    %v4920 = vcombine.high %v4905, %v4905
    %v4921 = vcombine.high %v4919, %v4919
    %v4922 = vcombine.high %v4878, %v4878
    %v4924 = vunpack.c.l.s4 1966171168
    %v4925 = vunpack.c.0.s8 %v4924
    %v4926 = vlaneseq
    %v4927 = vshrl.u32 %v4926, 7
    %v4928 = vsub.s32 %v4925, %v4927
    %v4929 = vrot.slane %v4878, %v4928
    %v4931 = vunpack.c.l.s4 1966171168
    %v4932 = vunpack.c.0.s8 %v4931
    %v4933 = vlaneseq
    %v4934 = vshrl.u32 %v4933, 7
    %v4935 = vsub.s32 %v4932, %v4934
    %v4936 = vrot.slane %v4922, %v4935
    %v4937 = vcombine.high %v4929, %v4929
    %v4939 = vunpack.c.l.s4 1966171168
    %v4940 = vunpack.c.0.s8 %v4939
    %v4941 = vlaneseq
    %v4942 = vshrl.u32 %v4941, 7
    %v4943 = vsub.s32 %v4940, %v4942
    %v4944 = vrot.slane %v4929, %v4943
    %v4946 = vunpack.c.l.s4 1966171168
    %v4947 = vunpack.c.0.s8 %v4946
    %v4948 = vlaneseq
    %v4949 = vshrl.u32 %v4948, 7
    %v4950 = vsub.s32 %v4947, %v4949
    %v4951 = vrot.slane %v4936, %v4950
    %v4953 = vunpack.c.l.s4 1966171168
    %v4954 = vunpack.c.0.s8 %v4953
    %v4955 = vlaneseq
    %v4956 = vshrl.u32 %v4955, 7
    %v4957 = vsub.s32 %v4954, %v4956
    %v4958 = vrot.slane %v4937, %v4957
    %v4959 = vcombine.high %v4944, %v4944
    %v4960 = vcombine.high %v4958, %v4958
    %v4961 = vld [vmem:[%s2 + $0xe0] sm:$0xff]
    %v4962 = vld [vmem:[%s2 + $0xe8] sm:$0xff]
    %4963 = vrot.lane.b32.xlu0 %v4513, 112
    %v4964 = vpop.permute.xlu0 %4963
    %4965 = vrot.lane.b32.xlu0 %v4513, 80
    %v4966 = vpop.permute.xlu0 %4965
    %v4967 = vsel %vm1425, %v4964, 0
    %v4969 = vsel %vm1425, %v4966, 0
    %4971 = vmatprep.subr.mxu0 0.0
    %4972 = vmatpush1.xpose.msra.mxu0 0.0
    %4973 = vmatprep.subr.mxu0 0.0
    %4974 = vmatpush1.xpose.msra.mxu0 0.0
    %4975 = vmatprep.subr.mxu0 0.0
    %4976 = vmatpush1.xpose.msra.mxu0 0.0
    %4977 = vmatprep.subr.mxu0 0.0
    %4978 = vmatpush1.xpose.msra.mxu0 0.0
    %4979 = vmatprep.subr.mxu0 0.0
    %4980 = vmatpush1.xpose.msra.mxu0 0.0
    %4981 = vmatprep.subr.mxu0 0.0
    %4982 = vmatpush1.xpose.msra.mxu0 0.0
    %4983 = vmatprep.subr.mxu0 0.0
    %4984 = vmatpush1.xpose.msra.mxu0 0.0
    %4985 = vmatprep.subr.mxu0 0.0
    %4986 = vmatpush1.xpose.msra.mxu0 0.0
    %4987 = vmatprep.subr.mxu0 0.0
    %4988 = vmatpush1.xpose.msra.mxu0 0.0
    %4989 = vmatprep.subr.mxu0 0.0
    %4990 = vmatpush1.xpose.msra.mxu0 0.0
    %4991 = vmatprep.subr.mxu0 0.0
    %4992 = vmatpush1.xpose.msra.mxu0 0.0
    %4993 = vmatprep.subr.mxu0 0.0
    %4994 = vmatpush1.xpose.msra.mxu0 0.0
    %4995 = vmatprep.subr.mxu0 0.0
    %4996 = vmatpush1.xpose.msra.mxu0 0.0
    %4997 = vmatprep.subr.mxu0 0.0
    %4998 = vmatpush1.xpose.msra.mxu0 0.0
    %4999 = vmatprep.subr.mxu0 0.0
    %5000 = vmatpush1.xpose.msra.mxu0 0.0
    %5001 = vmatprep.subr.mxu0 0.0
    %5002 = vmatpush1.xpose.msra.mxu0 %v4969
    %5003 = vmatprep.subr.mxu0 0.0
    %5004 = vmatpush2.xpose.msra.mxu0 0.0
    %5005 = vmatprep.subr.mxu0 0.0
    %5006 = vmatpush2.xpose.msra.mxu0 0.0
    %5007 = vmatprep.subr.mxu0 0.0
    %5008 = vmatpush2.xpose.msra.mxu0 0.0
    %5009 = vmatprep.subr.mxu0 0.0
    %5010 = vmatpush2.xpose.msra.mxu0 0.0
    %5011 = vmatprep.subr.mxu0 0.0
    %5012 = vmatpush2.xpose.msra.mxu0 0.0
    %5013 = vmatprep.subr.mxu0 0.0
    %5014 = vmatpush2.xpose.msra.mxu0 0.0
    %5015 = vmatprep.subr.mxu0 0.0
    %5016 = vmatpush2.xpose.msra.mxu0 0.0
    %5017 = vmatprep.subr.mxu0 0.0
    %5018 = vmatpush2.xpose.msra.mxu0 0.0
    %5019 = vmatprep.subr.mxu0 0.0
    %5020 = vmatpush2.xpose.msra.mxu0 0.0
    %5021 = vmatprep.subr.mxu0 0.0
    %5022 = vmatpush2.xpose.msra.mxu0 0.0
    %5023 = vmatprep.subr.mxu0 0.0
    %5024 = vmatpush2.xpose.msra.mxu0 0.0
    %5025 = vmatprep.subr.mxu0 0.0
    %5026 = vmatpush2.xpose.msra.mxu0 0.0
    %5027 = vmatprep.subr.mxu0 0.0
    %5028 = vmatpush2.xpose.msra.mxu0 0.0
    %5029 = vmatprep.subr.mxu0 0.0
    %5030 = vmatpush2.xpose.msra.mxu0 0.0
    %5031 = vmatprep.subr.mxu0 0.0
    %5032 = vmatpush2.xpose.msra.mxu0 0.0
    %5033 = vmatprep.subr.mxu0 0.0
    %5034 = vmatpush2.xpose.msra.mxu0 0.0
    %5035 = vmatprep.mubr.f32.mxu0 0.0
    %5036 = vmatmul.mubr.f32.gmra.mxu0 %v4967
    %v5037 = vpop.f32.mrf.mxu0
    %v5038 = vadd.f32 0.0, %v5037
    %v5039 = vpop.f32.mrf.mxu0
    %5040 = vdwg.mxu0
    %5041 = vrot.lane.b32.xlu0 %v4628, 112
    %v5042 = vpop.permute.xlu0 %5041
    %5043 = vrot.lane.b32.xlu0 %v4628, 80
    %v5044 = vpop.permute.xlu0 %5043
    %v5045 = vsel %vm1425, %v5042, 0
    %v5047 = vsel %vm1425, %v5044, 0
    %5049 = vmatprep.subr.mxu0 0.0
    %5050 = vmatpush1.xpose.msra.mxu0 0.0
    %5051 = vmatprep.subr.mxu0 0.0
    %5052 = vmatpush1.xpose.msra.mxu0 0.0
    %5053 = vmatprep.subr.mxu0 0.0
    %5054 = vmatpush1.xpose.msra.mxu0 0.0
    %5055 = vmatprep.subr.mxu0 0.0
    %5056 = vmatpush1.xpose.msra.mxu0 0.0
    %5057 = vmatprep.subr.mxu0 0.0
    %5058 = vmatpush1.xpose.msra.mxu0 0.0
    %5059 = vmatprep.subr.mxu0 0.0
    %5060 = vmatpush1.xpose.msra.mxu0 0.0
    %5061 = vmatprep.subr.mxu0 0.0
    %5062 = vmatpush1.xpose.msra.mxu0 0.0
    %5063 = vmatprep.subr.mxu0 0.0
    %5064 = vmatpush1.xpose.msra.mxu0 0.0
    %5065 = vmatprep.subr.mxu0 0.0
    %5066 = vmatpush1.xpose.msra.mxu0 0.0
    %5067 = vmatprep.subr.mxu0 0.0
    %5068 = vmatpush1.xpose.msra.mxu0 0.0
    %5069 = vmatprep.subr.mxu0 0.0
    %5070 = vmatpush1.xpose.msra.mxu0 0.0
    %5071 = vmatprep.subr.mxu0 0.0
    %5072 = vmatpush1.xpose.msra.mxu0 0.0
    %5073 = vmatprep.subr.mxu0 0.0
    %5074 = vmatpush1.xpose.msra.mxu0 0.0
    %5075 = vmatprep.subr.mxu0 0.0
    %5076 = vmatpush1.xpose.msra.mxu0 0.0
    %5077 = vmatprep.subr.mxu0 0.0
    %5078 = vmatpush1.xpose.msra.mxu0 0.0
    %5079 = vmatprep.subr.mxu0 0.0
    %5080 = vmatpush1.xpose.msra.mxu0 %v5047
    %5081 = vmatprep.subr.mxu0 0.0
    %5082 = vmatpush2.xpose.msra.mxu0 0.0
    %5083 = vmatprep.subr.mxu0 0.0
    %5084 = vmatpush2.xpose.msra.mxu0 0.0
    %5085 = vmatprep.subr.mxu0 0.0
    %5086 = vmatpush2.xpose.msra.mxu0 0.0
    %5087 = vmatprep.subr.mxu0 0.0
    %5088 = vmatpush2.xpose.msra.mxu0 0.0
    %5089 = vmatprep.subr.mxu0 0.0
    %5090 = vmatpush2.xpose.msra.mxu0 0.0
    %5091 = vmatprep.subr.mxu0 0.0
    %5092 = vmatpush2.xpose.msra.mxu0 0.0
    %5093 = vmatprep.subr.mxu0 0.0
    %5094 = vmatpush2.xpose.msra.mxu0 0.0
    %5095 = vmatprep.subr.mxu0 0.0
    %5096 = vmatpush2.xpose.msra.mxu0 0.0
    %5097 = vmatprep.subr.mxu0 0.0
    %5098 = vmatpush2.xpose.msra.mxu0 0.0
    %5099 = vmatprep.subr.mxu0 0.0
    %5100 = vmatpush2.xpose.msra.mxu0 0.0
    %5101 = vmatprep.subr.mxu0 0.0
    %5102 = vmatpush2.xpose.msra.mxu0 0.0
    %5103 = vmatprep.subr.mxu0 0.0
    %5104 = vmatpush2.xpose.msra.mxu0 0.0
    %5105 = vmatprep.subr.mxu0 0.0
    %5106 = vmatpush2.xpose.msra.mxu0 0.0
    %5107 = vmatprep.subr.mxu0 0.0
    %5108 = vmatpush2.xpose.msra.mxu0 0.0
    %5109 = vmatprep.subr.mxu0 0.0
    %5110 = vmatpush2.xpose.msra.mxu0 0.0
    %5111 = vmatprep.subr.mxu0 0.0
    %5112 = vmatpush2.xpose.msra.mxu0 0.0
    %5113 = vmatprep.mubr.f32.mxu0 0.0
    %5114 = vmatmul.mubr.f32.gmra.mxu0 %v5045
    %v5115 = vpop.f32.mrf.mxu0
    %v5116 = vadd.f32 0.0, %v5115
    %v5117 = vpop.f32.mrf.mxu0
    %5118 = vdwg.mxu0
    %v5119 = vsel %vm1615, %v5038, -inf
    %5120 = vmax.xlane.f32.xlu0 %v5119
    %v5121 = vpop.xlane.xlu0 %5120
    %v5122 = vsel %vm1615, %v5116, -inf
    %5123 = vmax.xlane.f32.xlu0 %v5122
    %v5124 = vpop.xlane.xlu0 %5123
    %v5125 = vsub.f32 %v5038, %v5121
    %v5126 = vsub.f32 %v5116, %v5124
    %v5127 = vmul.f32 %v5125, 1.442695
    %v5128 = vpow.pop %v5127
    %v5129 = vmul.f32 %v5126, 1.442695
    %v5130 = vpow.pop %v5129
    %v5131 = vsel %vm1615, %v5128, 0.0
    %5132 = vadd.xlane.f32.xlu0 %v5131
    %v5133 = vpop.xlane.xlu0 %5132
    %v5134 = vsel %vm1615, %v5130, 0.0
    %5135 = vadd.xlane.f32.xlu0 %v5134
    %v5136 = vpop.xlane.xlu0 %5135
    %v5137 = vrcp.pop %v5133
    %v5138 = vrcp.pop %v5136
    %v5139 = vmul.f32 %v5128, %v5137
    %v5140 = vmul.f32 %v5130, %v5138
    %5141 = vrot.lane.b32.xlu0 %v4513, 48
    %v5142 = vpop.permute.xlu0 %5141
    %v5144 = vsel %vm1640, %v5139, 0
    %v5146 = vsel %vm1644, %v5142, 0
    %5148 = vmatprep.subr.mxu0 0.0
    %5149 = vmatpush1.msra.mxu0 0.0
    %5150 = vmatprep.subr.mxu0 0.0
    %5151 = vmatpush1.msra.mxu0 0.0
    %5152 = vmatprep.subr.mxu0 0.0
    %5153 = vmatpush1.msra.mxu0 0.0
    %5154 = vmatprep.subr.mxu0 0.0
    %5155 = vmatpush1.msra.mxu0 0.0
    %5156 = vmatprep.subr.mxu0 0.0
    %5157 = vmatpush1.msra.mxu0 0.0
    %5158 = vmatprep.subr.mxu0 0.0
    %5159 = vmatpush1.msra.mxu0 0.0
    %5160 = vmatprep.subr.mxu0 0.0
    %5161 = vmatpush1.msra.mxu0 0.0
    %5162 = vmatprep.subr.mxu0 0.0
    %5163 = vmatpush1.msra.mxu0 0.0
    %5164 = vmatprep.subr.mxu0 0.0
    %5165 = vmatpush1.msra.mxu0 0.0
    %5166 = vmatprep.subr.mxu0 0.0
    %5167 = vmatpush1.msra.mxu0 0.0
    %5168 = vmatprep.subr.mxu0 0.0
    %5169 = vmatpush1.msra.mxu0 0.0
    %5170 = vmatprep.subr.mxu0 0.0
    %5171 = vmatpush1.msra.mxu0 0.0
    %5172 = vmatprep.subr.mxu0 0.0
    %5173 = vmatpush1.msra.mxu0 0.0
    %5174 = vmatprep.subr.mxu0 0.0
    %5175 = vmatpush1.msra.mxu0 0.0
    %5176 = vmatprep.subr.mxu0 0.0
    %5177 = vmatpush1.msra.mxu0 0.0
    %5178 = vmatprep.subr.mxu0 0.0
    %5179 = vmatpush1.msra.mxu0 %v5146
    %5180 = vmatprep.subr.mxu0 0.0
    %5181 = vmatpush2.msra.mxu0 0.0
    %5182 = vmatprep.subr.mxu0 0.0
    %5183 = vmatpush2.msra.mxu0 0.0
    %5184 = vmatprep.subr.mxu0 0.0
    %5185 = vmatpush2.msra.mxu0 0.0
    %5186 = vmatprep.subr.mxu0 0.0
    %5187 = vmatpush2.msra.mxu0 0.0
    %5188 = vmatprep.subr.mxu0 0.0
    %5189 = vmatpush2.msra.mxu0 0.0
    %5190 = vmatprep.subr.mxu0 0.0
    %5191 = vmatpush2.msra.mxu0 0.0
    %5192 = vmatprep.subr.mxu0 0.0
    %5193 = vmatpush2.msra.mxu0 0.0
    %5194 = vmatprep.subr.mxu0 0.0
    %5195 = vmatpush2.msra.mxu0 0.0
    %5196 = vmatprep.subr.mxu0 0.0
    %5197 = vmatpush2.msra.mxu0 0.0
    %5198 = vmatprep.subr.mxu0 0.0
    %5199 = vmatpush2.msra.mxu0 0.0
    %5200 = vmatprep.subr.mxu0 0.0
    %5201 = vmatpush2.msra.mxu0 0.0
    %5202 = vmatprep.subr.mxu0 0.0
    %5203 = vmatpush2.msra.mxu0 0.0
    %5204 = vmatprep.subr.mxu0 0.0
    %5205 = vmatpush2.msra.mxu0 0.0
    %5206 = vmatprep.subr.mxu0 0.0
    %5207 = vmatpush2.msra.mxu0 0.0
    %5208 = vmatprep.subr.mxu0 0.0
    %5209 = vmatpush2.msra.mxu0 0.0
    %5210 = vmatprep.subr.mxu0 0.0
    %5211 = vmatpush2.msra.mxu0 0.0
    %5212 = vmatprep.mubr.f32.mxu0 0.0
    %5213 = vmatmul.mubr.f32.gmra.mxu0 %v5144
    %v5214 = vpop.f32.mrf.mxu0
    %v5215 = vadd.f32 0.0, %v5214
    %v5216 = vpop.f32.mrf.mxu0
    %5217 = vdwg.mxu0
    %5218 = vrot.lane.b32.xlu0 %v4628, 48
    %v5219 = vpop.permute.xlu0 %5218
    %v5221 = vsel %vm1640, %v5140, 0
    %v5223 = vsel %vm1644, %v5219, 0
    %5225 = vmatprep.subr.mxu0 0.0
    %5226 = vmatpush1.msra.mxu0 0.0
    %5227 = vmatprep.subr.mxu0 0.0
    %5228 = vmatpush1.msra.mxu0 0.0
    %5229 = vmatprep.subr.mxu0 0.0
    %5230 = vmatpush1.msra.mxu0 0.0
    %5231 = vmatprep.subr.mxu0 0.0
    %5232 = vmatpush1.msra.mxu0 0.0
    %5233 = vmatprep.subr.mxu0 0.0
    %5234 = vmatpush1.msra.mxu0 0.0
    %5235 = vmatprep.subr.mxu0 0.0
    %5236 = vmatpush1.msra.mxu0 0.0
    %5237 = vmatprep.subr.mxu0 0.0
    %5238 = vmatpush1.msra.mxu0 0.0
    %5239 = vmatprep.subr.mxu0 0.0
    %5240 = vmatpush1.msra.mxu0 0.0
    %5241 = vmatprep.subr.mxu0 0.0
    %5242 = vmatpush1.msra.mxu0 0.0
    %5243 = vmatprep.subr.mxu0 0.0
    %5244 = vmatpush1.msra.mxu0 0.0
    %5245 = vmatprep.subr.mxu0 0.0
    %5246 = vmatpush1.msra.mxu0 0.0
    %5247 = vmatprep.subr.mxu0 0.0
    %5248 = vmatpush1.msra.mxu0 0.0
    %5249 = vmatprep.subr.mxu0 0.0
    %5250 = vmatpush1.msra.mxu0 0.0
    %5251 = vmatprep.subr.mxu0 0.0
    %5252 = vmatpush1.msra.mxu0 0.0
    %5253 = vmatprep.subr.mxu0 0.0
    %5254 = vmatpush1.msra.mxu0 0.0
    %5255 = vmatprep.subr.mxu0 0.0
    %5256 = vmatpush1.msra.mxu0 %v5223
    %5257 = vmatprep.subr.mxu0 0.0
    %5258 = vmatpush2.msra.mxu0 0.0
    %5259 = vmatprep.subr.mxu0 0.0
    %5260 = vmatpush2.msra.mxu0 0.0
    %5261 = vmatprep.subr.mxu0 0.0
    %5262 = vmatpush2.msra.mxu0 0.0
    %5263 = vmatprep.subr.mxu0 0.0
    %5264 = vmatpush2.msra.mxu0 0.0
    %5265 = vmatprep.subr.mxu0 0.0
    %5266 = vmatpush2.msra.mxu0 0.0
    %5267 = vmatprep.subr.mxu0 0.0
    %5268 = vmatpush2.msra.mxu0 0.0
    %5269 = vmatprep.subr.mxu0 0.0
    %5270 = vmatpush2.msra.mxu0 0.0
    %5271 = vmatprep.subr.mxu0 0.0
    %5272 = vmatpush2.msra.mxu0 0.0
    %5273 = vmatprep.subr.mxu0 0.0
    %5274 = vmatpush2.msra.mxu0 0.0
    %5275 = vmatprep.subr.mxu0 0.0
    %5276 = vmatpush2.msra.mxu0 0.0
    %5277 = vmatprep.subr.mxu0 0.0
    %5278 = vmatpush2.msra.mxu0 0.0
    %5279 = vmatprep.subr.mxu0 0.0
    %5280 = vmatpush2.msra.mxu0 0.0
    %5281 = vmatprep.subr.mxu0 0.0
    %5282 = vmatpush2.msra.mxu0 0.0
    %5283 = vmatprep.subr.mxu0 0.0
    %5284 = vmatpush2.msra.mxu0 0.0
    %5285 = vmatprep.subr.mxu0 0.0
    %5286 = vmatpush2.msra.mxu0 0.0
    %5287 = vmatprep.subr.mxu0 0.0
    %5288 = vmatpush2.msra.mxu0 0.0
    %5289 = vmatprep.mubr.f32.mxu0 0.0
    %5290 = vmatmul.mubr.f32.gmra.mxu0 %v5221
    %v5291 = vpop.f32.mrf.mxu0
    %v5292 = vadd.f32 0.0, %v5291
    %v5293 = vpop.f32.mrf.mxu0
    %5294 = vdwg.mxu0
    %v5297 = vcombine.high %v5215, %v5215
    %v5299 = vunpack.c.l.s4 1966171168
    %v5300 = vunpack.c.0.s8 %v5299
    %v5301 = vlaneseq
    %v5302 = vshrl.u32 %v5301, 7
    %v5303 = vsub.s32 %v5300, %v5302
    %v5304 = vrot.slane %v5215, %v5303
    %v5306 = vunpack.c.l.s4 1966171168
    %v5307 = vunpack.c.0.s8 %v5306
    %v5308 = vlaneseq
    %v5309 = vshrl.u32 %v5308, 7
    %v5310 = vsub.s32 %v5307, %v5309
    %v5311 = vrot.slane %v5297, %v5310
    %v5312 = vcombine.high %v5304, %v5304
    %v5314 = vunpack.c.l.s4 1966171168
    %v5315 = vunpack.c.0.s8 %v5314
    %v5316 = vlaneseq
    %v5317 = vshrl.u32 %v5316, 7
    %v5318 = vsub.s32 %v5315, %v5317
    %v5319 = vrot.slane %v5304, %v5318
    %v5321 = vunpack.c.l.s4 1966171168
    %v5322 = vunpack.c.0.s8 %v5321
    %v5323 = vlaneseq
    %v5324 = vshrl.u32 %v5323, 7
    %v5325 = vsub.s32 %v5322, %v5324
    %v5326 = vrot.slane %v5311, %v5325
    %v5328 = vunpack.c.l.s4 1966171168
    %v5329 = vunpack.c.0.s8 %v5328
    %v5330 = vlaneseq
    %v5331 = vshrl.u32 %v5330, 7
    %v5332 = vsub.s32 %v5329, %v5331
    %v5333 = vrot.slane %v5312, %v5332
    %v5334 = vcombine.high %v5319, %v5319
    %v5335 = vcombine.high %v5333, %v5333
    %v5336 = vcombine.high %v5292, %v5292
    %v5338 = vunpack.c.l.s4 1966171168
    %v5339 = vunpack.c.0.s8 %v5338
    %v5340 = vlaneseq
    %v5341 = vshrl.u32 %v5340, 7
    %v5342 = vsub.s32 %v5339, %v5341
    %v5343 = vrot.slane %v5292, %v5342
    %v5345 = vunpack.c.l.s4 1966171168
    %v5346 = vunpack.c.0.s8 %v5345
    %v5347 = vlaneseq
    %v5348 = vshrl.u32 %v5347, 7
    %v5349 = vsub.s32 %v5346, %v5348
    %v5350 = vrot.slane %v5336, %v5349
    %v5351 = vcombine.high %v5343, %v5343
    %v5353 = vunpack.c.l.s4 1966171168
    %v5354 = vunpack.c.0.s8 %v5353
    %v5355 = vlaneseq
    %v5356 = vshrl.u32 %v5355, 7
    %v5357 = vsub.s32 %v5354, %v5356
    %v5358 = vrot.slane %v5343, %v5357
    %v5360 = vunpack.c.l.s4 1966171168
    %v5361 = vunpack.c.0.s8 %v5360
    %v5362 = vlaneseq
    %v5363 = vshrl.u32 %v5362, 7
    %v5364 = vsub.s32 %v5361, %v5363
    %v5365 = vrot.slane %v5350, %v5364
    %v5367 = vunpack.c.l.s4 1966171168
    %v5368 = vunpack.c.0.s8 %v5367
    %v5369 = vlaneseq
    %v5370 = vshrl.u32 %v5369, 7
    %v5371 = vsub.s32 %v5368, %v5370
    %v5372 = vrot.slane %v5351, %v5371
    %v5373 = vcombine.high %v5358, %v5358
    %v5374 = vcombine.high %v5372, %v5372
    %v5375 = vld [vmem:[%s2 + $0xf0] sm:$0xff]
    %v5376 = vld [vmem:[%s2 + $0xf8] sm:$0xff]
    %v5377 = vcombine.low %v5319, %v5333
    %v5378 = vcombine.low %v5334, %v5335
    %v5379 = vcombine.low %v5326, %v5358
    %v5380 = vcombine.low %v5372, %v5373
    %v5382 = vunpack.c.l.s4 1966171168
    %v5383 = vunpack.c.0.s8 %v5382
    %v5384 = vlaneseq
    %v5385 = vshrl.u32 %v5384, 7
    %v5386 = vsub.s32 %v5383, %v5385
    %v5387 = vrot.slane %v5377, %v5386
    %v5389 = vunpack.c.l.s4 1966171168
    %v5390 = vunpack.c.0.s8 %v5389
    %v5391 = vlaneseq
    %v5392 = vshrl.u32 %v5391, 7
    %v5393 = vsub.s32 %v5390, %v5392
    %v5394 = vrot.slane %v5378, %v5393
    %v5396 = vunpack.c.l.s4 1966171168
    %v5397 = vunpack.c.0.s8 %v5396
    %v5398 = vlaneseq
    %v5399 = vshrl.u32 %v5398, 7
    %v5400 = vsub.s32 %v5397, %v5399
    %v5401 = vrot.slane %v5379, %v5400
    %v5403 = vunpack.c.l.s4 1966171168
    %v5404 = vunpack.c.0.s8 %v5403
    %v5405 = vlaneseq
    %v5406 = vshrl.u32 %v5405, 7
    %v5407 = vsub.s32 %v5404, %v5406
    %v5408 = vrot.slane %v5380, %v5407
    %v5409 = vcombine.low %v5387, %v5394
    %v5410 = vcombine.low %v5401, %v5408
    %v5412 = vunpack.c.l.s4 1966171168
    %v5413 = vunpack.c.0.s8 %v5412
    %v5414 = vlaneseq
    %v5415 = vshrl.u32 %v5414, 7
    %v5416 = vsub.s32 %v5413, %v5415
    %v5417 = vrot.slane %v5409, %v5416
    %v5419 = vunpack.c.l.s4 1966171168
    %v5420 = vunpack.c.0.s8 %v5419
    %v5421 = vlaneseq
    %v5422 = vshrl.u32 %v5421, 7
    %v5423 = vsub.s32 %v5420, %v5422
    %v5424 = vrot.slane %v5410, %v5423
    %v5425 = vcombine.low %v5417, %v5424
    %v5426 = vcombine.low %v5374, %v5365
    %v5428 = vunpack.c.l.s4 1966171168
    %v5429 = vunpack.c.0.s8 %v5428
    %v5430 = vlaneseq
    %v5431 = vshrl.u32 %v5430, 7
    %v5432 = vsub.s32 %v5429, %v5431
    %v5433 = vrot.slane %v5426, %v5432
    %v5435 = vunpack.c.l.s4 1966171168
    %v5436 = vunpack.c.0.s8 %v5435
    %v5437 = vlaneseq
    %v5438 = vshrl.u32 %v5437, 7
    %v5439 = vsub.s32 %v5436, %v5438
    %v5440 = vrot.slane %v5433, %v5439
    %v5441 = vsel %vm1425, %v5425, 0
    %v5443 = vsel %vm1425, %v5440, 0
    %5445 = vmatprep.subr.mxu0 0.0
    %5446 = vmatpush1.msra.mxu0 0.0
    %5447 = vmatprep.subr.mxu0 0.0
    %5448 = vmatpush1.msra.mxu0 0.0
    %5449 = vmatprep.subr.mxu0 0.0
    %5450 = vmatpush1.msra.mxu0 0.0
    %5451 = vmatprep.subr.mxu0 0.0
    %5452 = vmatpush1.msra.mxu0 0.0
    %5453 = vmatprep.subr.mxu0 0.0
    %5454 = vmatpush1.msra.mxu0 0.0
    %5455 = vmatprep.subr.mxu0 0.0
    %5456 = vmatpush1.msra.mxu0 0.0
    %5457 = vmatprep.subr.mxu0 0.0
    %5458 = vmatpush1.msra.mxu0 0.0
    %5459 = vmatprep.subr.mxu0 0.0
    %5460 = vmatpush1.msra.mxu0 0.0
    %5461 = vmatprep.subr.mxu0 0.0
    %5462 = vmatpush1.msra.mxu0 0.0
    %5463 = vmatprep.subr.mxu0 0.0
    %5464 = vmatpush1.msra.mxu0 0.0
    %5465 = vmatprep.subr.mxu0 0.0
    %5466 = vmatpush1.msra.mxu0 0.0
    %5467 = vmatprep.subr.mxu0 0.0
    %5468 = vmatpush1.msra.mxu0 0.0
    %5469 = vmatprep.subr.mxu0 0.0
    %5470 = vmatpush1.msra.mxu0 0.0
    %5471 = vmatprep.subr.mxu0 0.0
    %5472 = vmatpush1.msra.mxu0 0.0
    %5473 = vmatprep.subr.mxu0 0.0
    %5474 = vmatpush1.msra.mxu0 %v5376
    %5475 = vmatprep.subr.mxu0 0.0
    %5476 = vmatpush1.msra.mxu0 %v5375
    %5477 = vmatprep.subr.mxu0 0.0
    %5478 = vmatpush2.msra.mxu0 0.0
    %5479 = vmatprep.subr.mxu0 0.0
    %5480 = vmatpush2.msra.mxu0 0.0
    %5481 = vmatprep.subr.mxu0 0.0
    %5482 = vmatpush2.msra.mxu0 0.0
    %5483 = vmatprep.subr.mxu0 0.0
    %5484 = vmatpush2.msra.mxu0 0.0
    %5485 = vmatprep.subr.mxu0 0.0
    %5486 = vmatpush2.msra.mxu0 0.0
    %5487 = vmatprep.subr.mxu0 0.0
    %5488 = vmatpush2.msra.mxu0 0.0
    %5489 = vmatprep.subr.mxu0 0.0
    %5490 = vmatpush2.msra.mxu0 0.0
    %5491 = vmatprep.subr.mxu0 0.0
    %5492 = vmatpush2.msra.mxu0 0.0
    %5493 = vmatprep.subr.mxu0 0.0
    %5494 = vmatpush2.msra.mxu0 0.0
    %5495 = vmatprep.subr.mxu0 0.0
    %5496 = vmatpush2.msra.mxu0 0.0
    %5497 = vmatprep.subr.mxu0 0.0
    %5498 = vmatpush2.msra.mxu0 0.0
    %5499 = vmatprep.subr.mxu0 0.0
    %5500 = vmatpush2.msra.mxu0 0.0
    %5501 = vmatprep.subr.mxu0 0.0
    %5502 = vmatpush2.msra.mxu0 0.0
    %5503 = vmatprep.subr.mxu0 0.0
    %5504 = vmatpush2.msra.mxu0 0.0
    %5505 = vmatprep.subr.mxu0 0.0
    %5506 = vmatpush2.msra.mxu0 0.0
    %5507 = vmatprep.subr.mxu0 0.0
    %5508 = vmatpush2.msra.mxu0 0.0
    %5509 = vmatprep.mubr.f32.mxu0 0.0
    %5510 = vmatmul.mubr.f32.gmra.mxu0 %v5441
    %v5511 = vpop.f32.mrf.mxu0
    %v5512 = vadd.f32 0.0, %v5511
    %v5513 = vpop.f32.mrf.mxu0
    %5514 = vmatprep.mubr.f32.mxu0 0.0
    %5515 = vmatmul.mubr.f32.gmra.mxu0 %v5443
    %v5516 = vpop.f32.mrf.mxu0
    %v5517 = vadd.f32 0.0, %v5516
    %v5518 = vpop.f32.mrf.mxu0
    %5519 = vdwg.mxu0
    %v5520 = vcombine.low %v4905, %v4919
    %v5521 = vcombine.low %v4920, %v4921
    %v5522 = vcombine.low %v4912, %v4944
    %v5523 = vcombine.low %v4958, %v4959
    %v5525 = vunpack.c.l.s4 1966171168
    %v5526 = vunpack.c.0.s8 %v5525
    %v5527 = vlaneseq
    %v5528 = vshrl.u32 %v5527, 7
    %v5529 = vsub.s32 %v5526, %v5528
    %v5530 = vrot.slane %v5520, %v5529
    %v5532 = vunpack.c.l.s4 1966171168
    %v5533 = vunpack.c.0.s8 %v5532
    %v5534 = vlaneseq
    %v5535 = vshrl.u32 %v5534, 7
    %v5536 = vsub.s32 %v5533, %v5535
    %v5537 = vrot.slane %v5521, %v5536
    %v5539 = vunpack.c.l.s4 1966171168
    %v5540 = vunpack.c.0.s8 %v5539
    %v5541 = vlaneseq
    %v5542 = vshrl.u32 %v5541, 7
    %v5543 = vsub.s32 %v5540, %v5542
    %v5544 = vrot.slane %v5522, %v5543
    %v5546 = vunpack.c.l.s4 1966171168
    %v5547 = vunpack.c.0.s8 %v5546
    %v5548 = vlaneseq
    %v5549 = vshrl.u32 %v5548, 7
    %v5550 = vsub.s32 %v5547, %v5549
    %v5551 = vrot.slane %v5523, %v5550
    %v5552 = vcombine.low %v5530, %v5537
    %v5553 = vcombine.low %v5544, %v5551
    %v5555 = vunpack.c.l.s4 1966171168
    %v5556 = vunpack.c.0.s8 %v5555
    %v5557 = vlaneseq
    %v5558 = vshrl.u32 %v5557, 7
    %v5559 = vsub.s32 %v5556, %v5558
    %v5560 = vrot.slane %v5552, %v5559
    %v5562 = vunpack.c.l.s4 1966171168
    %v5563 = vunpack.c.0.s8 %v5562
    %v5564 = vlaneseq
    %v5565 = vshrl.u32 %v5564, 7
    %v5566 = vsub.s32 %v5563, %v5565
    %v5567 = vrot.slane %v5553, %v5566
    %v5568 = vcombine.low %v5560, %v5567
    %v5569 = vcombine.low %v4960, %v4951
    %v5571 = vunpack.c.l.s4 1966171168
    %v5572 = vunpack.c.0.s8 %v5571
    %v5573 = vlaneseq
    %v5574 = vshrl.u32 %v5573, 7
    %v5575 = vsub.s32 %v5572, %v5574
    %v5576 = vrot.slane %v5569, %v5575
    %v5578 = vunpack.c.l.s4 1966171168
    %v5579 = vunpack.c.0.s8 %v5578
    %v5580 = vlaneseq
    %v5581 = vshrl.u32 %v5580, 7
    %v5582 = vsub.s32 %v5579, %v5581
    %v5583 = vrot.slane %v5576, %v5582
    %v5584 = vsel %vm1425, %v5568, 0
    %v5586 = vsel %vm1425, %v5583, 0
    %5588 = vmatprep.subr.mxu0 0.0
    %5589 = vmatpush1.msra.mxu0 0.0
    %5590 = vmatprep.subr.mxu0 0.0
    %5591 = vmatpush1.msra.mxu0 0.0
    %5592 = vmatprep.subr.mxu0 0.0
    %5593 = vmatpush1.msra.mxu0 0.0
    %5594 = vmatprep.subr.mxu0 0.0
    %5595 = vmatpush1.msra.mxu0 0.0
    %5596 = vmatprep.subr.mxu0 0.0
    %5597 = vmatpush1.msra.mxu0 0.0
    %5598 = vmatprep.subr.mxu0 0.0
    %5599 = vmatpush1.msra.mxu0 0.0
    %5600 = vmatprep.subr.mxu0 0.0
    %5601 = vmatpush1.msra.mxu0 0.0
    %5602 = vmatprep.subr.mxu0 0.0
    %5603 = vmatpush1.msra.mxu0 0.0
    %5604 = vmatprep.subr.mxu0 0.0
    %5605 = vmatpush1.msra.mxu0 0.0
    %5606 = vmatprep.subr.mxu0 0.0
    %5607 = vmatpush1.msra.mxu0 0.0
    %5608 = vmatprep.subr.mxu0 0.0
    %5609 = vmatpush1.msra.mxu0 0.0
    %5610 = vmatprep.subr.mxu0 0.0
    %5611 = vmatpush1.msra.mxu0 0.0
    %5612 = vmatprep.subr.mxu0 0.0
    %5613 = vmatpush1.msra.mxu0 0.0
    %5614 = vmatprep.subr.mxu0 0.0
    %5615 = vmatpush1.msra.mxu0 0.0
    %5616 = vmatprep.subr.mxu0 0.0
    %5617 = vmatpush1.msra.mxu0 %v4962
    %5618 = vmatprep.subr.mxu0 0.0
    %5619 = vmatpush1.msra.mxu0 %v4961
    %5620 = vmatprep.subr.mxu0 0.0
    %5621 = vmatpush2.msra.mxu0 0.0
    %5622 = vmatprep.subr.mxu0 0.0
    %5623 = vmatpush2.msra.mxu0 0.0
    %5624 = vmatprep.subr.mxu0 0.0
    %5625 = vmatpush2.msra.mxu0 0.0
    %5626 = vmatprep.subr.mxu0 0.0
    %5627 = vmatpush2.msra.mxu0 0.0
    %5628 = vmatprep.subr.mxu0 0.0
    %5629 = vmatpush2.msra.mxu0 0.0
    %5630 = vmatprep.subr.mxu0 0.0
    %5631 = vmatpush2.msra.mxu0 0.0
    %5632 = vmatprep.subr.mxu0 0.0
    %5633 = vmatpush2.msra.mxu0 0.0
    %5634 = vmatprep.subr.mxu0 0.0
    %5635 = vmatpush2.msra.mxu0 0.0
    %5636 = vmatprep.subr.mxu0 0.0
    %5637 = vmatpush2.msra.mxu0 0.0
    %5638 = vmatprep.subr.mxu0 0.0
    %5639 = vmatpush2.msra.mxu0 0.0
    %5640 = vmatprep.subr.mxu0 0.0
    %5641 = vmatpush2.msra.mxu0 0.0
    %5642 = vmatprep.subr.mxu0 0.0
    %5643 = vmatpush2.msra.mxu0 0.0
    %5644 = vmatprep.subr.mxu0 0.0
    %5645 = vmatpush2.msra.mxu0 0.0
    %5646 = vmatprep.subr.mxu0 0.0
    %5647 = vmatpush2.msra.mxu0 0.0
    %5648 = vmatprep.subr.mxu0 0.0
    %5649 = vmatpush2.msra.mxu0 0.0
    %5650 = vmatprep.subr.mxu0 0.0
    %5651 = vmatpush2.msra.mxu0 0.0
    %5652 = vmatprep.mubr.f32.mxu0 0.0
    %5653 = vmatmul.mubr.f32.gmra.mxu0 %v5584
    %v5654 = vpop.f32.mrf.mxu0
    %v5655 = vadd.f32 %v5512, %v5654
    %v5656 = vpop.f32.mrf.mxu0
    %5657 = vmatprep.mubr.f32.mxu0 0.0
    %5658 = vmatmul.mubr.f32.gmra.mxu0 %v5586
    %v5659 = vpop.f32.mrf.mxu0
    %v5660 = vadd.f32 %v5517, %v5659
    %v5661 = vpop.f32.mrf.mxu0
    %5662 = vdwg.mxu0
    %v5665 = vcombine.high %v5655, %v5655
    %v5667 = vunpack.c.l.s4 1966171168
    %v5668 = vunpack.c.0.s8 %v5667
    %v5669 = vlaneseq
    %v5670 = vshrl.u32 %v5669, 7
    %v5671 = vsub.s32 %v5668, %v5670
    %v5672 = vrot.slane %v5655, %v5671
    %v5674 = vunpack.c.l.s4 1966171168
    %v5675 = vunpack.c.0.s8 %v5674
    %v5676 = vlaneseq
    %v5677 = vshrl.u32 %v5676, 7
    %v5678 = vsub.s32 %v5675, %v5677
    %v5679 = vrot.slane %v5665, %v5678
    %v5680 = vcombine.high %v5672, %v5672
    %v5681 = vcombine.high %v5679, %v5679
    %v5683 = vunpack.c.l.s4 1966171168
    %v5684 = vunpack.c.0.s8 %v5683
    %v5685 = vlaneseq
    %v5686 = vshrl.u32 %v5685, 7
    %v5687 = vsub.s32 %v5684, %v5686
    %v5688 = vrot.slane %v5672, %v5687
    %v5690 = vunpack.c.l.s4 1966171168
    %v5691 = vunpack.c.0.s8 %v5690
    %v5692 = vlaneseq
    %v5693 = vshrl.u32 %v5692, 7
    %v5694 = vsub.s32 %v5691, %v5693
    %v5695 = vrot.slane %v5679, %v5694
    %v5697 = vunpack.c.l.s4 1966171168
    %v5698 = vunpack.c.0.s8 %v5697
    %v5699 = vlaneseq
    %v5700 = vshrl.u32 %v5699, 7
    %v5701 = vsub.s32 %v5698, %v5700
    %v5702 = vrot.slane %v5680, %v5701
    %v5704 = vunpack.c.l.s4 1966171168
    %v5705 = vunpack.c.0.s8 %v5704
    %v5706 = vlaneseq
    %v5707 = vshrl.u32 %v5706, 7
    %v5708 = vsub.s32 %v5705, %v5707
    %v5709 = vrot.slane %v5681, %v5708
    %v5710 = vcombine.high %v5688, %v5688
    %v5711 = vcombine.high %v5695, %v5695
    %v5712 = vcombine.high %v5702, %v5702
    %v5713 = vcombine.high %v5709, %v5709
    %v5715 = vunpack.c.l.s4 1966171168
    %v5716 = vunpack.c.0.s8 %v5715
    %v5717 = vlaneseq
    %v5718 = vshrl.u32 %v5717, 7
    %v5719 = vsub.s32 %v5716, %v5718
    %v5720 = vrot.slane %v5660, %v5719
    %v5721 = vcombine.high %v5720, %v5720
    %v5723 = vunpack.c.l.s4 1966171168
    %v5724 = vunpack.c.0.s8 %v5723
    %v5725 = vlaneseq
    %v5726 = vshrl.u32 %v5725, 7
    %v5727 = vsub.s32 %v5724, %v5726
    %v5728 = vrot.slane %v5720, %v5727
    %v5730 = vunpack.c.l.s4 1966171168
    %v5731 = vunpack.c.0.s8 %v5730
    %v5732 = vlaneseq
    %v5733 = vshrl.u32 %v5732, 7
    %v5734 = vsub.s32 %v5731, %v5733
    %v5735 = vrot.slane %v5721, %v5734
    %v5746 = vadd.f32 %v3761, %v5688
    %v5747 = vadd.f32 %v3762, %v5702
    %v5748 = vadd.f32 %v3763, %v5710
    %v5749 = vadd.f32 %v3764, %v5712
    %v5750 = vadd.f32 %v3765, %v5695
    %v5751 = vadd.f32 %v3766, %v5709
    %v5752 = vadd.f32 %v3767, %v5711
    %v5753 = vadd.f32 %v3768, %v5713
    %v5754 = vadd.f32 %v3769, %v5728
    %v5755 = vadd.f32 %v3770, %v5735
    %v5756 = vlaneseq
    %v5757 = vshrl.u32 %v5756, 7
    %v5758 = vsub.s32 0, %v5757
    %v5759 = vrot.slane %v3773, %v5758
    %v5761 = vcombine.high %v5759, %v5759
    %v5763 = vunpack.c.l.s4 1966171168
    %v5764 = vunpack.c.0.s8 %v5763
    %v5765 = vlaneseq
    %v5766 = vshrl.u32 %v5765, 7
    %v5767 = vsub.s32 %v5764, %v5766
    %v5768 = vrot.slane %v5759, %v5767
    %v5770 = vunpack.c.l.s4 1966171168
    %v5771 = vunpack.c.0.s8 %v5770
    %v5772 = vlaneseq
    %v5773 = vshrl.u32 %v5772, 7
    %v5774 = vsub.s32 %v5771, %v5773
    %v5775 = vrot.slane %v5761, %v5774
    %v5776 = vcombine.high %v5768, %v5768
    %v5777 = vcombine.high %v5775, %v5775
    %v5779 = vunpack.c.l.s4 1966171168
    %v5780 = vunpack.c.0.s8 %v5779
    %v5781 = vlaneseq
    %v5782 = vshrl.u32 %v5781, 7
    %v5783 = vsub.s32 %v5780, %v5782
    %v5784 = vrot.slane %v5768, %v5783
    %v5786 = vunpack.c.l.s4 1966171168
    %v5787 = vunpack.c.0.s8 %v5786
    %v5788 = vlaneseq
    %v5789 = vshrl.u32 %v5788, 7
    %v5790 = vsub.s32 %v5787, %v5789
    %v5791 = vrot.slane %v5775, %v5790
    %v5793 = vunpack.c.l.s4 1966171168
    %v5794 = vunpack.c.0.s8 %v5793
    %v5795 = vlaneseq
    %v5796 = vshrl.u32 %v5795, 7
    %v5797 = vsub.s32 %v5794, %v5796
    %v5798 = vrot.slane %v5776, %v5797
    %v5800 = vunpack.c.l.s4 1966171168
    %v5801 = vunpack.c.0.s8 %v5800
    %v5802 = vlaneseq
    %v5803 = vshrl.u32 %v5802, 7
    %v5804 = vsub.s32 %v5801, %v5803
    %v5805 = vrot.slane %v5777, %v5804
    %v5806 = vcombine.high %v5784, %v5784
    %v5807 = vcombine.high %v5791, %v5791
    %v5808 = vcombine.high %v5798, %v5798
    %v5809 = vcombine.high %v5805, %v5805
    %v5818 = vadd.f32 %v5746, %v5784
    %v5819 = vadd.f32 %v5747, %v5798
    %v5820 = vadd.f32 %v5748, %v5806
    %v5821 = vadd.f32 %v5749, %v5808
    %v5822 = vadd.f32 %v5750, %v5791
    %v5823 = vadd.f32 %v5751, %v5805
    %v5824 = vadd.f32 %v5752, %v5807
    %v5825 = vadd.f32 %v5753, %v5809
    %v5826 = vadd.f32 %v5754, %v5784
    %v5827 = vadd.f32 %v5755, %v5798
    %v5838 = vcombine.low %v5818, %v5819
    %v5839 = vcombine.low %v5820, %v5821
    %v5840 = vcombine.low %v5822, %v5823
    %v5841 = vcombine.low %v5824, %v5825
    %v5843 = vunpack.c.l.s4 1966171168
    %v5844 = vunpack.c.0.s8 %v5843
    %v5845 = vlaneseq
    %v5846 = vshrl.u32 %v5845, 7
    %v5847 = vsub.s32 %v5844, %v5846
    %v5848 = vrot.slane %v5838, %v5847
    %v5850 = vunpack.c.l.s4 1966171168
    %v5851 = vunpack.c.0.s8 %v5850
    %v5852 = vlaneseq
    %v5853 = vshrl.u32 %v5852, 7
    %v5854 = vsub.s32 %v5851, %v5853
    %v5855 = vrot.slane %v5839, %v5854
    %v5857 = vunpack.c.l.s4 1966171168
    %v5858 = vunpack.c.0.s8 %v5857
    %v5859 = vlaneseq
    %v5860 = vshrl.u32 %v5859, 7
    %v5861 = vsub.s32 %v5858, %v5860
    %v5862 = vrot.slane %v5840, %v5861
    %v5864 = vunpack.c.l.s4 1966171168
    %v5865 = vunpack.c.0.s8 %v5864
    %v5866 = vlaneseq
    %v5867 = vshrl.u32 %v5866, 7
    %v5868 = vsub.s32 %v5865, %v5867
    %v5869 = vrot.slane %v5841, %v5868
    %v5870 = vcombine.low %v5848, %v5855
    %v5871 = vcombine.low %v5862, %v5869
    %v5873 = vunpack.c.l.s4 1966171168
    %v5874 = vunpack.c.0.s8 %v5873
    %v5875 = vlaneseq
    %v5876 = vshrl.u32 %v5875, 7
    %v5877 = vsub.s32 %v5874, %v5876
    %v5878 = vrot.slane %v5870, %v5877
    %v5880 = vunpack.c.l.s4 1966171168
    %v5881 = vunpack.c.0.s8 %v5880
    %v5882 = vlaneseq
    %v5883 = vshrl.u32 %v5882, 7
    %v5884 = vsub.s32 %v5881, %v5883
    %v5885 = vrot.slane %v5871, %v5884
    %v5886 = vcombine.low %v5878, %v5885
    %v5887 = vcombine.low %v5826, %v5827
    %v5889 = vunpack.c.l.s4 1966171168
    %v5890 = vunpack.c.0.s8 %v5889
    %v5891 = vlaneseq
    %v5892 = vshrl.u32 %v5891, 7
    %v5893 = vsub.s32 %v5890, %v5892
    %v5894 = vrot.slane %v5887, %v5893
    %v5896 = vunpack.c.l.s4 1966171168
    %v5897 = vunpack.c.0.s8 %v5896
    %v5898 = vlaneseq
    %v5899 = vshrl.u32 %v5898, 7
    %v5900 = vsub.s32 %v5897, %v5899
    %v5901 = vrot.slane %v5894, %v5900
    %v5904 = vsel %vm298, %v5886, 0.0
    %5905 = vadd.xlane.f32.xlu0 %v5904
    %v5906 = vpop.xlane.xlu0 %5905
    %v5907 = vsel %vm302, %v5901, 0.0
    %5908 = vadd.xlane.f32.xlu0 %v5907
    %v5909 = vpop.xlane.xlu0 %5908
    %v5910 = vmul.f32 %v5906, %v306
    %v5911 = vmul.f32 %v5909, %v306
    %v5912 = vmul.f32 %v5818, %v5818
    %v5913 = vmul.f32 %v5819, %v5819
    %v5914 = vmul.f32 %v5820, %v5820
    %v5915 = vmul.f32 %v5821, %v5821
    %v5916 = vmul.f32 %v5822, %v5822
    %v5917 = vmul.f32 %v5823, %v5823
    %v5918 = vmul.f32 %v5824, %v5824
    %v5919 = vmul.f32 %v5825, %v5825
    %v5920 = vmul.f32 %v5826, %v5826
    %v5921 = vmul.f32 %v5827, %v5827
    %v5932 = vcombine.low %v5912, %v5913
    %v5933 = vcombine.low %v5914, %v5915
    %v5934 = vcombine.low %v5916, %v5917
    %v5935 = vcombine.low %v5918, %v5919
    %v5937 = vunpack.c.l.s4 1966171168
    %v5938 = vunpack.c.0.s8 %v5937
    %v5939 = vlaneseq
    %v5940 = vshrl.u32 %v5939, 7
    %v5941 = vsub.s32 %v5938, %v5940
    %v5942 = vrot.slane %v5932, %v5941
    %v5944 = vunpack.c.l.s4 1966171168
    %v5945 = vunpack.c.0.s8 %v5944
    %v5946 = vlaneseq
    %v5947 = vshrl.u32 %v5946, 7
    %v5948 = vsub.s32 %v5945, %v5947
    %v5949 = vrot.slane %v5933, %v5948
    %v5951 = vunpack.c.l.s4 1966171168
    %v5952 = vunpack.c.0.s8 %v5951
    %v5953 = vlaneseq
    %v5954 = vshrl.u32 %v5953, 7
    %v5955 = vsub.s32 %v5952, %v5954
    %v5956 = vrot.slane %v5934, %v5955
    %v5958 = vunpack.c.l.s4 1966171168
    %v5959 = vunpack.c.0.s8 %v5958
    %v5960 = vlaneseq
    %v5961 = vshrl.u32 %v5960, 7
    %v5962 = vsub.s32 %v5959, %v5961
    %v5963 = vrot.slane %v5935, %v5962
    %v5964 = vcombine.low %v5942, %v5949
    %v5965 = vcombine.low %v5956, %v5963
    %v5967 = vunpack.c.l.s4 1966171168
    %v5968 = vunpack.c.0.s8 %v5967
    %v5969 = vlaneseq
    %v5970 = vshrl.u32 %v5969, 7
    %v5971 = vsub.s32 %v5968, %v5970
    %v5972 = vrot.slane %v5964, %v5971
    %v5974 = vunpack.c.l.s4 1966171168
    %v5975 = vunpack.c.0.s8 %v5974
    %v5976 = vlaneseq
    %v5977 = vshrl.u32 %v5976, 7
    %v5978 = vsub.s32 %v5975, %v5977
    %v5979 = vrot.slane %v5965, %v5978
    %v5980 = vcombine.low %v5972, %v5979
    %v5981 = vcombine.low %v5920, %v5921
    %v5983 = vunpack.c.l.s4 1966171168
    %v5984 = vunpack.c.0.s8 %v5983
    %v5985 = vlaneseq
    %v5986 = vshrl.u32 %v5985, 7
    %v5987 = vsub.s32 %v5984, %v5986
    %v5988 = vrot.slane %v5981, %v5987
    %v5990 = vunpack.c.l.s4 1966171168
    %v5991 = vunpack.c.0.s8 %v5990
    %v5992 = vlaneseq
    %v5993 = vshrl.u32 %v5992, 7
    %v5994 = vsub.s32 %v5991, %v5993
    %v5995 = vrot.slane %v5988, %v5994
    %v5998 = vsel %vm298, %v5980, 0.0
    %5999 = vadd.xlane.f32.xlu0 %v5998
    %v6000 = vpop.xlane.xlu0 %5999
    %v6001 = vsel %vm302, %v5995, 0.0
    %6002 = vadd.xlane.f32.xlu0 %v6001
    %v6003 = vpop.xlane.xlu0 %6002
    %v6004 = vmul.f32 %v6000, %v306
    %v6005 = vmul.f32 %v6003, %v306
    %v6006 = vmul.f32 %v5910, %v5910
    %v6007 = vmul.f32 %v5911, %v5911
    %v6008 = vsub.f32 %v6004, %v6006
    %v6009 = vsub.f32 %v6005, %v6007
    %v6010 = vmax.f32 %v6008, 0.0
    %v6011 = vmax.f32 %v6009, 0.0
    %v6014 = vlaneseq
    %v6015 = vshrl.u32 %v6014, 7
    %v6016 = vsub.s32 0, %v6015
    %v6017 = vrot.slane %v5910, %v6016
    %v6018 = vlaneseq
    %v6019 = vshrl.u32 %v6018, 7
    %v6020 = vsub.s32 1, %v6019
    %v6021 = vrot.slane %v5910, %v6020
    %v6022 = vlaneseq
    %v6023 = vshrl.u32 %v6022, 7
    %v6024 = vsub.s32 2, %v6023
    %v6025 = vrot.slane %v5910, %v6024
    %v6026 = vlaneseq
    %v6027 = vshrl.u32 %v6026, 7
    %v6028 = vsub.s32 3, %v6027
    %v6029 = vrot.slane %v5910, %v6028
    %v6030 = vlaneseq
    %v6031 = vshrl.u32 %v6030, 7
    %v6032 = vsub.s32 4, %v6031
    %v6033 = vrot.slane %v5910, %v6032
    %v6034 = vlaneseq
    %v6035 = vshrl.u32 %v6034, 7
    %v6036 = vsub.s32 5, %v6035
    %v6037 = vrot.slane %v5910, %v6036
    %v6038 = vlaneseq
    %v6039 = vshrl.u32 %v6038, 7
    %v6040 = vsub.s32 6, %v6039
    %v6041 = vrot.slane %v5910, %v6040
    %v6042 = vlaneseq
    %v6043 = vshrl.u32 %v6042, 7
    %v6044 = vsub.s32 7, %v6043
    %v6045 = vrot.slane %v5910, %v6044
    %v6046 = vlaneseq
    %v6047 = vshrl.u32 %v6046, 7
    %v6048 = vsub.s32 0, %v6047
    %v6049 = vrot.slane %v5911, %v6048
    %v6050 = vlaneseq
    %v6051 = vshrl.u32 %v6050, 7
    %v6052 = vsub.s32 1, %v6051
    %v6053 = vrot.slane %v5911, %v6052
    %v6064 = vsub.f32 %v5818, %v6017
    %v6065 = vsub.f32 %v5819, %v6021
    %v6066 = vsub.f32 %v5820, %v6025
    %v6067 = vsub.f32 %v5821, %v6029
    %v6068 = vsub.f32 %v5822, %v6033
    %v6069 = vsub.f32 %v5823, %v6037
    %v6070 = vsub.f32 %v5824, %v6041
    %v6071 = vsub.f32 %v5825, %v6045
    %v6072 = vsub.f32 %v5826, %v6049
    %v6073 = vsub.f32 %v5827, %v6053
    %v6074 = vadd.f32 %v6010, 1e-05
    %v6075 = vadd.f32 %v6011, 1e-05
    %v6076 = vrsqrt.pop %v6074
    %v6077 = vrsqrt.pop %v6075
    %v6080 = vlaneseq
    %v6081 = vshrl.u32 %v6080, 7
    %v6082 = vsub.s32 0, %v6081
    %v6083 = vrot.slane %v6076, %v6082
    %v6084 = vlaneseq
    %v6085 = vshrl.u32 %v6084, 7
    %v6086 = vsub.s32 1, %v6085
    %v6087 = vrot.slane %v6076, %v6086
    %v6088 = vlaneseq
    %v6089 = vshrl.u32 %v6088, 7
    %v6090 = vsub.s32 2, %v6089
    %v6091 = vrot.slane %v6076, %v6090
    %v6092 = vlaneseq
    %v6093 = vshrl.u32 %v6092, 7
    %v6094 = vsub.s32 3, %v6093
    %v6095 = vrot.slane %v6076, %v6094
    %v6096 = vlaneseq
    %v6097 = vshrl.u32 %v6096, 7
    %v6098 = vsub.s32 4, %v6097
    %v6099 = vrot.slane %v6076, %v6098
    %v6100 = vlaneseq
    %v6101 = vshrl.u32 %v6100, 7
    %v6102 = vsub.s32 5, %v6101
    %v6103 = vrot.slane %v6076, %v6102
    %v6104 = vlaneseq
    %v6105 = vshrl.u32 %v6104, 7
    %v6106 = vsub.s32 6, %v6105
    %v6107 = vrot.slane %v6076, %v6106
    %v6108 = vlaneseq
    %v6109 = vshrl.u32 %v6108, 7
    %v6110 = vsub.s32 7, %v6109
    %v6111 = vrot.slane %v6076, %v6110
    %v6112 = vlaneseq
    %v6113 = vshrl.u32 %v6112, 7
    %v6114 = vsub.s32 0, %v6113
    %v6115 = vrot.slane %v6077, %v6114
    %v6116 = vlaneseq
    %v6117 = vshrl.u32 %v6116, 7
    %v6118 = vsub.s32 1, %v6117
    %v6119 = vrot.slane %v6077, %v6118
    %v6130 = vmul.f32 %v6064, %v6083
    %v6131 = vmul.f32 %v6065, %v6087
    %v6132 = vmul.f32 %v6066, %v6091
    %v6133 = vmul.f32 %v6067, %v6095
    %v6134 = vmul.f32 %v6068, %v6099
    %v6135 = vmul.f32 %v6069, %v6103
    %v6136 = vmul.f32 %v6070, %v6107
    %v6137 = vmul.f32 %v6071, %v6111
    %v6138 = vmul.f32 %v6072, %v6115
    %v6139 = vmul.f32 %v6073, %v6119
    %v6140 = vlaneseq
    %v6141 = vshrl.u32 %v6140, 7
    %v6142 = vsub.s32 0, %v6141
    %v6143 = vrot.slane %v3774, %v6142
    %v6145 = vcombine.high %v6143, %v6143
    %v6147 = vunpack.c.l.s4 1966171168
    %v6148 = vunpack.c.0.s8 %v6147
    %v6149 = vlaneseq
    %v6150 = vshrl.u32 %v6149, 7
    %v6151 = vsub.s32 %v6148, %v6150
    %v6152 = vrot.slane %v6143, %v6151
    %v6154 = vunpack.c.l.s4 1966171168
    %v6155 = vunpack.c.0.s8 %v6154
    %v6156 = vlaneseq
    %v6157 = vshrl.u32 %v6156, 7
    %v6158 = vsub.s32 %v6155, %v6157
    %v6159 = vrot.slane %v6145, %v6158
    %v6160 = vcombine.high %v6152, %v6152
    %v6161 = vcombine.high %v6159, %v6159
    %v6163 = vunpack.c.l.s4 1966171168
    %v6164 = vunpack.c.0.s8 %v6163
    %v6165 = vlaneseq
    %v6166 = vshrl.u32 %v6165, 7
    %v6167 = vsub.s32 %v6164, %v6166
    %v6168 = vrot.slane %v6152, %v6167
    %v6170 = vunpack.c.l.s4 1966171168
    %v6171 = vunpack.c.0.s8 %v6170
    %v6172 = vlaneseq
    %v6173 = vshrl.u32 %v6172, 7
    %v6174 = vsub.s32 %v6171, %v6173
    %v6175 = vrot.slane %v6159, %v6174
    %v6177 = vunpack.c.l.s4 1966171168
    %v6178 = vunpack.c.0.s8 %v6177
    %v6179 = vlaneseq
    %v6180 = vshrl.u32 %v6179, 7
    %v6181 = vsub.s32 %v6178, %v6180
    %v6182 = vrot.slane %v6160, %v6181
    %v6184 = vunpack.c.l.s4 1966171168
    %v6185 = vunpack.c.0.s8 %v6184
    %v6186 = vlaneseq
    %v6187 = vshrl.u32 %v6186, 7
    %v6188 = vsub.s32 %v6185, %v6187
    %v6189 = vrot.slane %v6161, %v6188
    %v6190 = vcombine.high %v6168, %v6168
    %v6191 = vcombine.high %v6175, %v6175
    %v6192 = vcombine.high %v6182, %v6182
    %v6193 = vcombine.high %v6189, %v6189
    %v6202 = vmul.f32 %v6130, %v6168
    %v6203 = vmul.f32 %v6131, %v6182
    %v6204 = vmul.f32 %v6132, %v6190
    %v6205 = vmul.f32 %v6133, %v6192
    %v6206 = vmul.f32 %v6134, %v6175
    %v6207 = vmul.f32 %v6135, %v6189
    %v6208 = vmul.f32 %v6136, %v6191
    %v6209 = vmul.f32 %v6137, %v6193
    %v6210 = vmul.f32 %v6138, %v6168
    %v6211 = vmul.f32 %v6139, %v6182
    %v6212 = vlaneseq
    %v6213 = vshrl.u32 %v6212, 7
    %v6214 = vsub.s32 0, %v6213
    %v6215 = vrot.slane %v3775, %v6214
    %v6217 = vcombine.high %v6215, %v6215
    %v6219 = vunpack.c.l.s4 1966171168
    %v6220 = vunpack.c.0.s8 %v6219
    %v6221 = vlaneseq
    %v6222 = vshrl.u32 %v6221, 7
    %v6223 = vsub.s32 %v6220, %v6222
    %v6224 = vrot.slane %v6215, %v6223
    %v6226 = vunpack.c.l.s4 1966171168
    %v6227 = vunpack.c.0.s8 %v6226
    %v6228 = vlaneseq
    %v6229 = vshrl.u32 %v6228, 7
    %v6230 = vsub.s32 %v6227, %v6229
    %v6231 = vrot.slane %v6217, %v6230
    %v6232 = vcombine.high %v6224, %v6224
    %v6233 = vcombine.high %v6231, %v6231
    %v6235 = vunpack.c.l.s4 1966171168
    %v6236 = vunpack.c.0.s8 %v6235
    %v6237 = vlaneseq
    %v6238 = vshrl.u32 %v6237, 7
    %v6239 = vsub.s32 %v6236, %v6238
    %v6240 = vrot.slane %v6224, %v6239
    %v6242 = vunpack.c.l.s4 1966171168
    %v6243 = vunpack.c.0.s8 %v6242
    %v6244 = vlaneseq
    %v6245 = vshrl.u32 %v6244, 7
    %v6246 = vsub.s32 %v6243, %v6245
    %v6247 = vrot.slane %v6231, %v6246
    %v6249 = vunpack.c.l.s4 1966171168
    %v6250 = vunpack.c.0.s8 %v6249
    %v6251 = vlaneseq
    %v6252 = vshrl.u32 %v6251, 7
    %v6253 = vsub.s32 %v6250, %v6252
    %v6254 = vrot.slane %v6232, %v6253
    %v6256 = vunpack.c.l.s4 1966171168
    %v6257 = vunpack.c.0.s8 %v6256
    %v6258 = vlaneseq
    %v6259 = vshrl.u32 %v6258, 7
    %v6260 = vsub.s32 %v6257, %v6259
    %v6261 = vrot.slane %v6233, %v6260
    %v6262 = vcombine.high %v6240, %v6240
    %v6263 = vcombine.high %v6247, %v6247
    %v6264 = vcombine.high %v6254, %v6254
    %v6265 = vcombine.high %v6261, %v6261
    %v6274 = vadd.f32 %v6202, %v6240
    %v6275 = vadd.f32 %v6203, %v6254
    %v6276 = vadd.f32 %v6204, %v6262
    %v6277 = vadd.f32 %v6205, %v6264
    %v6278 = vadd.f32 %v6206, %v6247
    %v6279 = vadd.f32 %v6207, %v6261
    %v6280 = vadd.f32 %v6208, %v6263
    %v6281 = vadd.f32 %v6209, %v6265
    %v6282 = vadd.f32 %v6210, %v6240
    %v6283 = vadd.f32 %v6211, %v6254
    %v6284 = vld [vmem:[%s4 + $0x3] sm:$0x1]
    %v6285 = vlaneseq
    %v6286 = vshrl.u32 %v6285, 7
    %v6287 = vsub.s32 0, %v6286
    %v6288 = vrot.slane %v6284, %v6287
    %v6299 = vcombine.low %v6274, %v6275
    %v6300 = vcombine.low %v6276, %v6277
    %v6301 = vcombine.low %v6278, %v6279
    %v6302 = vcombine.low %v6280, %v6281
    %v6304 = vunpack.c.l.s4 1966171168
    %v6305 = vunpack.c.0.s8 %v6304
    %v6306 = vlaneseq
    %v6307 = vshrl.u32 %v6306, 7
    %v6308 = vsub.s32 %v6305, %v6307
    %v6309 = vrot.slane %v6299, %v6308
    %v6311 = vunpack.c.l.s4 1966171168
    %v6312 = vunpack.c.0.s8 %v6311
    %v6313 = vlaneseq
    %v6314 = vshrl.u32 %v6313, 7
    %v6315 = vsub.s32 %v6312, %v6314
    %v6316 = vrot.slane %v6300, %v6315
    %v6318 = vunpack.c.l.s4 1966171168
    %v6319 = vunpack.c.0.s8 %v6318
    %v6320 = vlaneseq
    %v6321 = vshrl.u32 %v6320, 7
    %v6322 = vsub.s32 %v6319, %v6321
    %v6323 = vrot.slane %v6301, %v6322
    %v6325 = vunpack.c.l.s4 1966171168
    %v6326 = vunpack.c.0.s8 %v6325
    %v6327 = vlaneseq
    %v6328 = vshrl.u32 %v6327, 7
    %v6329 = vsub.s32 %v6326, %v6328
    %v6330 = vrot.slane %v6302, %v6329
    %v6331 = vcombine.low %v6309, %v6316
    %v6332 = vcombine.low %v6323, %v6330
    %v6334 = vunpack.c.l.s4 1966171168
    %v6335 = vunpack.c.0.s8 %v6334
    %v6336 = vlaneseq
    %v6337 = vshrl.u32 %v6336, 7
    %v6338 = vsub.s32 %v6335, %v6337
    %v6339 = vrot.slane %v6331, %v6338
    %v6341 = vunpack.c.l.s4 1966171168
    %v6342 = vunpack.c.0.s8 %v6341
    %v6343 = vlaneseq
    %v6344 = vshrl.u32 %v6343, 7
    %v6345 = vsub.s32 %v6342, %v6344
    %v6346 = vrot.slane %v6332, %v6345
    %v6347 = vcombine.low %v6339, %v6346
    %v6348 = vcombine.low %v6282, %v6283
    %v6350 = vunpack.c.l.s4 1966171168
    %v6351 = vunpack.c.0.s8 %v6350
    %v6352 = vlaneseq
    %v6353 = vshrl.u32 %v6352, 7
    %v6354 = vsub.s32 %v6351, %v6353
    %v6355 = vrot.slane %v6348, %v6354
    %v6357 = vunpack.c.l.s4 1966171168
    %v6358 = vunpack.c.0.s8 %v6357
    %v6359 = vlaneseq
    %v6360 = vshrl.u32 %v6359, 7
    %v6361 = vsub.s32 %v6358, %v6360
    %v6362 = vrot.slane %v6355, %v6361
    %v6363 = vsel %vm298, %v6347, 0
    %v6365 = vsel %vm298, %v6362, 0
    %6367 = vmatprep.subr.mxu0 0.0
    %6368 = vmatpush1.msra.mxu0 0.0
    %6369 = vmatprep.subr.mxu0 0.0
    %6370 = vmatpush1.msra.mxu0 0.0
    %6371 = vmatprep.subr.mxu0 0.0
    %6372 = vmatpush1.msra.mxu0 0.0
    %6373 = vmatprep.subr.mxu0 0.0
    %6374 = vmatpush1.msra.mxu0 0.0
    %6375 = vmatprep.subr.mxu0 0.0
    %6376 = vmatpush1.msra.mxu0 0.0
    %6377 = vmatprep.subr.mxu0 0.0
    %6378 = vmatpush1.msra.mxu0 0.0
    %6379 = vmatprep.subr.mxu0 0.0
    %6380 = vmatpush1.msra.mxu0 0.0
    %6381 = vmatprep.subr.mxu0 0.0
    %6382 = vmatpush1.msra.mxu0 0.0
    %6383 = vmatprep.subr.mxu0 0.0
    %6384 = vmatpush1.msra.mxu0 0.0
    %6385 = vmatprep.subr.mxu0 0.0
    %6386 = vmatpush1.msra.mxu0 0.0
    %6387 = vmatprep.subr.mxu0 0.0
    %6388 = vmatpush1.msra.mxu0 0.0
    %6389 = vmatprep.subr.mxu0 0.0
    %6390 = vmatpush1.msra.mxu0 0.0
    %6391 = vmatprep.subr.mxu0 0.0
    %6392 = vmatpush1.msra.mxu0 %v4242
    %6393 = vmatprep.subr.mxu0 0.0
    %6394 = vmatpush1.msra.mxu0 %v4240
    %6395 = vmatprep.subr.mxu0 0.0
    %6396 = vmatpush1.msra.mxu0 %v4238
    %6397 = vmatprep.subr.mxu0 0.0
    %6398 = vmatpush1.msra.mxu0 %v4236
    %6399 = vmatprep.subr.mxu0 0.0
    %6400 = vmatpush2.msra.mxu0 0.0
    %6401 = vmatprep.subr.mxu0 0.0
    %6402 = vmatpush2.msra.mxu0 0.0
    %6403 = vmatprep.subr.mxu0 0.0
    %6404 = vmatpush2.msra.mxu0 0.0
    %6405 = vmatprep.subr.mxu0 0.0
    %6406 = vmatpush2.msra.mxu0 0.0
    %6407 = vmatprep.subr.mxu0 0.0
    %6408 = vmatpush2.msra.mxu0 0.0
    %6409 = vmatprep.subr.mxu0 0.0
    %6410 = vmatpush2.msra.mxu0 0.0
    %6411 = vmatprep.subr.mxu0 0.0
    %6412 = vmatpush2.msra.mxu0 0.0
    %6413 = vmatprep.subr.mxu0 0.0
    %6414 = vmatpush2.msra.mxu0 0.0
    %6415 = vmatprep.subr.mxu0 0.0
    %6416 = vmatpush2.msra.mxu0 0.0
    %6417 = vmatprep.subr.mxu0 0.0
    %6418 = vmatpush2.msra.mxu0 0.0
    %6419 = vmatprep.subr.mxu0 0.0
    %6420 = vmatpush2.msra.mxu0 0.0
    %6421 = vmatprep.subr.mxu0 0.0
    %6422 = vmatpush2.msra.mxu0 0.0
    %6423 = vmatprep.subr.mxu0 0.0
    %6424 = vmatpush2.msra.mxu0 0.0
    %6425 = vmatprep.subr.mxu0 0.0
    %6426 = vmatpush2.msra.mxu0 0.0
    %6427 = vmatprep.subr.mxu0 0.0
    %6428 = vmatpush2.msra.mxu0 0.0
    %6429 = vmatprep.subr.mxu0 0.0
    %6430 = vmatpush2.msra.mxu0 0.0
    %6431 = vmatprep.mubr.f32.mxu0 0.0
    %6432 = vmatmul.mubr.f32.gmra.mxu0 %v6363
    %v6433 = vpop.f32.mrf.mxu0
    %v6434 = vadd.f32 %v6288, %v6433
    %v6435 = vpop.f32.mrf.mxu0
    %6436 = vmatprep.mubr.f32.mxu0 0.0
    %6437 = vmatmul.mubr.f32.gmra.mxu0 %v6365
    %v6438 = vpop.f32.mrf.mxu0
    %v6439 = vadd.f32 %v6288, %v6438
    %v6440 = vpop.f32.mrf.mxu0
    %6441 = vdwg.mxu0
    %v6442 = vmul.f32 %v6434, 1.702
    %v6443 = vmul.f32 %v6439, 1.702
    %v6444 = vxor.u32 %v6442, 2147483648
    %v6445 = vxor.u32 %v6443, 2147483648
    %v6446 = vmul.f32 %v6444, 1.442695
    %v6447 = vpow.pop %v6446
    %v6448 = vmul.f32 %v6445, 1.442695
    %v6449 = vpow.pop %v6448
    %v6450 = vadd.f32 %v6447, 1.0
    %v6451 = vadd.f32 %v6449, 1.0
    %v6452 = vrcp.pop %v6450
    %v6453 = vmul.f32 1.0, %v6452
    %v6454 = vrcp.pop %v6451
    %v6455 = vmul.f32 1.0, %v6454
    %v6456 = vmul.f32 %v6434, %v6453
    %v6457 = vmul.f32 %v6439, %v6455
    %v6458 = vld [vmem:[%s2 + $0x180] sm:$0xff]
    %v6459 = vld [vmem:[%s2 + $0x188] sm:$0xff]
    %v6460 = vld [vmem:[%s2 + $0x190] sm:$0xff]
    %v6461 = vld [vmem:[%s2 + $0x198] sm:$0xff]
    %v6462 = vld [vmem:[%s2 + $0x1a0] sm:$0xff]
    %v6463 = vld [vmem:[%s2 + $0x1a8] sm:$0xff]
    %v6464 = vld [vmem:[%s2 + $0x1b0] sm:$0xff]
    %v6465 = vld [vmem:[%s2 + $0x1b8] sm:$0xff]
    %v6466 = vld [vmem:[%s2 + $0x1c0] sm:$0xff]
    %v6467 = vld [vmem:[%s2 + $0x1c8] sm:$0xff]
    %v6468 = vld [vmem:[%s2 + $0x1d0] sm:$0xff]
    %v6469 = vld [vmem:[%s2 + $0x1d8] sm:$0xff]
    %v6470 = vld [vmem:[%s2 + $0x1e0] sm:$0xff]
    %v6471 = vld [vmem:[%s2 + $0x1e8] sm:$0xff]
    %v6472 = vld [vmem:[%s2 + $0x1f0] sm:$0xff]
    %v6473 = vld [vmem:[%s2 + $0x1f8] sm:$0xff]
    %6474 = vmatprep.subr.mxu0 0.0
    %6475 = vmatpush1.msra.mxu0 %v6473
    %6476 = vmatprep.subr.mxu0 0.0
    %6477 = vmatpush1.msra.mxu0 %v6472
    %6478 = vmatprep.subr.mxu0 0.0
    %6479 = vmatpush1.msra.mxu0 %v6471
    %6480 = vmatprep.subr.mxu0 0.0
    %6481 = vmatpush1.msra.mxu0 %v6470
    %6482 = vmatprep.subr.mxu0 0.0
    %6483 = vmatpush1.msra.mxu0 %v6469
    %6484 = vmatprep.subr.mxu0 0.0
    %6485 = vmatpush1.msra.mxu0 %v6468
    %6486 = vmatprep.subr.mxu0 0.0
    %6487 = vmatpush1.msra.mxu0 %v6467
    %6488 = vmatprep.subr.mxu0 0.0
    %6489 = vmatpush1.msra.mxu0 %v6466
    %6490 = vmatprep.subr.mxu0 0.0
    %6491 = vmatpush1.msra.mxu0 %v6465
    %6492 = vmatprep.subr.mxu0 0.0
    %6493 = vmatpush1.msra.mxu0 %v6464
    %6494 = vmatprep.subr.mxu0 0.0
    %6495 = vmatpush1.msra.mxu0 %v6463
    %6496 = vmatprep.subr.mxu0 0.0
    %6497 = vmatpush1.msra.mxu0 %v6462
    %6498 = vmatprep.subr.mxu0 0.0
    %6499 = vmatpush1.msra.mxu0 %v6461
    %6500 = vmatprep.subr.mxu0 0.0
    %6501 = vmatpush1.msra.mxu0 %v6460
    %6502 = vmatprep.subr.mxu0 0.0
    %6503 = vmatpush1.msra.mxu0 %v6459
    %6504 = vmatprep.subr.mxu0 0.0
    %6505 = vmatpush1.msra.mxu0 %v6458
    %6506 = vmatprep.subr.mxu0 0.0
    %6507 = vmatpush2.msra.mxu0 0.0
    %6508 = vmatprep.subr.mxu0 0.0
    %6509 = vmatpush2.msra.mxu0 0.0
    %6510 = vmatprep.subr.mxu0 0.0
    %6511 = vmatpush2.msra.mxu0 0.0
    %6512 = vmatprep.subr.mxu0 0.0
    %6513 = vmatpush2.msra.mxu0 0.0
    %6514 = vmatprep.subr.mxu0 0.0
    %6515 = vmatpush2.msra.mxu0 0.0
    %6516 = vmatprep.subr.mxu0 0.0
    %6517 = vmatpush2.msra.mxu0 0.0
    %6518 = vmatprep.subr.mxu0 0.0
    %6519 = vmatpush2.msra.mxu0 0.0
    %6520 = vmatprep.subr.mxu0 0.0
    %6521 = vmatpush2.msra.mxu0 0.0
    %6522 = vmatprep.subr.mxu0 0.0
    %6523 = vmatpush2.msra.mxu0 0.0
    %6524 = vmatprep.subr.mxu0 0.0
    %6525 = vmatpush2.msra.mxu0 0.0
    %6526 = vmatprep.subr.mxu0 0.0
    %6527 = vmatpush2.msra.mxu0 0.0
    %6528 = vmatprep.subr.mxu0 0.0
    %6529 = vmatpush2.msra.mxu0 0.0
    %6530 = vmatprep.subr.mxu0 0.0
    %6531 = vmatpush2.msra.mxu0 0.0
    %6532 = vmatprep.subr.mxu0 0.0
    %6533 = vmatpush2.msra.mxu0 0.0
    %6534 = vmatprep.subr.mxu0 0.0
    %6535 = vmatpush2.msra.mxu0 0.0
    %6536 = vmatprep.subr.mxu0 0.0
    %6537 = vmatpush2.msra.mxu0 0.0
    %6538 = vmatprep.mubr.f32.mxu0 0.0
    %6539 = vmatmul.mubr.f32.gmra.mxu0 %v6456
    %v6540 = vpop.f32.mrf.mxu0
    %v6541 = vadd.f32 0.0, %v6540
    %v6542 = vpop.f32.mrf.mxu0
    %6543 = vmatprep.mubr.f32.mxu0 0.0
    %6544 = vmatmul.mubr.f32.gmra.mxu0 %v6457
    %v6545 = vpop.f32.mrf.mxu0
    %v6546 = vpop.f32.mrf.mxu0
    %6547 = vdwg.mxu0
    %v6549 = vcombine.high %v6541, %v6541
    %v6551 = vunpack.c.l.s4 1966171168
    %v6552 = vunpack.c.0.s8 %v6551
    %v6553 = vlaneseq
    %v6554 = vshrl.u32 %v6553, 7
    %v6555 = vsub.s32 %v6552, %v6554
    %v6556 = vrot.slane %v6541, %v6555
    %v6558 = vunpack.c.l.s4 1966171168
    %v6559 = vunpack.c.0.s8 %v6558
    %v6560 = vlaneseq
    %v6561 = vshrl.u32 %v6560, 7
    %v6562 = vsub.s32 %v6559, %v6561
    %v6563 = vrot.slane %v6549, %v6562
    %v6564 = vcombine.high %v6563, %v6563
    %v6566 = vunpack.c.l.s4 1966171168
    %v6567 = vunpack.c.0.s8 %v6566
    %v6568 = vlaneseq
    %v6569 = vshrl.u32 %v6568, 7
    %v6570 = vsub.s32 %v6567, %v6569
    %v6571 = vrot.slane %v6556, %v6570
    %v6573 = vunpack.c.l.s4 1966171168
    %v6574 = vunpack.c.0.s8 %v6573
    %v6575 = vlaneseq
    %v6576 = vshrl.u32 %v6575, 7
    %v6577 = vsub.s32 %v6574, %v6576
    %v6578 = vrot.slane %v6564, %v6577
    %v6581 = vadd.f32 %v5818, %v6571
    %v6582 = vadd.f32 %v5823, %v6578
    %v6583 = vlaneseq
    %v6584 = vshrl.u32 %v6583, 7
    %v6585 = vsub.s32 0, %v6584
    %v6586 = vrot.slane %v3776, %v6585
    %v6588 = vcombine.high %v6586, %v6586
    %v6590 = vunpack.c.l.s4 1966171168
    %v6591 = vunpack.c.0.s8 %v6590
    %v6592 = vlaneseq
    %v6593 = vshrl.u32 %v6592, 7
    %v6594 = vsub.s32 %v6591, %v6593
    %v6595 = vrot.slane %v6586, %v6594
    %v6597 = vunpack.c.l.s4 1966171168
    %v6598 = vunpack.c.0.s8 %v6597
    %v6599 = vlaneseq
    %v6600 = vshrl.u32 %v6599, 7
    %v6601 = vsub.s32 %v6598, %v6600
    %v6602 = vrot.slane %v6588, %v6601
    %v6603 = vcombine.high %v6602, %v6602
    %v6605 = vunpack.c.l.s4 1966171168
    %v6606 = vunpack.c.0.s8 %v6605
    %v6607 = vlaneseq
    %v6608 = vshrl.u32 %v6607, 7
    %v6609 = vsub.s32 %v6606, %v6608
    %v6610 = vrot.slane %v6595, %v6609
    %v6612 = vunpack.c.l.s4 1966171168
    %v6613 = vunpack.c.0.s8 %v6612
    %v6614 = vlaneseq
    %v6615 = vshrl.u32 %v6614, 7
    %v6616 = vsub.s32 %v6613, %v6615
    %v6617 = vrot.slane %v6603, %v6616
    %v6620 = vadd.f32 %v6581, %v6610
    %v6621 = vadd.f32 %v6582, %v6617
    %v6622 = vlaneseq
    %v6623 = vshrl.u32 %v6622, 7
    %v6624 = vsub.s32 0, %v6623
    %v6625 = vrot.slane %v3777, %v6624
    %v6627 = vcombine.high %v6625, %v6625
    %v6629 = vunpack.c.l.s4 1966171168
    %v6630 = vunpack.c.0.s8 %v6629
    %v6631 = vlaneseq
    %v6632 = vshrl.u32 %v6631, 7
    %v6633 = vsub.s32 %v6630, %v6632
    %v6634 = vrot.slane %v6625, %v6633
    %v6636 = vunpack.c.l.s4 1966171168
    %v6637 = vunpack.c.0.s8 %v6636
    %v6638 = vlaneseq
    %v6639 = vshrl.u32 %v6638, 7
    %v6640 = vsub.s32 %v6637, %v6639
    %v6641 = vrot.slane %v6627, %v6640
    %v6642 = vcombine.high %v6641, %v6641
    %v6644 = vunpack.c.l.s4 1966171168
    %v6645 = vunpack.c.0.s8 %v6644
    %v6646 = vlaneseq
    %v6647 = vshrl.u32 %v6646, 7
    %v6648 = vsub.s32 %v6645, %v6647
    %v6649 = vrot.slane %v6634, %v6648
    %v6651 = vunpack.c.l.s4 1966171168
    %v6652 = vunpack.c.0.s8 %v6651
    %v6653 = vlaneseq
    %v6654 = vshrl.u32 %v6653, 7
    %v6655 = vsub.s32 %v6652, %v6654
    %v6656 = vrot.slane %v6642, %v6655
    %v6659 = vmul.f32 %v6620, %v6649
    %v6660 = vmul.f32 %v6621, %v6656
    %v6661 = vlaneseq
    %v6662 = vshrl.u32 %v6661, 7
    %v6663 = vsub.s32 0, %v6662
    %v6664 = vrot.slane %v3778, %v6663
    %v6666 = vcombine.high %v6664, %v6664
    %v6668 = vunpack.c.l.s4 1966171168
    %v6669 = vunpack.c.0.s8 %v6668
    %v6670 = vlaneseq
    %v6671 = vshrl.u32 %v6670, 7
    %v6672 = vsub.s32 %v6669, %v6671
    %v6673 = vrot.slane %v6664, %v6672
    %v6675 = vunpack.c.l.s4 1966171168
    %v6676 = vunpack.c.0.s8 %v6675
    %v6677 = vlaneseq
    %v6678 = vshrl.u32 %v6677, 7
    %v6679 = vsub.s32 %v6676, %v6678
    %v6680 = vrot.slane %v6666, %v6679
    %v6681 = vcombine.high %v6680, %v6680
    %v6683 = vunpack.c.l.s4 1966171168
    %v6684 = vunpack.c.0.s8 %v6683
    %v6685 = vlaneseq
    %v6686 = vshrl.u32 %v6685, 7
    %v6687 = vsub.s32 %v6684, %v6686
    %v6688 = vrot.slane %v6673, %v6687
    %v6690 = vunpack.c.l.s4 1966171168
    %v6691 = vunpack.c.0.s8 %v6690
    %v6692 = vlaneseq
    %v6693 = vshrl.u32 %v6692, 7
    %v6694 = vsub.s32 %v6691, %v6693
    %v6695 = vrot.slane %v6681, %v6694
    %v6698 = vadd.f32 %v6659, %v6688
    %v6699 = vadd.f32 %v6660, %v6695
    %v6700 = vld [vmem:[%s1 + $0x17] sm:$0x1]
    %v6701 = vld [vmem:[%s1 + $0x18] sm:$0x1]
    %v6704 = vcombine.low %v6698, %v6699
    %v6706 = vunpack.c.l.s4 1966171168
    %v6707 = vunpack.c.0.s8 %v6706
    %v6708 = vlaneseq
    %v6709 = vshrl.u32 %v6708, 7
    %v6710 = vsub.s32 %v6707, %v6709
    %v6711 = vrot.slane %v6704, %v6710
    %v6713 = vunpack.c.l.s4 1966171168
    %v6714 = vunpack.c.0.s8 %v6713
    %v6715 = vlaneseq
    %v6716 = vshrl.u32 %v6715, 7
    %v6717 = vsub.s32 %v6714, %v6716
    %v6718 = vrot.slane %v6711, %v6717
    %v6720 = vsel %vm302, %v6718, 0.0
    %6721 = vadd.xlane.f32.xlu0 %v6720
    %v6722 = vpop.xlane.xlu0 %6721
    %v6723 = vmul.f32 %v6722, %v306
    %v6724 = vmul.f32 %v6698, %v6698
    %v6725 = vmul.f32 %v6699, %v6699
    %v6728 = vcombine.low %v6724, %v6725
    %v6730 = vunpack.c.l.s4 1966171168
    %v6731 = vunpack.c.0.s8 %v6730
    %v6732 = vlaneseq
    %v6733 = vshrl.u32 %v6732, 7
    %v6734 = vsub.s32 %v6731, %v6733
    %v6735 = vrot.slane %v6728, %v6734
    %v6737 = vunpack.c.l.s4 1966171168
    %v6738 = vunpack.c.0.s8 %v6737
    %v6739 = vlaneseq
    %v6740 = vshrl.u32 %v6739, 7
    %v6741 = vsub.s32 %v6738, %v6740
    %v6742 = vrot.slane %v6735, %v6741
    %v6744 = vsel %vm302, %v6742, 0.0
    %6745 = vadd.xlane.f32.xlu0 %v6744
    %v6746 = vpop.xlane.xlu0 %6745
    %v6747 = vmul.f32 %v6746, %v306
    %v6748 = vmul.f32 %v6723, %v6723
    %v6749 = vsub.f32 %v6747, %v6748
    %v6750 = vmax.f32 %v6749, 0.0
    %v6752 = vlaneseq
    %v6753 = vshrl.u32 %v6752, 7
    %v6754 = vsub.s32 0, %v6753
    %v6755 = vrot.slane %v6723, %v6754
    %v6756 = vlaneseq
    %v6757 = vshrl.u32 %v6756, 7
    %v6758 = vsub.s32 1, %v6757
    %v6759 = vrot.slane %v6723, %v6758
    %v6762 = vsub.f32 %v6698, %v6755
    %v6763 = vsub.f32 %v6699, %v6759
    %v6764 = vadd.f32 %v6750, 1e-05
    %v6765 = vrsqrt.pop %v6764
    %v6767 = vlaneseq
    %v6768 = vshrl.u32 %v6767, 7
    %v6769 = vsub.s32 0, %v6768
    %v6770 = vrot.slane %v6765, %v6769
    %v6771 = vlaneseq
    %v6772 = vshrl.u32 %v6771, 7
    %v6773 = vsub.s32 1, %v6772
    %v6774 = vrot.slane %v6765, %v6773
    %v6777 = vmul.f32 %v6762, %v6770
    %v6778 = vmul.f32 %v6763, %v6774
    %v6779 = vlaneseq
    %v6780 = vshrl.u32 %v6779, 7
    %v6781 = vsub.s32 0, %v6780
    %v6782 = vrot.slane %v6700, %v6781
    %v6785 = vunpack.c.l.s4 1966171168
    %v6786 = vunpack.c.0.s8 %v6785
    %v6787 = vlaneseq
    %v6788 = vshrl.u32 %v6787, 7
    %v6789 = vsub.s32 %v6786, %v6788
    %v6790 = vrot.slane %v6782, %v6789
    %v6791 = vcombine.high %v6790, %v6790
    %v6793 = vunpack.c.l.s4 1966171168
    %v6794 = vunpack.c.0.s8 %v6793
    %v6795 = vlaneseq
    %v6796 = vshrl.u32 %v6795, 7
    %v6797 = vsub.s32 %v6794, %v6796
    %v6798 = vrot.slane %v6790, %v6797
    %v6800 = vunpack.c.l.s4 1966171168
    %v6801 = vunpack.c.0.s8 %v6800
    %v6802 = vlaneseq
    %v6803 = vshrl.u32 %v6802, 7
    %v6804 = vsub.s32 %v6801, %v6803
    %v6805 = vrot.slane %v6791, %v6804
    %v6808 = vmul.f32 %v6777, %v6798
    %v6809 = vmul.f32 %v6778, %v6805
    %v6810 = vlaneseq
    %v6811 = vshrl.u32 %v6810, 7
    %v6812 = vsub.s32 0, %v6811
    %v6813 = vrot.slane %v6701, %v6812
    %v6816 = vunpack.c.l.s4 1966171168
    %v6817 = vunpack.c.0.s8 %v6816
    %v6818 = vlaneseq
    %v6819 = vshrl.u32 %v6818, 7
    %v6820 = vsub.s32 %v6817, %v6819
    %v6821 = vrot.slane %v6813, %v6820
    %v6822 = vcombine.high %v6821, %v6821
    %v6824 = vunpack.c.l.s4 1966171168
    %v6825 = vunpack.c.0.s8 %v6824
    %v6826 = vlaneseq
    %v6827 = vshrl.u32 %v6826, 7
    %v6828 = vsub.s32 %v6825, %v6827
    %v6829 = vrot.slane %v6821, %v6828
    %v6831 = vunpack.c.l.s4 1966171168
    %v6832 = vunpack.c.0.s8 %v6831
    %v6833 = vlaneseq
    %v6834 = vshrl.u32 %v6833, 7
    %v6835 = vsub.s32 %v6832, %v6834
    %v6836 = vrot.slane %v6822, %v6835
    %v6839 = vadd.f32 %v6808, %v6829
    %v6840 = vadd.f32 %v6809, %v6836
    %v6841 = vld [vmem:[%s5] sm:$0xff]
    %v6842 = vld [vmem:[%s5 + $0x8] sm:$0xff]
    %v6843 = vld [vmem:[%s5 + $0x10] sm:$0xff]
    %v6844 = vld [vmem:[%s5 + $0x18] sm:$0xff]
    %v6845 = vld [vmem:[%s4 + $0x4] sm:$0x1]
    %v6846 = vlaneseq
    %v6847 = vshrl.u32 %v6846, 7
    %v6848 = vsub.s32 0, %v6847
    %v6849 = vrot.slane %v6845, %v6848
    %v6852 = vcombine.low %v6839, %v6840
    %v6854 = vunpack.c.l.s4 1966171168
    %v6855 = vunpack.c.0.s8 %v6854
    %v6856 = vlaneseq
    %v6857 = vshrl.u32 %v6856, 7
    %v6858 = vsub.s32 %v6855, %v6857
    %v6859 = vrot.slane %v6852, %v6858
    %v6861 = vunpack.c.l.s4 1966171168
    %v6862 = vunpack.c.0.s8 %v6861
    %v6863 = vlaneseq
    %v6864 = vshrl.u32 %v6863, 7
    %v6865 = vsub.s32 %v6862, %v6864
    %v6866 = vrot.slane %v6859, %v6865
    %v6867 = vsel %vm298, %v6866, 0
    %6869 = vmatprep.subr.mxu0 0.0
    %6870 = vmatpush1.msra.mxu0 0.0
    %6871 = vmatprep.subr.mxu0 0.0
    %6872 = vmatpush1.msra.mxu0 0.0
    %6873 = vmatprep.subr.mxu0 0.0
    %6874 = vmatpush1.msra.mxu0 0.0
    %6875 = vmatprep.subr.mxu0 0.0
    %6876 = vmatpush1.msra.mxu0 0.0
    %6877 = vmatprep.subr.mxu0 0.0
    %6878 = vmatpush1.msra.mxu0 0.0
    %6879 = vmatprep.subr.mxu0 0.0
    %6880 = vmatpush1.msra.mxu0 0.0
    %6881 = vmatprep.subr.mxu0 0.0
    %6882 = vmatpush1.msra.mxu0 0.0
    %6883 = vmatprep.subr.mxu0 0.0
    %6884 = vmatpush1.msra.mxu0 0.0
    %6885 = vmatprep.subr.mxu0 0.0
    %6886 = vmatpush1.msra.mxu0 0.0
    %6887 = vmatprep.subr.mxu0 0.0
    %6888 = vmatpush1.msra.mxu0 0.0
    %6889 = vmatprep.subr.mxu0 0.0
    %6890 = vmatpush1.msra.mxu0 0.0
    %6891 = vmatprep.subr.mxu0 0.0
    %6892 = vmatpush1.msra.mxu0 0.0
    %6893 = vmatprep.subr.mxu0 0.0
    %6894 = vmatpush1.msra.mxu0 %v6844
    %6895 = vmatprep.subr.mxu0 0.0
    %6896 = vmatpush1.msra.mxu0 %v6843
    %6897 = vmatprep.subr.mxu0 0.0
    %6898 = vmatpush1.msra.mxu0 %v6842
    %6899 = vmatprep.subr.mxu0 0.0
    %6900 = vmatpush1.msra.mxu0 %v6841
    %6901 = vmatprep.subr.mxu0 0.0
    %6902 = vmatpush2.msra.mxu0 0.0
    %6903 = vmatprep.subr.mxu0 0.0
    %6904 = vmatpush2.msra.mxu0 0.0
    %6905 = vmatprep.subr.mxu0 0.0
    %6906 = vmatpush2.msra.mxu0 0.0
    %6907 = vmatprep.subr.mxu0 0.0
    %6908 = vmatpush2.msra.mxu0 0.0
    %6909 = vmatprep.subr.mxu0 0.0
    %6910 = vmatpush2.msra.mxu0 0.0
    %6911 = vmatprep.subr.mxu0 0.0
    %6912 = vmatpush2.msra.mxu0 0.0
    %6913 = vmatprep.subr.mxu0 0.0
    %6914 = vmatpush2.msra.mxu0 0.0
    %6915 = vmatprep.subr.mxu0 0.0
    %6916 = vmatpush2.msra.mxu0 0.0
    %6917 = vmatprep.subr.mxu0 0.0
    %6918 = vmatpush2.msra.mxu0 0.0
    %6919 = vmatprep.subr.mxu0 0.0
    %6920 = vmatpush2.msra.mxu0 0.0
    %6921 = vmatprep.subr.mxu0 0.0
    %6922 = vmatpush2.msra.mxu0 0.0
    %6923 = vmatprep.subr.mxu0 0.0
    %6924 = vmatpush2.msra.mxu0 0.0
    %6925 = vmatprep.subr.mxu0 0.0
    %6926 = vmatpush2.msra.mxu0 0.0
    %6927 = vmatprep.subr.mxu0 0.0
    %6928 = vmatpush2.msra.mxu0 0.0
    %6929 = vmatprep.subr.mxu0 0.0
    %6930 = vmatpush2.msra.mxu0 0.0
    %6931 = vmatprep.subr.mxu0 0.0
    %6932 = vmatpush2.msra.mxu0 0.0
    %6933 = vmatprep.mubr.f32.mxu0 0.0
    %6934 = vmatmul.mubr.f32.gmra.mxu0 %v6867
    %v6935 = vpop.f32.mrf.mxu0
    %v6936 = vadd.f32 %v6849, %v6935
    %v6937 = vpop.f32.mrf.mxu0
    %6938 = vdwg.mxu0
    %v6939 = vmax.f32 %v6936, 0.0
    %6940 = vrot.lane.b32.xlu0 %v6866, 64
    %v6941 = vpop.permute.xlu0 %6940
    %v6943 = vsel %vm50, %v6939, %v6941
    %v6944 = vld [vmem:[%s5 + $0x20] sm:$0xff]
    %v6945 = vld [vmem:[%s5 + $0x28] sm:$0xff]
    %v6946 = vld [vmem:[%s5 + $0x30] sm:$0xff]
    %v6947 = vld [vmem:[%s5 + $0x38] sm:$0xff]
    %v6948 = vld [vmem:[%s5 + $0x40] sm:$0xff]
    %v6949 = vld [vmem:[%s5 + $0x48] sm:$0xff]
    %v6950 = vld [vmem:[%s5 + $0x50] sm:$0xff]
    %v6951 = vld [vmem:[%s5 + $0x58] sm:$0xff]
    %v6952 = vld [vmem:[%s5 + $0x60] sm:$0xff]
    %v6953 = vld [vmem:[%s5 + $0x68] sm:$0xff]
    %v6954 = vld [vmem:[%s5 + $0x70] sm:$0xff]
    %v6955 = vld [vmem:[%s5 + $0x78] sm:$0xff]
    %v6956 = vld [vmem:[%s4 + $0x5] sm:$0x1]
    %v6957 = vlaneseq
    %v6958 = vshrl.u32 %v6957, 7
    %v6959 = vsub.s32 0, %v6958
    %v6960 = vrot.slane %v6956, %v6959
    %vm6961 = vcmask 785408
    %v6963 = vsel %vm6961, %v6943, 0
    %6965 = vmatprep.subr.mxu0 0.0
    %6966 = vmatpush1.msra.mxu0 0.0
    %6967 = vmatprep.subr.mxu0 0.0
    %6968 = vmatpush1.msra.mxu0 0.0
    %6969 = vmatprep.subr.mxu0 0.0
    %6970 = vmatpush1.msra.mxu0 0.0
    %6971 = vmatprep.subr.mxu0 0.0
    %6972 = vmatpush1.msra.mxu0 0.0
    %6973 = vmatprep.subr.mxu0 0.0
    %6974 = vmatpush1.msra.mxu0 %v6955
    %6975 = vmatprep.subr.mxu0 0.0
    %6976 = vmatpush1.msra.mxu0 %v6954
    %6977 = vmatprep.subr.mxu0 0.0
    %6978 = vmatpush1.msra.mxu0 %v6953
    %6979 = vmatprep.subr.mxu0 0.0
    %6980 = vmatpush1.msra.mxu0 %v6952
    %6981 = vmatprep.subr.mxu0 0.0
    %6982 = vmatpush1.msra.mxu0 %v6951
    %6983 = vmatprep.subr.mxu0 0.0
    %6984 = vmatpush1.msra.mxu0 %v6950
    %6985 = vmatprep.subr.mxu0 0.0
    %6986 = vmatpush1.msra.mxu0 %v6949
    %6987 = vmatprep.subr.mxu0 0.0
    %6988 = vmatpush1.msra.mxu0 %v6948
    %6989 = vmatprep.subr.mxu0 0.0
    %6990 = vmatpush1.msra.mxu0 %v6947
    %6991 = vmatprep.subr.mxu0 0.0
    %6992 = vmatpush1.msra.mxu0 %v6946
    %6993 = vmatprep.subr.mxu0 0.0
    %6994 = vmatpush1.msra.mxu0 %v6945
    %6995 = vmatprep.subr.mxu0 0.0
    %6996 = vmatpush1.msra.mxu0 %v6944
    %6997 = vmatprep.subr.mxu0 0.0
    %6998 = vmatpush2.msra.mxu0 0.0
    %6999 = vmatprep.subr.mxu0 0.0
    %7000 = vmatpush2.msra.mxu0 0.0
    %7001 = vmatprep.subr.mxu0 0.0
    %7002 = vmatpush2.msra.mxu0 0.0
    %7003 = vmatprep.subr.mxu0 0.0
    %7004 = vmatpush2.msra.mxu0 0.0
    %7005 = vmatprep.subr.mxu0 0.0
    %7006 = vmatpush2.msra.mxu0 0.0
    %7007 = vmatprep.subr.mxu0 0.0
    %7008 = vmatpush2.msra.mxu0 0.0
    %7009 = vmatprep.subr.mxu0 0.0
    %7010 = vmatpush2.msra.mxu0 0.0
    %7011 = vmatprep.subr.mxu0 0.0
    %7012 = vmatpush2.msra.mxu0 0.0
    %7013 = vmatprep.subr.mxu0 0.0
    %7014 = vmatpush2.msra.mxu0 0.0
    %7015 = vmatprep.subr.mxu0 0.0
    %7016 = vmatpush2.msra.mxu0 0.0
    %7017 = vmatprep.subr.mxu0 0.0
    %7018 = vmatpush2.msra.mxu0 0.0
    %7019 = vmatprep.subr.mxu0 0.0
    %7020 = vmatpush2.msra.mxu0 0.0
    %7021 = vmatprep.subr.mxu0 0.0
    %7022 = vmatpush2.msra.mxu0 0.0
    %7023 = vmatprep.subr.mxu0 0.0
    %7024 = vmatpush2.msra.mxu0 0.0
    %7025 = vmatprep.subr.mxu0 0.0
    %7026 = vmatpush2.msra.mxu0 0.0
    %7027 = vmatprep.subr.mxu0 0.0
    %7028 = vmatpush2.msra.mxu0 0.0
    %7029 = vmatprep.mubr.f32.mxu0 0.0
    %7030 = vmatmul.mubr.f32.gmra.mxu0 %v6963
    %v7031 = vpop.f32.mrf.mxu0
    %v7032 = vadd.f32 %v6960, %v7031
    %v7033 = vpop.f32.mrf.mxu0
    %7034 = vdwg.mxu0
    %vm7035 = vcmask 115712
    %7036 = vst.msk [vmem:[#allocation2] sm:$0x3] %vm7035, %v7032
    // Predicated region
    $region26: #{tpu_custom_call.1} parent=1 // pred_check
      _
    $region27: #{tpu_custom_call.1} parent=1 // pred_check_branch
      %7038 = sbr.rel (0) target = $region29
    $region28: #{tpu_custom_call.1} parent=1 // pred_region
      %s7040 = ssub.s32 32, 32
      %7041 = vsyncadd [#allocation3], %s7040
      %s7043 = sshll.u32 [#allocation2], 4
      %s7044 = int_to_ptr.vmem [resolvable:$true] %s7043
      %7046 = dma.vmem_to_hbm [thread:$0]  %s7044, 32, %s6, [#allocation3]
    $region29: #{tpu_custom_call.1} parent=1 // pred_fallthru
      _
    // Predicated region
    $region30: #{tpu_custom_call.1} parent=1 // pred_check
      _
    $region31: #{tpu_custom_call.1} parent=1 // pred_check_branch
      %7048 = sbr.rel (0) target = $region33
    $region32: #{tpu_custom_call.1} parent=1 // pred_region
      %7049 = dma.done [#allocation3], 32
    $region33: #{tpu_custom_call.1} parent=1 // pred_fallthru
      _
    %7050 = vsyncpa [#allocation3], 1

</llo_original>
